<compile_context>
chip_gen: v6e
topology: v6e:2x2x1
jax: 0.10.0
libtpu: 0.0.40
codegen_flags: <defaults>
</compile_context>

<pallas_src>
import functools
import math

import jax
import jax.numpy as jnp
from jax import lax
from jax.experimental import pallas as pl
from jax.experimental.pallas import tpu as pltpu


# ---------------------------------------------------------------------------
# In-kernel helpers (operate on VMEM refs / values, all shapes static)
# ---------------------------------------------------------------------------
def _stage(src_ref, wa_ref, ba_ref, alpha_ref, wb_ref, bb_ref, hbuf_ref,
           H, W, Cin, C):
    """One [conv3x3 s1 p1 + PReLU + conv3x3 s2 p1] stage, fully in VMEM.

    src_ref : (Hp*Wp, Cin) zero-padded, row-flattened input
    hbuf_ref: (Hp*Wp, C)   scratch for the zero-padded intermediate h
    returns : (nb, C) f32 value; valid stride-2 outputs live at rows
              q = yo*Wp + xo (xo < Wo); remaining rows are don't-cares.
    """
    Wp = W + 2
    Ho, Wo = H // 2, W // 2
    na = (H - 1) * Wp + W          # rows of the stride-1 implicit GEMM
    nb = (Ho - 1) * Wp + Wo        # rows of the stride-2 implicit GEMM

    # --- conv3x3, stride 1: out[y*Wp+x] = sum_t src[y*Wp+x + off_t] @ wa[t] ---
    acc = jnp.zeros((na, C), jnp.float32)
    for t in range(9):
        off = (t // 3) * Wp + (t % 3)
        lhs = src_ref[off:off + na, :]                      # (na, Cin), unit stride
        if Cin == 1:
            # K=1 would waste the MXU -> VPU broadcast multiply-add.
            acc = acc + lhs * wa_ref[t]
        else:
            acc = acc + jnp.dot(lhs, wa_ref[t],
                                preferred_element_type=jnp.float32)
    acc = acc + ba_ref[...]                                 # (na, C) + (1, C)
    alpha = alpha_ref[0]                                    # scalar from SMEM
    h = jnp.where(acc >= 0.0, acc, alpha * acc)             # PReLU

    # Rebuild a zero-padded intermediate in hbuf (interior rows only; the
    # don't-care columns of `h` are never copied, so padding stays zero).
    hbuf_ref[...] = jnp.zeros(hbuf_ref.shape, jnp.float32)
    for y in range(H):
        hbuf_ref[(y + 1) * Wp + 1:(y + 1) * Wp + 1 + W, :] = h[y * Wp:y * Wp + W, :]

    # --- conv3x3, stride 2: out[q] = sum_t hbuf[2*q + off_t] @ wb[t] ---------
    accd = jnp.zeros((nb, C), jnp.float32)
    for t in range(9):
        off = (t // 3) * Wp + (t % 3)
        lhs = hbuf_ref[pl.ds(off, nb, stride=2), :]         # row-strided load
        accd = accd + jnp.dot(lhs, wb_ref[t],
                              preferred_element_type=jnp.float32)
    return accd + bb_ref[...]


def _emit_output(dst_ref, accd, Ho, Wo, Wp):
    """Scatter the valid stride-2 rows into the (Ho, Wo, C) output ref."""
    for yo in range(Ho):
        dst_ref[yo, :, :] = accd[yo * Wp:yo * Wp + Wo, :].astype(dst_ref.dtype)


def _emit_padded(dst_ref, accd, Ho, Wo, Wp_src):
    """Scatter the valid stride-2 rows into the next stage's padded buffer."""
    Wp_dst = Wo + 2
    dst_ref[...] = jnp.zeros(dst_ref.shape, dst_ref.dtype)
    for yo in range(Ho):
        dst_ref[(yo + 1) * Wp_dst + 1:(yo + 1) * Wp_dst + 1 + Wo, :] = \
            accd[yo * Wp_src:yo * Wp_src + Wo, :]


def _extractor_kernel(x_ref,
                      w1a_ref, b1a_ref, a1_ref, w1b_ref, b1b_ref,
                      w2a_ref, b2a_ref, a2_ref, w2b_ref, b2b_ref,
                      w3a_ref, b3a_ref, a3_ref, w3b_ref, b3b_ref,
                      f1_ref, f2_ref, f3_ref,
                      h1buf, x2buf, h2buf, x3buf, h3buf,
                      *, H, W, in_channel, nf):
    H1, W1 = H, W
    H2, W2 = H1 // 2, W1 // 2
    H3, W3 = H2 // 2, W2 // 2
    H4, W4 = H3 // 2, W3 // 2

    # ---- stage 1: conv1 + PReLU + down1 ----
    d1 = _stage(x_ref, w1a_ref, b1a_ref, a1_ref, w1b_ref, b1b_ref,
                h1buf, H1, W1, in_channel, nf)
    _emit_output(f1_ref, d1, H2, W2, W1 + 2)
    _emit_padded(x2buf, d1, H2, W2, W1 + 2)

    # ---- stage 2: conv2 + PReLU + down2 ----
    d2 = _stage(x2buf, w2a_ref, b2a_ref, a2_ref, w2b_ref, b2b_ref,
                h2buf, H2, W2, nf, nf)
    _emit_output(f2_ref, d2, H3, W3, W2 + 2)
    _emit_padded(x3buf, d2, H3, W3, W2 + 2)

    # ---- stage 3: conv3 + PReLU + down3 ----
    d3 = _stage(x3buf, w3a_ref, b3a_ref, a3_ref, w3b_ref, b3b_ref,
                h3buf, H3, W3, nf, nf)
    _emit_output(f3_ref, d3, H4, W4, W3 + 2)


# ---------------------------------------------------------------------------
# Wrapper (single pallas_call for the whole module forward)
# ---------------------------------------------------------------------------
def structure_extractor_forward(x_nchw, params):
    """Matches StructureExtractor.forward; returns {'f1','f2','f3'} in NCHW."""
    N, Cin, H, W = x_nchw.shape
    assert H % 8 == 0 and W % 8 == 0, "spatial dims must be divisible by 8"
    nf = params['conv1_w'].shape[0]
    # NOTE: everything is kept VMEM-resident per batch item; for large images
    # the spatial dims would additionally be tiled with halos.

    # NCHW -> NHWC -> zero-pad -> row-flatten (cheap relayout, no replication)
    x = jnp.transpose(x_nchw, (0, 2, 3, 1)).astype(jnp.float32)
    xp = jnp.pad(x, ((0, 0), (1, 1), (1, 1), (0, 0)))
    Hp, Wp = H + 2, W + 2
    xflat = xp.reshape(N, Hp * Wp, Cin)

    def prep_w(w):   # (Cout, Cin, 3, 3) -> (9, Cin, Cout), tap order t = ky*3+kx
        cout, cin = w.shape[0], w.shape[1]
        return jnp.transpose(w, (2, 3, 1, 0)).reshape(9, cin, cout).astype(jnp.float32)

    prep_b = lambda b: b.reshape(1, -1).astype(jnp.float32)
    prep_a = lambda a: jnp.asarray(a, jnp.float32).reshape(1)

    H1, W1 = H, W
    H2, W2 = H1 // 2, W1 // 2
    H3, W3 = H2 // 2, W2 // 2
    H4, W4 = H3 // 2, W3 // 2

    kernel = functools.partial(_extractor_kernel, H=H1, W=W1,
                               in_channel=Cin, nf=nf)

    def full(shape):
        return pl.BlockSpec(shape, lambda n, _s=shape: (0,) * len(_s))

    smem = pl.BlockSpec(memory_space=pltpu.MemorySpace.SMEM)

    in_specs = [
        pl.BlockSpec((None, Hp * Wp, Cin), lambda n: (n, 0, 0)),   # x (flattened)
        full((9, Cin, nf)), full((1, nf)), smem, full((9, nf, nf)), full((1, nf)),
        full((9, nf, nf)), full((1, nf)), smem, full((9, nf, nf)), full((1, nf)),
        full((9, nf, nf)), full((1, nf)), smem, full((9, nf, nf)), full((1, nf)),
    ]
    out_specs = [
        pl.BlockSpec((None, H2, W2, nf), lambda n: (n, 0, 0, 0)),
        pl.BlockSpec((None, H3, W3, nf), lambda n: (n, 0, 0, 0)),
        pl.BlockSpec((None, H4, W4, nf), lambda n: (n, 0, 0, 0)),
    ]
    out_shape = [
        jax.ShapeDtypeStruct((N, H2, W2, nf), jnp.float32),
        jax.ShapeDtypeStruct((N, H3, W3, nf), jnp.float32),
        jax.ShapeDtypeStruct((N, H4, W4, nf), jnp.float32),
    ]
    scratch_shapes = [
        pltpu.VMEM(((H1 + 2) * (W1 + 2), nf), jnp.float32),   # padded h1
        pltpu.VMEM(((H2 + 2) * (W2 + 2), nf), jnp.float32),   # padded f1 (stage-2 in)
        pltpu.VMEM(((H2 + 2) * (W2 + 2), nf), jnp.float32),   # padded h2
        pltpu.VMEM(((H3 + 2) * (W3 + 2), nf), jnp.float32),   # padded f2 (stage-3 in)
        pltpu.VMEM(((H3 + 2) * (W3 + 2), nf), jnp.float32),   # padded h3
    ]

    f1, f2, f3 = pl.pallas_call(
        kernel,
        out_shape=out_shape,
        grid=(N,),
        in_specs=in_specs,
        out_specs=out_specs,
        scratch_shapes=scratch_shapes,
        compiler_params=pltpu.CompilerParams(
            dimension_semantics=("parallel",)),
    )(xflat,
      prep_w(params['conv1_w']), prep_b(params['conv1_b']), prep_a(params['alpha1']),
      prep_w(params['down1_w']), prep_b(params['down1_b']),
      prep_w(params['conv2_w']), prep_b(params['conv2_b']), prep_a(params['alpha2']),
      prep_w(params['down2_w']), prep_b(params['down2_b']),
      prep_w(params['conv3_w']), prep_b(params['conv3_b']), prep_a(params['alpha3']),
      prep_w(params['down3_w']), prep_b(params['down3_b']))

    to_nchw = lambda t: jnp.transpose(t, (0, 3, 1, 2))
    return {'f1': to_nchw(f1), 'f2': to_nchw(f2), 'f3': to_nchw(f3)}


# ---------------------------------------------------------------------------
# Parameter init (deterministic, mirrors nn.Conv2d / nn.PReLU shapes)
# ---------------------------------------------------------------------------
def init_params(key, in_channel=1, nf=32):
    def init_conv(k, cin, cout):
        k1, k2 = jax.random.split(k)
        scale = 1.0 / math.sqrt(cin * 9)
        w = jax.random.normal(k1, (cout, cin, 3, 3), jnp.float32) * scale
        b = jax.random.normal(k2, (cout,), jnp.float32) * 0.01
        return w, b

    keys = jax.random.split(key, 6)
    p = {}
    p['conv1_w'], p['conv1_b'] = init_conv(keys[0], in_channel, nf)
    p['down1_w'], p['down1_b'] = init_conv(keys[1], nf, nf)
    p['conv2_w'], p['conv2_b'] = init_conv(keys[2], nf, nf)
    p['down2_w'], p['down2_b'] = init_conv(keys[3], nf, nf)
    p['conv3_w'], p['conv3_b'] = init_conv(keys[4], nf, nf)
    p['down3_w'], p['down3_b'] = init_conv(keys[5], nf, nf)
    # nn.PReLU() default: single shared slope = 0.25
    p['alpha1'] = jnp.array([0.25], jnp.float32)
    p['alpha2'] = jnp.array([0.25], jnp.float32)
    p['alpha3'] = jnp.array([0.25], jnp.float32)
    return p


# ---------------------------------------------------------------------------
# Pure-JAX reference (correctness sanity check)
# ---------------------------------------------------------------------------
def _ref_conv(x_nhwc, w_oihw, b, stride):
    y = lax.conv_general_dilated(
        x_nhwc, jnp.transpose(w_oihw, (2, 3, 1, 0)),
        window_strides=(stride, stride), padding=((1, 1), (1, 1)),
        dimension_numbers=('NHWC', 'HWIO', 'NHWC'),
        precision=lax.Precision.HIGHEST)
    return y + b


def _ref_forward(x_nchw, p):
    prelu = lambda y, a: jnp.where(y >= 0, y, a[0] * y)
    x = jnp.transpose(x_nchw, (0, 2, 3, 1))
    f1 = _ref_conv(prelu(_ref_conv(x,  p['conv1_w'], p['conv1_b'], 1), p['alpha1']),
                   p['down1_w'], p['down1_b'], 2)
    f2 = _ref_conv(prelu(_ref_conv(f1, p['conv2_w'], p['conv2_b'], 1), p['alpha2']),
                   p['down2_w'], p['down2_b'], 2)
    f3 = _ref_conv(prelu(_ref_conv(f2, p['conv3_w'], p['conv3_b'], 1), p['alpha3']),
                   p['down3_w'], p['down3_b'], 2)
    to_nchw = lambda t: jnp.transpose(t, (0, 3, 1, 2))
    return {'f1': to_nchw(f1), 'f2': to_nchw(f2), 'f3': to_nchw(f3)}


if __name__ == "__main__":
    key = jax.random.PRNGKey(0)
    kx, kp = jax.random.split(key)

    # small shapes consistent with the module: batch=2, in_channel=1, 16x16, nf=32
    x = jax.random.normal(kx, (2, 1, 16, 16), jnp.float32)
    params = init_params(kp, in_channel=1, nf=32)

    out = structure_extractor_forward(x, params)
    out = jax.tree_util.tree_map(jax.block_until_ready, out)

    assert out['f1'].shape == (2, 32, 8, 8)
    assert out['f2'].shape == (2, 32, 4, 4)
    assert out['f3'].shape == (2, 32, 2, 2)

    ref = _ref_forward(x, params)
    for name in ('f1', 'f2', 'f3'):
        err = float(jnp.max(jnp.abs(out[name] - ref[name])))
        assert err < 2e-2, f"{name} mismatch, max abs err = {err}"

    print("KERNEL_OK")
</pallas_src>

<mosaic_0001>
module attributes {stable_mosaic.version = 11 : i64} {
  func.func @_extractor_kernel(%arg0: i32, %arg1: memref<1x324x1xf32, #tpu.memory_space<vmem>>, %arg2: memref<9x1x32xf32, #tpu.memory_space<vmem>>, %arg3: memref<1x32xf32, #tpu.memory_space<vmem>>, %arg4: memref<1xf32, #tpu.memory_space<smem>>, %arg5: memref<9x32x32xf32, #tpu.memory_space<vmem>>, %arg6: memref<1x32xf32, #tpu.memory_space<vmem>>, %arg7: memref<9x32x32xf32, #tpu.memory_space<vmem>>, %arg8: memref<1x32xf32, #tpu.memory_space<vmem>>, %arg9: memref<1xf32, #tpu.memory_space<smem>>, %arg10: memref<9x32x32xf32, #tpu.memory_space<vmem>>, %arg11: memref<1x32xf32, #tpu.memory_space<vmem>>, %arg12: memref<9x32x32xf32, #tpu.memory_space<vmem>>, %arg13: memref<1x32xf32, #tpu.memory_space<vmem>>, %arg14: memref<1xf32, #tpu.memory_space<smem>>, %arg15: memref<9x32x32xf32, #tpu.memory_space<vmem>>, %arg16: memref<1x32xf32, #tpu.memory_space<vmem>>, %arg17: memref<1x8x8x32xf32, #tpu.memory_space<vmem>>, %arg18: memref<1x4x4x32xf32, #tpu.memory_space<vmem>>, %arg19: memref<1x2x2x32xf32, #tpu.memory_space<vmem>>, %arg20: memref<324x32xf32, #tpu.memory_space<vmem>>, %arg21: memref<100x32xf32, #tpu.memory_space<vmem>>, %arg22: memref<100x32xf32, #tpu.memory_space<vmem>>, %arg23: memref<36x32xf32, #tpu.memory_space<vmem>>, %arg24: memref<36x32xf32, #tpu.memory_space<vmem>>) attributes {dimension_semantics = [#tpu.dimension_semantics<parallel>], iteration_bounds = array<i64: 2>, scalar_prefetch = 0 : i64, scratch_operands = 5 : i64, tpu.core_type = #tpu.core_type<tc>, window_params = [{transform_indices = @transform_0, window_bounds = array<i64: 1, 324, 1>}, {pipeline_mode = #tpu.pipeline_mode<synchronous>, transform_indices = @transform_1, window_bounds = array<i64: 9, 1, 32>}, {pipeline_mode = #tpu.pipeline_mode<synchronous>, transform_indices = @transform_2, window_bounds = array<i64: 1, 32>}, {transform_indices = @transform_3, window_bounds = array<i64: 1>}, {pipeline_mode = #tpu.pipeline_mode<synchronous>, transform_indices = @transform_4, window_bounds = array<i64: 9, 32, 32>}, {pipeline_mode = #tpu.pipeline_mode<synchronous>, transform_indices = @transform_5, window_bounds = array<i64: 1, 32>}, {pipeline_mode = #tpu.pipeline_mode<synchronous>, transform_indices = @transform_6, window_bounds = array<i64: 9, 32, 32>}, {pipeline_mode = #tpu.pipeline_mode<synchronous>, transform_indices = @transform_7, window_bounds = array<i64: 1, 32>}, {transform_indices = @transform_8, window_bounds = array<i64: 1>}, {pipeline_mode = #tpu.pipeline_mode<synchronous>, transform_indices = @transform_9, window_bounds = array<i64: 9, 32, 32>}, {pipeline_mode = #tpu.pipeline_mode<synchronous>, transform_indices = @transform_10, window_bounds = array<i64: 1, 32>}, {pipeline_mode = #tpu.pipeline_mode<synchronous>, transform_indices = @transform_11, window_bounds = array<i64: 9, 32, 32>}, {pipeline_mode = #tpu.pipeline_mode<synchronous>, transform_indices = @transform_12, window_bounds = array<i64: 1, 32>}, {transform_indices = @transform_13, window_bounds = array<i64: 1>}, {pipeline_mode = #tpu.pipeline_mode<synchronous>, transform_indices = @transform_14, window_bounds = array<i64: 9, 32, 32>}, {pipeline_mode = #tpu.pipeline_mode<synchronous>, transform_indices = @transform_15, window_bounds = array<i64: 1, 32>}, {transform_indices = @transform_16, window_bounds = array<i64: 1, 8, 8, 32>}, {transform_indices = @transform_17, window_bounds = array<i64: 1, 4, 4, 32>}, {transform_indices = @transform_18, window_bounds = array<i64: 1, 2, 2, 32>}]} {
    %cst = arith.constant 0.000000e+00 : f32
    %0 = vector.broadcast %cst : f32 to vector<286x32xf32>
    %c0 = arith.constant 0 : index
    %c0_0 = arith.constant 0 : index
    %c0_1 = arith.constant 0 : index
    %1 = vector.load %arg1[%c0, %c0_0, %c0_1] : memref<1x324x1xf32, #tpu.memory_space<vmem>>, vector<1x286x1xf32>
    %2 = vector.shape_cast %1 : vector<1x286x1xf32> to vector<286x1xf32>
    %c0_2 = arith.constant 0 : index
    %c0_3 = arith.constant 0 : index
    %c0_4 = arith.constant 0 : index
    %3 = vector.load %arg2[%c0_2, %c0_3, %c0_4] : memref<9x1x32xf32, #tpu.memory_space<vmem>>, vector<1x1x32xf32>
    %4 = vector.shape_cast %3 : vector<1x1x32xf32> to vector<1x32xf32>
    %5 = vector.broadcast %2 : vector<286x1xf32> to vector<286x32xf32>
    %6 = vector.broadcast %4 : vector<1x32xf32> to vector<286x32xf32>
    %7 = arith.mulf %5, %6 : vector<286x32xf32>
    %8 = arith.addf %0, %7 : vector<286x32xf32>
    %c0_5 = arith.constant 0 : index
    %c1 = arith.constant 1 : index
    %c0_6 = arith.constant 0 : index
    %9 = vector.load %arg1[%c0_5, %c1, %c0_6] : memref<1x324x1xf32, #tpu.memory_space<vmem>>, vector<1x286x1xf32>
    %10 = vector.shape_cast %9 : vector<1x286x1xf32> to vector<286x1xf32>
    %c1_7 = arith.constant 1 : index
    %c0_8 = arith.constant 0 : index
    %c0_9 = arith.constant 0 : index
    %11 = vector.load %arg2[%c1_7, %c0_8, %c0_9] : memref<9x1x32xf32, #tpu.memory_space<vmem>>, vector<1x1x32xf32>
    %12 = vector.shape_cast %11 : vector<1x1x32xf32> to vector<1x32xf32>
    %13 = vector.broadcast %10 : vector<286x1xf32> to vector<286x32xf32>
    %14 = vector.broadcast %12 : vector<1x32xf32> to vector<286x32xf32>
    %15 = arith.mulf %13, %14 : vector<286x32xf32>
    %16 = arith.addf %8, %15 : vector<286x32xf32>
    %c0_10 = arith.constant 0 : index
    %c2 = arith.constant 2 : index
    %c0_11 = arith.constant 0 : index
    %17 = vector.load %arg1[%c0_10, %c2, %c0_11] : memref<1x324x1xf32, #tpu.memory_space<vmem>>, vector<1x286x1xf32>
    %18 = vector.shape_cast %17 : vector<1x286x1xf32> to vector<286x1xf32>
    %c2_12 = arith.constant 2 : index
    %c0_13 = arith.constant 0 : index
    %c0_14 = arith.constant 0 : index
    %19 = vector.load %arg2[%c2_12, %c0_13, %c0_14] : memref<9x1x32xf32, #tpu.memory_space<vmem>>, vector<1x1x32xf32>
    %20 = vector.shape_cast %19 : vector<1x1x32xf32> to vector<1x32xf32>
    %21 = vector.broadcast %18 : vector<286x1xf32> to vector<286x32xf32>
    %22 = vector.broadcast %20 : vector<1x32xf32> to vector<286x32xf32>
    %23 = arith.mulf %21, %22 : vector<286x32xf32>
    %24 = arith.addf %16, %23 : vector<286x32xf32>
    %c0_15 = arith.constant 0 : index
    %c18 = arith.constant 18 : index
    %c0_16 = arith.constant 0 : index
    %25 = vector.load %arg1[%c0_15, %c18, %c0_16] : memref<1x324x1xf32, #tpu.memory_space<vmem>>, vector<1x286x1xf32>
    %26 = vector.shape_cast %25 : vector<1x286x1xf32> to vector<286x1xf32>
    %c3 = arith.constant 3 : index
    %c0_17 = arith.constant 0 : index
    %c0_18 = arith.constant 0 : index
    %27 = vector.load %arg2[%c3, %c0_17, %c0_18] : memref<9x1x32xf32, #tpu.memory_space<vmem>>, vector<1x1x32xf32>
    %28 = vector.shape_cast %27 : vector<1x1x32xf32> to vector<1x32xf32>
    %29 = vector.broadcast %26 : vector<286x1xf32> to vector<286x32xf32>
    %30 = vector.broadcast %28 : vector<1x32xf32> to vector<286x32xf32>
    %31 = arith.mulf %29, %30 : vector<286x32xf32>
    %32 = arith.addf %24, %31 : vector<286x32xf32>
    %c0_19 = arith.constant 0 : index
    %c19 = arith.constant 19 : index
    %c0_20 = arith.constant 0 : index
    %33 = vector.load %arg1[%c0_19, %c19, %c0_20] : memref<1x324x1xf32, #tpu.memory_space<vmem>>, vector<1x286x1xf32>
    %34 = vector.shape_cast %33 : vector<1x286x1xf32> to vector<286x1xf32>
    %c4 = arith.constant 4 : index
    %c0_21 = arith.constant 0 : index
    %c0_22 = arith.constant 0 : index
    %35 = vector.load %arg2[%c4, %c0_21, %c0_22] : memref<9x1x32xf32, #tpu.memory_space<vmem>>, vector<1x1x32xf32>
    %36 = vector.shape_cast %35 : vector<1x1x32xf32> to vector<1x32xf32>
    %37 = vector.broadcast %34 : vector<286x1xf32> to vector<286x32xf32>
    %38 = vector.broadcast %36 : vector<1x32xf32> to vector<286x32xf32>
    %39 = arith.mulf %37, %38 : vector<286x32xf32>
    %40 = arith.addf %32, %39 : vector<286x32xf32>
    %c0_23 = arith.constant 0 : index
    %c20 = arith.constant 20 : index
    %c0_24 = arith.constant 0 : index
    %41 = vector.load %arg1[%c0_23, %c20, %c0_24] : memref<1x324x1xf32, #tpu.memory_space<vmem>>, vector<1x286x1xf32>
    %42 = vector.shape_cast %41 : vector<1x286x1xf32> to vector<286x1xf32>
    %c5 = arith.constant 5 : index
    %c0_25 = arith.constant 0 : index
    %c0_26 = arith.constant 0 : index
    %43 = vector.load %arg2[%c5, %c0_25, %c0_26] : memref<9x1x32xf32, #tpu.memory_space<vmem>>, vector<1x1x32xf32>
    %44 = vector.shape_cast %43 : vector<1x1x32xf32> to vector<1x32xf32>
    %45 = vector.broadcast %42 : vector<286x1xf32> to vector<286x32xf32>
    %46 = vector.broadcast %44 : vector<1x32xf32> to vector<286x32xf32>
    %47 = arith.mulf %45, %46 : vector<286x32xf32>
    %48 = arith.addf %40, %47 : vector<286x32xf32>
    %c0_27 = arith.constant 0 : index
    %c36 = arith.constant 36 : index
    %c0_28 = arith.constant 0 : index
    %49 = vector.load %arg1[%c0_27, %c36, %c0_28] : memref<1x324x1xf32, #tpu.memory_space<vmem>>, vector<1x286x1xf32>
    %50 = vector.shape_cast %49 : vector<1x286x1xf32> to vector<286x1xf32>
    %c6 = arith.constant 6 : index
    %c0_29 = arith.constant 0 : index
    %c0_30 = arith.constant 0 : index
    %51 = vector.load %arg2[%c6, %c0_29, %c0_30] : memref<9x1x32xf32, #tpu.memory_space<vmem>>, vector<1x1x32xf32>
    %52 = vector.shape_cast %51 : vector<1x1x32xf32> to vector<1x32xf32>
    %53 = vector.broadcast %50 : vector<286x1xf32> to vector<286x32xf32>
    %54 = vector.broadcast %52 : vector<1x32xf32> to vector<286x32xf32>
    %55 = arith.mulf %53, %54 : vector<286x32xf32>
    %56 = arith.addf %48, %55 : vector<286x32xf32>
    %c0_31 = arith.constant 0 : index
    %c37 = arith.constant 37 : index
    %c0_32 = arith.constant 0 : index
    %57 = vector.load %arg1[%c0_31, %c37, %c0_32] : memref<1x324x1xf32, #tpu.memory_space<vmem>>, vector<1x286x1xf32>
    %58 = vector.shape_cast %57 : vector<1x286x1xf32> to vector<286x1xf32>
    %c7 = arith.constant 7 : index
    %c0_33 = arith.constant 0 : index
    %c0_34 = arith.constant 0 : index
    %59 = vector.load %arg2[%c7, %c0_33, %c0_34] : memref<9x1x32xf32, #tpu.memory_space<vmem>>, vector<1x1x32xf32>
    %60 = vector.shape_cast %59 : vector<1x1x32xf32> to vector<1x32xf32>
    %61 = vector.broadcast %58 : vector<286x1xf32> to vector<286x32xf32>
    %62 = vector.broadcast %60 : vector<1x32xf32> to vector<286x32xf32>
    %63 = arith.mulf %61, %62 : vector<286x32xf32>
    %64 = arith.addf %56, %63 : vector<286x32xf32>
    %c0_35 = arith.constant 0 : index
    %c38 = arith.constant 38 : index
    %c0_36 = arith.constant 0 : index
    %65 = vector.load %arg1[%c0_35, %c38, %c0_36] : memref<1x324x1xf32, #tpu.memory_space<vmem>>, vector<1x286x1xf32>
    %66 = vector.shape_cast %65 : vector<1x286x1xf32> to vector<286x1xf32>
    %c8 = arith.constant 8 : index
    %c0_37 = arith.constant 0 : index
    %c0_38 = arith.constant 0 : index
    %67 = vector.load %arg2[%c8, %c0_37, %c0_38] : memref<9x1x32xf32, #tpu.memory_space<vmem>>, vector<1x1x32xf32>
    %68 = vector.shape_cast %67 : vector<1x1x32xf32> to vector<1x32xf32>
    %69 = vector.broadcast %66 : vector<286x1xf32> to vector<286x32xf32>
    %70 = vector.broadcast %68 : vector<1x32xf32> to vector<286x32xf32>
    %71 = arith.mulf %69, %70 : vector<286x32xf32>
    %72 = arith.addf %64, %71 : vector<286x32xf32>
    %c0_39 = arith.constant 0 : index
    %c0_40 = arith.constant 0 : index
    %73 = vector.load %arg3[%c0_39, %c0_40] : memref<1x32xf32, #tpu.memory_space<vmem>>, vector<1x32xf32>
    %74 = vector.broadcast %73 : vector<1x32xf32> to vector<286x32xf32>
    %75 = arith.addf %72, %74 : vector<286x32xf32>
    %c0_41 = arith.constant 0 : index
    %76 = memref.load %arg4[%c0_41] : memref<1xf32, #tpu.memory_space<smem>>
    %cst_42 = arith.constant 0.000000e+00 : f32
    %77 = vector.broadcast %cst_42 : f32 to vector<286x32xf32>
    %78 = arith.cmpf oge, %75, %77 : vector<286x32xf32>
    %79 = vector.broadcast %76 : f32 to vector<286x32xf32>
    %80 = arith.mulf %79, %75 : vector<286x32xf32>
    %81 = arith.select %78, %75, %80 : vector<286x32xi1>, vector<286x32xf32>
    %cst_43 = arith.constant 0.000000e+00 : f32
    %82 = vector.broadcast %cst_43 : f32 to vector<324x32xf32>
    %c0_44 = arith.constant 0 : index
    %c0_45 = arith.constant 0 : index
    %83 = vector.load %arg20[%c0_44, %c0_45] : memref<324x32xf32, #tpu.memory_space<vmem>>, vector<324x32xf32>
    tpu.vector_store %arg20[%c0_44, %c0_45], %82 {strides = array<i32>} : memref<324x32xf32, #tpu.memory_space<vmem>>, vector<324x32xf32>,
    %84 = vector.extract_strided_slice %81 {offsets = [0, 0], sizes = [16, 32], strides = [1, 1]} : vector<286x32xf32> to vector<16x32xf32>
    %c19_46 = arith.constant 19 : index
    %c0_47 = arith.constant 0 : index
    %85 = vector.load %arg20[%c19_46, %c0_47] : memref<324x32xf32, #tpu.memory_space<vmem>>, vector<16x32xf32>
    tpu.vector_store %arg20[%c19_46, %c0_47], %84 {strides = array<i32>} : memref<324x32xf32, #tpu.memory_space<vmem>>, vector<16x32xf32>,
    %86 = vector.extract_strided_slice %81 {offsets = [18, 0], sizes = [16, 32], strides = [1, 1]} : vector<286x32xf32> to vector<16x32xf32>
    %c37_48 = arith.constant 37 : index
    %c0_49 = arith.constant 0 : index
    %87 = vector.load %arg20[%c37_48, %c0_49] : memref<324x32xf32, #tpu.memory_space<vmem>>, vector<16x32xf32>
    tpu.vector_store %arg20[%c37_48, %c0_49], %86 {strides = array<i32>} : memref<324x32xf32, #tpu.memory_space<vmem>>, vector<16x32xf32>,
    %88 = vector.extract_strided_slice %81 {offsets = [36, 0], sizes = [16, 32], strides = [1, 1]} : vector<286x32xf32> to vector<16x32xf32>
    %c55 = arith.constant 55 : index
    %c0_50 = arith.constant 0 : index
    %89 = vector.load %arg20[%c55, %c0_50] : memref<324x32xf32, #tpu.memory_space<vmem>>, vector<16x32xf32>
    tpu.vector_store %arg20[%c55, %c0_50], %88 {strides = array<i32>} : memref<324x32xf32, #tpu.memory_space<vmem>>, vector<16x32xf32>,
    %90 = vector.extract_strided_slice %81 {offsets = [54, 0], sizes = [16, 32], strides = [1, 1]} : vector<286x32xf32> to vector<16x32xf32>
    %c73 = arith.constant 73 : index
    %c0_51 = arith.constant 0 : index
    %91 = vector.load %arg20[%c73, %c0_51] : memref<324x32xf32, #tpu.memory_space<vmem>>, vector<16x32xf32>
    tpu.vector_store %arg20[%c73, %c0_51], %90 {strides = array<i32>} : memref<324x32xf32, #tpu.memory_space<vmem>>, vector<16x32xf32>,
    %92 = vector.extract_strided_slice %81 {offsets = [72, 0], sizes = [16, 32], strides = [1, 1]} : vector<286x32xf32> to vector<16x32xf32>
    %c91 = arith.constant 91 : index
    %c0_52 = arith.constant 0 : index
    %93 = vector.load %arg20[%c91, %c0_52] : memref<324x32xf32, #tpu.memory_space<vmem>>, vector<16x32xf32>
    tpu.vector_store %arg20[%c91, %c0_52], %92 {strides = array<i32>} : memref<324x32xf32, #tpu.memory_space<vmem>>, vector<16x32xf32>,
    %94 = vector.extract_strided_slice %81 {offsets = [90, 0], sizes = [16, 32], strides = [1, 1]} : vector<286x32xf32> to vector<16x32xf32>
    %c109 = arith.constant 109 : index
    %c0_53 = arith.constant 0 : index
    %95 = vector.load %arg20[%c109, %c0_53] : memref<324x32xf32, #tpu.memory_space<vmem>>, vector<16x32xf32>
    tpu.vector_store %arg20[%c109, %c0_53], %94 {strides = array<i32>} : memref<324x32xf32, #tpu.memory_space<vmem>>, vector<16x32xf32>,
    %96 = vector.extract_strided_slice %81 {offsets = [108, 0], sizes = [16, 32], strides = [1, 1]} : vector<286x32xf32> to vector<16x32xf32>
    %c127 = arith.constant 127 : index
    %c0_54 = arith.constant 0 : index
    %97 = vector.load %arg20[%c127, %c0_54] : memref<324x32xf32, #tpu.memory_space<vmem>>, vector<16x32xf32>
    tpu.vector_store %arg20[%c127, %c0_54], %96 {strides = array<i32>} : memref<324x32xf32, #tpu.memory_space<vmem>>, vector<16x32xf32>,
    %98 = vector.extract_strided_slice %81 {offsets = [126, 0], sizes = [16, 32], strides = [1, 1]} : vector<286x32xf32> to vector<16x32xf32>
    %c145 = arith.constant 145 : index
    %c0_55 = arith.constant 0 : index
    %99 = vector.load %arg20[%c145, %c0_55] : memref<324x32xf32, #tpu.memory_space<vmem>>, vector<16x32xf32>
    tpu.vector_store %arg20[%c145, %c0_55], %98 {strides = array<i32>} : memref<324x32xf32, #tpu.memory_space<vmem>>, vector<16x32xf32>,
    %100 = vector.extract_strided_slice %81 {offsets = [144, 0], sizes = [16, 32], strides = [1, 1]} : vector<286x32xf32> to vector<16x32xf32>
    %c163 = arith.constant 163 : index
    %c0_56 = arith.constant 0 : index
    %101 = vector.load %arg20[%c163, %c0_56] : memref<324x32xf32, #tpu.memory_space<vmem>>, vector<16x32xf32>
    tpu.vector_store %arg20[%c163, %c0_56], %100 {strides = array<i32>} : memref<324x32xf32, #tpu.memory_space<vmem>>, vector<16x32xf32>,
    %102 = vector.extract_strided_slice %81 {offsets = [162, 0], sizes = [16, 32], strides = [1, 1]} : vector<286x32xf32> to vector<16x32xf32>
    %c181 = arith.constant 181 : index
    %c0_57 = arith.constant 0 : index
    %103 = vector.load %arg20[%c181, %c0_57] : memref<324x32xf32, #tpu.memory_space<vmem>>, vector<16x32xf32>
    tpu.vector_store %arg20[%c181, %c0_57], %102 {strides = array<i32>} : memref<324x32xf32, #tpu.memory_space<vmem>>, vector<16x32xf32>,
    %104 = vector.extract_strided_slice %81 {offsets = [180, 0], sizes = [16, 32], strides = [1, 1]} : vector<286x32xf32> to vector<16x32xf32>
    %c199 = arith.constant 199 : index
    %c0_58 = arith.constant 0 : index
    %105 = vector.load %arg20[%c199, %c0_58] : memref<324x32xf32, #tpu.memory_space<vmem>>, vector<16x32xf32>
    tpu.vector_store %arg20[%c199, %c0_58], %104 {strides = array<i32>} : memref<324x32xf32, #tpu.memory_space<vmem>>, vector<16x32xf32>,
    %106 = vector.extract_strided_slice %81 {offsets = [198, 0], sizes = [16, 32], strides = [1, 1]} : vector<286x32xf32> to vector<16x32xf32>
    %c217 = arith.constant 217 : index
    %c0_59 = arith.constant 0 : index
    %107 = vector.load %arg20[%c217, %c0_59] : memref<324x32xf32, #tpu.memory_space<vmem>>, vector<16x32xf32>
    tpu.vector_store %arg20[%c217, %c0_59], %106 {strides = array<i32>} : memref<324x32xf32, #tpu.memory_space<vmem>>, vector<16x32xf32>,
    %108 = vector.extract_strided_slice %81 {offsets = [216, 0], sizes = [16, 32], strides = [1, 1]} : vector<286x32xf32> to vector<16x32xf32>
    %c235 = arith.constant 235 : index
    %c0_60 = arith.constant 0 : index
    %109 = vector.load %arg20[%c235, %c0_60] : memref<324x32xf32, #tpu.memory_space<vmem>>, vector<16x32xf32>
    tpu.vector_store %arg20[%c235, %c0_60], %108 {strides = array<i32>} : memref<324x32xf32, #tpu.memory_space<vmem>>, vector<16x32xf32>,
    %110 = vector.extract_strided_slice %81 {offsets = [234, 0], sizes = [16, 32], strides = [1, 1]} : vector<286x32xf32> to vector<16x32xf32>
    %c253 = arith.constant 253 : index
    %c0_61 = arith.constant 0 : index
    %111 = vector.load %arg20[%c253, %c0_61] : memref<324x32xf32, #tpu.memory_space<vmem>>, vector<16x32xf32>
    tpu.vector_store %arg20[%c253, %c0_61], %110 {strides = array<i32>} : memref<324x32xf32, #tpu.memory_space<vmem>>, vector<16x32xf32>,
    %112 = vector.extract_strided_slice %81 {offsets = [252, 0], sizes = [16, 32], strides = [1, 1]} : vector<286x32xf32> to vector<16x32xf32>
    %c271 = arith.constant 271 : index
    %c0_62 = arith.constant 0 : index
    %113 = vector.load %arg20[%c271, %c0_62] : memref<324x32xf32, #tpu.memory_space<vmem>>, vector<16x32xf32>
    tpu.vector_store %arg20[%c271, %c0_62], %112 {strides = array<i32>} : memref<324x32xf32, #tpu.memory_space<vmem>>, vector<16x32xf32>,
    %114 = vector.extract_strided_slice %81 {offsets = [270, 0], sizes = [16, 32], strides = [1, 1]} : vector<286x32xf32> to vector<16x32xf32>
    %c289 = arith.constant 289 : index
    %c0_63 = arith.constant 0 : index
    %115 = vector.load %arg20[%c289, %c0_63] : memref<324x32xf32, #tpu.memory_space<vmem>>, vector<16x32xf32>
    tpu.vector_store %arg20[%c289, %c0_63], %114 {strides = array<i32>} : memref<324x32xf32, #tpu.memory_space<vmem>>, vector<16x32xf32>,
    %cst_64 = arith.constant 0.000000e+00 : f32
    %116 = vector.broadcast %cst_64 : f32 to vector<134x32xf32>
    %c0_65 = arith.constant 0 : index
    %c0_66 = arith.constant 0 : index
    %117 = tpu.strided_load %arg20[%c0_65, %c0_66] {strides = array<i32: 2, 1>} : memref<324x32xf32, #tpu.memory_space<vmem>>, vector<134x32xf32>
    %c0_67 = arith.constant 0 : index
    %c0_68 = arith.constant 0 : index
    %c0_69 = arith.constant 0 : index
    %118 = vector.load %arg5[%c0_67, %c0_68, %c0_69] : memref<9x32x32xf32, #tpu.memory_space<vmem>>, vector<1x32x32xf32>
    %119 = vector.shape_cast %118 : vector<1x32x32xf32> to vector<32x32xf32>
    %cst_70 = arith.constant dense<0.000000e+00> : vector<134x32xf32>
    %120 = tpu.matmul %117, %119, %cst_70 {dimension_numbers = #tpu.dot_dimension_numbers<[1], [0], [0], [1], [0, 0, 1, 1], [], []>} : vector<134x32xf32>, vector<32x32xf32>, vector<134x32xf32> -> vector<134x32xf32>
    %121 = arith.addf %116, %120 : vector<134x32xf32>
    %c1_71 = arith.constant 1 : index
    %c0_72 = arith.constant 0 : index
    %122 = tpu.strided_load %arg20[%c1_71, %c0_72] {strides = array<i32: 2, 1>} : memref<324x32xf32, #tpu.memory_space<vmem>>, vector<134x32xf32>
    %c1_73 = arith.constant 1 : index
    %c0_74 = arith.constant 0 : index
    %c0_75 = arith.constant 0 : index
    %123 = vector.load %arg5[%c1_73, %c0_74, %c0_75] : memref<9x32x32xf32, #tpu.memory_space<vmem>>, vector<1x32x32xf32>
    %124 = vector.shape_cast %123 : vector<1x32x32xf32> to vector<32x32xf32>
    %cst_76 = arith.constant dense<0.000000e+00> : vector<134x32xf32>
    %125 = tpu.matmul %122, %124, %cst_76 {dimension_numbers = #tpu.dot_dimension_numbers<[1], [0], [0], [1], [0, 0, 1, 1], [], []>} : vector<134x32xf32>, vector<32x32xf32>, vector<134x32xf32> -> vector<134x32xf32>
    %126 = arith.addf %121, %125 : vector<134x32xf32>
    %c2_77 = arith.constant 2 : index
    %c0_78 = arith.constant 0 : index
    %127 = tpu.strided_load %arg20[%c2_77, %c0_78] {strides = array<i32: 2, 1>} : memref<324x32xf32, #tpu.memory_space<vmem>>, vector<134x32xf32>
    %c2_79 = arith.constant 2 : index
    %c0_80 = arith.constant 0 : index
    %c0_81 = arith.constant 0 : index
    %128 = vector.load %arg5[%c2_79, %c0_80, %c0_81] : memref<9x32x32xf32, #tpu.memory_space<vmem>>, vector<1x32x32xf32>
    %129 = vector.shape_cast %128 : vector<1x32x32xf32> to vector<32x32xf32>
    %cst_82 = arith.constant dense<0.000000e+00> : vector<134x32xf32>
    %130 = tpu.matmul %127, %129, %cst_82 {dimension_numbers = #tpu.dot_dimension_numbers<[1], [0], [0], [1], [0, 0, 1, 1], [], []>} : vector<134x32xf32>, vector<32x32xf32>, vector<134x32xf32> -> vector<134x32xf32>
    %131 = arith.addf %126, %130 : vector<134x32xf32>
    %c18_83 = arith.constant 18 : index
    %c0_84 = arith.constant 0 : index
    %132 = tpu.strided_load %arg20[%c18_83, %c0_84] {strides = array<i32: 2, 1>} : memref<324x32xf32, #tpu.memory_space<vmem>>, vector<134x32xf32>
    %c3_85 = arith.constant 3 : index
    %c0_86 = arith.constant 0 : index
    %c0_87 = arith.constant 0 : index
    %133 = vector.load %arg5[%c3_85, %c0_86, %c0_87] : memref<9x32x32xf32, #tpu.memory_space<vmem>>, vector<1x32x32xf32>
    %134 = vector.shape_cast %133 : vector<1x32x32xf32> to vector<32x32xf32>
    %cst_88 = arith.constant dense<0.000000e+00> : vector<134x32xf32>
    %135 = tpu.matmul %132, %134, %cst_88 {dimension_numbers = #tpu.dot_dimension_numbers<[1], [0], [0], [1], [0, 0, 1, 1], [], []>} : vector<134x32xf32>, vector<32x32xf32>, vector<134x32xf32> -> vector<134x32xf32>
    %136 = arith.addf %131, %135 : vector<134x32xf32>
    %c19_89 = arith.constant 19 : index
    %c0_90 = arith.constant 0 : index
    %137 = tpu.strided_load %arg20[%c19_89, %c0_90] {strides = array<i32: 2, 1>} : memref<324x32xf32, #tpu.memory_space<vmem>>, vector<134x32xf32>
    %c4_91 = arith.constant 4 : index
    %c0_92 = arith.constant 0 : index
    %c0_93 = arith.constant 0 : index
    %138 = vector.load %arg5[%c4_91, %c0_92, %c0_93] : memref<9x32x32xf32, #tpu.memory_space<vmem>>, vector<1x32x32xf32>
    %139 = vector.shape_cast %138 : vector<1x32x32xf32> to vector<32x32xf32>
    %cst_94 = arith.constant dense<0.000000e+00> : vector<134x32xf32>
    %140 = tpu.matmul %137, %139, %cst_94 {dimension_numbers = #tpu.dot_dimension_numbers<[1], [0], [0], [1], [0, 0, 1, 1], [], []>} : vector<134x32xf32>, vector<32x32xf32>, vector<134x32xf32> -> vector<134x32xf32>
    %141 = arith.addf %136, %140 : vector<134x32xf32>
    %c20_95 = arith.constant 20 : index
    %c0_96 = arith.constant 0 : index
    %142 = tpu.strided_load %arg20[%c20_95, %c0_96] {strides = array<i32: 2, 1>} : memref<324x32xf32, #tpu.memory_space<vmem>>, vector<134x32xf32>
    %c5_97 = arith.constant 5 : index
    %c0_98 = arith.constant 0 : index
    %c0_99 = arith.constant 0 : index
    %143 = vector.load %arg5[%c5_97, %c0_98, %c0_99] : memref<9x32x32xf32, #tpu.memory_space<vmem>>, vector<1x32x32xf32>
    %144 = vector.shape_cast %143 : vector<1x32x32xf32> to vector<32x32xf32>
    %cst_100 = arith.constant dense<0.000000e+00> : vector<134x32xf32>
    %145 = tpu.matmul %142, %144, %cst_100 {dimension_numbers = #tpu.dot_dimension_numbers<[1], [0], [0], [1], [0, 0, 1, 1], [], []>} : vector<134x32xf32>, vector<32x32xf32>, vector<134x32xf32> -> vector<134x32xf32>
    %146 = arith.addf %141, %145 : vector<134x32xf32>
    %c36_101 = arith.constant 36 : index
    %c0_102 = arith.constant 0 : index
    %147 = tpu.strided_load %arg20[%c36_101, %c0_102] {strides = array<i32: 2, 1>} : memref<324x32xf32, #tpu.memory_space<vmem>>, vector<134x32xf32>
    %c6_103 = arith.constant 6 : index
    %c0_104 = arith.constant 0 : index
    %c0_105 = arith.constant 0 : index
    %148 = vector.load %arg5[%c6_103, %c0_104, %c0_105] : memref<9x32x32xf32, #tpu.memory_space<vmem>>, vector<1x32x32xf32>
    %149 = vector.shape_cast %148 : vector<1x32x32xf32> to vector<32x32xf32>
    %cst_106 = arith.constant dense<0.000000e+00> : vector<134x32xf32>
    %150 = tpu.matmul %147, %149, %cst_106 {dimension_numbers = #tpu.dot_dimension_numbers<[1], [0], [0], [1], [0, 0, 1, 1], [], []>} : vector<134x32xf32>, vector<32x32xf32>, vector<134x32xf32> -> vector<134x32xf32>
    %151 = arith.addf %146, %150 : vector<134x32xf32>
    %c37_107 = arith.constant 37 : index
    %c0_108 = arith.constant 0 : index
    %152 = tpu.strided_load %arg20[%c37_107, %c0_108] {strides = array<i32: 2, 1>} : memref<324x32xf32, #tpu.memory_space<vmem>>, vector<134x32xf32>
    %c7_109 = arith.constant 7 : index
    %c0_110 = arith.constant 0 : index
    %c0_111 = arith.constant 0 : index
    %153 = vector.load %arg5[%c7_109, %c0_110, %c0_111] : memref<9x32x32xf32, #tpu.memory_space<vmem>>, vector<1x32x32xf32>
    %154 = vector.shape_cast %153 : vector<1x32x32xf32> to vector<32x32xf32>
    %cst_112 = arith.constant dense<0.000000e+00> : vector<134x32xf32>
    %155 = tpu.matmul %152, %154, %cst_112 {dimension_numbers = #tpu.dot_dimension_numbers<[1], [0], [0], [1], [0, 0, 1, 1], [], []>} : vector<134x32xf32>, vector<32x32xf32>, vector<134x32xf32> -> vector<134x32xf32>
    %156 = arith.addf %151, %155 : vector<134x32xf32>
    %c38_113 = arith.constant 38 : index
    %c0_114 = arith.constant 0 : index
    %157 = tpu.strided_load %arg20[%c38_113, %c0_114] {strides = array<i32: 2, 1>} : memref<324x32xf32, #tpu.memory_space<vmem>>, vector<134x32xf32>
    %c8_115 = arith.constant 8 : index
    %c0_116 = arith.constant 0 : index
    %c0_117 = arith.constant 0 : index
    %158 = vector.load %arg5[%c8_115, %c0_116, %c0_117] : memref<9x32x32xf32, #tpu.memory_space<vmem>>, vector<1x32x32xf32>
    %159 = vector.shape_cast %158 : vector<1x32x32xf32> to vector<32x32xf32>
    %cst_118 = arith.constant dense<0.000000e+00> : vector<134x32xf32>
    %160 = tpu.matmul %157, %159, %cst_118 {dimension_numbers = #tpu.dot_dimension_numbers<[1], [0], [0], [1], [0, 0, 1, 1], [], []>} : vector<134x32xf32>, vector<32x32xf32>, vector<134x32xf32> -> vector<134x32xf32>
    %161 = arith.addf %156, %160 : vector<134x32xf32>
    %c0_119 = arith.constant 0 : index
    %c0_120 = arith.constant 0 : index
    %162 = vector.load %arg6[%c0_119, %c0_120] : memref<1x32xf32, #tpu.memory_space<vmem>>, vector<1x32xf32>
    %163 = vector.broadcast %162 : vector<1x32xf32> to vector<134x32xf32>
    %164 = arith.addf %161, %163 : vector<134x32xf32>
    %165 = vector.extract_strided_slice %164 {offsets = [0, 0], sizes = [8, 32], strides = [1, 1]} : vector<134x32xf32> to vector<8x32xf32>
    %c0_121 = arith.constant 0 : index
    %c0_122 = arith.constant 0 : index
    %c0_123 = arith.constant 0 : index
    %c0_124 = arith.constant 0 : index
    %166 = vector.load %arg17[%c0_121, %c0_122, %c0_123, %c0_124] : memref<1x8x8x32xf32, #tpu.memory_space<vmem>>, vector<1x1x8x32xf32>
    %167 = vector.shape_cast %166 : vector<1x1x8x32xf32> to vector<8x32xf32>
    %168 = vector.shape_cast %165 : vector<8x32xf32> to vector<1x1x8x32xf32>
    tpu.vector_store %arg17[%c0_121, %c0_122, %c0_123, %c0_124], %168 {strides = array<i32>} : memref<1x8x8x32xf32, #tpu.memory_space<vmem>>, vector<1x1x8x32xf32>,
    %169 = vector.extract_strided_slice %164 {offsets = [18, 0], sizes = [8, 32], strides = [1, 1]} : vector<134x32xf32> to vector<8x32xf32>
    %c0_125 = arith.constant 0 : index
    %c1_126 = arith.constant 1 : index
    %c0_127 = arith.constant 0 : index
    %c0_128 = arith.constant 0 : index
    %170 = vector.load %arg17[%c0_125, %c1_126, %c0_127, %c0_128] : memref<1x8x8x32xf32, #tpu.memory_space<vmem>>, vector<1x1x8x32xf32>
    %171 = vector.shape_cast %170 : vector<1x1x8x32xf32> to vector<8x32xf32>
    %172 = vector.shape_cast %169 : vector<8x32xf32> to vector<1x1x8x32xf32>
    tpu.vector_store %arg17[%c0_125, %c1_126, %c0_127, %c0_128], %172 {strides = array<i32>} : memref<1x8x8x32xf32, #tpu.memory_space<vmem>>, vector<1x1x8x32xf32>,
    %173 = vector.extract_strided_slice %164 {offsets = [36, 0], sizes = [8, 32], strides = [1, 1]} : vector<134x32xf32> to vector<8x32xf32>
    %c0_129 = arith.constant 0 : index
    %c2_130 = arith.constant 2 : index
    %c0_131 = arith.constant 0 : index
    %c0_132 = arith.constant 0 : index
    %174 = vector.load %arg17[%c0_129, %c2_130, %c0_131, %c0_132] : memref<1x8x8x32xf32, #tpu.memory_space<vmem>>, vector<1x1x8x32xf32>
    %175 = vector.shape_cast %174 : vector<1x1x8x32xf32> to vector<8x32xf32>
    %176 = vector.shape_cast %173 : vector<8x32xf32> to vector<1x1x8x32xf32>
    tpu.vector_store %arg17[%c0_129, %c2_130, %c0_131, %c0_132], %176 {strides = array<i32>} : memref<1x8x8x32xf32, #tpu.memory_space<vmem>>, vector<1x1x8x32xf32>,
    %177 = vector.extract_strided_slice %164 {offsets = [54, 0], sizes = [8, 32], strides = [1, 1]} : vector<134x32xf32> to vector<8x32xf32>
    %c0_133 = arith.constant 0 : index
    %c3_134 = arith.constant 3 : index
    %c0_135 = arith.constant 0 : index
    %c0_136 = arith.constant 0 : index
    %178 = vector.load %arg17[%c0_133, %c3_134, %c0_135, %c0_136] : memref<1x8x8x32xf32, #tpu.memory_space<vmem>>, vector<1x1x8x32xf32>
    %179 = vector.shape_cast %178 : vector<1x1x8x32xf32> to vector<8x32xf32>
    %180 = vector.shape_cast %177 : vector<8x32xf32> to vector<1x1x8x32xf32>
    tpu.vector_store %arg17[%c0_133, %c3_134, %c0_135, %c0_136], %180 {strides = array<i32>} : memref<1x8x8x32xf32, #tpu.memory_space<vmem>>, vector<1x1x8x32xf32>,
    %181 = vector.extract_strided_slice %164 {offsets = [72, 0], sizes = [8, 32], strides = [1, 1]} : vector<134x32xf32> to vector<8x32xf32>
    %c0_137 = arith.constant 0 : index
    %c4_138 = arith.constant 4 : index
    %c0_139 = arith.constant 0 : index
    %c0_140 = arith.constant 0 : index
    %182 = vector.load %arg17[%c0_137, %c4_138, %c0_139, %c0_140] : memref<1x8x8x32xf32, #tpu.memory_space<vmem>>, vector<1x1x8x32xf32>
    %183 = vector.shape_cast %182 : vector<1x1x8x32xf32> to vector<8x32xf32>
    %184 = vector.shape_cast %181 : vector<8x32xf32> to vector<1x1x8x32xf32>
    tpu.vector_store %arg17[%c0_137, %c4_138, %c0_139, %c0_140], %184 {strides = array<i32>} : memref<1x8x8x32xf32, #tpu.memory_space<vmem>>, vector<1x1x8x32xf32>,
    %185 = vector.extract_strided_slice %164 {offsets = [90, 0], sizes = [8, 32], strides = [1, 1]} : vector<134x32xf32> to vector<8x32xf32>
    %c0_141 = arith.constant 0 : index
    %c5_142 = arith.constant 5 : index
    %c0_143 = arith.constant 0 : index
    %c0_144 = arith.constant 0 : index
    %186 = vector.load %arg17[%c0_141, %c5_142, %c0_143, %c0_144] : memref<1x8x8x32xf32, #tpu.memory_space<vmem>>, vector<1x1x8x32xf32>
    %187 = vector.shape_cast %186 : vector<1x1x8x32xf32> to vector<8x32xf32>
    %188 = vector.shape_cast %185 : vector<8x32xf32> to vector<1x1x8x32xf32>
    tpu.vector_store %arg17[%c0_141, %c5_142, %c0_143, %c0_144], %188 {strides = array<i32>} : memref<1x8x8x32xf32, #tpu.memory_space<vmem>>, vector<1x1x8x32xf32>,
    %189 = vector.extract_strided_slice %164 {offsets = [108, 0], sizes = [8, 32], strides = [1, 1]} : vector<134x32xf32> to vector<8x32xf32>
    %c0_145 = arith.constant 0 : index
    %c6_146 = arith.constant 6 : index
    %c0_147 = arith.constant 0 : index
    %c0_148 = arith.constant 0 : index
    %190 = vector.load %arg17[%c0_145, %c6_146, %c0_147, %c0_148] : memref<1x8x8x32xf32, #tpu.memory_space<vmem>>, vector<1x1x8x32xf32>
    %191 = vector.shape_cast %190 : vector<1x1x8x32xf32> to vector<8x32xf32>
    %192 = vector.shape_cast %189 : vector<8x32xf32> to vector<1x1x8x32xf32>
    tpu.vector_store %arg17[%c0_145, %c6_146, %c0_147, %c0_148], %192 {strides = array<i32>} : memref<1x8x8x32xf32, #tpu.memory_space<vmem>>, vector<1x1x8x32xf32>,
    %193 = vector.extract_strided_slice %164 {offsets = [126, 0], sizes = [8, 32], strides = [1, 1]} : vector<134x32xf32> to vector<8x32xf32>
    %c0_149 = arith.constant 0 : index
    %c7_150 = arith.constant 7 : index
    %c0_151 = arith.constant 0 : index
    %c0_152 = arith.constant 0 : index
    %194 = vector.load %arg17[%c0_149, %c7_150, %c0_151, %c0_152] : memref<1x8x8x32xf32, #tpu.memory_space<vmem>>, vector<1x1x8x32xf32>
    %195 = vector.shape_cast %194 : vector<1x1x8x32xf32> to vector<8x32xf32>
    %196 = vector.shape_cast %193 : vector<8x32xf32> to vector<1x1x8x32xf32>
    tpu.vector_store %arg17[%c0_149, %c7_150, %c0_151, %c0_152], %196 {strides = array<i32>} : memref<1x8x8x32xf32, #tpu.memory_space<vmem>>, vector<1x1x8x32xf32>,
    %cst_153 = arith.constant 0.000000e+00 : f32
    %197 = vector.broadcast %cst_153 : f32 to vector<100x32xf32>
    %c0_154 = arith.constant 0 : index
    %c0_155 = arith.constant 0 : index
    %198 = vector.load %arg21[%c0_154, %c0_155] : memref<100x32xf32, #tpu.memory_space<vmem>>, vector<100x32xf32>
    tpu.vector_store %arg21[%c0_154, %c0_155], %197 {strides = array<i32>} : memref<100x32xf32, #tpu.memory_space<vmem>>, vector<100x32xf32>,
    %199 = vector.extract_strided_slice %164 {offsets = [0, 0], sizes = [8, 32], strides = [1, 1]} : vector<134x32xf32> to vector<8x32xf32>
    %c11 = arith.constant 11 : index
    %c0_156 = arith.constant 0 : index
    %200 = vector.load %arg21[%c11, %c0_156] : memref<100x32xf32, #tpu.memory_space<vmem>>, vector<8x32xf32>
    tpu.vector_store %arg21[%c11, %c0_156], %199 {strides = array<i32>} : memref<100x32xf32, #tpu.memory_space<vmem>>, vector<8x32xf32>,
    %201 = vector.extract_strided_slice %164 {offsets = [18, 0], sizes = [8, 32], strides = [1, 1]} : vector<134x32xf32> to vector<8x32xf32>
    %c21 = arith.constant 21 : index
    %c0_157 = arith.constant 0 : index
    %202 = vector.load %arg21[%c21, %c0_157] : memref<100x32xf32, #tpu.memory_space<vmem>>, vector<8x32xf32>
    tpu.vector_store %arg21[%c21, %c0_157], %201 {strides = array<i32>} : memref<100x32xf32, #tpu.memory_space<vmem>>, vector<8x32xf32>,
    %203 = vector.extract_strided_slice %164 {offsets = [36, 0], sizes = [8, 32], strides = [1, 1]} : vector<134x32xf32> to vector<8x32xf32>
    %c31 = arith.constant 31 : index
    %c0_158 = arith.constant 0 : index
    %204 = vector.load %arg21[%c31, %c0_158] : memref<100x32xf32, #tpu.memory_space<vmem>>, vector<8x32xf32>
    tpu.vector_store %arg21[%c31, %c0_158], %203 {strides = array<i32>} : memref<100x32xf32, #tpu.memory_space<vmem>>, vector<8x32xf32>,
    %205 = vector.extract_strided_slice %164 {offsets = [54, 0], sizes = [8, 32], strides = [1, 1]} : vector<134x32xf32> to vector<8x32xf32>
    %c41 = arith.constant 41 : index
    %c0_159 = arith.constant 0 : index
    %206 = vector.load %arg21[%c41, %c0_159] : memref<100x32xf32, #tpu.memory_space<vmem>>, vector<8x32xf32>
    tpu.vector_store %arg21[%c41, %c0_159], %205 {strides = array<i32>} : memref<100x32xf32, #tpu.memory_space<vmem>>, vector<8x32xf32>,
    %207 = vector.extract_strided_slice %164 {offsets = [72, 0], sizes = [8, 32], strides = [1, 1]} : vector<134x32xf32> to vector<8x32xf32>
    %c51 = arith.constant 51 : index
    %c0_160 = arith.constant 0 : index
    %208 = vector.load %arg21[%c51, %c0_160] : memref<100x32xf32, #tpu.memory_space<vmem>>, vector<8x32xf32>
    tpu.vector_store %arg21[%c51, %c0_160], %207 {strides = array<i32>} : memref<100x32xf32, #tpu.memory_space<vmem>>, vector<8x32xf32>,
    %209 = vector.extract_strided_slice %164 {offsets = [90, 0], sizes = [8, 32], strides = [1, 1]} : vector<134x32xf32> to vector<8x32xf32>
    %c61 = arith.constant 61 : index
    %c0_161 = arith.constant 0 : index
    %210 = vector.load %arg21[%c61, %c0_161] : memref<100x32xf32, #tpu.memory_space<vmem>>, vector<8x32xf32>
    tpu.vector_store %arg21[%c61, %c0_161], %209 {strides = array<i32>} : memref<100x32xf32, #tpu.memory_space<vmem>>, vector<8x32xf32>,
    %211 = vector.extract_strided_slice %164 {offsets = [108, 0], sizes = [8, 32], strides = [1, 1]} : vector<134x32xf32> to vector<8x32xf32>
    %c71 = arith.constant 71 : index
    %c0_162 = arith.constant 0 : index
    %212 = vector.load %arg21[%c71, %c0_162] : memref<100x32xf32, #tpu.memory_space<vmem>>, vector<8x32xf32>
    tpu.vector_store %arg21[%c71, %c0_162], %211 {strides = array<i32>} : memref<100x32xf32, #tpu.memory_space<vmem>>, vector<8x32xf32>,
    %213 = vector.extract_strided_slice %164 {offsets = [126, 0], sizes = [8, 32], strides = [1, 1]} : vector<134x32xf32> to vector<8x32xf32>
    %c81 = arith.constant 81 : index
    %c0_163 = arith.constant 0 : index
    %214 = vector.load %arg21[%c81, %c0_163] : memref<100x32xf32, #tpu.memory_space<vmem>>, vector<8x32xf32>
    tpu.vector_store %arg21[%c81, %c0_163], %213 {strides = array<i32>} : memref<100x32xf32, #tpu.memory_space<vmem>>, vector<8x32xf32>,
    %cst_164 = arith.constant 0.000000e+00 : f32
    %215 = vector.broadcast %cst_164 : f32 to vector<78x32xf32>
    %c0_165 = arith.constant 0 : index
    %c0_166 = arith.constant 0 : index
    %216 = vector.load %arg21[%c0_165, %c0_166] : memref<100x32xf32, #tpu.memory_space<vmem>>, vector<78x32xf32>
    %c0_167 = arith.constant 0 : index
    %c0_168 = arith.constant 0 : index
    %c0_169 = arith.constant 0 : index
    %217 = vector.load %arg7[%c0_167, %c0_168, %c0_169] : memref<9x32x32xf32, #tpu.memory_space<vmem>>, vector<1x32x32xf32>
    %218 = vector.shape_cast %217 : vector<1x32x32xf32> to vector<32x32xf32>
    %cst_170 = arith.constant dense<0.000000e+00> : vector<78x32xf32>
    %219 = tpu.matmul %216, %218, %cst_170 {dimension_numbers = #tpu.dot_dimension_numbers<[1], [0], [0], [1], [0, 0, 1, 1], [], []>} : vector<78x32xf32>, vector<32x32xf32>, vector<78x32xf32> -> vector<78x32xf32>
    %220 = arith.addf %215, %219 : vector<78x32xf32>
    %c1_171 = arith.constant 1 : index
    %c0_172 = arith.constant 0 : index
    %221 = vector.load %arg21[%c1_171, %c0_172] : memref<100x32xf32, #tpu.memory_space<vmem>>, vector<78x32xf32>
    %c1_173 = arith.constant 1 : index
    %c0_174 = arith.constant 0 : index
    %c0_175 = arith.constant 0 : index
    %222 = vector.load %arg7[%c1_173, %c0_174, %c0_175] : memref<9x32x32xf32, #tpu.memory_space<vmem>>, vector<1x32x32xf32>
    %223 = vector.shape_cast %222 : vector<1x32x32xf32> to vector<32x32xf32>
    %cst_176 = arith.constant dense<0.000000e+00> : vector<78x32xf32>
    %224 = tpu.matmul %221, %223, %cst_176 {dimension_numbers = #tpu.dot_dimension_numbers<[1], [0], [0], [1], [0, 0, 1, 1], [], []>} : vector<78x32xf32>, vector<32x32xf32>, vector<78x32xf32> -> vector<78x32xf32>
    %225 = arith.addf %220, %224 : vector<78x32xf32>
    %c2_177 = arith.constant 2 : index
    %c0_178 = arith.constant 0 : index
    %226 = vector.load %arg21[%c2_177, %c0_178] : memref<100x32xf32, #tpu.memory_space<vmem>>, vector<78x32xf32>
    %c2_179 = arith.constant 2 : index
    %c0_180 = arith.constant 0 : index
    %c0_181 = arith.constant 0 : index
    %227 = vector.load %arg7[%c2_179, %c0_180, %c0_181] : memref<9x32x32xf32, #tpu.memory_space<vmem>>, vector<1x32x32xf32>
    %228 = vector.shape_cast %227 : vector<1x32x32xf32> to vector<32x32xf32>
    %cst_182 = arith.constant dense<0.000000e+00> : vector<78x32xf32>
    %229 = tpu.matmul %226, %228, %cst_182 {dimension_numbers = #tpu.dot_dimension_numbers<[1], [0], [0], [1], [0, 0, 1, 1], [], []>} : vector<78x32xf32>, vector<32x32xf32>, vector<78x32xf32> -> vector<78x32xf32>
    %230 = arith.addf %225, %229 : vector<78x32xf32>
    %c10 = arith.constant 10 : index
    %c0_183 = arith.constant 0 : index
    %231 = vector.load %arg21[%c10, %c0_183] : memref<100x32xf32, #tpu.memory_space<vmem>>, vector<78x32xf32>
    %c3_184 = arith.constant 3 : index
    %c0_185 = arith.constant 0 : index
    %c0_186 = arith.constant 0 : index
    %232 = vector.load %arg7[%c3_184, %c0_185, %c0_186] : memref<9x32x32xf32, #tpu.memory_space<vmem>>, vector<1x32x32xf32>
    %233 = vector.shape_cast %232 : vector<1x32x32xf32> to vector<32x32xf32>
    %cst_187 = arith.constant dense<0.000000e+00> : vector<78x32xf32>
    %234 = tpu.matmul %231, %233, %cst_187 {dimension_numbers = #tpu.dot_dimension_numbers<[1], [0], [0], [1], [0, 0, 1, 1], [], []>} : vector<78x32xf32>, vector<32x32xf32>, vector<78x32xf32> -> vector<78x32xf32>
    %235 = arith.addf %230, %234 : vector<78x32xf32>
    %c11_188 = arith.constant 11 : index
    %c0_189 = arith.constant 0 : index
    %236 = vector.load %arg21[%c11_188, %c0_189] : memref<100x32xf32, #tpu.memory_space<vmem>>, vector<78x32xf32>
    %c4_190 = arith.constant 4 : index
    %c0_191 = arith.constant 0 : index
    %c0_192 = arith.constant 0 : index
    %237 = vector.load %arg7[%c4_190, %c0_191, %c0_192] : memref<9x32x32xf32, #tpu.memory_space<vmem>>, vector<1x32x32xf32>
    %238 = vector.shape_cast %237 : vector<1x32x32xf32> to vector<32x32xf32>
    %cst_193 = arith.constant dense<0.000000e+00> : vector<78x32xf32>
    %239 = tpu.matmul %236, %238, %cst_193 {dimension_numbers = #tpu.dot_dimension_numbers<[1], [0], [0], [1], [0, 0, 1, 1], [], []>} : vector<78x32xf32>, vector<32x32xf32>, vector<78x32xf32> -> vector<78x32xf32>
    %240 = arith.addf %235, %239 : vector<78x32xf32>
    %c12 = arith.constant 12 : index
    %c0_194 = arith.constant 0 : index
    %241 = vector.load %arg21[%c12, %c0_194] : memref<100x32xf32, #tpu.memory_space<vmem>>, vector<78x32xf32>
    %c5_195 = arith.constant 5 : index
    %c0_196 = arith.constant 0 : index
    %c0_197 = arith.constant 0 : index
    %242 = vector.load %arg7[%c5_195, %c0_196, %c0_197] : memref<9x32x32xf32, #tpu.memory_space<vmem>>, vector<1x32x32xf32>
    %243 = vector.shape_cast %242 : vector<1x32x32xf32> to vector<32x32xf32>
    %cst_198 = arith.constant dense<0.000000e+00> : vector<78x32xf32>
    %244 = tpu.matmul %241, %243, %cst_198 {dimension_numbers = #tpu.dot_dimension_numbers<[1], [0], [0], [1], [0, 0, 1, 1], [], []>} : vector<78x32xf32>, vector<32x32xf32>, vector<78x32xf32> -> vector<78x32xf32>
    %245 = arith.addf %240, %244 : vector<78x32xf32>
    %c20_199 = arith.constant 20 : index
    %c0_200 = arith.constant 0 : index
    %246 = vector.load %arg21[%c20_199, %c0_200] : memref<100x32xf32, #tpu.memory_space<vmem>>, vector<78x32xf32>
    %c6_201 = arith.constant 6 : index
    %c0_202 = arith.constant 0 : index
    %c0_203 = arith.constant 0 : index
    %247 = vector.load %arg7[%c6_201, %c0_202, %c0_203] : memref<9x32x32xf32, #tpu.memory_space<vmem>>, vector<1x32x32xf32>
    %248 = vector.shape_cast %247 : vector<1x32x32xf32> to vector<32x32xf32>
    %cst_204 = arith.constant dense<0.000000e+00> : vector<78x32xf32>
    %249 = tpu.matmul %246, %248, %cst_204 {dimension_numbers = #tpu.dot_dimension_numbers<[1], [0], [0], [1], [0, 0, 1, 1], [], []>} : vector<78x32xf32>, vector<32x32xf32>, vector<78x32xf32> -> vector<78x32xf32>
    %250 = arith.addf %245, %249 : vector<78x32xf32>
    %c21_205 = arith.constant 21 : index
    %c0_206 = arith.constant 0 : index
    %251 = vector.load %arg21[%c21_205, %c0_206] : memref<100x32xf32, #tpu.memory_space<vmem>>, vector<78x32xf32>
    %c7_207 = arith.constant 7 : index
    %c0_208 = arith.constant 0 : index
    %c0_209 = arith.constant 0 : index
    %252 = vector.load %arg7[%c7_207, %c0_208, %c0_209] : memref<9x32x32xf32, #tpu.memory_space<vmem>>, vector<1x32x32xf32>
    %253 = vector.shape_cast %252 : vector<1x32x32xf32> to vector<32x32xf32>
    %cst_210 = arith.constant dense<0.000000e+00> : vector<78x32xf32>
    %254 = tpu.matmul %251, %253, %cst_210 {dimension_numbers = #tpu.dot_dimension_numbers<[1], [0], [0], [1], [0, 0, 1, 1], [], []>} : vector<78x32xf32>, vector<32x32xf32>, vector<78x32xf32> -> vector<78x32xf32>
    %255 = arith.addf %250, %254 : vector<78x32xf32>
    %c22 = arith.constant 22 : index
    %c0_211 = arith.constant 0 : index
    %256 = vector.load %arg21[%c22, %c0_211] : memref<100x32xf32, #tpu.memory_space<vmem>>, vector<78x32xf32>
    %c8_212 = arith.constant 8 : index
    %c0_213 = arith.constant 0 : index
    %c0_214 = arith.constant 0 : index
    %257 = vector.load %arg7[%c8_212, %c0_213, %c0_214] : memref<9x32x32xf32, #tpu.memory_space<vmem>>, vector<1x32x32xf32>
    %258 = vector.shape_cast %257 : vector<1x32x32xf32> to vector<32x32xf32>
    %cst_215 = arith.constant dense<0.000000e+00> : vector<78x32xf32>
    %259 = tpu.matmul %256, %258, %cst_215 {dimension_numbers = #tpu.dot_dimension_numbers<[1], [0], [0], [1], [0, 0, 1, 1], [], []>} : vector<78x32xf32>, vector<32x32xf32>, vector<78x32xf32> -> vector<78x32xf32>
    %260 = arith.addf %255, %259 : vector<78x32xf32>
    %c0_216 = arith.constant 0 : index
    %c0_217 = arith.constant 0 : index
    %261 = vector.load %arg8[%c0_216, %c0_217] : memref<1x32xf32, #tpu.memory_space<vmem>>, vector<1x32xf32>
    %262 = vector.broadcast %261 : vector<1x32xf32> to vector<78x32xf32>
    %263 = arith.addf %260, %262 : vector<78x32xf32>
    %c0_218 = arith.constant 0 : index
    %264 = memref.load %arg9[%c0_218] : memref<1xf32, #tpu.memory_space<smem>>
    %cst_219 = arith.constant 0.000000e+00 : f32
    %265 = vector.broadcast %cst_219 : f32 to vector<78x32xf32>
    %266 = arith.cmpf oge, %263, %265 : vector<78x32xf32>
    %267 = vector.broadcast %264 : f32 to vector<78x32xf32>
    %268 = arith.mulf %267, %263 : vector<78x32xf32>
    %269 = arith.select %266, %263, %268 : vector<78x32xi1>, vector<78x32xf32>
    %cst_220 = arith.constant 0.000000e+00 : f32
    %270 = vector.broadcast %cst_220 : f32 to vector<100x32xf32>
    %c0_221 = arith.constant 0 : index
    %c0_222 = arith.constant 0 : index
    %271 = vector.load %arg22[%c0_221, %c0_222] : memref<100x32xf32, #tpu.memory_space<vmem>>, vector<100x32xf32>
    tpu.vector_store %arg22[%c0_221, %c0_222], %270 {strides = array<i32>} : memref<100x32xf32, #tpu.memory_space<vmem>>, vector<100x32xf32>,
    %272 = vector.extract_strided_slice %269 {offsets = [0, 0], sizes = [8, 32], strides = [1, 1]} : vector<78x32xf32> to vector<8x32xf32>
    %c11_223 = arith.constant 11 : index
    %c0_224 = arith.constant 0 : index
    %273 = vector.load %arg22[%c11_223, %c0_224] : memref<100x32xf32, #tpu.memory_space<vmem>>, vector<8x32xf32>
    tpu.vector_store %arg22[%c11_223, %c0_224], %272 {strides = array<i32>} : memref<100x32xf32, #tpu.memory_space<vmem>>, vector<8x32xf32>,
    %274 = vector.extract_strided_slice %269 {offsets = [10, 0], sizes = [8, 32], strides = [1, 1]} : vector<78x32xf32> to vector<8x32xf32>
    %c21_225 = arith.constant 21 : index
    %c0_226 = arith.constant 0 : index
    %275 = vector.load %arg22[%c21_225, %c0_226] : memref<100x32xf32, #tpu.memory_space<vmem>>, vector<8x32xf32>
    tpu.vector_store %arg22[%c21_225, %c0_226], %274 {strides = array<i32>} : memref<100x32xf32, #tpu.memory_space<vmem>>, vector<8x32xf32>,
    %276 = vector.extract_strided_slice %269 {offsets = [20, 0], sizes = [8, 32], strides = [1, 1]} : vector<78x32xf32> to vector<8x32xf32>
    %c31_227 = arith.constant 31 : index
    %c0_228 = arith.constant 0 : index
    %277 = vector.load %arg22[%c31_227, %c0_228] : memref<100x32xf32, #tpu.memory_space<vmem>>, vector<8x32xf32>
    tpu.vector_store %arg22[%c31_227, %c0_228], %276 {strides = array<i32>} : memref<100x32xf32, #tpu.memory_space<vmem>>, vector<8x32xf32>,
    %278 = vector.extract_strided_slice %269 {offsets = [30, 0], sizes = [8, 32], strides = [1, 1]} : vector<78x32xf32> to vector<8x32xf32>
    %c41_229 = arith.constant 41 : index
    %c0_230 = arith.constant 0 : index
    %279 = vector.load %arg22[%c41_229, %c0_230] : memref<100x32xf32, #tpu.memory_space<vmem>>, vector<8x32xf32>
    tpu.vector_store %arg22[%c41_229, %c0_230], %278 {strides = array<i32>} : memref<100x32xf32, #tpu.memory_space<vmem>>, vector<8x32xf32>,
    %280 = vector.extract_strided_slice %269 {offsets = [40, 0], sizes = [8, 32], strides = [1, 1]} : vector<78x32xf32> to vector<8x32xf32>
    %c51_231 = arith.constant 51 : index
    %c0_232 = arith.constant 0 : index
    %281 = vector.load %arg22[%c51_231, %c0_232] : memref<100x32xf32, #tpu.memory_space<vmem>>, vector<8x32xf32>
    tpu.vector_store %arg22[%c51_231, %c0_232], %280 {strides = array<i32>} : memref<100x32xf32, #tpu.memory_space<vmem>>, vector<8x32xf32>,
    %282 = vector.extract_strided_slice %269 {offsets = [50, 0], sizes = [8, 32], strides = [1, 1]} : vector<78x32xf32> to vector<8x32xf32>
    %c61_233 = arith.constant 61 : index
    %c0_234 = arith.constant 0 : index
    %283 = vector.load %arg22[%c61_233, %c0_234] : memref<100x32xf32, #tpu.memory_space<vmem>>, vector<8x32xf32>
    tpu.vector_store %arg22[%c61_233, %c0_234], %282 {strides = array<i32>} : memref<100x32xf32, #tpu.memory_space<vmem>>, vector<8x32xf32>,
    %284 = vector.extract_strided_slice %269 {offsets = [60, 0], sizes = [8, 32], strides = [1, 1]} : vector<78x32xf32> to vector<8x32xf32>
    %c71_235 = arith.constant 71 : index
    %c0_236 = arith.constant 0 : index
    %285 = vector.load %arg22[%c71_235, %c0_236] : memref<100x32xf32, #tpu.memory_space<vmem>>, vector<8x32xf32>
    tpu.vector_store %arg22[%c71_235, %c0_236], %284 {strides = array<i32>} : memref<100x32xf32, #tpu.memory_space<vmem>>, vector<8x32xf32>,
    %286 = vector.extract_strided_slice %269 {offsets = [70, 0], sizes = [8, 32], strides = [1, 1]} : vector<78x32xf32> to vector<8x32xf32>
    %c81_237 = arith.constant 81 : index
    %c0_238 = arith.constant 0 : index
    %287 = vector.load %arg22[%c81_237, %c0_238] : memref<100x32xf32, #tpu.memory_space<vmem>>, vector<8x32xf32>
    tpu.vector_store %arg22[%c81_237, %c0_238], %286 {strides = array<i32>} : memref<100x32xf32, #tpu.memory_space<vmem>>, vector<8x32xf32>,
    %cst_239 = arith.constant 0.000000e+00 : f32
    %288 = vector.broadcast %cst_239 : f32 to vector<34x32xf32>
    %c0_240 = arith.constant 0 : index
    %c0_241 = arith.constant 0 : index
    %289 = tpu.strided_load %arg22[%c0_240, %c0_241] {strides = array<i32: 2, 1>} : memref<100x32xf32, #tpu.memory_space<vmem>>, vector<34x32xf32>
    %c0_242 = arith.constant 0 : index
    %c0_243 = arith.constant 0 : index
    %c0_244 = arith.constant 0 : index
    %290 = vector.load %arg10[%c0_242, %c0_243, %c0_244] : memref<9x32x32xf32, #tpu.memory_space<vmem>>, vector<1x32x32xf32>
    %291 = vector.shape_cast %290 : vector<1x32x32xf32> to vector<32x32xf32>
    %cst_245 = arith.constant dense<0.000000e+00> : vector<34x32xf32>
    %292 = tpu.matmul %289, %291, %cst_245 {dimension_numbers = #tpu.dot_dimension_numbers<[1], [0], [0], [1], [0, 0, 1, 1], [], []>} : vector<34x32xf32>, vector<32x32xf32>, vector<34x32xf32> -> vector<34x32xf32>
    %293 = arith.addf %288, %292 : vector<34x32xf32>
    %c1_246 = arith.constant 1 : index
    %c0_247 = arith.constant 0 : index
    %294 = tpu.strided_load %arg22[%c1_246, %c0_247] {strides = array<i32: 2, 1>} : memref<100x32xf32, #tpu.memory_space<vmem>>, vector<34x32xf32>
    %c1_248 = arith.constant 1 : index
    %c0_249 = arith.constant 0 : index
    %c0_250 = arith.constant 0 : index
    %295 = vector.load %arg10[%c1_248, %c0_249, %c0_250] : memref<9x32x32xf32, #tpu.memory_space<vmem>>, vector<1x32x32xf32>
    %296 = vector.shape_cast %295 : vector<1x32x32xf32> to vector<32x32xf32>
    %cst_251 = arith.constant dense<0.000000e+00> : vector<34x32xf32>
    %297 = tpu.matmul %294, %296, %cst_251 {dimension_numbers = #tpu.dot_dimension_numbers<[1], [0], [0], [1], [0, 0, 1, 1], [], []>} : vector<34x32xf32>, vector<32x32xf32>, vector<34x32xf32> -> vector<34x32xf32>
    %298 = arith.addf %293, %297 : vector<34x32xf32>
    %c2_252 = arith.constant 2 : index
    %c0_253 = arith.constant 0 : index
    %299 = tpu.strided_load %arg22[%c2_252, %c0_253] {strides = array<i32: 2, 1>} : memref<100x32xf32, #tpu.memory_space<vmem>>, vector<34x32xf32>
    %c2_254 = arith.constant 2 : index
    %c0_255 = arith.constant 0 : index
    %c0_256 = arith.constant 0 : index
    %300 = vector.load %arg10[%c2_254, %c0_255, %c0_256] : memref<9x32x32xf32, #tpu.memory_space<vmem>>, vector<1x32x32xf32>
    %301 = vector.shape_cast %300 : vector<1x32x32xf32> to vector<32x32xf32>
    %cst_257 = arith.constant dense<0.000000e+00> : vector<34x32xf32>
    %302 = tpu.matmul %299, %301, %cst_257 {dimension_numbers = #tpu.dot_dimension_numbers<[1], [0], [0], [1], [0, 0, 1, 1], [], []>} : vector<34x32xf32>, vector<32x32xf32>, vector<34x32xf32> -> vector<34x32xf32>
    %303 = arith.addf %298, %302 : vector<34x32xf32>
    %c10_258 = arith.constant 10 : index
    %c0_259 = arith.constant 0 : index
    %304 = tpu.strided_load %arg22[%c10_258, %c0_259] {strides = array<i32: 2, 1>} : memref<100x32xf32, #tpu.memory_space<vmem>>, vector<34x32xf32>
    %c3_260 = arith.constant 3 : index
    %c0_261 = arith.constant 0 : index
    %c0_262 = arith.constant 0 : index
    %305 = vector.load %arg10[%c3_260, %c0_261, %c0_262] : memref<9x32x32xf32, #tpu.memory_space<vmem>>, vector<1x32x32xf32>
    %306 = vector.shape_cast %305 : vector<1x32x32xf32> to vector<32x32xf32>
    %cst_263 = arith.constant dense<0.000000e+00> : vector<34x32xf32>
    %307 = tpu.matmul %304, %306, %cst_263 {dimension_numbers = #tpu.dot_dimension_numbers<[1], [0], [0], [1], [0, 0, 1, 1], [], []>} : vector<34x32xf32>, vector<32x32xf32>, vector<34x32xf32> -> vector<34x32xf32>
    %308 = arith.addf %303, %307 : vector<34x32xf32>
    %c11_264 = arith.constant 11 : index
    %c0_265 = arith.constant 0 : index
    %309 = tpu.strided_load %arg22[%c11_264, %c0_265] {strides = array<i32: 2, 1>} : memref<100x32xf32, #tpu.memory_space<vmem>>, vector<34x32xf32>
    %c4_266 = arith.constant 4 : index
    %c0_267 = arith.constant 0 : index
    %c0_268 = arith.constant 0 : index
    %310 = vector.load %arg10[%c4_266, %c0_267, %c0_268] : memref<9x32x32xf32, #tpu.memory_space<vmem>>, vector<1x32x32xf32>
    %311 = vector.shape_cast %310 : vector<1x32x32xf32> to vector<32x32xf32>
    %cst_269 = arith.constant dense<0.000000e+00> : vector<34x32xf32>
    %312 = tpu.matmul %309, %311, %cst_269 {dimension_numbers = #tpu.dot_dimension_numbers<[1], [0], [0], [1], [0, 0, 1, 1], [], []>} : vector<34x32xf32>, vector<32x32xf32>, vector<34x32xf32> -> vector<34x32xf32>
    %313 = arith.addf %308, %312 : vector<34x32xf32>
    %c12_270 = arith.constant 12 : index
    %c0_271 = arith.constant 0 : index
    %314 = tpu.strided_load %arg22[%c12_270, %c0_271] {strides = array<i32: 2, 1>} : memref<100x32xf32, #tpu.memory_space<vmem>>, vector<34x32xf32>
    %c5_272 = arith.constant 5 : index
    %c0_273 = arith.constant 0 : index
    %c0_274 = arith.constant 0 : index
    %315 = vector.load %arg10[%c5_272, %c0_273, %c0_274] : memref<9x32x32xf32, #tpu.memory_space<vmem>>, vector<1x32x32xf32>
    %316 = vector.shape_cast %315 : vector<1x32x32xf32> to vector<32x32xf32>
    %cst_275 = arith.constant dense<0.000000e+00> : vector<34x32xf32>
    %317 = tpu.matmul %314, %316, %cst_275 {dimension_numbers = #tpu.dot_dimension_numbers<[1], [0], [0], [1], [0, 0, 1, 1], [], []>} : vector<34x32xf32>, vector<32x32xf32>, vector<34x32xf32> -> vector<34x32xf32>
    %318 = arith.addf %313, %317 : vector<34x32xf32>
    %c20_276 = arith.constant 20 : index
    %c0_277 = arith.constant 0 : index
    %319 = tpu.strided_load %arg22[%c20_276, %c0_277] {strides = array<i32: 2, 1>} : memref<100x32xf32, #tpu.memory_space<vmem>>, vector<34x32xf32>
    %c6_278 = arith.constant 6 : index
    %c0_279 = arith.constant 0 : index
    %c0_280 = arith.constant 0 : index
    %320 = vector.load %arg10[%c6_278, %c0_279, %c0_280] : memref<9x32x32xf32, #tpu.memory_space<vmem>>, vector<1x32x32xf32>
    %321 = vector.shape_cast %320 : vector<1x32x32xf32> to vector<32x32xf32>
    %cst_281 = arith.constant dense<0.000000e+00> : vector<34x32xf32>
    %322 = tpu.matmul %319, %321, %cst_281 {dimension_numbers = #tpu.dot_dimension_numbers<[1], [0], [0], [1], [0, 0, 1, 1], [], []>} : vector<34x32xf32>, vector<32x32xf32>, vector<34x32xf32> -> vector<34x32xf32>
    %323 = arith.addf %318, %322 : vector<34x32xf32>
    %c21_282 = arith.constant 21 : index
    %c0_283 = arith.constant 0 : index
    %324 = tpu.strided_load %arg22[%c21_282, %c0_283] {strides = array<i32: 2, 1>} : memref<100x32xf32, #tpu.memory_space<vmem>>, vector<34x32xf32>
    %c7_284 = arith.constant 7 : index
    %c0_285 = arith.constant 0 : index
    %c0_286 = arith.constant 0 : index
    %325 = vector.load %arg10[%c7_284, %c0_285, %c0_286] : memref<9x32x32xf32, #tpu.memory_space<vmem>>, vector<1x32x32xf32>
    %326 = vector.shape_cast %325 : vector<1x32x32xf32> to vector<32x32xf32>
    %cst_287 = arith.constant dense<0.000000e+00> : vector<34x32xf32>
    %327 = tpu.matmul %324, %326, %cst_287 {dimension_numbers = #tpu.dot_dimension_numbers<[1], [0], [0], [1], [0, 0, 1, 1], [], []>} : vector<34x32xf32>, vector<32x32xf32>, vector<34x32xf32> -> vector<34x32xf32>
    %328 = arith.addf %323, %327 : vector<34x32xf32>
    %c22_288 = arith.constant 22 : index
    %c0_289 = arith.constant 0 : index
    %329 = tpu.strided_load %arg22[%c22_288, %c0_289] {strides = array<i32: 2, 1>} : memref<100x32xf32, #tpu.memory_space<vmem>>, vector<34x32xf32>
    %c8_290 = arith.constant 8 : index
    %c0_291 = arith.constant 0 : index
    %c0_292 = arith.constant 0 : index
    %330 = vector.load %arg10[%c8_290, %c0_291, %c0_292] : memref<9x32x32xf32, #tpu.memory_space<vmem>>, vector<1x32x32xf32>
    %331 = vector.shape_cast %330 : vector<1x32x32xf32> to vector<32x32xf32>
    %cst_293 = arith.constant dense<0.000000e+00> : vector<34x32xf32>
    %332 = tpu.matmul %329, %331, %cst_293 {dimension_numbers = #tpu.dot_dimension_numbers<[1], [0], [0], [1], [0, 0, 1, 1], [], []>} : vector<34x32xf32>, vector<32x32xf32>, vector<34x32xf32> -> vector<34x32xf32>
    %333 = arith.addf %328, %332 : vector<34x32xf32>
    %c0_294 = arith.constant 0 : index
    %c0_295 = arith.constant 0 : index
    %334 = vector.load %arg11[%c0_294, %c0_295] : memref<1x32xf32, #tpu.memory_space<vmem>>, vector<1x32xf32>
    %335 = vector.broadcast %334 : vector<1x32xf32> to vector<34x32xf32>
    %336 = arith.addf %333, %335 : vector<34x32xf32>
    %337 = vector.extract_strided_slice %336 {offsets = [0, 0], sizes = [4, 32], strides = [1, 1]} : vector<34x32xf32> to vector<4x32xf32>
    %c0_296 = arith.constant 0 : index
    %c0_297 = arith.constant 0 : index
    %c0_298 = arith.constant 0 : index
    %c0_299 = arith.constant 0 : index
    %338 = vector.load %arg18[%c0_296, %c0_297, %c0_298, %c0_299] : memref<1x4x4x32xf32, #tpu.memory_space<vmem>>, vector<1x1x4x32xf32>
    %339 = vector.shape_cast %338 : vector<1x1x4x32xf32> to vector<4x32xf32>
    %340 = vector.shape_cast %337 : vector<4x32xf32> to vector<1x1x4x32xf32>
    tpu.vector_store %arg18[%c0_296, %c0_297, %c0_298, %c0_299], %340 {strides = array<i32>} : memref<1x4x4x32xf32, #tpu.memory_space<vmem>>, vector<1x1x4x32xf32>,
    %341 = vector.extract_strided_slice %336 {offsets = [10, 0], sizes = [4, 32], strides = [1, 1]} : vector<34x32xf32> to vector<4x32xf32>
    %c0_300 = arith.constant 0 : index
    %c1_301 = arith.constant 1 : index
    %c0_302 = arith.constant 0 : index
    %c0_303 = arith.constant 0 : index
    %342 = vector.load %arg18[%c0_300, %c1_301, %c0_302, %c0_303] : memref<1x4x4x32xf32, #tpu.memory_space<vmem>>, vector<1x1x4x32xf32>
    %343 = vector.shape_cast %342 : vector<1x1x4x32xf32> to vector<4x32xf32>
    %344 = vector.shape_cast %341 : vector<4x32xf32> to vector<1x1x4x32xf32>
    tpu.vector_store %arg18[%c0_300, %c1_301, %c0_302, %c0_303], %344 {strides = array<i32>} : memref<1x4x4x32xf32, #tpu.memory_space<vmem>>, vector<1x1x4x32xf32>,
    %345 = vector.extract_strided_slice %336 {offsets = [20, 0], sizes = [4, 32], strides = [1, 1]} : vector<34x32xf32> to vector<4x32xf32>
    %c0_304 = arith.constant 0 : index
    %c2_305 = arith.constant 2 : index
    %c0_306 = arith.constant 0 : index
    %c0_307 = arith.constant 0 : index
    %346 = vector.load %arg18[%c0_304, %c2_305, %c0_306, %c0_307] : memref<1x4x4x32xf32, #tpu.memory_space<vmem>>, vector<1x1x4x32xf32>
    %347 = vector.shape_cast %346 : vector<1x1x4x32xf32> to vector<4x32xf32>
    %348 = vector.shape_cast %345 : vector<4x32xf32> to vector<1x1x4x32xf32>
    tpu.vector_store %arg18[%c0_304, %c2_305, %c0_306, %c0_307], %348 {strides = array<i32>} : memref<1x4x4x32xf32, #tpu.memory_space<vmem>>, vector<1x1x4x32xf32>,
    %349 = vector.extract_strided_slice %336 {offsets = [30, 0], sizes = [4, 32], strides = [1, 1]} : vector<34x32xf32> to vector<4x32xf32>
    %c0_308 = arith.constant 0 : index
    %c3_309 = arith.constant 3 : index
    %c0_310 = arith.constant 0 : index
    %c0_311 = arith.constant 0 : index
    %350 = vector.load %arg18[%c0_308, %c3_309, %c0_310, %c0_311] : memref<1x4x4x32xf32, #tpu.memory_space<vmem>>, vector<1x1x4x32xf32>
    %351 = vector.shape_cast %350 : vector<1x1x4x32xf32> to vector<4x32xf32>
    %352 = vector.shape_cast %349 : vector<4x32xf32> to vector<1x1x4x32xf32>
    tpu.vector_store %arg18[%c0_308, %c3_309, %c0_310, %c0_311], %352 {strides = array<i32>} : memref<1x4x4x32xf32, #tpu.memory_space<vmem>>, vector<1x1x4x32xf32>,
    %cst_312 = arith.constant 0.000000e+00 : f32
    %353 = vector.broadcast %cst_312 : f32 to vector<36x32xf32>
    %c0_313 = arith.constant 0 : index
    %c0_314 = arith.constant 0 : index
    %354 = vector.load %arg23[%c0_313, %c0_314] : memref<36x32xf32, #tpu.memory_space<vmem>>, vector<36x32xf32>
    tpu.vector_store %arg23[%c0_313, %c0_314], %353 {strides = array<i32>} : memref<36x32xf32, #tpu.memory_space<vmem>>, vector<36x32xf32>,
    %355 = vector.extract_strided_slice %336 {offsets = [0, 0], sizes = [4, 32], strides = [1, 1]} : vector<34x32xf32> to vector<4x32xf32>
    %c7_315 = arith.constant 7 : index
    %c0_316 = arith.constant 0 : index
    %356 = vector.load %arg23[%c7_315, %c0_316] : memref<36x32xf32, #tpu.memory_space<vmem>>, vector<4x32xf32>
    tpu.vector_store %arg23[%c7_315, %c0_316], %355 {strides = array<i32>} : memref<36x32xf32, #tpu.memory_space<vmem>>, vector<4x32xf32>,
    %357 = vector.extract_strided_slice %336 {offsets = [10, 0], sizes = [4, 32], strides = [1, 1]} : vector<34x32xf32> to vector<4x32xf32>
    %c13 = arith.constant 13 : index
    %c0_317 = arith.constant 0 : index
    %358 = vector.load %arg23[%c13, %c0_317] : memref<36x32xf32, #tpu.memory_space<vmem>>, vector<4x32xf32>
    tpu.vector_store %arg23[%c13, %c0_317], %357 {strides = array<i32>} : memref<36x32xf32, #tpu.memory_space<vmem>>, vector<4x32xf32>,
    %359 = vector.extract_strided_slice %336 {offsets = [20, 0], sizes = [4, 32], strides = [1, 1]} : vector<34x32xf32> to vector<4x32xf32>
    %c19_318 = arith.constant 19 : index
    %c0_319 = arith.constant 0 : index
    %360 = vector.load %arg23[%c19_318, %c0_319] : memref<36x32xf32, #tpu.memory_space<vmem>>, vector<4x32xf32>
    tpu.vector_store %arg23[%c19_318, %c0_319], %359 {strides = array<i32>} : memref<36x32xf32, #tpu.memory_space<vmem>>, vector<4x32xf32>,
    %361 = vector.extract_strided_slice %336 {offsets = [30, 0], sizes = [4, 32], strides = [1, 1]} : vector<34x32xf32> to vector<4x32xf32>
    %c25 = arith.constant 25 : index
    %c0_320 = arith.constant 0 : index
    %362 = vector.load %arg23[%c25, %c0_320] : memref<36x32xf32, #tpu.memory_space<vmem>>, vector<4x32xf32>
    tpu.vector_store %arg23[%c25, %c0_320], %361 {strides = array<i32>} : memref<36x32xf32, #tpu.memory_space<vmem>>, vector<4x32xf32>,
    %cst_321 = arith.constant 0.000000e+00 : f32
    %363 = vector.broadcast %cst_321 : f32 to vector<22x32xf32>
    %c0_322 = arith.constant 0 : index
    %c0_323 = arith.constant 0 : index
    %364 = vector.load %arg23[%c0_322, %c0_323] : memref<36x32xf32, #tpu.memory_space<vmem>>, vector<22x32xf32>
    %c0_324 = arith.constant 0 : index
    %c0_325 = arith.constant 0 : index
    %c0_326 = arith.constant 0 : index
    %365 = vector.load %arg12[%c0_324, %c0_325, %c0_326] : memref<9x32x32xf32, #tpu.memory_space<vmem>>, vector<1x32x32xf32>
    %366 = vector.shape_cast %365 : vector<1x32x32xf32> to vector<32x32xf32>
    %cst_327 = arith.constant dense<0.000000e+00> : vector<22x32xf32>
    %367 = tpu.matmul %364, %366, %cst_327 {dimension_numbers = #tpu.dot_dimension_numbers<[1], [0], [0], [1], [0, 0, 1, 1], [], []>} : vector<22x32xf32>, vector<32x32xf32>, vector<22x32xf32> -> vector<22x32xf32>
    %368 = arith.addf %363, %367 : vector<22x32xf32>
    %c1_328 = arith.constant 1 : index
    %c0_329 = arith.constant 0 : index
    %369 = vector.load %arg23[%c1_328, %c0_329] : memref<36x32xf32, #tpu.memory_space<vmem>>, vector<22x32xf32>
    %c1_330 = arith.constant 1 : index
    %c0_331 = arith.constant 0 : index
    %c0_332 = arith.constant 0 : index
    %370 = vector.load %arg12[%c1_330, %c0_331, %c0_332] : memref<9x32x32xf32, #tpu.memory_space<vmem>>, vector<1x32x32xf32>
    %371 = vector.shape_cast %370 : vector<1x32x32xf32> to vector<32x32xf32>
    %cst_333 = arith.constant dense<0.000000e+00> : vector<22x32xf32>
    %372 = tpu.matmul %369, %371, %cst_333 {dimension_numbers = #tpu.dot_dimension_numbers<[1], [0], [0], [1], [0, 0, 1, 1], [], []>} : vector<22x32xf32>, vector<32x32xf32>, vector<22x32xf32> -> vector<22x32xf32>
    %373 = arith.addf %368, %372 : vector<22x32xf32>
    %c2_334 = arith.constant 2 : index
    %c0_335 = arith.constant 0 : index
    %374 = vector.load %arg23[%c2_334, %c0_335] : memref<36x32xf32, #tpu.memory_space<vmem>>, vector<22x32xf32>
    %c2_336 = arith.constant 2 : index
    %c0_337 = arith.constant 0 : index
    %c0_338 = arith.constant 0 : index
    %375 = vector.load %arg12[%c2_336, %c0_337, %c0_338] : memref<9x32x32xf32, #tpu.memory_space<vmem>>, vector<1x32x32xf32>
    %376 = vector.shape_cast %375 : vector<1x32x32xf32> to vector<32x32xf32>
    %cst_339 = arith.constant dense<0.000000e+00> : vector<22x32xf32>
    %377 = tpu.matmul %374, %376, %cst_339 {dimension_numbers = #tpu.dot_dimension_numbers<[1], [0], [0], [1], [0, 0, 1, 1], [], []>} : vector<22x32xf32>, vector<32x32xf32>, vector<22x32xf32> -> vector<22x32xf32>
    %378 = arith.addf %373, %377 : vector<22x32xf32>
    %c6_340 = arith.constant 6 : index
    %c0_341 = arith.constant 0 : index
    %379 = vector.load %arg23[%c6_340, %c0_341] : memref<36x32xf32, #tpu.memory_space<vmem>>, vector<22x32xf32>
    %c3_342 = arith.constant 3 : index
    %c0_343 = arith.constant 0 : index
    %c0_344 = arith.constant 0 : index
    %380 = vector.load %arg12[%c3_342, %c0_343, %c0_344] : memref<9x32x32xf32, #tpu.memory_space<vmem>>, vector<1x32x32xf32>
    %381 = vector.shape_cast %380 : vector<1x32x32xf32> to vector<32x32xf32>
    %cst_345 = arith.constant dense<0.000000e+00> : vector<22x32xf32>
    %382 = tpu.matmul %379, %381, %cst_345 {dimension_numbers = #tpu.dot_dimension_numbers<[1], [0], [0], [1], [0, 0, 1, 1], [], []>} : vector<22x32xf32>, vector<32x32xf32>, vector<22x32xf32> -> vector<22x32xf32>
    %383 = arith.addf %378, %382 : vector<22x32xf32>
    %c7_346 = arith.constant 7 : index
    %c0_347 = arith.constant 0 : index
    %384 = vector.load %arg23[%c7_346, %c0_347] : memref<36x32xf32, #tpu.memory_space<vmem>>, vector<22x32xf32>
    %c4_348 = arith.constant 4 : index
    %c0_349 = arith.constant 0 : index
    %c0_350 = arith.constant 0 : index
    %385 = vector.load %arg12[%c4_348, %c0_349, %c0_350] : memref<9x32x32xf32, #tpu.memory_space<vmem>>, vector<1x32x32xf32>
    %386 = vector.shape_cast %385 : vector<1x32x32xf32> to vector<32x32xf32>
    %cst_351 = arith.constant dense<0.000000e+00> : vector<22x32xf32>
    %387 = tpu.matmul %384, %386, %cst_351 {dimension_numbers = #tpu.dot_dimension_numbers<[1], [0], [0], [1], [0, 0, 1, 1], [], []>} : vector<22x32xf32>, vector<32x32xf32>, vector<22x32xf32> -> vector<22x32xf32>
    %388 = arith.addf %383, %387 : vector<22x32xf32>
    %c8_352 = arith.constant 8 : index
    %c0_353 = arith.constant 0 : index
    %389 = vector.load %arg23[%c8_352, %c0_353] : memref<36x32xf32, #tpu.memory_space<vmem>>, vector<22x32xf32>
    %c5_354 = arith.constant 5 : index
    %c0_355 = arith.constant 0 : index
    %c0_356 = arith.constant 0 : index
    %390 = vector.load %arg12[%c5_354, %c0_355, %c0_356] : memref<9x32x32xf32, #tpu.memory_space<vmem>>, vector<1x32x32xf32>
    %391 = vector.shape_cast %390 : vector<1x32x32xf32> to vector<32x32xf32>
    %cst_357 = arith.constant dense<0.000000e+00> : vector<22x32xf32>
    %392 = tpu.matmul %389, %391, %cst_357 {dimension_numbers = #tpu.dot_dimension_numbers<[1], [0], [0], [1], [0, 0, 1, 1], [], []>} : vector<22x32xf32>, vector<32x32xf32>, vector<22x32xf32> -> vector<22x32xf32>
    %393 = arith.addf %388, %392 : vector<22x32xf32>
    %c12_358 = arith.constant 12 : index
    %c0_359 = arith.constant 0 : index
    %394 = vector.load %arg23[%c12_358, %c0_359] : memref<36x32xf32, #tpu.memory_space<vmem>>, vector<22x32xf32>
    %c6_360 = arith.constant 6 : index
    %c0_361 = arith.constant 0 : index
    %c0_362 = arith.constant 0 : index
    %395 = vector.load %arg12[%c6_360, %c0_361, %c0_362] : memref<9x32x32xf32, #tpu.memory_space<vmem>>, vector<1x32x32xf32>
    %396 = vector.shape_cast %395 : vector<1x32x32xf32> to vector<32x32xf32>
    %cst_363 = arith.constant dense<0.000000e+00> : vector<22x32xf32>
    %397 = tpu.matmul %394, %396, %cst_363 {dimension_numbers = #tpu.dot_dimension_numbers<[1], [0], [0], [1], [0, 0, 1, 1], [], []>} : vector<22x32xf32>, vector<32x32xf32>, vector<22x32xf32> -> vector<22x32xf32>
    %398 = arith.addf %393, %397 : vector<22x32xf32>
    %c13_364 = arith.constant 13 : index
    %c0_365 = arith.constant 0 : index
    %399 = vector.load %arg23[%c13_364, %c0_365] : memref<36x32xf32, #tpu.memory_space<vmem>>, vector<22x32xf32>
    %c7_366 = arith.constant 7 : index
    %c0_367 = arith.constant 0 : index
    %c0_368 = arith.constant 0 : index
    %400 = vector.load %arg12[%c7_366, %c0_367, %c0_368] : memref<9x32x32xf32, #tpu.memory_space<vmem>>, vector<1x32x32xf32>
    %401 = vector.shape_cast %400 : vector<1x32x32xf32> to vector<32x32xf32>
    %cst_369 = arith.constant dense<0.000000e+00> : vector<22x32xf32>
    %402 = tpu.matmul %399, %401, %cst_369 {dimension_numbers = #tpu.dot_dimension_numbers<[1], [0], [0], [1], [0, 0, 1, 1], [], []>} : vector<22x32xf32>, vector<32x32xf32>, vector<22x32xf32> -> vector<22x32xf32>
    %403 = arith.addf %398, %402 : vector<22x32xf32>
    %c14 = arith.constant 14 : index
    %c0_370 = arith.constant 0 : index
    %404 = vector.load %arg23[%c14, %c0_370] : memref<36x32xf32, #tpu.memory_space<vmem>>, vector<22x32xf32>
    %c8_371 = arith.constant 8 : index
    %c0_372 = arith.constant 0 : index
    %c0_373 = arith.constant 0 : index
    %405 = vector.load %arg12[%c8_371, %c0_372, %c0_373] : memref<9x32x32xf32, #tpu.memory_space<vmem>>, vector<1x32x32xf32>
    %406 = vector.shape_cast %405 : vector<1x32x32xf32> to vector<32x32xf32>
    %cst_374 = arith.constant dense<0.000000e+00> : vector<22x32xf32>
    %407 = tpu.matmul %404, %406, %cst_374 {dimension_numbers = #tpu.dot_dimension_numbers<[1], [0], [0], [1], [0, 0, 1, 1], [], []>} : vector<22x32xf32>, vector<32x32xf32>, vector<22x32xf32> -> vector<22x32xf32>
    %408 = arith.addf %403, %407 : vector<22x32xf32>
    %c0_375 = arith.constant 0 : index
    %c0_376 = arith.constant 0 : index
    %409 = vector.load %arg13[%c0_375, %c0_376] : memref<1x32xf32, #tpu.memory_space<vmem>>, vector<1x32xf32>
    %410 = vector.broadcast %409 : vector<1x32xf32> to vector<22x32xf32>
    %411 = arith.addf %408, %410 : vector<22x32xf32>
    %c0_377 = arith.constant 0 : index
    %412 = memref.load %arg14[%c0_377] : memref<1xf32, #tpu.memory_space<smem>>
    %cst_378 = arith.constant 0.000000e+00 : f32
    %413 = vector.broadcast %cst_378 : f32 to vector<22x32xf32>
    %414 = arith.cmpf oge, %411, %413 : vector<22x32xf32>
    %415 = vector.broadcast %412 : f32 to vector<22x32xf32>
    %416 = arith.mulf %415, %411 : vector<22x32xf32>
    %417 = arith.select %414, %411, %416 : vector<22x32xi1>, vector<22x32xf32>
    %cst_379 = arith.constant 0.000000e+00 : f32
    %418 = vector.broadcast %cst_379 : f32 to vector<36x32xf32>
    %c0_380 = arith.constant 0 : index
    %c0_381 = arith.constant 0 : index
    %419 = vector.load %arg24[%c0_380, %c0_381] : memref<36x32xf32, #tpu.memory_space<vmem>>, vector<36x32xf32>
    tpu.vector_store %arg24[%c0_380, %c0_381], %418 {strides = array<i32>} : memref<36x32xf32, #tpu.memory_space<vmem>>, vector<36x32xf32>,
    %420 = vector.extract_strided_slice %417 {offsets = [0, 0], sizes = [4, 32], strides = [1, 1]} : vector<22x32xf32> to vector<4x32xf32>
    %c7_382 = arith.constant 7 : index
    %c0_383 = arith.constant 0 : index
    %421 = vector.load %arg24[%c7_382, %c0_383] : memref<36x32xf32, #tpu.memory_space<vmem>>, vector<4x32xf32>
    tpu.vector_store %arg24[%c7_382, %c0_383], %420 {strides = array<i32>} : memref<36x32xf32, #tpu.memory_space<vmem>>, vector<4x32xf32>,
    %422 = vector.extract_strided_slice %417 {offsets = [6, 0], sizes = [4, 32], strides = [1, 1]} : vector<22x32xf32> to vector<4x32xf32>
    %c13_384 = arith.constant 13 : index
    %c0_385 = arith.constant 0 : index
    %423 = vector.load %arg24[%c13_384, %c0_385] : memref<36x32xf32, #tpu.memory_space<vmem>>, vector<4x32xf32>
    tpu.vector_store %arg24[%c13_384, %c0_385], %422 {strides = array<i32>} : memref<36x32xf32, #tpu.memory_space<vmem>>, vector<4x32xf32>,
    %424 = vector.extract_strided_slice %417 {offsets = [12, 0], sizes = [4, 32], strides = [1, 1]} : vector<22x32xf32> to vector<4x32xf32>
    %c19_386 = arith.constant 19 : index
    %c0_387 = arith.constant 0 : index
    %425 = vector.load %arg24[%c19_386, %c0_387] : memref<36x32xf32, #tpu.memory_space<vmem>>, vector<4x32xf32>
    tpu.vector_store %arg24[%c19_386, %c0_387], %424 {strides = array<i32>} : memref<36x32xf32, #tpu.memory_space<vmem>>, vector<4x32xf32>,
    %426 = vector.extract_strided_slice %417 {offsets = [18, 0], sizes = [4, 32], strides = [1, 1]} : vector<22x32xf32> to vector<4x32xf32>
    %c25_388 = arith.constant 25 : index
    %c0_389 = arith.constant 0 : index
    %427 = vector.load %arg24[%c25_388, %c0_389] : memref<36x32xf32, #tpu.memory_space<vmem>>, vector<4x32xf32>
    tpu.vector_store %arg24[%c25_388, %c0_389], %426 {strides = array<i32>} : memref<36x32xf32, #tpu.memory_space<vmem>>, vector<4x32xf32>,
    %cst_390 = arith.constant 0.000000e+00 : f32
    %428 = vector.broadcast %cst_390 : f32 to vector<8x32xf32>
    %c0_391 = arith.constant 0 : index
    %c0_392 = arith.constant 0 : index
    %429 = tpu.strided_load %arg24[%c0_391, %c0_392] {strides = array<i32: 2, 1>} : memref<36x32xf32, #tpu.memory_space<vmem>>, vector<8x32xf32>
    %c0_393 = arith.constant 0 : index
    %c0_394 = arith.constant 0 : index
    %c0_395 = arith.constant 0 : index
    %430 = vector.load %arg15[%c0_393, %c0_394, %c0_395] : memref<9x32x32xf32, #tpu.memory_space<vmem>>, vector<1x32x32xf32>
    %431 = vector.shape_cast %430 : vector<1x32x32xf32> to vector<32x32xf32>
    %cst_396 = arith.constant dense<0.000000e+00> : vector<8x32xf32>
    %432 = tpu.matmul %429, %431, %cst_396 {dimension_numbers = #tpu.dot_dimension_numbers<[1], [0], [0], [1], [0, 0, 1, 1], [], []>} : vector<8x32xf32>, vector<32x32xf32>, vector<8x32xf32> -> vector<8x32xf32>
    %433 = arith.addf %428, %432 : vector<8x32xf32>
    %c1_397 = arith.constant 1 : index
    %c0_398 = arith.constant 0 : index
    %434 = tpu.strided_load %arg24[%c1_397, %c0_398] {strides = array<i32: 2, 1>} : memref<36x32xf32, #tpu.memory_space<vmem>>, vector<8x32xf32>
    %c1_399 = arith.constant 1 : index
    %c0_400 = arith.constant 0 : index
    %c0_401 = arith.constant 0 : index
    %435 = vector.load %arg15[%c1_399, %c0_400, %c0_401] : memref<9x32x32xf32, #tpu.memory_space<vmem>>, vector<1x32x32xf32>
    %436 = vector.shape_cast %435 : vector<1x32x32xf32> to vector<32x32xf32>
    %cst_402 = arith.constant dense<0.000000e+00> : vector<8x32xf32>
    %437 = tpu.matmul %434, %436, %cst_402 {dimension_numbers = #tpu.dot_dimension_numbers<[1], [0], [0], [1], [0, 0, 1, 1], [], []>} : vector<8x32xf32>, vector<32x32xf32>, vector<8x32xf32> -> vector<8x32xf32>
    %438 = arith.addf %433, %437 : vector<8x32xf32>
    %c2_403 = arith.constant 2 : index
    %c0_404 = arith.constant 0 : index
    %439 = tpu.strided_load %arg24[%c2_403, %c0_404] {strides = array<i32: 2, 1>} : memref<36x32xf32, #tpu.memory_space<vmem>>, vector<8x32xf32>
    %c2_405 = arith.constant 2 : index
    %c0_406 = arith.constant 0 : index
    %c0_407 = arith.constant 0 : index
    %440 = vector.load %arg15[%c2_405, %c0_406, %c0_407] : memref<9x32x32xf32, #tpu.memory_space<vmem>>, vector<1x32x32xf32>
    %441 = vector.shape_cast %440 : vector<1x32x32xf32> to vector<32x32xf32>
    %cst_408 = arith.constant dense<0.000000e+00> : vector<8x32xf32>
    %442 = tpu.matmul %439, %441, %cst_408 {dimension_numbers = #tpu.dot_dimension_numbers<[1], [0], [0], [1], [0, 0, 1, 1], [], []>} : vector<8x32xf32>, vector<32x32xf32>, vector<8x32xf32> -> vector<8x32xf32>
    %443 = arith.addf %438, %442 : vector<8x32xf32>
    %c6_409 = arith.constant 6 : index
    %c0_410 = arith.constant 0 : index
    %444 = tpu.strided_load %arg24[%c6_409, %c0_410] {strides = array<i32: 2, 1>} : memref<36x32xf32, #tpu.memory_space<vmem>>, vector<8x32xf32>
    %c3_411 = arith.constant 3 : index
    %c0_412 = arith.constant 0 : index
    %c0_413 = arith.constant 0 : index
    %445 = vector.load %arg15[%c3_411, %c0_412, %c0_413] : memref<9x32x32xf32, #tpu.memory_space<vmem>>, vector<1x32x32xf32>
    %446 = vector.shape_cast %445 : vector<1x32x32xf32> to vector<32x32xf32>
    %cst_414 = arith.constant dense<0.000000e+00> : vector<8x32xf32>
    %447 = tpu.matmul %444, %446, %cst_414 {dimension_numbers = #tpu.dot_dimension_numbers<[1], [0], [0], [1], [0, 0, 1, 1], [], []>} : vector<8x32xf32>, vector<32x32xf32>, vector<8x32xf32> -> vector<8x32xf32>
    %448 = arith.addf %443, %447 : vector<8x32xf32>
    %c7_415 = arith.constant 7 : index
    %c0_416 = arith.constant 0 : index
    %449 = tpu.strided_load %arg24[%c7_415, %c0_416] {strides = array<i32: 2, 1>} : memref<36x32xf32, #tpu.memory_space<vmem>>, vector<8x32xf32>
    %c4_417 = arith.constant 4 : index
    %c0_418 = arith.constant 0 : index
    %c0_419 = arith.constant 0 : index
    %450 = vector.load %arg15[%c4_417, %c0_418, %c0_419] : memref<9x32x32xf32, #tpu.memory_space<vmem>>, vector<1x32x32xf32>
    %451 = vector.shape_cast %450 : vector<1x32x32xf32> to vector<32x32xf32>
    %cst_420 = arith.constant dense<0.000000e+00> : vector<8x32xf32>
    %452 = tpu.matmul %449, %451, %cst_420 {dimension_numbers = #tpu.dot_dimension_numbers<[1], [0], [0], [1], [0, 0, 1, 1], [], []>} : vector<8x32xf32>, vector<32x32xf32>, vector<8x32xf32> -> vector<8x32xf32>
    %453 = arith.addf %448, %452 : vector<8x32xf32>
    %c8_421 = arith.constant 8 : index
    %c0_422 = arith.constant 0 : index
    %454 = tpu.strided_load %arg24[%c8_421, %c0_422] {strides = array<i32: 2, 1>} : memref<36x32xf32, #tpu.memory_space<vmem>>, vector<8x32xf32>
    %c5_423 = arith.constant 5 : index
    %c0_424 = arith.constant 0 : index
    %c0_425 = arith.constant 0 : index
    %455 = vector.load %arg15[%c5_423, %c0_424, %c0_425] : memref<9x32x32xf32, #tpu.memory_space<vmem>>, vector<1x32x32xf32>
    %456 = vector.shape_cast %455 : vector<1x32x32xf32> to vector<32x32xf32>
    %cst_426 = arith.constant dense<0.000000e+00> : vector<8x32xf32>
    %457 = tpu.matmul %454, %456, %cst_426 {dimension_numbers = #tpu.dot_dimension_numbers<[1], [0], [0], [1], [0, 0, 1, 1], [], []>} : vector<8x32xf32>, vector<32x32xf32>, vector<8x32xf32> -> vector<8x32xf32>
    %458 = arith.addf %453, %457 : vector<8x32xf32>
    %c12_427 = arith.constant 12 : index
    %c0_428 = arith.constant 0 : index
    %459 = tpu.strided_load %arg24[%c12_427, %c0_428] {strides = array<i32: 2, 1>} : memref<36x32xf32, #tpu.memory_space<vmem>>, vector<8x32xf32>
    %c6_429 = arith.constant 6 : index
    %c0_430 = arith.constant 0 : index
    %c0_431 = arith.constant 0 : index
    %460 = vector.load %arg15[%c6_429, %c0_430, %c0_431] : memref<9x32x32xf32, #tpu.memory_space<vmem>>, vector<1x32x32xf32>
    %461 = vector.shape_cast %460 : vector<1x32x32xf32> to vector<32x32xf32>
    %cst_432 = arith.constant dense<0.000000e+00> : vector<8x32xf32>
    %462 = tpu.matmul %459, %461, %cst_432 {dimension_numbers = #tpu.dot_dimension_numbers<[1], [0], [0], [1], [0, 0, 1, 1], [], []>} : vector<8x32xf32>, vector<32x32xf32>, vector<8x32xf32> -> vector<8x32xf32>
    %463 = arith.addf %458, %462 : vector<8x32xf32>
    %c13_433 = arith.constant 13 : index
    %c0_434 = arith.constant 0 : index
    %464 = tpu.strided_load %arg24[%c13_433, %c0_434] {strides = array<i32: 2, 1>} : memref<36x32xf32, #tpu.memory_space<vmem>>, vector<8x32xf32>
    %c7_435 = arith.constant 7 : index
    %c0_436 = arith.constant 0 : index
    %c0_437 = arith.constant 0 : index
    %465 = vector.load %arg15[%c7_435, %c0_436, %c0_437] : memref<9x32x32xf32, #tpu.memory_space<vmem>>, vector<1x32x32xf32>
    %466 = vector.shape_cast %465 : vector<1x32x32xf32> to vector<32x32xf32>
    %cst_438 = arith.constant dense<0.000000e+00> : vector<8x32xf32>
    %467 = tpu.matmul %464, %466, %cst_438 {dimension_numbers = #tpu.dot_dimension_numbers<[1], [0], [0], [1], [0, 0, 1, 1], [], []>} : vector<8x32xf32>, vector<32x32xf32>, vector<8x32xf32> -> vector<8x32xf32>
    %468 = arith.addf %463, %467 : vector<8x32xf32>
    %c14_439 = arith.constant 14 : index
    %c0_440 = arith.constant 0 : index
    %469 = tpu.strided_load %arg24[%c14_439, %c0_440] {strides = array<i32: 2, 1>} : memref<36x32xf32, #tpu.memory_space<vmem>>, vector<8x32xf32>
    %c8_441 = arith.constant 8 : index
    %c0_442 = arith.constant 0 : index
    %c0_443 = arith.constant 0 : index
    %470 = vector.load %arg15[%c8_441, %c0_442, %c0_443] : memref<9x32x32xf32, #tpu.memory_space<vmem>>, vector<1x32x32xf32>
    %471 = vector.shape_cast %470 : vector<1x32x32xf32> to vector<32x32xf32>
    %cst_444 = arith.constant dense<0.000000e+00> : vector<8x32xf32>
    %472 = tpu.matmul %469, %471, %cst_444 {dimension_numbers = #tpu.dot_dimension_numbers<[1], [0], [0], [1], [0, 0, 1, 1], [], []>} : vector<8x32xf32>, vector<32x32xf32>, vector<8x32xf32> -> vector<8x32xf32>
    %473 = arith.addf %468, %472 : vector<8x32xf32>
    %c0_445 = arith.constant 0 : index
    %c0_446 = arith.constant 0 : index
    %474 = vector.load %arg16[%c0_445, %c0_446] : memref<1x32xf32, #tpu.memory_space<vmem>>, vector<1x32xf32>
    %475 = vector.broadcast %474 : vector<1x32xf32> to vector<8x32xf32>
    %476 = arith.addf %473, %475 : vector<8x32xf32>
    %477 = vector.extract_strided_slice %476 {offsets = [0, 0], sizes = [2, 32], strides = [1, 1]} : vector<8x32xf32> to vector<2x32xf32>
    %c0_447 = arith.constant 0 : index
    %c0_448 = arith.constant 0 : index
    %c0_449 = arith.constant 0 : index
    %c0_450 = arith.constant 0 : index
    %478 = vector.load %arg19[%c0_447, %c0_448, %c0_449, %c0_450] : memref<1x2x2x32xf32, #tpu.memory_space<vmem>>, vector<1x1x2x32xf32>
    %479 = vector.shape_cast %478 : vector<1x1x2x32xf32> to vector<2x32xf32>
    %480 = vector.shape_cast %477 : vector<2x32xf32> to vector<1x1x2x32xf32>
    tpu.vector_store %arg19[%c0_447, %c0_448, %c0_449, %c0_450], %480 {strides = array<i32>} : memref<1x2x2x32xf32, #tpu.memory_space<vmem>>, vector<1x1x2x32xf32>,
    %481 = vector.extract_strided_slice %476 {offsets = [6, 0], sizes = [2, 32], strides = [1, 1]} : vector<8x32xf32> to vector<2x32xf32>
    %c0_451 = arith.constant 0 : index
    %c1_452 = arith.constant 1 : index
    %c0_453 = arith.constant 0 : index
    %c0_454 = arith.constant 0 : index
    %482 = vector.load %arg19[%c0_451, %c1_452, %c0_453, %c0_454] : memref<1x2x2x32xf32, #tpu.memory_space<vmem>>, vector<1x1x2x32xf32>
    %483 = vector.shape_cast %482 : vector<1x1x2x32xf32> to vector<2x32xf32>
    %484 = vector.shape_cast %481 : vector<2x32xf32> to vector<1x1x2x32xf32>
    tpu.vector_store %arg19[%c0_451, %c1_452, %c0_453, %c0_454], %484 {strides = array<i32>} : memref<1x2x2x32xf32, #tpu.memory_space<vmem>>, vector<1x1x2x32xf32>,
    return
  }
  func.func @transform_0(%arg0: i32) -> (i32, i32, i32) {
    %c0_i32 = arith.constant 0 : i32
    %c0_i32_0 = arith.constant 0 : i32
    %c0_i32_1 = arith.constant 0 : i32
    return %arg0, %c0_i32, %c0_i32_0 : i32, i32, i32
  }
  func.func @transform_1(%arg0: i32) -> (i32, i32, i32) {
    %c0_i32 = arith.constant 0 : i32
    %c0_i32_0 = arith.constant 0 : i32
    %c0_i32_1 = arith.constant 0 : i32
    %c0_i32_2 = arith.constant 0 : i32
    return %c0_i32, %c0_i32_0, %c0_i32_1 : i32, i32, i32
  }
  func.func @transform_2(%arg0: i32) -> (i32, i32) {
    %c0_i32 = arith.constant 0 : i32
    %c0_i32_0 = arith.constant 0 : i32
    %c0_i32_1 = arith.constant 0 : i32
    return %c0_i32, %c0_i32_0 : i32, i32
  }
  func.func @transform_3(%arg0: i32) -> i32 {
    %c0_i32 = arith.constant 0 : i32
    %c0_i32_0 = arith.constant 0 : i32
    return %c0_i32 : i32
  }
  func.func @transform_4(%arg0: i32) -> (i32, i32, i32) {
    %c0_i32 = arith.constant 0 : i32
    %c0_i32_0 = arith.constant 0 : i32
    %c0_i32_1 = arith.constant 0 : i32
    %c0_i32_2 = arith.constant 0 : i32
    return %c0_i32, %c0_i32_0, %c0_i32_1 : i32, i32, i32
  }
  func.func @transform_5(%arg0: i32) -> (i32, i32) {
    %c0_i32 = arith.constant 0 : i32
    %c0_i32_0 = arith.constant 0 : i32
    %c0_i32_1 = arith.constant 0 : i32
    return %c0_i32, %c0_i32_0 : i32, i32
  }
  func.func @transform_6(%arg0: i32) -> (i32, i32, i32) {
    %c0_i32 = arith.constant 0 : i32
    %c0_i32_0 = arith.constant 0 : i32
    %c0_i32_1 = arith.constant 0 : i32
    %c0_i32_2 = arith.constant 0 : i32
    return %c0_i32, %c0_i32_0, %c0_i32_1 : i32, i32, i32
  }
  func.func @transform_7(%arg0: i32) -> (i32, i32) {
    %c0_i32 = arith.constant 0 : i32
    %c0_i32_0 = arith.constant 0 : i32
    %c0_i32_1 = arith.constant 0 : i32
    return %c0_i32, %c0_i32_0 : i32, i32
  }
  func.func @transform_8(%arg0: i32) -> i32 {
    %c0_i32 = arith.constant 0 : i32
    %c0_i32_0 = arith.constant 0 : i32
    return %c0_i32 : i32
  }
  func.func @transform_9(%arg0: i32) -> (i32, i32, i32) {
    %c0_i32 = arith.constant 0 : i32
    %c0_i32_0 = arith.constant 0 : i32
    %c0_i32_1 = arith.constant 0 : i32
    %c0_i32_2 = arith.constant 0 : i32
    return %c0_i32, %c0_i32_0, %c0_i32_1 : i32, i32, i32
  }
  func.func @transform_10(%arg0: i32) -> (i32, i32) {
    %c0_i32 = arith.constant 0 : i32
    %c0_i32_0 = arith.constant 0 : i32
    %c0_i32_1 = arith.constant 0 : i32
    return %c0_i32, %c0_i32_0 : i32, i32
  }
  func.func @transform_11(%arg0: i32) -> (i32, i32, i32) {
    %c0_i32 = arith.constant 0 : i32
    %c0_i32_0 = arith.constant 0 : i32
    %c0_i32_1 = arith.constant 0 : i32
    %c0_i32_2 = arith.constant 0 : i32
    return %c0_i32, %c0_i32_0, %c0_i32_1 : i32, i32, i32
  }
  func.func @transform_12(%arg0: i32) -> (i32, i32) {
    %c0_i32 = arith.constant 0 : i32
    %c0_i32_0 = arith.constant 0 : i32
    %c0_i32_1 = arith.constant 0 : i32
    return %c0_i32, %c0_i32_0 : i32, i32
  }
  func.func @transform_13(%arg0: i32) -> i32 {
    %c0_i32 = arith.constant 0 : i32
    %c0_i32_0 = arith.constant 0 : i32
    return %c0_i32 : i32
  }
  func.func @transform_14(%arg0: i32) -> (i32, i32, i32) {
    %c0_i32 = arith.constant 0 : i32
    %c0_i32_0 = arith.constant 0 : i32
    %c0_i32_1 = arith.constant 0 : i32
    %c0_i32_2 = arith.constant 0 : i32
    return %c0_i32, %c0_i32_0, %c0_i32_1 : i32, i32, i32
  }
  func.func @transform_15(%arg0: i32) -> (i32, i32) {
    %c0_i32 = arith.constant 0 : i32
    %c0_i32_0 = arith.constant 0 : i32
    %c0_i32_1 = arith.constant 0 : i32
    return %c0_i32, %c0_i32_0 : i32, i32
  }
  func.func @transform_16(%arg0: i32) -> (i32, i32, i32, i32) {
    %c0_i32 = arith.constant 0 : i32
    %c0_i32_0 = arith.constant 0 : i32
    %c0_i32_1 = arith.constant 0 : i32
    %c0_i32_2 = arith.constant 0 : i32
    return %arg0, %c0_i32, %c0_i32_0, %c0_i32_1 : i32, i32, i32, i32
  }
  func.func @transform_17(%arg0: i32) -> (i32, i32, i32, i32) {
    %c0_i32 = arith.constant 0 : i32
    %c0_i32_0 = arith.constant 0 : i32
    %c0_i32_1 = arith.constant 0 : i32
    %c0_i32_2 = arith.constant 0 : i32
    return %arg0, %c0_i32, %c0_i32_0, %c0_i32_1 : i32, i32, i32, i32
  }
  func.func @transform_18(%arg0: i32) -> (i32, i32, i32, i32) {
    %c0_i32 = arith.constant 0 : i32
    %c0_i32_0 = arith.constant 0 : i32
    %c0_i32_1 = arith.constant 0 : i32
    %c0_i32_2 = arith.constant 0 : i32
    return %arg0, %c0_i32, %c0_i32_0, %c0_i32_1 : i32, i32, i32, i32
  }
}

</mosaic_0001>

<llo_original>
// kernel: tpu_custom_call.1
$region0: #{tpu_custom_call.1}
  #allocation0 [shape = 'u32[]', space=smem, size = 0x4, offset = 0x4, fixed_abs, tag = 'smem constant byte address 0x4 - core index']
  #allocation1 [shape = 'u32[144,128]{1,0:T(1,128)}', space=vmem, size = 0x12000, scoped, tag = 'internal scratch']
  #allocation2 [shape = 'f32[324,32]{1,0:T(8,128)}', space=vmem, size = 0x29000, scoped, tag = 'scratch operand']
  #allocation3 [shape = 'f32[100,32]{1,0:T(8,128)}', space=vmem, size = 0xd000, scoped, tag = 'scratch operand']
  #allocation4 [shape = 'f32[100,32]{1,0:T(8,128)}', space=vmem, size = 0xd000, scoped, tag = 'scratch operand']
  #allocation5 [shape = 'f32[36,32]{1,0:T(8,128)}', space=vmem, size = 0x5000, scoped, tag = 'scratch operand']
  #allocation6 [shape = 'f32[36,32]{1,0:T(8,128)}', space=vmem, size = 0x5000, scoped, tag = 'scratch operand']
  #allocation7 [shape = 'f32[1]{0:T(128)S(6)}', space=smem, size = 0x200, scoped, tag = 'scoped memory for tpu_custom_call.1']
  #allocation8 [shape = 'f32[1]{0:T(128)S(6)}', space=smem, size = 0x200, scoped, tag = 'scoped memory for tpu_custom_call.1']
  #allocation9 [shape = 'f32[1]{0:T(128)S(6)}', space=smem, size = 0x200, scoped, tag = 'scoped memory for tpu_custom_call.1']
  %s0 = inlined_call_operand.vmem [shape: f32[2,324,1], index: 0, kind: input, shape index: {}]
  %s1 = inlined_call_operand.vmem [shape: f32[9,1,32], index: 1, kind: input, shape index: {}]
  %s2 = inlined_call_operand.vmem [shape: f32[1,32], index: 2, kind: input, shape index: {}]
  %s3 = inlined_call_operand.<no memory space> [shape: f32[1], index: 3, kind: input, shape index: {}]
  %s4 = inlined_call_operand.vmem [shape: f32[9,32,32], index: 4, kind: input, shape index: {}]
  %s5 = inlined_call_operand.vmem [shape: f32[1,32], index: 5, kind: input, shape index: {}]
  %s6 = inlined_call_operand.vmem [shape: f32[9,32,32], index: 6, kind: input, shape index: {}]
  %s7 = inlined_call_operand.vmem [shape: f32[1,32], index: 7, kind: input, shape index: {}]
  %s8 = inlined_call_operand.<no memory space> [shape: f32[1], index: 8, kind: input, shape index: {}]
  %s9 = inlined_call_operand.hbm [shape: f32[9,32,32], index: 9, kind: input, shape index: {}]
  %s10 = inlined_call_operand.vmem [shape: f32[1,32], index: 10, kind: input, shape index: {}]
  %s11 = inlined_call_operand.hbm [shape: f32[9,32,32], index: 11, kind: input, shape index: {}]
  %s12 = inlined_call_operand.vmem [shape: f32[1,32], index: 12, kind: input, shape index: {}]
  %s13 = inlined_call_operand.<no memory space> [shape: f32[1], index: 13, kind: input, shape index: {}]
  %s14 = inlined_call_operand.hbm [shape: f32[9,32,32], index: 14, kind: input, shape index: {}]
  %s15 = inlined_call_operand.vmem [shape: f32[1,32], index: 15, kind: input, shape index: {}]
  %s16 = inlined_call_operand.hbm [shape: f32[2,8,8,32], index: 16, kind: output, shape index: {0}]
  %s17 = inlined_call_operand.hbm [shape: f32[2,4,4,32], index: 17, kind: output, shape index: {1}]
  %s18 = inlined_call_operand.hbm [shape: f32[2,2,2,32], index: 18, kind: output, shape index: {2}]
  %19 = xla_tuple %s16, %s17, %s18
  %s20 = sld [smem:[#allocation0]]
  $region125: #{tpu_custom_call.1} parent=0
    _
  %s22 = ssub.s32 1, %s20
  %s23 = scalar_select 0, %s22, %s20
  %24 = sst [smem:[#allocation7]] %s3
  %25 = sst [smem:[#allocation8]] %s8
  %26 = sst [smem:[#allocation9]] %s13
  $region1: #{tpu_custom_call.1} parent=0
    #allocation10 [shape = 'u8[147456]{0}', space=vmem, size = 0x24000, scoped, tag = 'input window, operand 9, single buffered']
    #allocation11 [shape = 's32[2]{0}', space=sflag, size = 0x8, scoped, tag = 'scoped memory for tpu_custom_call.1']
    #allocation12 [shape = 's32[2]{0}', space=sflag, size = 0x8, scoped, tag = 'scoped memory for tpu_custom_call.1']
    #allocation13 [shape = 'u8[147456]{0}', space=vmem, size = 0x24000, scoped, tag = 'input window, operand 11, single buffered']
    #allocation14 [shape = 's32[1]{0}', space=sflag, size = 0x4, scoped, tag = 'scoped memory for tpu_custom_call.1']
    #allocation15 [shape = 'u8[147456]{0}', space=vmem, size = 0x24000, scoped, tag = 'input window, operand 14, single buffered']
    #allocation16 [shape = 'u8[65536]{0}', space=vmem, size = 0x10000, scoped, tag = 'output window, operand 0']
    #allocation17 [shape = 'u8[16384]{0}', space=vmem, size = 0x4000, scoped, tag = 'output window, operand 1']
    #allocation18 [shape = 's32[2]{0}', space=sflag, size = 0x8, scoped, tag = 'scoped memory for tpu_custom_call.1']
    #allocation19 [shape = 'u8[4096]{0}', space=vmem, size = 0x1000, scoped, tag = 'output window, operand 2']
    %27 = vsyncpa [#allocation11], 0
    %28 = vsyncpa [#allocation14], 0
    %29 = vsyncpa [#allocation12], 0
    %s30 = scalar_lea.sflag [#allocation12], 1
    %31 = vsyncpa %s30, 0
    %32 = vsyncpa [#allocation18], 0
    %s33 = scalar_lea.sflag [#allocation18], 1
    %34 = vsyncpa %s33, 0
    loop: start=0, step=1, limit=4
    $region2: #{tpu_custom_call.1} parent=1 // loop_pre_header
      _
    $region3: #{tpu_custom_call.1} parent=1 // loop_header
      %s36 = sphi 0, %s40
      %p37 = scmp.ge.s32.totalorder %s36, 4
      %s46 = sphi 0, %s48
      %s49 = sphi 0, %s46
      %s50 = sphi 0, %s49
      %s66 = sphi 0, %s50
      %s70 = sphi 0, %s70
      %s72 = sphi 0, %s70
      %s73 = sphi 0, %s72
      %s87 = sphi 0, %s73
      %s91 = sphi 0, %s91
      %s93 = sphi 0, %s91
      %s94 = sphi 0, %s93
      %s108 = sphi 0, %s94
      %s112 = sphi 0, %s112
      %s114 = sphi 0, %s112
      %s115 = sphi 0, %s114
      %s129 = sphi 0, %s115
      %s133 = sphi 0, %s133
      %s135 = sphi 0, %s133
      %s136 = sphi 0, %s135
      %s150 = sphi 0, %s136
      %s154 = sphi 0, %s154
      %s156 = sphi 0, %s154
      %s157 = sphi 0, %s156
      %s171 = sphi 0, %s157
      %s175 = sphi 0, %s175
      %s177 = sphi 0, %s175
      %s178 = sphi 0, %s177
      %s192 = sphi 0, %s178
      %s196 = sphi 0, %s196
      %s198 = sphi 0, %s196
      %s199 = sphi 0, %s198
      %s213 = sphi 0, %s199
      %s217 = sphi 0, %s217
      %s219 = sphi 0, %s217
      %s220 = sphi 0, %s219
      %s234 = sphi 0, %s220
      %s238 = sphi 0, %s238
      %s240 = sphi 0, %s238
      %s241 = sphi 0, %s240
      %s255 = sphi 0, %s241
      %s259 = sphi 0, %s259
      %s261 = sphi 0, %s259
      %s262 = sphi 0, %s261
      %s276 = sphi 0, %s262
      %s280 = sphi 0, %s280
      %s282 = sphi 0, %s280
      %s283 = sphi 0, %s282
      %s297 = sphi 0, %s283
      %s301 = sphi 0, %s301
      %s303 = sphi 0, %s301
      %s304 = sphi 0, %s303
      %s318 = sphi 0, %s304
      %s322 = sphi 0, %s322
      %s324 = sphi 0, %s322
      %s325 = sphi 0, %s324
      %s339 = sphi 0, %s325
      %s343 = sphi 0, %s343
      %s345 = sphi 0, %s343
      %s346 = sphi 0, %s345
      %s360 = sphi 0, %s346
      %s364 = sphi 0, %s364
      %s366 = sphi 0, %s364
      %s367 = sphi 0, %s366
      %s381 = sphi 0, %s367
      %s387 = sphi 0, %s389
      %s390 = sphi 0, %s387
      %s391 = sphi 0, %s390
      %s407 = sphi 0, %s391
      %s413 = sphi 0, %s415
      %s416 = sphi 0, %s413
      %s417 = sphi 0, %s416
      %s433 = sphi 0, %s417
      %s439 = sphi 0, %s441
      %s442 = sphi 0, %s439
      %s443 = sphi 0, %s442
      %s459 = sphi 0, %s443
    $region4: #{tpu_custom_call.1} parent=1 // loop_header_branch
      %39 = sbr.rel (%p37) target = $region8
    $region5: #{tpu_custom_call.1} parent=1 // loop_body
      %s41 = ssub.s32 %s36, 1
      %s42 = ssub.s32 %s36, 2
      %s43 = sadd.s32 %s36, 1
      %s44 = ssub.s32 %s36, %s43
      %p45 = scmp.eq.s32.totalorder %s44, 0
      %s47 = sadd.s32 %s46, 1
      %s48 = scalar_select %p45, %s46, %s47
      %p51 = pneg %p45
      %p52 = scmp.eq.s32.totalorder %s36, 1
      %p53 = por %p51, %p52
      %p54 = scmp.ne.s32.totalorder %s46, %s49
      %p55 = scmp.eq.s32.totalorder %s36, 0
      %p56 = por %p54, %p55
      %p57 = scmp.ne.s32.totalorder %s46, %s49
      %p58 = scmp.eq.s32.totalorder %s41, 1
      %p59 = por %p57, %p58
      %p60 = scmp.ne.s32.totalorder %s49, %s50
      %p61 = scmp.eq.s32.totalorder %s41, 0
      %p62 = por %p60, %p61
      %p63 = scmp.ne.s32.totalorder %s49, %s50
      %p64 = scmp.eq.s32.totalorder %s42, 1
      %p65 = por %p63, %p64
      %p67 = scmp.ne.s32.totalorder %s50, %s66
      %p68 = scmp.eq.s32.totalorder %s42, 0
      %p69 = por %p67, %p68
      %s71 = sadd.s32 %s70, 1
      %p74 = scmp.eq.s32.totalorder %s36, 1
      %p75 = scmp.ne.s32.totalorder %s70, %s72
      %p76 = scmp.eq.s32.totalorder %s36, 0
      %p77 = por %p75, %p76
      %p78 = scmp.ne.s32.totalorder %s70, %s72
      %p79 = scmp.eq.s32.totalorder %s41, 1
      %p80 = por %p78, %p79
      %p81 = scmp.ne.s32.totalorder %s72, %s73
      %p82 = scmp.eq.s32.totalorder %s41, 0
      %p83 = por %p81, %p82
      %p84 = scmp.ne.s32.totalorder %s72, %s73
      %p85 = scmp.eq.s32.totalorder %s42, 1
      %p86 = por %p84, %p85
      %p88 = scmp.ne.s32.totalorder %s73, %s87
      %p89 = scmp.eq.s32.totalorder %s42, 0
      %p90 = por %p88, %p89
      %s92 = sadd.s32 %s91, 1
      %p95 = scmp.eq.s32.totalorder %s36, 1
      %p96 = scmp.ne.s32.totalorder %s91, %s93
      %p97 = scmp.eq.s32.totalorder %s36, 0
      %p98 = por %p96, %p97
      %p99 = scmp.ne.s32.totalorder %s91, %s93
      %p100 = scmp.eq.s32.totalorder %s41, 1
      %p101 = por %p99, %p100
      %p102 = scmp.ne.s32.totalorder %s93, %s94
      %p103 = scmp.eq.s32.totalorder %s41, 0
      %p104 = por %p102, %p103
      %p105 = scmp.ne.s32.totalorder %s93, %s94
      %p106 = scmp.eq.s32.totalorder %s42, 1
      %p107 = por %p105, %p106
      %p109 = scmp.ne.s32.totalorder %s94, %s108
      %p110 = scmp.eq.s32.totalorder %s42, 0
      %p111 = por %p109, %p110
      %s113 = sadd.s32 %s112, 1
      %p116 = scmp.eq.s32.totalorder %s36, 1
      %p117 = scmp.ne.s32.totalorder %s112, %s114
      %p118 = scmp.eq.s32.totalorder %s36, 0
      %p119 = por %p117, %p118
      %p120 = scmp.ne.s32.totalorder %s112, %s114
      %p121 = scmp.eq.s32.totalorder %s41, 1
      %p122 = por %p120, %p121
      %p123 = scmp.ne.s32.totalorder %s114, %s115
      %p124 = scmp.eq.s32.totalorder %s41, 0
      %p125 = por %p123, %p124
      %p126 = scmp.ne.s32.totalorder %s114, %s115
      %p127 = scmp.eq.s32.totalorder %s42, 1
      %p128 = por %p126, %p127
      %p130 = scmp.ne.s32.totalorder %s115, %s129
      %p131 = scmp.eq.s32.totalorder %s42, 0
      %p132 = por %p130, %p131
      %s134 = sadd.s32 %s133, 1
      %p137 = scmp.eq.s32.totalorder %s36, 1
      %p138 = scmp.ne.s32.totalorder %s133, %s135
      %p139 = scmp.eq.s32.totalorder %s36, 0
      %p140 = por %p138, %p139
      %p141 = scmp.ne.s32.totalorder %s133, %s135
      %p142 = scmp.eq.s32.totalorder %s41, 1
      %p143 = por %p141, %p142
      %p144 = scmp.ne.s32.totalorder %s135, %s136
      %p145 = scmp.eq.s32.totalorder %s41, 0
      %p146 = por %p144, %p145
      %p147 = scmp.ne.s32.totalorder %s135, %s136
      %p148 = scmp.eq.s32.totalorder %s42, 1
      %p149 = por %p147, %p148
      %p151 = scmp.ne.s32.totalorder %s136, %s150
      %p152 = scmp.eq.s32.totalorder %s42, 0
      %p153 = por %p151, %p152
      %s155 = sadd.s32 %s154, 1
      %p158 = scmp.eq.s32.totalorder %s36, 1
      %p159 = scmp.ne.s32.totalorder %s154, %s156
      %p160 = scmp.eq.s32.totalorder %s36, 0
      %p161 = por %p159, %p160
      %p162 = scmp.ne.s32.totalorder %s154, %s156
      %p163 = scmp.eq.s32.totalorder %s41, 1
      %p164 = por %p162, %p163
      %p165 = scmp.ne.s32.totalorder %s156, %s157
      %p166 = scmp.eq.s32.totalorder %s41, 0
      %p167 = por %p165, %p166
      %p168 = scmp.ne.s32.totalorder %s156, %s157
      %p169 = scmp.eq.s32.totalorder %s42, 1
      %p170 = por %p168, %p169
      %p172 = scmp.ne.s32.totalorder %s157, %s171
      %p173 = scmp.eq.s32.totalorder %s42, 0
      %p174 = por %p172, %p173
      %s176 = sadd.s32 %s175, 1
      %p179 = scmp.eq.s32.totalorder %s36, 1
      %p180 = scmp.ne.s32.totalorder %s175, %s177
      %p181 = scmp.eq.s32.totalorder %s36, 0
      %p182 = por %p180, %p181
      %p183 = scmp.ne.s32.totalorder %s175, %s177
      %p184 = scmp.eq.s32.totalorder %s41, 1
      %p185 = por %p183, %p184
      %p186 = scmp.ne.s32.totalorder %s177, %s178
      %p187 = scmp.eq.s32.totalorder %s41, 0
      %p188 = por %p186, %p187
      %p189 = scmp.ne.s32.totalorder %s177, %s178
      %p190 = scmp.eq.s32.totalorder %s42, 1
      %p191 = por %p189, %p190
      %p193 = scmp.ne.s32.totalorder %s178, %s192
      %p194 = scmp.eq.s32.totalorder %s42, 0
      %p195 = por %p193, %p194
      %s197 = sadd.s32 %s196, 1
      %p200 = scmp.eq.s32.totalorder %s36, 1
      %p201 = scmp.ne.s32.totalorder %s196, %s198
      %p202 = scmp.eq.s32.totalorder %s36, 0
      %p203 = por %p201, %p202
      %p204 = scmp.ne.s32.totalorder %s196, %s198
      %p205 = scmp.eq.s32.totalorder %s41, 1
      %p206 = por %p204, %p205
      %p207 = scmp.ne.s32.totalorder %s198, %s199
      %p208 = scmp.eq.s32.totalorder %s41, 0
      %p209 = por %p207, %p208
      %p210 = scmp.ne.s32.totalorder %s198, %s199
      %p211 = scmp.eq.s32.totalorder %s42, 1
      %p212 = por %p210, %p211
      %p214 = scmp.ne.s32.totalorder %s199, %s213
      %p215 = scmp.eq.s32.totalorder %s42, 0
      %p216 = por %p214, %p215
      %s218 = sadd.s32 %s217, 1
      %p221 = scmp.eq.s32.totalorder %s36, 1
      %p222 = scmp.ne.s32.totalorder %s217, %s219
      %p223 = scmp.eq.s32.totalorder %s36, 0
      %p224 = por %p222, %p223
      %p225 = scmp.ne.s32.totalorder %s217, %s219
      %p226 = scmp.eq.s32.totalorder %s41, 1
      %p227 = por %p225, %p226
      %p228 = scmp.ne.s32.totalorder %s219, %s220
      %p229 = scmp.eq.s32.totalorder %s41, 0
      %p230 = por %p228, %p229
      %p231 = scmp.ne.s32.totalorder %s219, %s220
      %p232 = scmp.eq.s32.totalorder %s42, 1
      %p233 = por %p231, %p232
      %p235 = scmp.ne.s32.totalorder %s220, %s234
      %p236 = scmp.eq.s32.totalorder %s42, 0
      %p237 = por %p235, %p236
      %s239 = sadd.s32 %s238, 1
      %p242 = scmp.eq.s32.totalorder %s36, 1
      %p243 = scmp.ne.s32.totalorder %s238, %s240
      %p244 = scmp.eq.s32.totalorder %s36, 0
      %p245 = por %p243, %p244
      %p246 = scmp.ne.s32.totalorder %s238, %s240
      %p247 = scmp.eq.s32.totalorder %s41, 1
      %p248 = por %p246, %p247
      %p249 = scmp.ne.s32.totalorder %s240, %s241
      %p250 = scmp.eq.s32.totalorder %s41, 0
      %p251 = por %p249, %p250
      %p252 = scmp.ne.s32.totalorder %s240, %s241
      %p253 = scmp.eq.s32.totalorder %s42, 1
      %p254 = por %p252, %p253
      %p256 = scmp.ne.s32.totalorder %s241, %s255
      %p257 = scmp.eq.s32.totalorder %s42, 0
      %p258 = por %p256, %p257
      %s260 = sadd.s32 %s259, 1
      %p263 = scmp.eq.s32.totalorder %s36, 1
      %p264 = scmp.ne.s32.totalorder %s259, %s261
      %p265 = scmp.eq.s32.totalorder %s36, 0
      %p266 = por %p264, %p265
      %p267 = scmp.ne.s32.totalorder %s259, %s261
      %p268 = scmp.eq.s32.totalorder %s41, 1
      %p269 = por %p267, %p268
      %p270 = scmp.ne.s32.totalorder %s261, %s262
      %p271 = scmp.eq.s32.totalorder %s41, 0
      %p272 = por %p270, %p271
      %p273 = scmp.ne.s32.totalorder %s261, %s262
      %p274 = scmp.eq.s32.totalorder %s42, 1
      %p275 = por %p273, %p274
      %p277 = scmp.ne.s32.totalorder %s262, %s276
      %p278 = scmp.eq.s32.totalorder %s42, 0
      %p279 = por %p277, %p278
      %s281 = sadd.s32 %s280, 1
      %p284 = scmp.eq.s32.totalorder %s36, 1
      %p285 = scmp.ne.s32.totalorder %s280, %s282
      %p286 = scmp.eq.s32.totalorder %s36, 0
      %p287 = por %p285, %p286
      %p288 = scmp.ne.s32.totalorder %s280, %s282
      %p289 = scmp.eq.s32.totalorder %s41, 1
      %p290 = por %p288, %p289
      %p291 = scmp.ne.s32.totalorder %s282, %s283
      %p292 = scmp.eq.s32.totalorder %s41, 0
      %p293 = por %p291, %p292
      %p294 = scmp.ne.s32.totalorder %s282, %s283
      %p295 = scmp.eq.s32.totalorder %s42, 1
      %p296 = por %p294, %p295
      %p298 = scmp.ne.s32.totalorder %s283, %s297
      %p299 = scmp.eq.s32.totalorder %s42, 0
      %p300 = por %p298, %p299
      %s302 = sadd.s32 %s301, 1
      %p305 = scmp.eq.s32.totalorder %s36, 1
      %p306 = scmp.ne.s32.totalorder %s301, %s303
      %p307 = scmp.eq.s32.totalorder %s36, 0
      %p308 = por %p306, %p307
      %p309 = scmp.ne.s32.totalorder %s301, %s303
      %p310 = scmp.eq.s32.totalorder %s41, 1
      %p311 = por %p309, %p310
      %p312 = scmp.ne.s32.totalorder %s303, %s304
      %p313 = scmp.eq.s32.totalorder %s41, 0
      %p314 = por %p312, %p313
      %p315 = scmp.ne.s32.totalorder %s303, %s304
      %p316 = scmp.eq.s32.totalorder %s42, 1
      %p317 = por %p315, %p316
      %p319 = scmp.ne.s32.totalorder %s304, %s318
      %p320 = scmp.eq.s32.totalorder %s42, 0
      %p321 = por %p319, %p320
      %s323 = sadd.s32 %s322, 1
      %p326 = scmp.eq.s32.totalorder %s36, 1
      %p327 = scmp.ne.s32.totalorder %s322, %s324
      %p328 = scmp.eq.s32.totalorder %s36, 0
      %p329 = por %p327, %p328
      %p330 = scmp.ne.s32.totalorder %s322, %s324
      %p331 = scmp.eq.s32.totalorder %s41, 1
      %p332 = por %p330, %p331
      %p333 = scmp.ne.s32.totalorder %s324, %s325
      %p334 = scmp.eq.s32.totalorder %s41, 0
      %p335 = por %p333, %p334
      %p336 = scmp.ne.s32.totalorder %s324, %s325
      %p337 = scmp.eq.s32.totalorder %s42, 1
      %p338 = por %p336, %p337
      %p340 = scmp.ne.s32.totalorder %s325, %s339
      %p341 = scmp.eq.s32.totalorder %s42, 0
      %p342 = por %p340, %p341
      %s344 = sadd.s32 %s343, 1
      %p347 = scmp.eq.s32.totalorder %s36, 1
      %p348 = scmp.ne.s32.totalorder %s343, %s345
      %p349 = scmp.eq.s32.totalorder %s36, 0
      %p350 = por %p348, %p349
      %p351 = scmp.ne.s32.totalorder %s343, %s345
      %p352 = scmp.eq.s32.totalorder %s41, 1
      %p353 = por %p351, %p352
      %p354 = scmp.ne.s32.totalorder %s345, %s346
      %p355 = scmp.eq.s32.totalorder %s41, 0
      %p356 = por %p354, %p355
      %p357 = scmp.ne.s32.totalorder %s345, %s346
      %p358 = scmp.eq.s32.totalorder %s42, 1
      %p359 = por %p357, %p358
      %p361 = scmp.ne.s32.totalorder %s346, %s360
      %p362 = scmp.eq.s32.totalorder %s42, 0
      %p363 = por %p361, %p362
      %s365 = sadd.s32 %s364, 1
      %p368 = scmp.eq.s32.totalorder %s36, 1
      %p369 = scmp.ne.s32.totalorder %s364, %s366
      %p370 = scmp.eq.s32.totalorder %s36, 0
      %p371 = por %p369, %p370
      %p372 = scmp.ne.s32.totalorder %s364, %s366
      %p373 = scmp.eq.s32.totalorder %s41, 1
      %p374 = por %p372, %p373
      %p375 = scmp.ne.s32.totalorder %s366, %s367
      %p376 = scmp.eq.s32.totalorder %s41, 0
      %p377 = por %p375, %p376
      %p378 = scmp.ne.s32.totalorder %s366, %s367
      %p379 = scmp.eq.s32.totalorder %s42, 1
      %p380 = por %p378, %p379
      %p382 = scmp.ne.s32.totalorder %s367, %s381
      %p383 = scmp.eq.s32.totalorder %s42, 0
      %p384 = por %p382, %p383
      %s385 = ssub.s32 %s36, %s43
      %p386 = scmp.eq.s32.totalorder %s385, 0
      %s388 = sadd.s32 %s387, 1
      %s389 = scalar_select %p386, %s387, %s388
      %p392 = pneg %p386
      %p393 = scmp.eq.s32.totalorder %s36, 1
      %p394 = por %p392, %p393
      %p395 = scmp.ne.s32.totalorder %s387, %s390
      %p396 = scmp.eq.s32.totalorder %s36, 0
      %p397 = por %p395, %p396
      %p398 = scmp.ne.s32.totalorder %s387, %s390
      %p399 = scmp.eq.s32.totalorder %s41, 1
      %p400 = por %p398, %p399
      %p401 = scmp.ne.s32.totalorder %s390, %s391
      %p402 = scmp.eq.s32.totalorder %s41, 0
      %p403 = por %p401, %p402
      %p404 = scmp.ne.s32.totalorder %s390, %s391
      %p405 = scmp.eq.s32.totalorder %s42, 1
      %p406 = por %p404, %p405
      %p408 = scmp.ne.s32.totalorder %s391, %s407
      %p409 = scmp.eq.s32.totalorder %s42, 0
      %p410 = por %p408, %p409
      %s411 = ssub.s32 %s36, %s43
      %p412 = scmp.eq.s32.totalorder %s411, 0
      %s414 = sadd.s32 %s413, 1
      %s415 = scalar_select %p412, %s413, %s414
      %p418 = pneg %p412
      %p419 = scmp.eq.s32.totalorder %s36, 1
      %p420 = por %p418, %p419
      %p421 = scmp.ne.s32.totalorder %s413, %s416
      %p422 = scmp.eq.s32.totalorder %s36, 0
      %p423 = por %p421, %p422
      %p424 = scmp.ne.s32.totalorder %s413, %s416
      %p425 = scmp.eq.s32.totalorder %s41, 1
      %p426 = por %p424, %p425
      %p427 = scmp.ne.s32.totalorder %s416, %s417
      %p428 = scmp.eq.s32.totalorder %s41, 0
      %p429 = por %p427, %p428
      %p430 = scmp.ne.s32.totalorder %s416, %s417
      %p431 = scmp.eq.s32.totalorder %s42, 1
      %p432 = por %p430, %p431
      %p434 = scmp.ne.s32.totalorder %s417, %s433
      %p435 = scmp.eq.s32.totalorder %s42, 0
      %p436 = por %p434, %p435
      %s437 = ssub.s32 %s36, %s43
      %p438 = scmp.eq.s32.totalorder %s437, 0
      %s440 = sadd.s32 %s439, 1
      %s441 = scalar_select %p438, %s439, %s440
      %p444 = pneg %p438
      %p445 = scmp.eq.s32.totalorder %s36, 1
      %p446 = por %p444, %p445
      %p447 = scmp.ne.s32.totalorder %s439, %s442
      %p448 = scmp.eq.s32.totalorder %s36, 0
      %p449 = por %p447, %p448
      %p450 = scmp.ne.s32.totalorder %s439, %s442
      %p451 = scmp.eq.s32.totalorder %s41, 1
      %p452 = por %p450, %p451
      %p453 = scmp.ne.s32.totalorder %s442, %s443
      %p454 = scmp.eq.s32.totalorder %s41, 0
      %p455 = por %p453, %p454
      %p456 = scmp.ne.s32.totalorder %s442, %s443
      %p457 = scmp.eq.s32.totalorder %s42, 1
      %p458 = por %p456, %p457
      %p460 = scmp.ne.s32.totalorder %s443, %s459
      %p461 = scmp.eq.s32.totalorder %s42, 0
      %p462 = por %p460, %p461
      %p463 = scmp.le.s32.totalorder 1, %s36
      %p464 = scmp.lt.s32.totalorder %s36, 3
      %p465 = pnand %p463, %p464
      %p466 = pneg %p465
      // Predicated region
      $region9: #{tpu_custom_call.1} parent=5 // pred_check
        _
      $region10: #{tpu_custom_call.1} parent=5 // pred_check_branch
        %468 = sbr.rel (%p465) target = $region12
      $region11: #{tpu_custom_call.1} parent=5 // pred_region
        %s469 = ssub.s32 %s36, 1
        // Predicated region
        $region13: #{tpu_custom_call.1} parent=11 // pred_check
          %p470 = pneg %p83
        $region14: #{tpu_custom_call.1} parent=11 // pred_check_branch
          %472 = sbr.rel (%p470) target = $region16
        $region15: #{tpu_custom_call.1} parent=11 // pred_region
          _
        $region16: #{tpu_custom_call.1} parent=11 // pred_fallthru
          _
        // Predicated region
        $region17: #{tpu_custom_call.1} parent=11 // pred_check
          %p473 = pneg %p104
        $region18: #{tpu_custom_call.1} parent=11 // pred_check_branch
          %475 = sbr.rel (%p473) target = $region20
        $region19: #{tpu_custom_call.1} parent=11 // pred_region
          _
        $region20: #{tpu_custom_call.1} parent=11 // pred_fallthru
          _
        // Predicated region
        $region21: #{tpu_custom_call.1} parent=11 // pred_check
          %p476 = pneg %p125
        $region22: #{tpu_custom_call.1} parent=11 // pred_check_branch
          %478 = sbr.rel (%p476) target = $region24
        $region23: #{tpu_custom_call.1} parent=11 // pred_region
          _
        $region24: #{tpu_custom_call.1} parent=11 // pred_fallthru
          _
        // Predicated region
        $region25: #{tpu_custom_call.1} parent=11 // pred_check
          %p479 = pneg %p146
        $region26: #{tpu_custom_call.1} parent=11 // pred_check_branch
          %481 = sbr.rel (%p479) target = $region28
        $region27: #{tpu_custom_call.1} parent=11 // pred_region
          _
        $region28: #{tpu_custom_call.1} parent=11 // pred_fallthru
          _
        // Predicated region
        $region29: #{tpu_custom_call.1} parent=11 // pred_check
          %p482 = pneg %p167
        $region30: #{tpu_custom_call.1} parent=11 // pred_check_branch
          %484 = sbr.rel (%p482) target = $region32
        $region31: #{tpu_custom_call.1} parent=11 // pred_region
          _
        $region32: #{tpu_custom_call.1} parent=11 // pred_fallthru
          _
        // Predicated region
        $region33: #{tpu_custom_call.1} parent=11 // pred_check
          %p485 = pneg %p188
        $region34: #{tpu_custom_call.1} parent=11 // pred_check_branch
          %487 = sbr.rel (%p485) target = $region36
        $region35: #{tpu_custom_call.1} parent=11 // pred_region
          _
        $region36: #{tpu_custom_call.1} parent=11 // pred_fallthru
          _
        // Predicated region
        $region37: #{tpu_custom_call.1} parent=11 // pred_check
          %p488 = pneg %p209
        $region38: #{tpu_custom_call.1} parent=11 // pred_check_branch
          %490 = sbr.rel (%p488) target = $region40
        $region39: #{tpu_custom_call.1} parent=11 // pred_region
          _
        $region40: #{tpu_custom_call.1} parent=11 // pred_fallthru
          _
        // Predicated region
        $region41: #{tpu_custom_call.1} parent=11 // pred_check
          %p491 = pneg %p230
        $region42: #{tpu_custom_call.1} parent=11 // pred_check_branch
          %493 = sbr.rel (%p491) target = $region44
        $region43: #{tpu_custom_call.1} parent=11 // pred_region
          _
        $region44: #{tpu_custom_call.1} parent=11 // pred_fallthru
          _
        // Predicated region
        $region45: #{tpu_custom_call.1} parent=11 // pred_check
          %p494 = pneg %p251
        $region46: #{tpu_custom_call.1} parent=11 // pred_check_branch
          %496 = sbr.rel (%p494) target = $region48
        $region47: #{tpu_custom_call.1} parent=11 // pred_region
          %s498 = ssub.s32 4608, 4608
          %499 = vsyncadd [#allocation11], %s498
          %s500 = sshll.u32 [#allocation10], 4
          %s501 = int_to_ptr.vmem [resolvable:$true] %s500
          %506 = dma.hbm_to_vmem [thread:$0]  %s9, 4608, %s501, [#allocation11], 128, 128, 8
        $region48: #{tpu_custom_call.1} parent=11 // pred_fallthru
          _
        // Predicated region
        $region49: #{tpu_custom_call.1} parent=11 // pred_check
          %p507 = pneg %p272
        $region50: #{tpu_custom_call.1} parent=11 // pred_check_branch
          %509 = sbr.rel (%p507) target = $region52
        $region51: #{tpu_custom_call.1} parent=11 // pred_region
          _
        $region52: #{tpu_custom_call.1} parent=11 // pred_fallthru
          _
        // Predicated region
        $region53: #{tpu_custom_call.1} parent=11 // pred_check
          %p510 = pneg %p293
        $region54: #{tpu_custom_call.1} parent=11 // pred_check_branch
          %512 = sbr.rel (%p510) target = $region56
        $region55: #{tpu_custom_call.1} parent=11 // pred_region
          %s514 = ssub.s32 4608, 4608
          %515 = vsyncadd [#allocation14], %s514
          %s516 = sshll.u32 [#allocation13], 4
          %s517 = int_to_ptr.vmem [resolvable:$true] %s516
          %522 = dma.hbm_to_vmem [thread:$0]  %s11, 4608, %s517, [#allocation14], 128, 128, 8
        $region56: #{tpu_custom_call.1} parent=11 // pred_fallthru
          _
        // Predicated region
        $region57: #{tpu_custom_call.1} parent=11 // pred_check
          %p523 = pneg %p314
        $region58: #{tpu_custom_call.1} parent=11 // pred_check_branch
          %525 = sbr.rel (%p523) target = $region60
        $region59: #{tpu_custom_call.1} parent=11 // pred_region
          _
        $region60: #{tpu_custom_call.1} parent=11 // pred_fallthru
          _
        // Predicated region
        $region61: #{tpu_custom_call.1} parent=11 // pred_check
          %p526 = pneg %p335
        $region62: #{tpu_custom_call.1} parent=11 // pred_check_branch
          %528 = sbr.rel (%p526) target = $region64
        $region63: #{tpu_custom_call.1} parent=11 // pred_region
          _
        $region64: #{tpu_custom_call.1} parent=11 // pred_fallthru
          _
        // Predicated region
        $region65: #{tpu_custom_call.1} parent=11 // pred_check
          %p529 = pneg %p356
        $region66: #{tpu_custom_call.1} parent=11 // pred_check_branch
          %531 = sbr.rel (%p529) target = $region68
        $region67: #{tpu_custom_call.1} parent=11 // pred_region
          %s533 = ssub.s32 4608, 4608
          %534 = vsyncadd [#allocation14], %s533
          %s535 = sshll.u32 [#allocation15], 4
          %s536 = int_to_ptr.vmem [resolvable:$true] %s535
          %541 = dma.hbm_to_vmem [thread:$0]  %s14, 4608, %s536, [#allocation14], 128, 128, 8
        $region68: #{tpu_custom_call.1} parent=11 // pred_fallthru
          _
        // Predicated region
        $region69: #{tpu_custom_call.1} parent=11 // pred_check
          %p542 = pneg %p377
        $region70: #{tpu_custom_call.1} parent=11 // pred_check_branch
          %544 = sbr.rel (%p542) target = $region72
        $region71: #{tpu_custom_call.1} parent=11 // pred_region
          _
        $region72: #{tpu_custom_call.1} parent=11 // pred_fallthru
          _
      $region12: #{tpu_custom_call.1} parent=5 // pred_fallthru
        _
      %p545 = scmp.lt.s32.totalorder %s36, 2
      // Predicated region
      $region73: #{tpu_custom_call.1} parent=5 // pred_check
        %p546 = pneg %p545
      $region74: #{tpu_custom_call.1} parent=5 // pred_check_branch
        %548 = sbr.rel (%p546) target = $region76
      $region75: #{tpu_custom_call.1} parent=5 // pred_region
        // Predicated region
        $region77: #{tpu_custom_call.1} parent=75 // pred_check
          %p549 = pneg %p56
        $region78: #{tpu_custom_call.1} parent=75 // pred_check_branch
          %551 = sbr.rel (%p549) target = $region80
        $region79: #{tpu_custom_call.1} parent=75 // pred_region
          %p552 = scmp.lt.s32.totalorder %s36, 1
          %s553 = scalar_select %p552, %s36, 1
          %s554 = smul.addr %s553, 41
          %s555 = smul.addr %s554, 8
          %s556 = scalar_lea.vmem %s0, %s555
        $region80: #{tpu_custom_call.1} parent=75 // pred_fallthru
          _
      $region76: #{tpu_custom_call.1} parent=5 // pred_fallthru
        _
      %p557 = scmp.le.s32.totalorder 1, %s36
      %p558 = scmp.lt.s32.totalorder %s36, 3
      %p559 = pnand %p557, %p558
      %p560 = pneg %p559
      // Predicated region
      $region81: #{tpu_custom_call.1} parent=5 // pred_check
        _
      $region82: #{tpu_custom_call.1} parent=5 // pred_check_branch
        %562 = sbr.rel (%p559) target = $region84
      $region83: #{tpu_custom_call.1} parent=5 // pred_region
        %s563 = ssub.s32 %s36, 1
        // Predicated region
        $region85: #{tpu_custom_call.1} parent=83 // pred_check
          %p564 = pneg %p251
        $region86: #{tpu_custom_call.1} parent=83 // pred_check_branch
          %566 = sbr.rel (%p564) target = $region88
        $region87: #{tpu_custom_call.1} parent=83 // pred_region
          %567 = dma.done [#allocation11], 4608
        $region88: #{tpu_custom_call.1} parent=83 // pred_fallthru
          _
        // Predicated region
        $region89: #{tpu_custom_call.1} parent=83 // pred_check
          %p568 = pneg %p293
        $region90: #{tpu_custom_call.1} parent=83 // pred_check_branch
          %570 = sbr.rel (%p568) target = $region92
        $region91: #{tpu_custom_call.1} parent=83 // pred_region
          %571 = dma.done [#allocation14], 4608
        $region92: #{tpu_custom_call.1} parent=83 // pred_fallthru
          _
        // Predicated region
        $region93: #{tpu_custom_call.1} parent=83 // pred_check
          %p572 = pneg %p356
        $region94: #{tpu_custom_call.1} parent=83 // pred_check_branch
          %574 = sbr.rel (%p572) target = $region96
        $region95: #{tpu_custom_call.1} parent=83 // pred_region
          %575 = dma.done [#allocation14], 4608
        $region96: #{tpu_custom_call.1} parent=83 // pred_fallthru
          _
        %p576 = scmp.lt.s32.totalorder %s41, 1
        %s577 = scalar_select %p576, %s41, 1
        %s578 = smul.addr %s577, 41
        %s579 = smul.addr %s578, 8
        %s580 = scalar_lea.vmem %s0, %s579
        %p581 = pneg %p62
        %p582 = pneg %p59
        %p583 = pneg %p83
        %p584 = pneg %p80
        %p585 = pneg %p104
        %p586 = pneg %p101
        %p587 = pneg %p125
        %p588 = pneg %p122
        %p589 = pneg %p146
        %p590 = pneg %p143
        %p591 = pneg %p167
        %p592 = pneg %p164
        %p593 = pneg %p188
        %p594 = pneg %p185
        %p595 = pneg %p209
        %p596 = pneg %p206
        %p597 = pneg %p230
        %p598 = pneg %p227
        %p599 = pneg %p251
        %p600 = pneg %p248
        %p601 = pneg %p272
        %p602 = pneg %p269
        %p603 = pneg %p293
        %p604 = pneg %p290
        %p605 = pneg %p314
        %p606 = pneg %p311
        %p607 = pneg %p335
        %p608 = pneg %p332
        %p609 = pneg %p356
        %p610 = pneg %p353
        %p611 = pneg %p377
        %p612 = pneg %p374
        %p613 = pneg %p403
        %p614 = pneg %p400
        %s615 = sand.u32 %s390, 1
        %s616 = scalar_lea.sflag [#allocation12], %s615
        %s617 = sand.u32 %s390, 1
        %s618 = smul.addr %s617, 64
        %s619 = scalar_lea.vmem [#allocation16], %s618
        %p620 = pneg %p429
        %p621 = pneg %p426
        %s622 = sand.u32 %s41, 1
        %s623 = scalar_lea.sflag [#allocation18], %s622
        %s624 = sand.u32 %s416, 1
        %s625 = smul.addr %s624, 16
        %s626 = scalar_lea.vmem [#allocation17], %s625
        %p627 = pneg %p455
        %p628 = pneg %p452
        %s629 = sand.u32 %s41, 1
        %s630 = scalar_lea.sflag [#allocation18], %s629
        %s631 = sand.u32 %s442, 1
        %s632 = smul.addr %s631, 4
        %s633 = scalar_lea.vmem [#allocation19], %s632
        %p634 = scmp.lt.s32.totalorder %s41, 1
        %s635 = scalar_select %p634, %s41, 1
        %s636 = smul.addr %s635, 41
        %s637 = smul.addr %s636, 8
        %s638 = scalar_lea.vmem %s0, %s637
        %v639 = vld [vmem:[%s638] sm:$0xff]
        %v640 = vld [vmem:[%s638 + $0x8] sm:$0xff]
        %v641 = vld [vmem:[%s638 + $0x10] sm:$0xff]
        %v642 = vld [vmem:[%s638 + $0x18] sm:$0xff]
        %v643 = vld [vmem:[%s638 + $0x20] sm:$0xff]
        %v644 = vld [vmem:[%s638 + $0x28] sm:$0xff]
        %v645 = vld [vmem:[%s638 + $0x30] sm:$0xff]
        %v646 = vld [vmem:[%s638 + $0x38] sm:$0xff]
        %v647 = vld [vmem:[%s638 + $0x40] sm:$0xff]
        %v648 = vld [vmem:[%s638 + $0x48] sm:$0xff]
        %v649 = vld [vmem:[%s638 + $0x50] sm:$0xff]
        %v650 = vld [vmem:[%s638 + $0x58] sm:$0xff]
        %v651 = vld [vmem:[%s638 + $0x60] sm:$0xff]
        %v652 = vld [vmem:[%s638 + $0x68] sm:$0xff]
        %v653 = vld [vmem:[%s638 + $0x70] sm:$0xff]
        %v654 = vld [vmem:[%s638 + $0x78] sm:$0xff]
        %v655 = vld [vmem:[%s638 + $0x80] sm:$0xff]
        %v656 = vld [vmem:[%s638 + $0x88] sm:$0xff]
        %v657 = vld [vmem:[%s638 + $0x90] sm:$0xff]
        %v658 = vld [vmem:[%s638 + $0x98] sm:$0xff]
        %v659 = vld [vmem:[%s638 + $0xa0] sm:$0xff]
        %v660 = vld [vmem:[%s638 + $0xa8] sm:$0xff]
        %v661 = vld [vmem:[%s638 + $0xb0] sm:$0xff]
        %v662 = vld [vmem:[%s638 + $0xb8] sm:$0xff]
        %v663 = vld [vmem:[%s638 + $0xc0] sm:$0xff]
        %v664 = vld [vmem:[%s638 + $0xc8] sm:$0xff]
        %v665 = vld [vmem:[%s638 + $0xd0] sm:$0xff]
        %v666 = vld [vmem:[%s638 + $0xd8] sm:$0xff]
        %v667 = vld [vmem:[%s638 + $0xe0] sm:$0xff]
        %v668 = vld [vmem:[%s638 + $0xe8] sm:$0xff]
        %v669 = vld [vmem:[%s638 + $0xf0] sm:$0xff]
        %v670 = vld [vmem:[%s638 + $0xf8] sm:$0xff]
        %v671 = vld [vmem:[%s638 + $0x100] sm:$0xff]
        %v672 = vld [vmem:[%s638 + $0x108] sm:$0xff]
        %v673 = vld [vmem:[%s638 + $0x110] sm:$0xff]
        %v674 = vld [vmem:[%s638 + $0x118] sm:$0x3f]
        %v675 = vld [vmem:[%s1] sm:$0x1]
        %677 = vset.pattern.permute.xlu0 0
        %678 = vperm.xlu0 %677, %v639
        %v679 = vpop.permute.xlu0 %678
        %682 = vset.pattern.permute.xlu0 0
        %683 = vperm.xlu0 %682, %v640
        %v684 = vpop.permute.xlu0 %683
        %687 = vset.pattern.permute.xlu0 0
        %688 = vperm.xlu0 %687, %v641
        %v689 = vpop.permute.xlu0 %688
        %692 = vset.pattern.permute.xlu0 0
        %693 = vperm.xlu0 %692, %v642
        %v694 = vpop.permute.xlu0 %693
        %697 = vset.pattern.permute.xlu0 0
        %698 = vperm.xlu0 %697, %v643
        %v699 = vpop.permute.xlu0 %698
        %702 = vset.pattern.permute.xlu0 0
        %703 = vperm.xlu0 %702, %v644
        %v704 = vpop.permute.xlu0 %703
        %707 = vset.pattern.permute.xlu0 0
        %708 = vperm.xlu0 %707, %v645
        %v709 = vpop.permute.xlu0 %708
        %712 = vset.pattern.permute.xlu0 0
        %713 = vperm.xlu0 %712, %v646
        %v714 = vpop.permute.xlu0 %713
        %717 = vset.pattern.permute.xlu0 0
        %718 = vperm.xlu0 %717, %v647
        %v719 = vpop.permute.xlu0 %718
        %722 = vset.pattern.permute.xlu0 0
        %723 = vperm.xlu0 %722, %v648
        %v724 = vpop.permute.xlu0 %723
        %727 = vset.pattern.permute.xlu0 0
        %728 = vperm.xlu0 %727, %v649
        %v729 = vpop.permute.xlu0 %728
        %732 = vset.pattern.permute.xlu0 0
        %733 = vperm.xlu0 %732, %v650
        %v734 = vpop.permute.xlu0 %733
        %737 = vset.pattern.permute.xlu0 0
        %738 = vperm.xlu0 %737, %v651
        %v739 = vpop.permute.xlu0 %738
        %742 = vset.pattern.permute.xlu0 0
        %743 = vperm.xlu0 %742, %v652
        %v744 = vpop.permute.xlu0 %743
        %747 = vset.pattern.permute.xlu0 0
        %748 = vperm.xlu0 %747, %v653
        %v749 = vpop.permute.xlu0 %748
        %752 = vset.pattern.permute.xlu0 0
        %753 = vperm.xlu0 %752, %v654
        %v754 = vpop.permute.xlu0 %753
        %757 = vset.pattern.permute.xlu0 0
        %758 = vperm.xlu0 %757, %v655
        %v759 = vpop.permute.xlu0 %758
        %762 = vset.pattern.permute.xlu0 0
        %763 = vperm.xlu0 %762, %v656
        %v764 = vpop.permute.xlu0 %763
        %767 = vset.pattern.permute.xlu0 0
        %768 = vperm.xlu0 %767, %v657
        %v769 = vpop.permute.xlu0 %768
        %772 = vset.pattern.permute.xlu0 0
        %773 = vperm.xlu0 %772, %v658
        %v774 = vpop.permute.xlu0 %773
        %777 = vset.pattern.permute.xlu0 0
        %778 = vperm.xlu0 %777, %v659
        %v779 = vpop.permute.xlu0 %778
        %782 = vset.pattern.permute.xlu0 0
        %783 = vperm.xlu0 %782, %v660
        %v784 = vpop.permute.xlu0 %783
        %787 = vset.pattern.permute.xlu0 0
        %788 = vperm.xlu0 %787, %v661
        %v789 = vpop.permute.xlu0 %788
        %792 = vset.pattern.permute.xlu0 0
        %793 = vperm.xlu0 %792, %v662
        %v794 = vpop.permute.xlu0 %793
        %797 = vset.pattern.permute.xlu0 0
        %798 = vperm.xlu0 %797, %v663
        %v799 = vpop.permute.xlu0 %798
        %802 = vset.pattern.permute.xlu0 0
        %803 = vperm.xlu0 %802, %v664
        %v804 = vpop.permute.xlu0 %803
        %807 = vset.pattern.permute.xlu0 0
        %808 = vperm.xlu0 %807, %v665
        %v809 = vpop.permute.xlu0 %808
        %812 = vset.pattern.permute.xlu0 0
        %813 = vperm.xlu0 %812, %v666
        %v814 = vpop.permute.xlu0 %813
        %817 = vset.pattern.permute.xlu0 0
        %818 = vperm.xlu0 %817, %v667
        %v819 = vpop.permute.xlu0 %818
        %822 = vset.pattern.permute.xlu0 0
        %823 = vperm.xlu0 %822, %v668
        %v824 = vpop.permute.xlu0 %823
        %827 = vset.pattern.permute.xlu0 0
        %828 = vperm.xlu0 %827, %v669
        %v829 = vpop.permute.xlu0 %828
        %832 = vset.pattern.permute.xlu0 0
        %833 = vperm.xlu0 %832, %v670
        %v834 = vpop.permute.xlu0 %833
        %837 = vset.pattern.permute.xlu0 0
        %838 = vperm.xlu0 %837, %v671
        %v839 = vpop.permute.xlu0 %838
        %842 = vset.pattern.permute.xlu0 0
        %843 = vperm.xlu0 %842, %v672
        %v844 = vpop.permute.xlu0 %843
        %847 = vset.pattern.permute.xlu0 0
        %848 = vperm.xlu0 %847, %v673
        %v849 = vpop.permute.xlu0 %848
        %852 = vset.pattern.permute.xlu0 0
        %853 = vperm.xlu0 %852, %v674
        %v854 = vpop.permute.xlu0 %853
        %v857 = vlaneseq
        %v858 = vshrl.u32 %v857, 7
        %v859 = vsub.s32 0, %v858
        %v860 = vrot.slane %v675, %v859
        %v862 = vmul.f32 %v679, %v860
        %v863 = vmul.f32 %v684, %v860
        %v864 = vmul.f32 %v689, %v860
        %v865 = vmul.f32 %v694, %v860
        %v866 = vmul.f32 %v699, %v860
        %v867 = vmul.f32 %v704, %v860
        %v868 = vmul.f32 %v709, %v860
        %v869 = vmul.f32 %v714, %v860
        %v870 = vmul.f32 %v719, %v860
        %v871 = vmul.f32 %v724, %v860
        %v872 = vmul.f32 %v729, %v860
        %v873 = vmul.f32 %v734, %v860
        %v874 = vmul.f32 %v739, %v860
        %v875 = vmul.f32 %v744, %v860
        %v876 = vmul.f32 %v749, %v860
        %v877 = vmul.f32 %v754, %v860
        %v878 = vmul.f32 %v759, %v860
        %v879 = vmul.f32 %v764, %v860
        %v880 = vmul.f32 %v769, %v860
        %v881 = vmul.f32 %v774, %v860
        %v882 = vmul.f32 %v779, %v860
        %v883 = vmul.f32 %v784, %v860
        %v884 = vmul.f32 %v789, %v860
        %v885 = vmul.f32 %v794, %v860
        %v886 = vmul.f32 %v799, %v860
        %v887 = vmul.f32 %v804, %v860
        %v888 = vmul.f32 %v809, %v860
        %v889 = vmul.f32 %v814, %v860
        %v890 = vmul.f32 %v819, %v860
        %v891 = vmul.f32 %v824, %v860
        %v892 = vmul.f32 %v829, %v860
        %v893 = vmul.f32 %v834, %v860
        %v894 = vmul.f32 %v839, %v860
        %v895 = vmul.f32 %v844, %v860
        %v896 = vmul.f32 %v849, %v860
        %v897 = vmul.f32 %v854, %v860
        %v898 = vadd.f32 %v862, 0.0
        %v899 = vadd.f32 %v863, 0.0
        %v900 = vadd.f32 %v864, 0.0
        %v901 = vadd.f32 %v865, 0.0
        %v902 = vadd.f32 %v866, 0.0
        %v903 = vadd.f32 %v867, 0.0
        %v904 = vadd.f32 %v868, 0.0
        %v905 = vadd.f32 %v869, 0.0
        %v906 = vadd.f32 %v870, 0.0
        %v907 = vadd.f32 %v871, 0.0
        %v908 = vadd.f32 %v872, 0.0
        %v909 = vadd.f32 %v873, 0.0
        %v910 = vadd.f32 %v874, 0.0
        %v911 = vadd.f32 %v875, 0.0
        %v912 = vadd.f32 %v876, 0.0
        %v913 = vadd.f32 %v877, 0.0
        %v914 = vadd.f32 %v878, 0.0
        %v915 = vadd.f32 %v879, 0.0
        %v916 = vadd.f32 %v880, 0.0
        %v917 = vadd.f32 %v881, 0.0
        %v918 = vadd.f32 %v882, 0.0
        %v919 = vadd.f32 %v883, 0.0
        %v920 = vadd.f32 %v884, 0.0
        %v921 = vadd.f32 %v885, 0.0
        %v922 = vadd.f32 %v886, 0.0
        %v923 = vadd.f32 %v887, 0.0
        %v924 = vadd.f32 %v888, 0.0
        %v925 = vadd.f32 %v889, 0.0
        %v926 = vadd.f32 %v890, 0.0
        %v927 = vadd.f32 %v891, 0.0
        %v928 = vadd.f32 %v892, 0.0
        %v929 = vadd.f32 %v893, 0.0
        %v930 = vadd.f32 %v894, 0.0
        %v931 = vadd.f32 %v895, 0.0
        %v932 = vadd.f32 %v896, 0.0
        %v933 = vadd.f32 %v897, 0.0
        %v934 = vld [vmem:[%s638 + $0x1] sm:$0xff]
        %v935 = vld [vmem:[%s638 + $0x9] sm:$0xff]
        %v936 = vld [vmem:[%s638 + $0x11] sm:$0xff]
        %v937 = vld [vmem:[%s638 + $0x19] sm:$0xff]
        %v938 = vld [vmem:[%s638 + $0x21] sm:$0xff]
        %v939 = vld [vmem:[%s638 + $0x29] sm:$0xff]
        %v940 = vld [vmem:[%s638 + $0x31] sm:$0xff]
        %v941 = vld [vmem:[%s638 + $0x39] sm:$0xff]
        %v942 = vld [vmem:[%s638 + $0x41] sm:$0xff]
        %v943 = vld [vmem:[%s638 + $0x49] sm:$0xff]
        %v944 = vld [vmem:[%s638 + $0x51] sm:$0xff]
        %v945 = vld [vmem:[%s638 + $0x59] sm:$0xff]
        %v946 = vld [vmem:[%s638 + $0x61] sm:$0xff]
        %v947 = vld [vmem:[%s638 + $0x69] sm:$0xff]
        %v948 = vld [vmem:[%s638 + $0x71] sm:$0xff]
        %v949 = vld [vmem:[%s638 + $0x79] sm:$0xff]
        %v950 = vld [vmem:[%s638 + $0x81] sm:$0xff]
        %v951 = vld [vmem:[%s638 + $0x89] sm:$0xff]
        %v952 = vld [vmem:[%s638 + $0x91] sm:$0xff]
        %v953 = vld [vmem:[%s638 + $0x99] sm:$0xff]
        %v954 = vld [vmem:[%s638 + $0xa1] sm:$0xff]
        %v955 = vld [vmem:[%s638 + $0xa9] sm:$0xff]
        %v956 = vld [vmem:[%s638 + $0xb1] sm:$0xff]
        %v957 = vld [vmem:[%s638 + $0xb9] sm:$0xff]
        %v958 = vld [vmem:[%s638 + $0xc1] sm:$0xff]
        %v959 = vld [vmem:[%s638 + $0xc9] sm:$0xff]
        %v960 = vld [vmem:[%s638 + $0xd1] sm:$0xff]
        %v961 = vld [vmem:[%s638 + $0xd9] sm:$0xff]
        %v962 = vld [vmem:[%s638 + $0xe1] sm:$0xff]
        %v963 = vld [vmem:[%s638 + $0xe9] sm:$0xff]
        %v964 = vld [vmem:[%s638 + $0xf1] sm:$0xff]
        %v965 = vld [vmem:[%s638 + $0xf9] sm:$0xff]
        %v966 = vld [vmem:[%s638 + $0x101] sm:$0xff]
        %v967 = vld [vmem:[%s638 + $0x109] sm:$0xff]
        %v968 = vld [vmem:[%s638 + $0x111] sm:$0xff]
        %v969 = vld [vmem:[%s638 + $0x119] sm:$0x3f]
        %s970 = scalar_lea.vmem %s1, 1
        %v971 = vld [vmem:[%s970] sm:$0x1]
        %973 = vset.pattern.permute.xlu0 0
        %974 = vperm.xlu0 %973, %v934
        %v975 = vpop.permute.xlu0 %974
        %978 = vset.pattern.permute.xlu0 0
        %979 = vperm.xlu0 %978, %v935
        %v980 = vpop.permute.xlu0 %979
        %983 = vset.pattern.permute.xlu0 0
        %984 = vperm.xlu0 %983, %v936
        %v985 = vpop.permute.xlu0 %984
        %988 = vset.pattern.permute.xlu0 0
        %989 = vperm.xlu0 %988, %v937
        %v990 = vpop.permute.xlu0 %989
        %993 = vset.pattern.permute.xlu0 0
        %994 = vperm.xlu0 %993, %v938
        %v995 = vpop.permute.xlu0 %994
        %998 = vset.pattern.permute.xlu0 0
        %999 = vperm.xlu0 %998, %v939
        %v1000 = vpop.permute.xlu0 %999
        %1003 = vset.pattern.permute.xlu0 0
        %1004 = vperm.xlu0 %1003, %v940
        %v1005 = vpop.permute.xlu0 %1004
        %1008 = vset.pattern.permute.xlu0 0
        %1009 = vperm.xlu0 %1008, %v941
        %v1010 = vpop.permute.xlu0 %1009
        %1013 = vset.pattern.permute.xlu0 0
        %1014 = vperm.xlu0 %1013, %v942
        %v1015 = vpop.permute.xlu0 %1014
        %1018 = vset.pattern.permute.xlu0 0
        %1019 = vperm.xlu0 %1018, %v943
        %v1020 = vpop.permute.xlu0 %1019
        %1023 = vset.pattern.permute.xlu0 0
        %1024 = vperm.xlu0 %1023, %v944
        %v1025 = vpop.permute.xlu0 %1024
        %1028 = vset.pattern.permute.xlu0 0
        %1029 = vperm.xlu0 %1028, %v945
        %v1030 = vpop.permute.xlu0 %1029
        %1033 = vset.pattern.permute.xlu0 0
        %1034 = vperm.xlu0 %1033, %v946
        %v1035 = vpop.permute.xlu0 %1034
        %1038 = vset.pattern.permute.xlu0 0
        %1039 = vperm.xlu0 %1038, %v947
        %v1040 = vpop.permute.xlu0 %1039
        %1043 = vset.pattern.permute.xlu0 0
        %1044 = vperm.xlu0 %1043, %v948
        %v1045 = vpop.permute.xlu0 %1044
        %1048 = vset.pattern.permute.xlu0 0
        %1049 = vperm.xlu0 %1048, %v949
        %v1050 = vpop.permute.xlu0 %1049
        %1053 = vset.pattern.permute.xlu0 0
        %1054 = vperm.xlu0 %1053, %v950
        %v1055 = vpop.permute.xlu0 %1054
        %1058 = vset.pattern.permute.xlu0 0
        %1059 = vperm.xlu0 %1058, %v951
        %v1060 = vpop.permute.xlu0 %1059
        %1063 = vset.pattern.permute.xlu0 0
        %1064 = vperm.xlu0 %1063, %v952
        %v1065 = vpop.permute.xlu0 %1064
        %1068 = vset.pattern.permute.xlu0 0
        %1069 = vperm.xlu0 %1068, %v953
        %v1070 = vpop.permute.xlu0 %1069
        %1073 = vset.pattern.permute.xlu0 0
        %1074 = vperm.xlu0 %1073, %v954
        %v1075 = vpop.permute.xlu0 %1074
        %1078 = vset.pattern.permute.xlu0 0
        %1079 = vperm.xlu0 %1078, %v955
        %v1080 = vpop.permute.xlu0 %1079
        %1083 = vset.pattern.permute.xlu0 0
        %1084 = vperm.xlu0 %1083, %v956
        %v1085 = vpop.permute.xlu0 %1084
        %1088 = vset.pattern.permute.xlu0 0
        %1089 = vperm.xlu0 %1088, %v957
        %v1090 = vpop.permute.xlu0 %1089
        %1093 = vset.pattern.permute.xlu0 0
        %1094 = vperm.xlu0 %1093, %v958
        %v1095 = vpop.permute.xlu0 %1094
        %1098 = vset.pattern.permute.xlu0 0
        %1099 = vperm.xlu0 %1098, %v959
        %v1100 = vpop.permute.xlu0 %1099
        %1103 = vset.pattern.permute.xlu0 0
        %1104 = vperm.xlu0 %1103, %v960
        %v1105 = vpop.permute.xlu0 %1104
        %1108 = vset.pattern.permute.xlu0 0
        %1109 = vperm.xlu0 %1108, %v961
        %v1110 = vpop.permute.xlu0 %1109
        %1113 = vset.pattern.permute.xlu0 0
        %1114 = vperm.xlu0 %1113, %v962
        %v1115 = vpop.permute.xlu0 %1114
        %1118 = vset.pattern.permute.xlu0 0
        %1119 = vperm.xlu0 %1118, %v963
        %v1120 = vpop.permute.xlu0 %1119
        %1123 = vset.pattern.permute.xlu0 0
        %1124 = vperm.xlu0 %1123, %v964
        %v1125 = vpop.permute.xlu0 %1124
        %1128 = vset.pattern.permute.xlu0 0
        %1129 = vperm.xlu0 %1128, %v965
        %v1130 = vpop.permute.xlu0 %1129
        %1133 = vset.pattern.permute.xlu0 0
        %1134 = vperm.xlu0 %1133, %v966
        %v1135 = vpop.permute.xlu0 %1134
        %1138 = vset.pattern.permute.xlu0 0
        %1139 = vperm.xlu0 %1138, %v967
        %v1140 = vpop.permute.xlu0 %1139
        %1143 = vset.pattern.permute.xlu0 0
        %1144 = vperm.xlu0 %1143, %v968
        %v1145 = vpop.permute.xlu0 %1144
        %1148 = vset.pattern.permute.xlu0 0
        %1149 = vperm.xlu0 %1148, %v969
        %v1150 = vpop.permute.xlu0 %1149
        %v1153 = vlaneseq
        %v1154 = vshrl.u32 %v1153, 7
        %v1155 = vsub.s32 0, %v1154
        %v1156 = vrot.slane %v971, %v1155
        %v1158 = vmul.f32 %v975, %v1156
        %v1159 = vmul.f32 %v980, %v1156
        %v1160 = vmul.f32 %v985, %v1156
        %v1161 = vmul.f32 %v990, %v1156
        %v1162 = vmul.f32 %v995, %v1156
        %v1163 = vmul.f32 %v1000, %v1156
        %v1164 = vmul.f32 %v1005, %v1156
        %v1165 = vmul.f32 %v1010, %v1156
        %v1166 = vmul.f32 %v1015, %v1156
        %v1167 = vmul.f32 %v1020, %v1156
        %v1168 = vmul.f32 %v1025, %v1156
        %v1169 = vmul.f32 %v1030, %v1156
        %v1170 = vmul.f32 %v1035, %v1156
        %v1171 = vmul.f32 %v1040, %v1156
        %v1172 = vmul.f32 %v1045, %v1156
        %v1173 = vmul.f32 %v1050, %v1156
        %v1174 = vmul.f32 %v1055, %v1156
        %v1175 = vmul.f32 %v1060, %v1156
        %v1176 = vmul.f32 %v1065, %v1156
        %v1177 = vmul.f32 %v1070, %v1156
        %v1178 = vmul.f32 %v1075, %v1156
        %v1179 = vmul.f32 %v1080, %v1156
        %v1180 = vmul.f32 %v1085, %v1156
        %v1181 = vmul.f32 %v1090, %v1156
        %v1182 = vmul.f32 %v1095, %v1156
        %v1183 = vmul.f32 %v1100, %v1156
        %v1184 = vmul.f32 %v1105, %v1156
        %v1185 = vmul.f32 %v1110, %v1156
        %v1186 = vmul.f32 %v1115, %v1156
        %v1187 = vmul.f32 %v1120, %v1156
        %v1188 = vmul.f32 %v1125, %v1156
        %v1189 = vmul.f32 %v1130, %v1156
        %v1190 = vmul.f32 %v1135, %v1156
        %v1191 = vmul.f32 %v1140, %v1156
        %v1192 = vmul.f32 %v1145, %v1156
        %v1193 = vmul.f32 %v1150, %v1156
        %v1194 = vadd.f32 %v898, %v1158
        %v1195 = vadd.f32 %v899, %v1159
        %v1196 = vadd.f32 %v900, %v1160
        %v1197 = vadd.f32 %v901, %v1161
        %v1198 = vadd.f32 %v902, %v1162
        %v1199 = vadd.f32 %v903, %v1163
        %v1200 = vadd.f32 %v904, %v1164
        %v1201 = vadd.f32 %v905, %v1165
        %v1202 = vadd.f32 %v906, %v1166
        %v1203 = vadd.f32 %v907, %v1167
        %v1204 = vadd.f32 %v908, %v1168
        %v1205 = vadd.f32 %v909, %v1169
        %v1206 = vadd.f32 %v910, %v1170
        %v1207 = vadd.f32 %v911, %v1171
        %v1208 = vadd.f32 %v912, %v1172
        %v1209 = vadd.f32 %v913, %v1173
        %v1210 = vadd.f32 %v914, %v1174
        %v1211 = vadd.f32 %v915, %v1175
        %v1212 = vadd.f32 %v916, %v1176
        %v1213 = vadd.f32 %v917, %v1177
        %v1214 = vadd.f32 %v918, %v1178
        %v1215 = vadd.f32 %v919, %v1179
        %v1216 = vadd.f32 %v920, %v1180
        %v1217 = vadd.f32 %v921, %v1181
        %v1218 = vadd.f32 %v922, %v1182
        %v1219 = vadd.f32 %v923, %v1183
        %v1220 = vadd.f32 %v924, %v1184
        %v1221 = vadd.f32 %v925, %v1185
        %v1222 = vadd.f32 %v926, %v1186
        %v1223 = vadd.f32 %v927, %v1187
        %v1224 = vadd.f32 %v928, %v1188
        %v1225 = vadd.f32 %v929, %v1189
        %v1226 = vadd.f32 %v930, %v1190
        %v1227 = vadd.f32 %v931, %v1191
        %v1228 = vadd.f32 %v932, %v1192
        %v1229 = vadd.f32 %v933, %v1193
        %v1230 = vld [vmem:[%s638 + $0x2] sm:$0xff]
        %v1231 = vld [vmem:[%s638 + $0xa] sm:$0xff]
        %v1232 = vld [vmem:[%s638 + $0x12] sm:$0xff]
        %v1233 = vld [vmem:[%s638 + $0x1a] sm:$0xff]
        %v1234 = vld [vmem:[%s638 + $0x22] sm:$0xff]
        %v1235 = vld [vmem:[%s638 + $0x2a] sm:$0xff]
        %v1236 = vld [vmem:[%s638 + $0x32] sm:$0xff]
        %v1237 = vld [vmem:[%s638 + $0x3a] sm:$0xff]
        %v1238 = vld [vmem:[%s638 + $0x42] sm:$0xff]
        %v1239 = vld [vmem:[%s638 + $0x4a] sm:$0xff]
        %v1240 = vld [vmem:[%s638 + $0x52] sm:$0xff]
        %v1241 = vld [vmem:[%s638 + $0x5a] sm:$0xff]
        %v1242 = vld [vmem:[%s638 + $0x62] sm:$0xff]
        %v1243 = vld [vmem:[%s638 + $0x6a] sm:$0xff]
        %v1244 = vld [vmem:[%s638 + $0x72] sm:$0xff]
        %v1245 = vld [vmem:[%s638 + $0x7a] sm:$0xff]
        %v1246 = vld [vmem:[%s638 + $0x82] sm:$0xff]
        %v1247 = vld [vmem:[%s638 + $0x8a] sm:$0xff]
        %v1248 = vld [vmem:[%s638 + $0x92] sm:$0xff]
        %v1249 = vld [vmem:[%s638 + $0x9a] sm:$0xff]
        %v1250 = vld [vmem:[%s638 + $0xa2] sm:$0xff]
        %v1251 = vld [vmem:[%s638 + $0xaa] sm:$0xff]
        %v1252 = vld [vmem:[%s638 + $0xb2] sm:$0xff]
        %v1253 = vld [vmem:[%s638 + $0xba] sm:$0xff]
        %v1254 = vld [vmem:[%s638 + $0xc2] sm:$0xff]
        %v1255 = vld [vmem:[%s638 + $0xca] sm:$0xff]
        %v1256 = vld [vmem:[%s638 + $0xd2] sm:$0xff]
        %v1257 = vld [vmem:[%s638 + $0xda] sm:$0xff]
        %v1258 = vld [vmem:[%s638 + $0xe2] sm:$0xff]
        %v1259 = vld [vmem:[%s638 + $0xea] sm:$0xff]
        %v1260 = vld [vmem:[%s638 + $0xf2] sm:$0xff]
        %v1261 = vld [vmem:[%s638 + $0xfa] sm:$0xff]
        %v1262 = vld [vmem:[%s638 + $0x102] sm:$0xff]
        %v1263 = vld [vmem:[%s638 + $0x10a] sm:$0xff]
        %v1264 = vld [vmem:[%s638 + $0x112] sm:$0xff]
        %v1265 = vld [vmem:[%s638 + $0x11a] sm:$0x3f]
        %s1266 = scalar_lea.vmem %s1, 2
        %v1267 = vld [vmem:[%s1266] sm:$0x1]
        %1269 = vset.pattern.permute.xlu0 0
        %1270 = vperm.xlu0 %1269, %v1230
        %v1271 = vpop.permute.xlu0 %1270
        %1274 = vset.pattern.permute.xlu0 0
        %1275 = vperm.xlu0 %1274, %v1231
        %v1276 = vpop.permute.xlu0 %1275
        %1279 = vset.pattern.permute.xlu0 0
        %1280 = vperm.xlu0 %1279, %v1232
        %v1281 = vpop.permute.xlu0 %1280
        %1284 = vset.pattern.permute.xlu0 0
        %1285 = vperm.xlu0 %1284, %v1233
        %v1286 = vpop.permute.xlu0 %1285
        %1289 = vset.pattern.permute.xlu0 0
        %1290 = vperm.xlu0 %1289, %v1234
        %v1291 = vpop.permute.xlu0 %1290
        %1294 = vset.pattern.permute.xlu0 0
        %1295 = vperm.xlu0 %1294, %v1235
        %v1296 = vpop.permute.xlu0 %1295
        %1299 = vset.pattern.permute.xlu0 0
        %1300 = vperm.xlu0 %1299, %v1236
        %v1301 = vpop.permute.xlu0 %1300
        %1304 = vset.pattern.permute.xlu0 0
        %1305 = vperm.xlu0 %1304, %v1237
        %v1306 = vpop.permute.xlu0 %1305
        %1309 = vset.pattern.permute.xlu0 0
        %1310 = vperm.xlu0 %1309, %v1238
        %v1311 = vpop.permute.xlu0 %1310
        %1314 = vset.pattern.permute.xlu0 0
        %1315 = vperm.xlu0 %1314, %v1239
        %v1316 = vpop.permute.xlu0 %1315
        %1319 = vset.pattern.permute.xlu0 0
        %1320 = vperm.xlu0 %1319, %v1240
        %v1321 = vpop.permute.xlu0 %1320
        %1324 = vset.pattern.permute.xlu0 0
        %1325 = vperm.xlu0 %1324, %v1241
        %v1326 = vpop.permute.xlu0 %1325
        %1329 = vset.pattern.permute.xlu0 0
        %1330 = vperm.xlu0 %1329, %v1242
        %v1331 = vpop.permute.xlu0 %1330
        %1334 = vset.pattern.permute.xlu0 0
        %1335 = vperm.xlu0 %1334, %v1243
        %v1336 = vpop.permute.xlu0 %1335
        %1339 = vset.pattern.permute.xlu0 0
        %1340 = vperm.xlu0 %1339, %v1244
        %v1341 = vpop.permute.xlu0 %1340
        %1344 = vset.pattern.permute.xlu0 0
        %1345 = vperm.xlu0 %1344, %v1245
        %v1346 = vpop.permute.xlu0 %1345
        %1349 = vset.pattern.permute.xlu0 0
        %1350 = vperm.xlu0 %1349, %v1246
        %v1351 = vpop.permute.xlu0 %1350
        %1354 = vset.pattern.permute.xlu0 0
        %1355 = vperm.xlu0 %1354, %v1247
        %v1356 = vpop.permute.xlu0 %1355
        %1359 = vset.pattern.permute.xlu0 0
        %1360 = vperm.xlu0 %1359, %v1248
        %v1361 = vpop.permute.xlu0 %1360
        %1364 = vset.pattern.permute.xlu0 0
        %1365 = vperm.xlu0 %1364, %v1249
        %v1366 = vpop.permute.xlu0 %1365
        %1369 = vset.pattern.permute.xlu0 0
        %1370 = vperm.xlu0 %1369, %v1250
        %v1371 = vpop.permute.xlu0 %1370
        %1374 = vset.pattern.permute.xlu0 0
        %1375 = vperm.xlu0 %1374, %v1251
        %v1376 = vpop.permute.xlu0 %1375
        %1379 = vset.pattern.permute.xlu0 0
        %1380 = vperm.xlu0 %1379, %v1252
        %v1381 = vpop.permute.xlu0 %1380
        %1384 = vset.pattern.permute.xlu0 0
        %1385 = vperm.xlu0 %1384, %v1253
        %v1386 = vpop.permute.xlu0 %1385
        %1389 = vset.pattern.permute.xlu0 0
        %1390 = vperm.xlu0 %1389, %v1254
        %v1391 = vpop.permute.xlu0 %1390
        %1394 = vset.pattern.permute.xlu0 0
        %1395 = vperm.xlu0 %1394, %v1255
        %v1396 = vpop.permute.xlu0 %1395
        %1399 = vset.pattern.permute.xlu0 0
        %1400 = vperm.xlu0 %1399, %v1256
        %v1401 = vpop.permute.xlu0 %1400
        %1404 = vset.pattern.permute.xlu0 0
        %1405 = vperm.xlu0 %1404, %v1257
        %v1406 = vpop.permute.xlu0 %1405
        %1409 = vset.pattern.permute.xlu0 0
        %1410 = vperm.xlu0 %1409, %v1258
        %v1411 = vpop.permute.xlu0 %1410
        %1414 = vset.pattern.permute.xlu0 0
        %1415 = vperm.xlu0 %1414, %v1259
        %v1416 = vpop.permute.xlu0 %1415
        %1419 = vset.pattern.permute.xlu0 0
        %1420 = vperm.xlu0 %1419, %v1260
        %v1421 = vpop.permute.xlu0 %1420
        %1424 = vset.pattern.permute.xlu0 0
        %1425 = vperm.xlu0 %1424, %v1261
        %v1426 = vpop.permute.xlu0 %1425
        %1429 = vset.pattern.permute.xlu0 0
        %1430 = vperm.xlu0 %1429, %v1262
        %v1431 = vpop.permute.xlu0 %1430
        %1434 = vset.pattern.permute.xlu0 0
        %1435 = vperm.xlu0 %1434, %v1263
        %v1436 = vpop.permute.xlu0 %1435
        %1439 = vset.pattern.permute.xlu0 0
        %1440 = vperm.xlu0 %1439, %v1264
        %v1441 = vpop.permute.xlu0 %1440
        %1444 = vset.pattern.permute.xlu0 0
        %1445 = vperm.xlu0 %1444, %v1265
        %v1446 = vpop.permute.xlu0 %1445
        %v1449 = vlaneseq
        %v1450 = vshrl.u32 %v1449, 7
        %v1451 = vsub.s32 0, %v1450
        %v1452 = vrot.slane %v1267, %v1451
        %v1454 = vmul.f32 %v1271, %v1452
        %v1455 = vmul.f32 %v1276, %v1452
        %v1456 = vmul.f32 %v1281, %v1452
        %v1457 = vmul.f32 %v1286, %v1452
        %v1458 = vmul.f32 %v1291, %v1452
        %v1459 = vmul.f32 %v1296, %v1452
        %v1460 = vmul.f32 %v1301, %v1452
        %v1461 = vmul.f32 %v1306, %v1452
        %v1462 = vmul.f32 %v1311, %v1452
        %v1463 = vmul.f32 %v1316, %v1452
        %v1464 = vmul.f32 %v1321, %v1452
        %v1465 = vmul.f32 %v1326, %v1452
        %v1466 = vmul.f32 %v1331, %v1452
        %v1467 = vmul.f32 %v1336, %v1452
        %v1468 = vmul.f32 %v1341, %v1452
        %v1469 = vmul.f32 %v1346, %v1452
        %v1470 = vmul.f32 %v1351, %v1452
        %v1471 = vmul.f32 %v1356, %v1452
        %v1472 = vmul.f32 %v1361, %v1452
        %v1473 = vmul.f32 %v1366, %v1452
        %v1474 = vmul.f32 %v1371, %v1452
        %v1475 = vmul.f32 %v1376, %v1452
        %v1476 = vmul.f32 %v1381, %v1452
        %v1477 = vmul.f32 %v1386, %v1452
        %v1478 = vmul.f32 %v1391, %v1452
        %v1479 = vmul.f32 %v1396, %v1452
        %v1480 = vmul.f32 %v1401, %v1452
        %v1481 = vmul.f32 %v1406, %v1452
        %v1482 = vmul.f32 %v1411, %v1452
        %v1483 = vmul.f32 %v1416, %v1452
        %v1484 = vmul.f32 %v1421, %v1452
        %v1485 = vmul.f32 %v1426, %v1452
        %v1486 = vmul.f32 %v1431, %v1452
        %v1487 = vmul.f32 %v1436, %v1452
        %v1488 = vmul.f32 %v1441, %v1452
        %v1489 = vmul.f32 %v1446, %v1452
        %v1490 = vadd.f32 %v1194, %v1454
        %v1491 = vadd.f32 %v1195, %v1455
        %v1492 = vadd.f32 %v1196, %v1456
        %v1493 = vadd.f32 %v1197, %v1457
        %v1494 = vadd.f32 %v1198, %v1458
        %v1495 = vadd.f32 %v1199, %v1459
        %v1496 = vadd.f32 %v1200, %v1460
        %v1497 = vadd.f32 %v1201, %v1461
        %v1498 = vadd.f32 %v1202, %v1462
        %v1499 = vadd.f32 %v1203, %v1463
        %v1500 = vadd.f32 %v1204, %v1464
        %v1501 = vadd.f32 %v1205, %v1465
        %v1502 = vadd.f32 %v1206, %v1466
        %v1503 = vadd.f32 %v1207, %v1467
        %v1504 = vadd.f32 %v1208, %v1468
        %v1505 = vadd.f32 %v1209, %v1469
        %v1506 = vadd.f32 %v1210, %v1470
        %v1507 = vadd.f32 %v1211, %v1471
        %v1508 = vadd.f32 %v1212, %v1472
        %v1509 = vadd.f32 %v1213, %v1473
        %v1510 = vadd.f32 %v1214, %v1474
        %v1511 = vadd.f32 %v1215, %v1475
        %v1512 = vadd.f32 %v1216, %v1476
        %v1513 = vadd.f32 %v1217, %v1477
        %v1514 = vadd.f32 %v1218, %v1478
        %v1515 = vadd.f32 %v1219, %v1479
        %v1516 = vadd.f32 %v1220, %v1480
        %v1517 = vadd.f32 %v1221, %v1481
        %v1518 = vadd.f32 %v1222, %v1482
        %v1519 = vadd.f32 %v1223, %v1483
        %v1520 = vadd.f32 %v1224, %v1484
        %v1521 = vadd.f32 %v1225, %v1485
        %v1522 = vadd.f32 %v1226, %v1486
        %v1523 = vadd.f32 %v1227, %v1487
        %v1524 = vadd.f32 %v1228, %v1488
        %v1525 = vadd.f32 %v1229, %v1489
        %v1526 = vld [vmem:[%s638 + $0x12] sm:$0xff]
        %v1527 = vld [vmem:[%s638 + $0x1a] sm:$0xff]
        %v1528 = vld [vmem:[%s638 + $0x22] sm:$0xff]
        %v1529 = vld [vmem:[%s638 + $0x2a] sm:$0xff]
        %v1530 = vld [vmem:[%s638 + $0x32] sm:$0xff]
        %v1531 = vld [vmem:[%s638 + $0x3a] sm:$0xff]
        %v1532 = vld [vmem:[%s638 + $0x42] sm:$0xff]
        %v1533 = vld [vmem:[%s638 + $0x4a] sm:$0xff]
        %v1534 = vld [vmem:[%s638 + $0x52] sm:$0xff]
        %v1535 = vld [vmem:[%s638 + $0x5a] sm:$0xff]
        %v1536 = vld [vmem:[%s638 + $0x62] sm:$0xff]
        %v1537 = vld [vmem:[%s638 + $0x6a] sm:$0xff]
        %v1538 = vld [vmem:[%s638 + $0x72] sm:$0xff]
        %v1539 = vld [vmem:[%s638 + $0x7a] sm:$0xff]
        %v1540 = vld [vmem:[%s638 + $0x82] sm:$0xff]
        %v1541 = vld [vmem:[%s638 + $0x8a] sm:$0xff]
        %v1542 = vld [vmem:[%s638 + $0x92] sm:$0xff]
        %v1543 = vld [vmem:[%s638 + $0x9a] sm:$0xff]
        %v1544 = vld [vmem:[%s638 + $0xa2] sm:$0xff]
        %v1545 = vld [vmem:[%s638 + $0xaa] sm:$0xff]
        %v1546 = vld [vmem:[%s638 + $0xb2] sm:$0xff]
        %v1547 = vld [vmem:[%s638 + $0xba] sm:$0xff]
        %v1548 = vld [vmem:[%s638 + $0xc2] sm:$0xff]
        %v1549 = vld [vmem:[%s638 + $0xca] sm:$0xff]
        %v1550 = vld [vmem:[%s638 + $0xd2] sm:$0xff]
        %v1551 = vld [vmem:[%s638 + $0xda] sm:$0xff]
        %v1552 = vld [vmem:[%s638 + $0xe2] sm:$0xff]
        %v1553 = vld [vmem:[%s638 + $0xea] sm:$0xff]
        %v1554 = vld [vmem:[%s638 + $0xf2] sm:$0xff]
        %v1555 = vld [vmem:[%s638 + $0xfa] sm:$0xff]
        %v1556 = vld [vmem:[%s638 + $0x102] sm:$0xff]
        %v1557 = vld [vmem:[%s638 + $0x10a] sm:$0xff]
        %v1558 = vld [vmem:[%s638 + $0x112] sm:$0xff]
        %v1559 = vld [vmem:[%s638 + $0x11a] sm:$0xff]
        %v1560 = vld [vmem:[%s638 + $0x122] sm:$0xff]
        %v1561 = vld [vmem:[%s638 + $0x12a] sm:$0x3f]
        %s1562 = scalar_lea.vmem %s1, 3
        %v1563 = vld [vmem:[%s1562] sm:$0x1]
        %1565 = vset.pattern.permute.xlu0 0
        %1566 = vperm.xlu0 %1565, %v1526
        %v1567 = vpop.permute.xlu0 %1566
        %1570 = vset.pattern.permute.xlu0 0
        %1571 = vperm.xlu0 %1570, %v1527
        %v1572 = vpop.permute.xlu0 %1571
        %1575 = vset.pattern.permute.xlu0 0
        %1576 = vperm.xlu0 %1575, %v1528
        %v1577 = vpop.permute.xlu0 %1576
        %1580 = vset.pattern.permute.xlu0 0
        %1581 = vperm.xlu0 %1580, %v1529
        %v1582 = vpop.permute.xlu0 %1581
        %1585 = vset.pattern.permute.xlu0 0
        %1586 = vperm.xlu0 %1585, %v1530
        %v1587 = vpop.permute.xlu0 %1586
        %1590 = vset.pattern.permute.xlu0 0
        %1591 = vperm.xlu0 %1590, %v1531
        %v1592 = vpop.permute.xlu0 %1591
        %1595 = vset.pattern.permute.xlu0 0
        %1596 = vperm.xlu0 %1595, %v1532
        %v1597 = vpop.permute.xlu0 %1596
        %1600 = vset.pattern.permute.xlu0 0
        %1601 = vperm.xlu0 %1600, %v1533
        %v1602 = vpop.permute.xlu0 %1601
        %1605 = vset.pattern.permute.xlu0 0
        %1606 = vperm.xlu0 %1605, %v1534
        %v1607 = vpop.permute.xlu0 %1606
        %1610 = vset.pattern.permute.xlu0 0
        %1611 = vperm.xlu0 %1610, %v1535
        %v1612 = vpop.permute.xlu0 %1611
        %1615 = vset.pattern.permute.xlu0 0
        %1616 = vperm.xlu0 %1615, %v1536
        %v1617 = vpop.permute.xlu0 %1616
        %1620 = vset.pattern.permute.xlu0 0
        %1621 = vperm.xlu0 %1620, %v1537
        %v1622 = vpop.permute.xlu0 %1621
        %1625 = vset.pattern.permute.xlu0 0
        %1626 = vperm.xlu0 %1625, %v1538
        %v1627 = vpop.permute.xlu0 %1626
        %1630 = vset.pattern.permute.xlu0 0
        %1631 = vperm.xlu0 %1630, %v1539
        %v1632 = vpop.permute.xlu0 %1631
        %1635 = vset.pattern.permute.xlu0 0
        %1636 = vperm.xlu0 %1635, %v1540
        %v1637 = vpop.permute.xlu0 %1636
        %1640 = vset.pattern.permute.xlu0 0
        %1641 = vperm.xlu0 %1640, %v1541
        %v1642 = vpop.permute.xlu0 %1641
        %1645 = vset.pattern.permute.xlu0 0
        %1646 = vperm.xlu0 %1645, %v1542
        %v1647 = vpop.permute.xlu0 %1646
        %1650 = vset.pattern.permute.xlu0 0
        %1651 = vperm.xlu0 %1650, %v1543
        %v1652 = vpop.permute.xlu0 %1651
        %1655 = vset.pattern.permute.xlu0 0
        %1656 = vperm.xlu0 %1655, %v1544
        %v1657 = vpop.permute.xlu0 %1656
        %1660 = vset.pattern.permute.xlu0 0
        %1661 = vperm.xlu0 %1660, %v1545
        %v1662 = vpop.permute.xlu0 %1661
        %1665 = vset.pattern.permute.xlu0 0
        %1666 = vperm.xlu0 %1665, %v1546
        %v1667 = vpop.permute.xlu0 %1666
        %1670 = vset.pattern.permute.xlu0 0
        %1671 = vperm.xlu0 %1670, %v1547
        %v1672 = vpop.permute.xlu0 %1671
        %1675 = vset.pattern.permute.xlu0 0
        %1676 = vperm.xlu0 %1675, %v1548
        %v1677 = vpop.permute.xlu0 %1676
        %1680 = vset.pattern.permute.xlu0 0
        %1681 = vperm.xlu0 %1680, %v1549
        %v1682 = vpop.permute.xlu0 %1681
        %1685 = vset.pattern.permute.xlu0 0
        %1686 = vperm.xlu0 %1685, %v1550
        %v1687 = vpop.permute.xlu0 %1686
        %1690 = vset.pattern.permute.xlu0 0
        %1691 = vperm.xlu0 %1690, %v1551
        %v1692 = vpop.permute.xlu0 %1691
        %1695 = vset.pattern.permute.xlu0 0
        %1696 = vperm.xlu0 %1695, %v1552
        %v1697 = vpop.permute.xlu0 %1696
        %1700 = vset.pattern.permute.xlu0 0
        %1701 = vperm.xlu0 %1700, %v1553
        %v1702 = vpop.permute.xlu0 %1701
        %1705 = vset.pattern.permute.xlu0 0
        %1706 = vperm.xlu0 %1705, %v1554
        %v1707 = vpop.permute.xlu0 %1706
        %1710 = vset.pattern.permute.xlu0 0
        %1711 = vperm.xlu0 %1710, %v1555
        %v1712 = vpop.permute.xlu0 %1711
        %1715 = vset.pattern.permute.xlu0 0
        %1716 = vperm.xlu0 %1715, %v1556
        %v1717 = vpop.permute.xlu0 %1716
        %1720 = vset.pattern.permute.xlu0 0
        %1721 = vperm.xlu0 %1720, %v1557
        %v1722 = vpop.permute.xlu0 %1721
        %1725 = vset.pattern.permute.xlu0 0
        %1726 = vperm.xlu0 %1725, %v1558
        %v1727 = vpop.permute.xlu0 %1726
        %1730 = vset.pattern.permute.xlu0 0
        %1731 = vperm.xlu0 %1730, %v1559
        %v1732 = vpop.permute.xlu0 %1731
        %1735 = vset.pattern.permute.xlu0 0
        %1736 = vperm.xlu0 %1735, %v1560
        %v1737 = vpop.permute.xlu0 %1736
        %1740 = vset.pattern.permute.xlu0 0
        %1741 = vperm.xlu0 %1740, %v1561
        %v1742 = vpop.permute.xlu0 %1741
        %v1745 = vlaneseq
        %v1746 = vshrl.u32 %v1745, 7
        %v1747 = vsub.s32 0, %v1746
        %v1748 = vrot.slane %v1563, %v1747
        %v1750 = vmul.f32 %v1567, %v1748
        %v1751 = vmul.f32 %v1572, %v1748
        %v1752 = vmul.f32 %v1577, %v1748
        %v1753 = vmul.f32 %v1582, %v1748
        %v1754 = vmul.f32 %v1587, %v1748
        %v1755 = vmul.f32 %v1592, %v1748
        %v1756 = vmul.f32 %v1597, %v1748
        %v1757 = vmul.f32 %v1602, %v1748
        %v1758 = vmul.f32 %v1607, %v1748
        %v1759 = vmul.f32 %v1612, %v1748
        %v1760 = vmul.f32 %v1617, %v1748
        %v1761 = vmul.f32 %v1622, %v1748
        %v1762 = vmul.f32 %v1627, %v1748
        %v1763 = vmul.f32 %v1632, %v1748
        %v1764 = vmul.f32 %v1637, %v1748
        %v1765 = vmul.f32 %v1642, %v1748
        %v1766 = vmul.f32 %v1647, %v1748
        %v1767 = vmul.f32 %v1652, %v1748
        %v1768 = vmul.f32 %v1657, %v1748
        %v1769 = vmul.f32 %v1662, %v1748
        %v1770 = vmul.f32 %v1667, %v1748
        %v1771 = vmul.f32 %v1672, %v1748
        %v1772 = vmul.f32 %v1677, %v1748
        %v1773 = vmul.f32 %v1682, %v1748
        %v1774 = vmul.f32 %v1687, %v1748
        %v1775 = vmul.f32 %v1692, %v1748
        %v1776 = vmul.f32 %v1697, %v1748
        %v1777 = vmul.f32 %v1702, %v1748
        %v1778 = vmul.f32 %v1707, %v1748
        %v1779 = vmul.f32 %v1712, %v1748
        %v1780 = vmul.f32 %v1717, %v1748
        %v1781 = vmul.f32 %v1722, %v1748
        %v1782 = vmul.f32 %v1727, %v1748
        %v1783 = vmul.f32 %v1732, %v1748
        %v1784 = vmul.f32 %v1737, %v1748
        %v1785 = vmul.f32 %v1742, %v1748
        %v1786 = vadd.f32 %v1490, %v1750
        %v1787 = vadd.f32 %v1491, %v1751
        %v1788 = vadd.f32 %v1492, %v1752
        %v1789 = vadd.f32 %v1493, %v1753
        %v1790 = vadd.f32 %v1494, %v1754
        %v1791 = vadd.f32 %v1495, %v1755
        %v1792 = vadd.f32 %v1496, %v1756
        %v1793 = vadd.f32 %v1497, %v1757
        %v1794 = vadd.f32 %v1498, %v1758
        %v1795 = vadd.f32 %v1499, %v1759
        %v1796 = vadd.f32 %v1500, %v1760
        %v1797 = vadd.f32 %v1501, %v1761
        %v1798 = vadd.f32 %v1502, %v1762
        %v1799 = vadd.f32 %v1503, %v1763
        %v1800 = vadd.f32 %v1504, %v1764
        %v1801 = vadd.f32 %v1505, %v1765
        %v1802 = vadd.f32 %v1506, %v1766
        %v1803 = vadd.f32 %v1507, %v1767
        %v1804 = vadd.f32 %v1508, %v1768
        %v1805 = vadd.f32 %v1509, %v1769
        %v1806 = vadd.f32 %v1510, %v1770
        %v1807 = vadd.f32 %v1511, %v1771
        %v1808 = vadd.f32 %v1512, %v1772
        %v1809 = vadd.f32 %v1513, %v1773
        %v1810 = vadd.f32 %v1514, %v1774
        %v1811 = vadd.f32 %v1515, %v1775
        %v1812 = vadd.f32 %v1516, %v1776
        %v1813 = vadd.f32 %v1517, %v1777
        %v1814 = vadd.f32 %v1518, %v1778
        %v1815 = vadd.f32 %v1519, %v1779
        %v1816 = vadd.f32 %v1520, %v1780
        %v1817 = vadd.f32 %v1521, %v1781
        %v1818 = vadd.f32 %v1522, %v1782
        %v1819 = vadd.f32 %v1523, %v1783
        %v1820 = vadd.f32 %v1524, %v1784
        %v1821 = vadd.f32 %v1525, %v1785
        %v1822 = vld [vmem:[%s638 + $0x13] sm:$0xff]
        %v1823 = vld [vmem:[%s638 + $0x1b] sm:$0xff]
        %v1824 = vld [vmem:[%s638 + $0x23] sm:$0xff]
        %v1825 = vld [vmem:[%s638 + $0x2b] sm:$0xff]
        %v1826 = vld [vmem:[%s638 + $0x33] sm:$0xff]
        %v1827 = vld [vmem:[%s638 + $0x3b] sm:$0xff]
        %v1828 = vld [vmem:[%s638 + $0x43] sm:$0xff]
        %v1829 = vld [vmem:[%s638 + $0x4b] sm:$0xff]
        %v1830 = vld [vmem:[%s638 + $0x53] sm:$0xff]
        %v1831 = vld [vmem:[%s638 + $0x5b] sm:$0xff]
        %v1832 = vld [vmem:[%s638 + $0x63] sm:$0xff]
        %v1833 = vld [vmem:[%s638 + $0x6b] sm:$0xff]
        %v1834 = vld [vmem:[%s638 + $0x73] sm:$0xff]
        %v1835 = vld [vmem:[%s638 + $0x7b] sm:$0xff]
        %v1836 = vld [vmem:[%s638 + $0x83] sm:$0xff]
        %v1837 = vld [vmem:[%s638 + $0x8b] sm:$0xff]
        %v1838 = vld [vmem:[%s638 + $0x93] sm:$0xff]
        %v1839 = vld [vmem:[%s638 + $0x9b] sm:$0xff]
        %v1840 = vld [vmem:[%s638 + $0xa3] sm:$0xff]
        %v1841 = vld [vmem:[%s638 + $0xab] sm:$0xff]
        %v1842 = vld [vmem:[%s638 + $0xb3] sm:$0xff]
        %v1843 = vld [vmem:[%s638 + $0xbb] sm:$0xff]
        %v1844 = vld [vmem:[%s638 + $0xc3] sm:$0xff]
        %v1845 = vld [vmem:[%s638 + $0xcb] sm:$0xff]
        %v1846 = vld [vmem:[%s638 + $0xd3] sm:$0xff]
        %v1847 = vld [vmem:[%s638 + $0xdb] sm:$0xff]
        %v1848 = vld [vmem:[%s638 + $0xe3] sm:$0xff]
        %v1849 = vld [vmem:[%s638 + $0xeb] sm:$0xff]
        %v1850 = vld [vmem:[%s638 + $0xf3] sm:$0xff]
        %v1851 = vld [vmem:[%s638 + $0xfb] sm:$0xff]
        %v1852 = vld [vmem:[%s638 + $0x103] sm:$0xff]
        %v1853 = vld [vmem:[%s638 + $0x10b] sm:$0xff]
        %v1854 = vld [vmem:[%s638 + $0x113] sm:$0xff]
        %v1855 = vld [vmem:[%s638 + $0x11b] sm:$0xff]
        %v1856 = vld [vmem:[%s638 + $0x123] sm:$0xff]
        %v1857 = vld [vmem:[%s638 + $0x12b] sm:$0x3f]
        %s1858 = scalar_lea.vmem %s1, 4
        %v1859 = vld [vmem:[%s1858] sm:$0x1]
        %1861 = vset.pattern.permute.xlu0 0
        %1862 = vperm.xlu0 %1861, %v1822
        %v1863 = vpop.permute.xlu0 %1862
        %1866 = vset.pattern.permute.xlu0 0
        %1867 = vperm.xlu0 %1866, %v1823
        %v1868 = vpop.permute.xlu0 %1867
        %1871 = vset.pattern.permute.xlu0 0
        %1872 = vperm.xlu0 %1871, %v1824
        %v1873 = vpop.permute.xlu0 %1872
        %1876 = vset.pattern.permute.xlu0 0
        %1877 = vperm.xlu0 %1876, %v1825
        %v1878 = vpop.permute.xlu0 %1877
        %1881 = vset.pattern.permute.xlu0 0
        %1882 = vperm.xlu0 %1881, %v1826
        %v1883 = vpop.permute.xlu0 %1882
        %1886 = vset.pattern.permute.xlu0 0
        %1887 = vperm.xlu0 %1886, %v1827
        %v1888 = vpop.permute.xlu0 %1887
        %1891 = vset.pattern.permute.xlu0 0
        %1892 = vperm.xlu0 %1891, %v1828
        %v1893 = vpop.permute.xlu0 %1892
        %1896 = vset.pattern.permute.xlu0 0
        %1897 = vperm.xlu0 %1896, %v1829
        %v1898 = vpop.permute.xlu0 %1897
        %1901 = vset.pattern.permute.xlu0 0
        %1902 = vperm.xlu0 %1901, %v1830
        %v1903 = vpop.permute.xlu0 %1902
        %1906 = vset.pattern.permute.xlu0 0
        %1907 = vperm.xlu0 %1906, %v1831
        %v1908 = vpop.permute.xlu0 %1907
        %1911 = vset.pattern.permute.xlu0 0
        %1912 = vperm.xlu0 %1911, %v1832
        %v1913 = vpop.permute.xlu0 %1912
        %1916 = vset.pattern.permute.xlu0 0
        %1917 = vperm.xlu0 %1916, %v1833
        %v1918 = vpop.permute.xlu0 %1917
        %1921 = vset.pattern.permute.xlu0 0
        %1922 = vperm.xlu0 %1921, %v1834
        %v1923 = vpop.permute.xlu0 %1922
        %1926 = vset.pattern.permute.xlu0 0
        %1927 = vperm.xlu0 %1926, %v1835
        %v1928 = vpop.permute.xlu0 %1927
        %1931 = vset.pattern.permute.xlu0 0
        %1932 = vperm.xlu0 %1931, %v1836
        %v1933 = vpop.permute.xlu0 %1932
        %1936 = vset.pattern.permute.xlu0 0
        %1937 = vperm.xlu0 %1936, %v1837
        %v1938 = vpop.permute.xlu0 %1937
        %1941 = vset.pattern.permute.xlu0 0
        %1942 = vperm.xlu0 %1941, %v1838
        %v1943 = vpop.permute.xlu0 %1942
        %1946 = vset.pattern.permute.xlu0 0
        %1947 = vperm.xlu0 %1946, %v1839
        %v1948 = vpop.permute.xlu0 %1947
        %1951 = vset.pattern.permute.xlu0 0
        %1952 = vperm.xlu0 %1951, %v1840
        %v1953 = vpop.permute.xlu0 %1952
        %1956 = vset.pattern.permute.xlu0 0
        %1957 = vperm.xlu0 %1956, %v1841
        %v1958 = vpop.permute.xlu0 %1957
        %1961 = vset.pattern.permute.xlu0 0
        %1962 = vperm.xlu0 %1961, %v1842
        %v1963 = vpop.permute.xlu0 %1962
        %1966 = vset.pattern.permute.xlu0 0
        %1967 = vperm.xlu0 %1966, %v1843
        %v1968 = vpop.permute.xlu0 %1967
        %1971 = vset.pattern.permute.xlu0 0
        %1972 = vperm.xlu0 %1971, %v1844
        %v1973 = vpop.permute.xlu0 %1972
        %1976 = vset.pattern.permute.xlu0 0
        %1977 = vperm.xlu0 %1976, %v1845
        %v1978 = vpop.permute.xlu0 %1977
        %1981 = vset.pattern.permute.xlu0 0
        %1982 = vperm.xlu0 %1981, %v1846
        %v1983 = vpop.permute.xlu0 %1982
        %1986 = vset.pattern.permute.xlu0 0
        %1987 = vperm.xlu0 %1986, %v1847
        %v1988 = vpop.permute.xlu0 %1987
        %1991 = vset.pattern.permute.xlu0 0
        %1992 = vperm.xlu0 %1991, %v1848
        %v1993 = vpop.permute.xlu0 %1992
        %1996 = vset.pattern.permute.xlu0 0
        %1997 = vperm.xlu0 %1996, %v1849
        %v1998 = vpop.permute.xlu0 %1997
        %2001 = vset.pattern.permute.xlu0 0
        %2002 = vperm.xlu0 %2001, %v1850
        %v2003 = vpop.permute.xlu0 %2002
        %2006 = vset.pattern.permute.xlu0 0
        %2007 = vperm.xlu0 %2006, %v1851
        %v2008 = vpop.permute.xlu0 %2007
        %2011 = vset.pattern.permute.xlu0 0
        %2012 = vperm.xlu0 %2011, %v1852
        %v2013 = vpop.permute.xlu0 %2012
        %2016 = vset.pattern.permute.xlu0 0
        %2017 = vperm.xlu0 %2016, %v1853
        %v2018 = vpop.permute.xlu0 %2017
        %2021 = vset.pattern.permute.xlu0 0
        %2022 = vperm.xlu0 %2021, %v1854
        %v2023 = vpop.permute.xlu0 %2022
        %2026 = vset.pattern.permute.xlu0 0
        %2027 = vperm.xlu0 %2026, %v1855
        %v2028 = vpop.permute.xlu0 %2027
        %2031 = vset.pattern.permute.xlu0 0
        %2032 = vperm.xlu0 %2031, %v1856
        %v2033 = vpop.permute.xlu0 %2032
        %2036 = vset.pattern.permute.xlu0 0
        %2037 = vperm.xlu0 %2036, %v1857
        %v2038 = vpop.permute.xlu0 %2037
        %v2041 = vlaneseq
        %v2042 = vshrl.u32 %v2041, 7
        %v2043 = vsub.s32 0, %v2042
        %v2044 = vrot.slane %v1859, %v2043
        %v2046 = vmul.f32 %v1863, %v2044
        %v2047 = vmul.f32 %v1868, %v2044
        %v2048 = vmul.f32 %v1873, %v2044
        %v2049 = vmul.f32 %v1878, %v2044
        %v2050 = vmul.f32 %v1883, %v2044
        %v2051 = vmul.f32 %v1888, %v2044
        %v2052 = vmul.f32 %v1893, %v2044
        %v2053 = vmul.f32 %v1898, %v2044
        %v2054 = vmul.f32 %v1903, %v2044
        %v2055 = vmul.f32 %v1908, %v2044
        %v2056 = vmul.f32 %v1913, %v2044
        %v2057 = vmul.f32 %v1918, %v2044
        %v2058 = vmul.f32 %v1923, %v2044
        %v2059 = vmul.f32 %v1928, %v2044
        %v2060 = vmul.f32 %v1933, %v2044
        %v2061 = vmul.f32 %v1938, %v2044
        %v2062 = vmul.f32 %v1943, %v2044
        %v2063 = vmul.f32 %v1948, %v2044
        %v2064 = vmul.f32 %v1953, %v2044
        %v2065 = vmul.f32 %v1958, %v2044
        %v2066 = vmul.f32 %v1963, %v2044
        %v2067 = vmul.f32 %v1968, %v2044
        %v2068 = vmul.f32 %v1973, %v2044
        %v2069 = vmul.f32 %v1978, %v2044
        %v2070 = vmul.f32 %v1983, %v2044
        %v2071 = vmul.f32 %v1988, %v2044
        %v2072 = vmul.f32 %v1993, %v2044
        %v2073 = vmul.f32 %v1998, %v2044
        %v2074 = vmul.f32 %v2003, %v2044
        %v2075 = vmul.f32 %v2008, %v2044
        %v2076 = vmul.f32 %v2013, %v2044
        %v2077 = vmul.f32 %v2018, %v2044
        %v2078 = vmul.f32 %v2023, %v2044
        %v2079 = vmul.f32 %v2028, %v2044
        %v2080 = vmul.f32 %v2033, %v2044
        %v2081 = vmul.f32 %v2038, %v2044
        %v2082 = vadd.f32 %v1786, %v2046
        %v2083 = vadd.f32 %v1787, %v2047
        %v2084 = vadd.f32 %v1788, %v2048
        %v2085 = vadd.f32 %v1789, %v2049
        %v2086 = vadd.f32 %v1790, %v2050
        %v2087 = vadd.f32 %v1791, %v2051
        %v2088 = vadd.f32 %v1792, %v2052
        %v2089 = vadd.f32 %v1793, %v2053
        %v2090 = vadd.f32 %v1794, %v2054
        %v2091 = vadd.f32 %v1795, %v2055
        %v2092 = vadd.f32 %v1796, %v2056
        %v2093 = vadd.f32 %v1797, %v2057
        %v2094 = vadd.f32 %v1798, %v2058
        %v2095 = vadd.f32 %v1799, %v2059
        %v2096 = vadd.f32 %v1800, %v2060
        %v2097 = vadd.f32 %v1801, %v2061
        %v2098 = vadd.f32 %v1802, %v2062
        %v2099 = vadd.f32 %v1803, %v2063
        %v2100 = vadd.f32 %v1804, %v2064
        %v2101 = vadd.f32 %v1805, %v2065
        %v2102 = vadd.f32 %v1806, %v2066
        %v2103 = vadd.f32 %v1807, %v2067
        %v2104 = vadd.f32 %v1808, %v2068
        %v2105 = vadd.f32 %v1809, %v2069
        %v2106 = vadd.f32 %v1810, %v2070
        %v2107 = vadd.f32 %v1811, %v2071
        %v2108 = vadd.f32 %v1812, %v2072
        %v2109 = vadd.f32 %v1813, %v2073
        %v2110 = vadd.f32 %v1814, %v2074
        %v2111 = vadd.f32 %v1815, %v2075
        %v2112 = vadd.f32 %v1816, %v2076
        %v2113 = vadd.f32 %v1817, %v2077
        %v2114 = vadd.f32 %v1818, %v2078
        %v2115 = vadd.f32 %v1819, %v2079
        %v2116 = vadd.f32 %v1820, %v2080
        %v2117 = vadd.f32 %v1821, %v2081
        %v2118 = vld [vmem:[%s638 + $0x14] sm:$0xff]
        %v2119 = vld [vmem:[%s638 + $0x1c] sm:$0xff]
        %v2120 = vld [vmem:[%s638 + $0x24] sm:$0xff]
        %v2121 = vld [vmem:[%s638 + $0x2c] sm:$0xff]
        %v2122 = vld [vmem:[%s638 + $0x34] sm:$0xff]
        %v2123 = vld [vmem:[%s638 + $0x3c] sm:$0xff]
        %v2124 = vld [vmem:[%s638 + $0x44] sm:$0xff]
        %v2125 = vld [vmem:[%s638 + $0x4c] sm:$0xff]
        %v2126 = vld [vmem:[%s638 + $0x54] sm:$0xff]
        %v2127 = vld [vmem:[%s638 + $0x5c] sm:$0xff]
        %v2128 = vld [vmem:[%s638 + $0x64] sm:$0xff]
        %v2129 = vld [vmem:[%s638 + $0x6c] sm:$0xff]
        %v2130 = vld [vmem:[%s638 + $0x74] sm:$0xff]
        %v2131 = vld [vmem:[%s638 + $0x7c] sm:$0xff]
        %v2132 = vld [vmem:[%s638 + $0x84] sm:$0xff]
        %v2133 = vld [vmem:[%s638 + $0x8c] sm:$0xff]
        %v2134 = vld [vmem:[%s638 + $0x94] sm:$0xff]
        %v2135 = vld [vmem:[%s638 + $0x9c] sm:$0xff]
        %v2136 = vld [vmem:[%s638 + $0xa4] sm:$0xff]
        %v2137 = vld [vmem:[%s638 + $0xac] sm:$0xff]
        %v2138 = vld [vmem:[%s638 + $0xb4] sm:$0xff]
        %v2139 = vld [vmem:[%s638 + $0xbc] sm:$0xff]
        %v2140 = vld [vmem:[%s638 + $0xc4] sm:$0xff]
        %v2141 = vld [vmem:[%s638 + $0xcc] sm:$0xff]
        %v2142 = vld [vmem:[%s638 + $0xd4] sm:$0xff]
        %v2143 = vld [vmem:[%s638 + $0xdc] sm:$0xff]
        %v2144 = vld [vmem:[%s638 + $0xe4] sm:$0xff]
        %v2145 = vld [vmem:[%s638 + $0xec] sm:$0xff]
        %v2146 = vld [vmem:[%s638 + $0xf4] sm:$0xff]
        %v2147 = vld [vmem:[%s638 + $0xfc] sm:$0xff]
        %v2148 = vld [vmem:[%s638 + $0x104] sm:$0xff]
        %v2149 = vld [vmem:[%s638 + $0x10c] sm:$0xff]
        %v2150 = vld [vmem:[%s638 + $0x114] sm:$0xff]
        %v2151 = vld [vmem:[%s638 + $0x11c] sm:$0xff]
        %v2152 = vld [vmem:[%s638 + $0x124] sm:$0xff]
        %v2153 = vld [vmem:[%s638 + $0x12c] sm:$0x3f]
        %s2154 = scalar_lea.vmem %s1, 5
        %v2155 = vld [vmem:[%s2154] sm:$0x1]
        %2157 = vset.pattern.permute.xlu0 0
        %2158 = vperm.xlu0 %2157, %v2118
        %v2159 = vpop.permute.xlu0 %2158
        %2162 = vset.pattern.permute.xlu0 0
        %2163 = vperm.xlu0 %2162, %v2119
        %v2164 = vpop.permute.xlu0 %2163
        %2167 = vset.pattern.permute.xlu0 0
        %2168 = vperm.xlu0 %2167, %v2120
        %v2169 = vpop.permute.xlu0 %2168
        %2172 = vset.pattern.permute.xlu0 0
        %2173 = vperm.xlu0 %2172, %v2121
        %v2174 = vpop.permute.xlu0 %2173
        %2177 = vset.pattern.permute.xlu0 0
        %2178 = vperm.xlu0 %2177, %v2122
        %v2179 = vpop.permute.xlu0 %2178
        %2182 = vset.pattern.permute.xlu0 0
        %2183 = vperm.xlu0 %2182, %v2123
        %v2184 = vpop.permute.xlu0 %2183
        %2187 = vset.pattern.permute.xlu0 0
        %2188 = vperm.xlu0 %2187, %v2124
        %v2189 = vpop.permute.xlu0 %2188
        %2192 = vset.pattern.permute.xlu0 0
        %2193 = vperm.xlu0 %2192, %v2125
        %v2194 = vpop.permute.xlu0 %2193
        %2197 = vset.pattern.permute.xlu0 0
        %2198 = vperm.xlu0 %2197, %v2126
        %v2199 = vpop.permute.xlu0 %2198
        %2202 = vset.pattern.permute.xlu0 0
        %2203 = vperm.xlu0 %2202, %v2127
        %v2204 = vpop.permute.xlu0 %2203
        %2207 = vset.pattern.permute.xlu0 0
        %2208 = vperm.xlu0 %2207, %v2128
        %v2209 = vpop.permute.xlu0 %2208
        %2212 = vset.pattern.permute.xlu0 0
        %2213 = vperm.xlu0 %2212, %v2129
        %v2214 = vpop.permute.xlu0 %2213
        %2217 = vset.pattern.permute.xlu0 0
        %2218 = vperm.xlu0 %2217, %v2130
        %v2219 = vpop.permute.xlu0 %2218
        %2222 = vset.pattern.permute.xlu0 0
        %2223 = vperm.xlu0 %2222, %v2131
        %v2224 = vpop.permute.xlu0 %2223
        %2227 = vset.pattern.permute.xlu0 0
        %2228 = vperm.xlu0 %2227, %v2132
        %v2229 = vpop.permute.xlu0 %2228
        %2232 = vset.pattern.permute.xlu0 0
        %2233 = vperm.xlu0 %2232, %v2133
        %v2234 = vpop.permute.xlu0 %2233
        %2237 = vset.pattern.permute.xlu0 0
        %2238 = vperm.xlu0 %2237, %v2134
        %v2239 = vpop.permute.xlu0 %2238
        %2242 = vset.pattern.permute.xlu0 0
        %2243 = vperm.xlu0 %2242, %v2135
        %v2244 = vpop.permute.xlu0 %2243
        %2247 = vset.pattern.permute.xlu0 0
        %2248 = vperm.xlu0 %2247, %v2136
        %v2249 = vpop.permute.xlu0 %2248
        %2252 = vset.pattern.permute.xlu0 0
        %2253 = vperm.xlu0 %2252, %v2137
        %v2254 = vpop.permute.xlu0 %2253
        %2257 = vset.pattern.permute.xlu0 0
        %2258 = vperm.xlu0 %2257, %v2138
        %v2259 = vpop.permute.xlu0 %2258
        %2262 = vset.pattern.permute.xlu0 0
        %2263 = vperm.xlu0 %2262, %v2139
        %v2264 = vpop.permute.xlu0 %2263
        %2267 = vset.pattern.permute.xlu0 0
        %2268 = vperm.xlu0 %2267, %v2140
        %v2269 = vpop.permute.xlu0 %2268
        %2272 = vset.pattern.permute.xlu0 0
        %2273 = vperm.xlu0 %2272, %v2141
        %v2274 = vpop.permute.xlu0 %2273
        %2277 = vset.pattern.permute.xlu0 0
        %2278 = vperm.xlu0 %2277, %v2142
        %v2279 = vpop.permute.xlu0 %2278
        %2282 = vset.pattern.permute.xlu0 0
        %2283 = vperm.xlu0 %2282, %v2143
        %v2284 = vpop.permute.xlu0 %2283
        %2287 = vset.pattern.permute.xlu0 0
        %2288 = vperm.xlu0 %2287, %v2144
        %v2289 = vpop.permute.xlu0 %2288
        %2292 = vset.pattern.permute.xlu0 0
        %2293 = vperm.xlu0 %2292, %v2145
        %v2294 = vpop.permute.xlu0 %2293
        %2297 = vset.pattern.permute.xlu0 0
        %2298 = vperm.xlu0 %2297, %v2146
        %v2299 = vpop.permute.xlu0 %2298
        %2302 = vset.pattern.permute.xlu0 0
        %2303 = vperm.xlu0 %2302, %v2147
        %v2304 = vpop.permute.xlu0 %2303
        %2307 = vset.pattern.permute.xlu0 0
        %2308 = vperm.xlu0 %2307, %v2148
        %v2309 = vpop.permute.xlu0 %2308
        %2312 = vset.pattern.permute.xlu0 0
        %2313 = vperm.xlu0 %2312, %v2149
        %v2314 = vpop.permute.xlu0 %2313
        %2317 = vset.pattern.permute.xlu0 0
        %2318 = vperm.xlu0 %2317, %v2150
        %v2319 = vpop.permute.xlu0 %2318
        %2322 = vset.pattern.permute.xlu0 0
        %2323 = vperm.xlu0 %2322, %v2151
        %v2324 = vpop.permute.xlu0 %2323
        %2327 = vset.pattern.permute.xlu0 0
        %2328 = vperm.xlu0 %2327, %v2152
        %v2329 = vpop.permute.xlu0 %2328
        %2332 = vset.pattern.permute.xlu0 0
        %2333 = vperm.xlu0 %2332, %v2153
        %v2334 = vpop.permute.xlu0 %2333
        %v2337 = vlaneseq
        %v2338 = vshrl.u32 %v2337, 7
        %v2339 = vsub.s32 0, %v2338
        %v2340 = vrot.slane %v2155, %v2339
        %v2342 = vmul.f32 %v2159, %v2340
        %v2343 = vmul.f32 %v2164, %v2340
        %v2344 = vmul.f32 %v2169, %v2340
        %v2345 = vmul.f32 %v2174, %v2340
        %v2346 = vmul.f32 %v2179, %v2340
        %v2347 = vmul.f32 %v2184, %v2340
        %v2348 = vmul.f32 %v2189, %v2340
        %v2349 = vmul.f32 %v2194, %v2340
        %v2350 = vmul.f32 %v2199, %v2340
        %v2351 = vmul.f32 %v2204, %v2340
        %v2352 = vmul.f32 %v2209, %v2340
        %v2353 = vmul.f32 %v2214, %v2340
        %v2354 = vmul.f32 %v2219, %v2340
        %v2355 = vmul.f32 %v2224, %v2340
        %v2356 = vmul.f32 %v2229, %v2340
        %v2357 = vmul.f32 %v2234, %v2340
        %v2358 = vmul.f32 %v2239, %v2340
        %v2359 = vmul.f32 %v2244, %v2340
        %v2360 = vmul.f32 %v2249, %v2340
        %v2361 = vmul.f32 %v2254, %v2340
        %v2362 = vmul.f32 %v2259, %v2340
        %v2363 = vmul.f32 %v2264, %v2340
        %v2364 = vmul.f32 %v2269, %v2340
        %v2365 = vmul.f32 %v2274, %v2340
        %v2366 = vmul.f32 %v2279, %v2340
        %v2367 = vmul.f32 %v2284, %v2340
        %v2368 = vmul.f32 %v2289, %v2340
        %v2369 = vmul.f32 %v2294, %v2340
        %v2370 = vmul.f32 %v2299, %v2340
        %v2371 = vmul.f32 %v2304, %v2340
        %v2372 = vmul.f32 %v2309, %v2340
        %v2373 = vmul.f32 %v2314, %v2340
        %v2374 = vmul.f32 %v2319, %v2340
        %v2375 = vmul.f32 %v2324, %v2340
        %v2376 = vmul.f32 %v2329, %v2340
        %v2377 = vmul.f32 %v2334, %v2340
        %v2378 = vadd.f32 %v2082, %v2342
        %v2379 = vadd.f32 %v2083, %v2343
        %v2380 = vadd.f32 %v2084, %v2344
        %v2381 = vadd.f32 %v2085, %v2345
        %v2382 = vadd.f32 %v2086, %v2346
        %v2383 = vadd.f32 %v2087, %v2347
        %v2384 = vadd.f32 %v2088, %v2348
        %v2385 = vadd.f32 %v2089, %v2349
        %v2386 = vadd.f32 %v2090, %v2350
        %v2387 = vadd.f32 %v2091, %v2351
        %v2388 = vadd.f32 %v2092, %v2352
        %v2389 = vadd.f32 %v2093, %v2353
        %v2390 = vadd.f32 %v2094, %v2354
        %v2391 = vadd.f32 %v2095, %v2355
        %v2392 = vadd.f32 %v2096, %v2356
        %v2393 = vadd.f32 %v2097, %v2357
        %v2394 = vadd.f32 %v2098, %v2358
        %v2395 = vadd.f32 %v2099, %v2359
        %v2396 = vadd.f32 %v2100, %v2360
        %v2397 = vadd.f32 %v2101, %v2361
        %v2398 = vadd.f32 %v2102, %v2362
        %v2399 = vadd.f32 %v2103, %v2363
        %v2400 = vadd.f32 %v2104, %v2364
        %v2401 = vadd.f32 %v2105, %v2365
        %v2402 = vadd.f32 %v2106, %v2366
        %v2403 = vadd.f32 %v2107, %v2367
        %v2404 = vadd.f32 %v2108, %v2368
        %v2405 = vadd.f32 %v2109, %v2369
        %v2406 = vadd.f32 %v2110, %v2370
        %v2407 = vadd.f32 %v2111, %v2371
        %v2408 = vadd.f32 %v2112, %v2372
        %v2409 = vadd.f32 %v2113, %v2373
        %v2410 = vadd.f32 %v2114, %v2374
        %v2411 = vadd.f32 %v2115, %v2375
        %v2412 = vadd.f32 %v2116, %v2376
        %v2413 = vadd.f32 %v2117, %v2377
        %v2414 = vld [vmem:[%s638 + $0x24] sm:$0xff]
        %v2415 = vld [vmem:[%s638 + $0x2c] sm:$0xff]
        %v2416 = vld [vmem:[%s638 + $0x34] sm:$0xff]
        %v2417 = vld [vmem:[%s638 + $0x3c] sm:$0xff]
        %v2418 = vld [vmem:[%s638 + $0x44] sm:$0xff]
        %v2419 = vld [vmem:[%s638 + $0x4c] sm:$0xff]
        %v2420 = vld [vmem:[%s638 + $0x54] sm:$0xff]
        %v2421 = vld [vmem:[%s638 + $0x5c] sm:$0xff]
        %v2422 = vld [vmem:[%s638 + $0x64] sm:$0xff]
        %v2423 = vld [vmem:[%s638 + $0x6c] sm:$0xff]
        %v2424 = vld [vmem:[%s638 + $0x74] sm:$0xff]
        %v2425 = vld [vmem:[%s638 + $0x7c] sm:$0xff]
        %v2426 = vld [vmem:[%s638 + $0x84] sm:$0xff]
        %v2427 = vld [vmem:[%s638 + $0x8c] sm:$0xff]
        %v2428 = vld [vmem:[%s638 + $0x94] sm:$0xff]
        %v2429 = vld [vmem:[%s638 + $0x9c] sm:$0xff]
        %v2430 = vld [vmem:[%s638 + $0xa4] sm:$0xff]
        %v2431 = vld [vmem:[%s638 + $0xac] sm:$0xff]
        %v2432 = vld [vmem:[%s638 + $0xb4] sm:$0xff]
        %v2433 = vld [vmem:[%s638 + $0xbc] sm:$0xff]
        %v2434 = vld [vmem:[%s638 + $0xc4] sm:$0xff]
        %v2435 = vld [vmem:[%s638 + $0xcc] sm:$0xff]
        %v2436 = vld [vmem:[%s638 + $0xd4] sm:$0xff]
        %v2437 = vld [vmem:[%s638 + $0xdc] sm:$0xff]
        %v2438 = vld [vmem:[%s638 + $0xe4] sm:$0xff]
        %v2439 = vld [vmem:[%s638 + $0xec] sm:$0xff]
        %v2440 = vld [vmem:[%s638 + $0xf4] sm:$0xff]
        %v2441 = vld [vmem:[%s638 + $0xfc] sm:$0xff]
        %v2442 = vld [vmem:[%s638 + $0x104] sm:$0xff]
        %v2443 = vld [vmem:[%s638 + $0x10c] sm:$0xff]
        %v2444 = vld [vmem:[%s638 + $0x114] sm:$0xff]
        %v2445 = vld [vmem:[%s638 + $0x11c] sm:$0xff]
        %v2446 = vld [vmem:[%s638 + $0x124] sm:$0xff]
        %v2447 = vld [vmem:[%s638 + $0x12c] sm:$0xff]
        %v2448 = vld [vmem:[%s638 + $0x134] sm:$0xff]
        %v2449 = vld [vmem:[%s638 + $0x13c] sm:$0x3f]
        %s2450 = scalar_lea.vmem %s1, 6
        %v2451 = vld [vmem:[%s2450] sm:$0x1]
        %2453 = vset.pattern.permute.xlu0 0
        %2454 = vperm.xlu0 %2453, %v2414
        %v2455 = vpop.permute.xlu0 %2454
        %2458 = vset.pattern.permute.xlu0 0
        %2459 = vperm.xlu0 %2458, %v2415
        %v2460 = vpop.permute.xlu0 %2459
        %2463 = vset.pattern.permute.xlu0 0
        %2464 = vperm.xlu0 %2463, %v2416
        %v2465 = vpop.permute.xlu0 %2464
        %2468 = vset.pattern.permute.xlu0 0
        %2469 = vperm.xlu0 %2468, %v2417
        %v2470 = vpop.permute.xlu0 %2469
        %2473 = vset.pattern.permute.xlu0 0
        %2474 = vperm.xlu0 %2473, %v2418
        %v2475 = vpop.permute.xlu0 %2474
        %2478 = vset.pattern.permute.xlu0 0
        %2479 = vperm.xlu0 %2478, %v2419
        %v2480 = vpop.permute.xlu0 %2479
        %2483 = vset.pattern.permute.xlu0 0
        %2484 = vperm.xlu0 %2483, %v2420
        %v2485 = vpop.permute.xlu0 %2484
        %2488 = vset.pattern.permute.xlu0 0
        %2489 = vperm.xlu0 %2488, %v2421
        %v2490 = vpop.permute.xlu0 %2489
        %2493 = vset.pattern.permute.xlu0 0
        %2494 = vperm.xlu0 %2493, %v2422
        %v2495 = vpop.permute.xlu0 %2494
        %2498 = vset.pattern.permute.xlu0 0
        %2499 = vperm.xlu0 %2498, %v2423
        %v2500 = vpop.permute.xlu0 %2499
        %2503 = vset.pattern.permute.xlu0 0
        %2504 = vperm.xlu0 %2503, %v2424
        %v2505 = vpop.permute.xlu0 %2504
        %2508 = vset.pattern.permute.xlu0 0
        %2509 = vperm.xlu0 %2508, %v2425
        %v2510 = vpop.permute.xlu0 %2509
        %2513 = vset.pattern.permute.xlu0 0
        %2514 = vperm.xlu0 %2513, %v2426
        %v2515 = vpop.permute.xlu0 %2514
        %2518 = vset.pattern.permute.xlu0 0
        %2519 = vperm.xlu0 %2518, %v2427
        %v2520 = vpop.permute.xlu0 %2519
        %2523 = vset.pattern.permute.xlu0 0
        %2524 = vperm.xlu0 %2523, %v2428
        %v2525 = vpop.permute.xlu0 %2524
        %2528 = vset.pattern.permute.xlu0 0
        %2529 = vperm.xlu0 %2528, %v2429
        %v2530 = vpop.permute.xlu0 %2529
        %2533 = vset.pattern.permute.xlu0 0
        %2534 = vperm.xlu0 %2533, %v2430
        %v2535 = vpop.permute.xlu0 %2534
        %2538 = vset.pattern.permute.xlu0 0
        %2539 = vperm.xlu0 %2538, %v2431
        %v2540 = vpop.permute.xlu0 %2539
        %2543 = vset.pattern.permute.xlu0 0
        %2544 = vperm.xlu0 %2543, %v2432
        %v2545 = vpop.permute.xlu0 %2544
        %2548 = vset.pattern.permute.xlu0 0
        %2549 = vperm.xlu0 %2548, %v2433
        %v2550 = vpop.permute.xlu0 %2549
        %2553 = vset.pattern.permute.xlu0 0
        %2554 = vperm.xlu0 %2553, %v2434
        %v2555 = vpop.permute.xlu0 %2554
        %2558 = vset.pattern.permute.xlu0 0
        %2559 = vperm.xlu0 %2558, %v2435
        %v2560 = vpop.permute.xlu0 %2559
        %2563 = vset.pattern.permute.xlu0 0
        %2564 = vperm.xlu0 %2563, %v2436
        %v2565 = vpop.permute.xlu0 %2564
        %2568 = vset.pattern.permute.xlu0 0
        %2569 = vperm.xlu0 %2568, %v2437
        %v2570 = vpop.permute.xlu0 %2569
        %2573 = vset.pattern.permute.xlu0 0
        %2574 = vperm.xlu0 %2573, %v2438
        %v2575 = vpop.permute.xlu0 %2574
        %2578 = vset.pattern.permute.xlu0 0
        %2579 = vperm.xlu0 %2578, %v2439
        %v2580 = vpop.permute.xlu0 %2579
        %2583 = vset.pattern.permute.xlu0 0
        %2584 = vperm.xlu0 %2583, %v2440
        %v2585 = vpop.permute.xlu0 %2584
        %2588 = vset.pattern.permute.xlu0 0
        %2589 = vperm.xlu0 %2588, %v2441
        %v2590 = vpop.permute.xlu0 %2589
        %2593 = vset.pattern.permute.xlu0 0
        %2594 = vperm.xlu0 %2593, %v2442
        %v2595 = vpop.permute.xlu0 %2594
        %2598 = vset.pattern.permute.xlu0 0
        %2599 = vperm.xlu0 %2598, %v2443
        %v2600 = vpop.permute.xlu0 %2599
        %2603 = vset.pattern.permute.xlu0 0
        %2604 = vperm.xlu0 %2603, %v2444
        %v2605 = vpop.permute.xlu0 %2604
        %2608 = vset.pattern.permute.xlu0 0
        %2609 = vperm.xlu0 %2608, %v2445
        %v2610 = vpop.permute.xlu0 %2609
        %2613 = vset.pattern.permute.xlu0 0
        %2614 = vperm.xlu0 %2613, %v2446
        %v2615 = vpop.permute.xlu0 %2614
        %2618 = vset.pattern.permute.xlu0 0
        %2619 = vperm.xlu0 %2618, %v2447
        %v2620 = vpop.permute.xlu0 %2619
        %2623 = vset.pattern.permute.xlu0 0
        %2624 = vperm.xlu0 %2623, %v2448
        %v2625 = vpop.permute.xlu0 %2624
        %2628 = vset.pattern.permute.xlu0 0
        %2629 = vperm.xlu0 %2628, %v2449
        %v2630 = vpop.permute.xlu0 %2629
        %v2633 = vlaneseq
        %v2634 = vshrl.u32 %v2633, 7
        %v2635 = vsub.s32 0, %v2634
        %v2636 = vrot.slane %v2451, %v2635
        %v2638 = vmul.f32 %v2455, %v2636
        %v2639 = vmul.f32 %v2460, %v2636
        %v2640 = vmul.f32 %v2465, %v2636
        %v2641 = vmul.f32 %v2470, %v2636
        %v2642 = vmul.f32 %v2475, %v2636
        %v2643 = vmul.f32 %v2480, %v2636
        %v2644 = vmul.f32 %v2485, %v2636
        %v2645 = vmul.f32 %v2490, %v2636
        %v2646 = vmul.f32 %v2495, %v2636
        %v2647 = vmul.f32 %v2500, %v2636
        %v2648 = vmul.f32 %v2505, %v2636
        %v2649 = vmul.f32 %v2510, %v2636
        %v2650 = vmul.f32 %v2515, %v2636
        %v2651 = vmul.f32 %v2520, %v2636
        %v2652 = vmul.f32 %v2525, %v2636
        %v2653 = vmul.f32 %v2530, %v2636
        %v2654 = vmul.f32 %v2535, %v2636
        %v2655 = vmul.f32 %v2540, %v2636
        %v2656 = vmul.f32 %v2545, %v2636
        %v2657 = vmul.f32 %v2550, %v2636
        %v2658 = vmul.f32 %v2555, %v2636
        %v2659 = vmul.f32 %v2560, %v2636
        %v2660 = vmul.f32 %v2565, %v2636
        %v2661 = vmul.f32 %v2570, %v2636
        %v2662 = vmul.f32 %v2575, %v2636
        %v2663 = vmul.f32 %v2580, %v2636
        %v2664 = vmul.f32 %v2585, %v2636
        %v2665 = vmul.f32 %v2590, %v2636
        %v2666 = vmul.f32 %v2595, %v2636
        %v2667 = vmul.f32 %v2600, %v2636
        %v2668 = vmul.f32 %v2605, %v2636
        %v2669 = vmul.f32 %v2610, %v2636
        %v2670 = vmul.f32 %v2615, %v2636
        %v2671 = vmul.f32 %v2620, %v2636
        %v2672 = vmul.f32 %v2625, %v2636
        %v2673 = vmul.f32 %v2630, %v2636
        %v2674 = vadd.f32 %v2378, %v2638
        %v2675 = vadd.f32 %v2379, %v2639
        %v2676 = vadd.f32 %v2380, %v2640
        %v2677 = vadd.f32 %v2381, %v2641
        %v2678 = vadd.f32 %v2382, %v2642
        %v2679 = vadd.f32 %v2383, %v2643
        %v2680 = vadd.f32 %v2384, %v2644
        %v2681 = vadd.f32 %v2385, %v2645
        %v2682 = vadd.f32 %v2386, %v2646
        %v2683 = vadd.f32 %v2387, %v2647
        %v2684 = vadd.f32 %v2388, %v2648
        %v2685 = vadd.f32 %v2389, %v2649
        %v2686 = vadd.f32 %v2390, %v2650
        %v2687 = vadd.f32 %v2391, %v2651
        %v2688 = vadd.f32 %v2392, %v2652
        %v2689 = vadd.f32 %v2393, %v2653
        %v2690 = vadd.f32 %v2394, %v2654
        %v2691 = vadd.f32 %v2395, %v2655
        %v2692 = vadd.f32 %v2396, %v2656
        %v2693 = vadd.f32 %v2397, %v2657
        %v2694 = vadd.f32 %v2398, %v2658
        %v2695 = vadd.f32 %v2399, %v2659
        %v2696 = vadd.f32 %v2400, %v2660
        %v2697 = vadd.f32 %v2401, %v2661
        %v2698 = vadd.f32 %v2402, %v2662
        %v2699 = vadd.f32 %v2403, %v2663
        %v2700 = vadd.f32 %v2404, %v2664
        %v2701 = vadd.f32 %v2405, %v2665
        %v2702 = vadd.f32 %v2406, %v2666
        %v2703 = vadd.f32 %v2407, %v2667
        %v2704 = vadd.f32 %v2408, %v2668
        %v2705 = vadd.f32 %v2409, %v2669
        %v2706 = vadd.f32 %v2410, %v2670
        %v2707 = vadd.f32 %v2411, %v2671
        %v2708 = vadd.f32 %v2412, %v2672
        %v2709 = vadd.f32 %v2413, %v2673
        %v2710 = vld [vmem:[%s638 + $0x25] sm:$0xff]
        %v2711 = vld [vmem:[%s638 + $0x2d] sm:$0xff]
        %v2712 = vld [vmem:[%s638 + $0x35] sm:$0xff]
        %v2713 = vld [vmem:[%s638 + $0x3d] sm:$0xff]
        %v2714 = vld [vmem:[%s638 + $0x45] sm:$0xff]
        %v2715 = vld [vmem:[%s638 + $0x4d] sm:$0xff]
        %v2716 = vld [vmem:[%s638 + $0x55] sm:$0xff]
        %v2717 = vld [vmem:[%s638 + $0x5d] sm:$0xff]
        %v2718 = vld [vmem:[%s638 + $0x65] sm:$0xff]
        %v2719 = vld [vmem:[%s638 + $0x6d] sm:$0xff]
        %v2720 = vld [vmem:[%s638 + $0x75] sm:$0xff]
        %v2721 = vld [vmem:[%s638 + $0x7d] sm:$0xff]
        %v2722 = vld [vmem:[%s638 + $0x85] sm:$0xff]
        %v2723 = vld [vmem:[%s638 + $0x8d] sm:$0xff]
        %v2724 = vld [vmem:[%s638 + $0x95] sm:$0xff]
        %v2725 = vld [vmem:[%s638 + $0x9d] sm:$0xff]
        %v2726 = vld [vmem:[%s638 + $0xa5] sm:$0xff]
        %v2727 = vld [vmem:[%s638 + $0xad] sm:$0xff]
        %v2728 = vld [vmem:[%s638 + $0xb5] sm:$0xff]
        %v2729 = vld [vmem:[%s638 + $0xbd] sm:$0xff]
        %v2730 = vld [vmem:[%s638 + $0xc5] sm:$0xff]
        %v2731 = vld [vmem:[%s638 + $0xcd] sm:$0xff]
        %v2732 = vld [vmem:[%s638 + $0xd5] sm:$0xff]
        %v2733 = vld [vmem:[%s638 + $0xdd] sm:$0xff]
        %v2734 = vld [vmem:[%s638 + $0xe5] sm:$0xff]
        %v2735 = vld [vmem:[%s638 + $0xed] sm:$0xff]
        %v2736 = vld [vmem:[%s638 + $0xf5] sm:$0xff]
        %v2737 = vld [vmem:[%s638 + $0xfd] sm:$0xff]
        %v2738 = vld [vmem:[%s638 + $0x105] sm:$0xff]
        %v2739 = vld [vmem:[%s638 + $0x10d] sm:$0xff]
        %v2740 = vld [vmem:[%s638 + $0x115] sm:$0xff]
        %v2741 = vld [vmem:[%s638 + $0x11d] sm:$0xff]
        %v2742 = vld [vmem:[%s638 + $0x125] sm:$0xff]
        %v2743 = vld [vmem:[%s638 + $0x12d] sm:$0xff]
        %v2744 = vld [vmem:[%s638 + $0x135] sm:$0xff]
        %v2745 = vld [vmem:[%s638 + $0x13d] sm:$0x3f]
        %s2746 = scalar_lea.vmem %s1, 7
        %v2747 = vld [vmem:[%s2746] sm:$0x1]
        %2749 = vset.pattern.permute.xlu0 0
        %2750 = vperm.xlu0 %2749, %v2710
        %v2751 = vpop.permute.xlu0 %2750
        %2754 = vset.pattern.permute.xlu0 0
        %2755 = vperm.xlu0 %2754, %v2711
        %v2756 = vpop.permute.xlu0 %2755
        %2759 = vset.pattern.permute.xlu0 0
        %2760 = vperm.xlu0 %2759, %v2712
        %v2761 = vpop.permute.xlu0 %2760
        %2764 = vset.pattern.permute.xlu0 0
        %2765 = vperm.xlu0 %2764, %v2713
        %v2766 = vpop.permute.xlu0 %2765
        %2769 = vset.pattern.permute.xlu0 0
        %2770 = vperm.xlu0 %2769, %v2714
        %v2771 = vpop.permute.xlu0 %2770
        %2774 = vset.pattern.permute.xlu0 0
        %2775 = vperm.xlu0 %2774, %v2715
        %v2776 = vpop.permute.xlu0 %2775
        %2779 = vset.pattern.permute.xlu0 0
        %2780 = vperm.xlu0 %2779, %v2716
        %v2781 = vpop.permute.xlu0 %2780
        %2784 = vset.pattern.permute.xlu0 0
        %2785 = vperm.xlu0 %2784, %v2717
        %v2786 = vpop.permute.xlu0 %2785
        %2789 = vset.pattern.permute.xlu0 0
        %2790 = vperm.xlu0 %2789, %v2718
        %v2791 = vpop.permute.xlu0 %2790
        %2794 = vset.pattern.permute.xlu0 0
        %2795 = vperm.xlu0 %2794, %v2719
        %v2796 = vpop.permute.xlu0 %2795
        %2799 = vset.pattern.permute.xlu0 0
        %2800 = vperm.xlu0 %2799, %v2720
        %v2801 = vpop.permute.xlu0 %2800
        %2804 = vset.pattern.permute.xlu0 0
        %2805 = vperm.xlu0 %2804, %v2721
        %v2806 = vpop.permute.xlu0 %2805
        %2809 = vset.pattern.permute.xlu0 0
        %2810 = vperm.xlu0 %2809, %v2722
        %v2811 = vpop.permute.xlu0 %2810
        %2814 = vset.pattern.permute.xlu0 0
        %2815 = vperm.xlu0 %2814, %v2723
        %v2816 = vpop.permute.xlu0 %2815
        %2819 = vset.pattern.permute.xlu0 0
        %2820 = vperm.xlu0 %2819, %v2724
        %v2821 = vpop.permute.xlu0 %2820
        %2824 = vset.pattern.permute.xlu0 0
        %2825 = vperm.xlu0 %2824, %v2725
        %v2826 = vpop.permute.xlu0 %2825
        %2829 = vset.pattern.permute.xlu0 0
        %2830 = vperm.xlu0 %2829, %v2726
        %v2831 = vpop.permute.xlu0 %2830
        %2834 = vset.pattern.permute.xlu0 0
        %2835 = vperm.xlu0 %2834, %v2727
        %v2836 = vpop.permute.xlu0 %2835
        %2839 = vset.pattern.permute.xlu0 0
        %2840 = vperm.xlu0 %2839, %v2728
        %v2841 = vpop.permute.xlu0 %2840
        %2844 = vset.pattern.permute.xlu0 0
        %2845 = vperm.xlu0 %2844, %v2729
        %v2846 = vpop.permute.xlu0 %2845
        %2849 = vset.pattern.permute.xlu0 0
        %2850 = vperm.xlu0 %2849, %v2730
        %v2851 = vpop.permute.xlu0 %2850
        %2854 = vset.pattern.permute.xlu0 0
        %2855 = vperm.xlu0 %2854, %v2731
        %v2856 = vpop.permute.xlu0 %2855
        %2859 = vset.pattern.permute.xlu0 0
        %2860 = vperm.xlu0 %2859, %v2732
        %v2861 = vpop.permute.xlu0 %2860
        %2864 = vset.pattern.permute.xlu0 0
        %2865 = vperm.xlu0 %2864, %v2733
        %v2866 = vpop.permute.xlu0 %2865
        %2869 = vset.pattern.permute.xlu0 0
        %2870 = vperm.xlu0 %2869, %v2734
        %v2871 = vpop.permute.xlu0 %2870
        %2874 = vset.pattern.permute.xlu0 0
        %2875 = vperm.xlu0 %2874, %v2735
        %v2876 = vpop.permute.xlu0 %2875
        %2879 = vset.pattern.permute.xlu0 0
        %2880 = vperm.xlu0 %2879, %v2736
        %v2881 = vpop.permute.xlu0 %2880
        %2884 = vset.pattern.permute.xlu0 0
        %2885 = vperm.xlu0 %2884, %v2737
        %v2886 = vpop.permute.xlu0 %2885
        %2889 = vset.pattern.permute.xlu0 0
        %2890 = vperm.xlu0 %2889, %v2738
        %v2891 = vpop.permute.xlu0 %2890
        %2894 = vset.pattern.permute.xlu0 0
        %2895 = vperm.xlu0 %2894, %v2739
        %v2896 = vpop.permute.xlu0 %2895
        %2899 = vset.pattern.permute.xlu0 0
        %2900 = vperm.xlu0 %2899, %v2740
        %v2901 = vpop.permute.xlu0 %2900
        %2904 = vset.pattern.permute.xlu0 0
        %2905 = vperm.xlu0 %2904, %v2741
        %v2906 = vpop.permute.xlu0 %2905
        %2909 = vset.pattern.permute.xlu0 0
        %2910 = vperm.xlu0 %2909, %v2742
        %v2911 = vpop.permute.xlu0 %2910
        %2914 = vset.pattern.permute.xlu0 0
        %2915 = vperm.xlu0 %2914, %v2743
        %v2916 = vpop.permute.xlu0 %2915
        %2919 = vset.pattern.permute.xlu0 0
        %2920 = vperm.xlu0 %2919, %v2744
        %v2921 = vpop.permute.xlu0 %2920
        %2924 = vset.pattern.permute.xlu0 0
        %2925 = vperm.xlu0 %2924, %v2745
        %v2926 = vpop.permute.xlu0 %2925
        %v2929 = vlaneseq
        %v2930 = vshrl.u32 %v2929, 7
        %v2931 = vsub.s32 0, %v2930
        %v2932 = vrot.slane %v2747, %v2931
        %v2934 = vmul.f32 %v2751, %v2932
        %v2935 = vmul.f32 %v2756, %v2932
        %v2936 = vmul.f32 %v2761, %v2932
        %v2937 = vmul.f32 %v2766, %v2932
        %v2938 = vmul.f32 %v2771, %v2932
        %v2939 = vmul.f32 %v2776, %v2932
        %v2940 = vmul.f32 %v2781, %v2932
        %v2941 = vmul.f32 %v2786, %v2932
        %v2942 = vmul.f32 %v2791, %v2932
        %v2943 = vmul.f32 %v2796, %v2932
        %v2944 = vmul.f32 %v2801, %v2932
        %v2945 = vmul.f32 %v2806, %v2932
        %v2946 = vmul.f32 %v2811, %v2932
        %v2947 = vmul.f32 %v2816, %v2932
        %v2948 = vmul.f32 %v2821, %v2932
        %v2949 = vmul.f32 %v2826, %v2932
        %v2950 = vmul.f32 %v2831, %v2932
        %v2951 = vmul.f32 %v2836, %v2932
        %v2952 = vmul.f32 %v2841, %v2932
        %v2953 = vmul.f32 %v2846, %v2932
        %v2954 = vmul.f32 %v2851, %v2932
        %v2955 = vmul.f32 %v2856, %v2932
        %v2956 = vmul.f32 %v2861, %v2932
        %v2957 = vmul.f32 %v2866, %v2932
        %v2958 = vmul.f32 %v2871, %v2932
        %v2959 = vmul.f32 %v2876, %v2932
        %v2960 = vmul.f32 %v2881, %v2932
        %v2961 = vmul.f32 %v2886, %v2932
        %v2962 = vmul.f32 %v2891, %v2932
        %v2963 = vmul.f32 %v2896, %v2932
        %v2964 = vmul.f32 %v2901, %v2932
        %v2965 = vmul.f32 %v2906, %v2932
        %v2966 = vmul.f32 %v2911, %v2932
        %v2967 = vmul.f32 %v2916, %v2932
        %v2968 = vmul.f32 %v2921, %v2932
        %v2969 = vmul.f32 %v2926, %v2932
        %v2970 = vadd.f32 %v2674, %v2934
        %v2971 = vadd.f32 %v2675, %v2935
        %v2972 = vadd.f32 %v2676, %v2936
        %v2973 = vadd.f32 %v2677, %v2937
        %v2974 = vadd.f32 %v2678, %v2938
        %v2975 = vadd.f32 %v2679, %v2939
        %v2976 = vadd.f32 %v2680, %v2940
        %v2977 = vadd.f32 %v2681, %v2941
        %v2978 = vadd.f32 %v2682, %v2942
        %v2979 = vadd.f32 %v2683, %v2943
        %v2980 = vadd.f32 %v2684, %v2944
        %v2981 = vadd.f32 %v2685, %v2945
        %v2982 = vadd.f32 %v2686, %v2946
        %v2983 = vadd.f32 %v2687, %v2947
        %v2984 = vadd.f32 %v2688, %v2948
        %v2985 = vadd.f32 %v2689, %v2949
        %v2986 = vadd.f32 %v2690, %v2950
        %v2987 = vadd.f32 %v2691, %v2951
        %v2988 = vadd.f32 %v2692, %v2952
        %v2989 = vadd.f32 %v2693, %v2953
        %v2990 = vadd.f32 %v2694, %v2954
        %v2991 = vadd.f32 %v2695, %v2955
        %v2992 = vadd.f32 %v2696, %v2956
        %v2993 = vadd.f32 %v2697, %v2957
        %v2994 = vadd.f32 %v2698, %v2958
        %v2995 = vadd.f32 %v2699, %v2959
        %v2996 = vadd.f32 %v2700, %v2960
        %v2997 = vadd.f32 %v2701, %v2961
        %v2998 = vadd.f32 %v2702, %v2962
        %v2999 = vadd.f32 %v2703, %v2963
        %v3000 = vadd.f32 %v2704, %v2964
        %v3001 = vadd.f32 %v2705, %v2965
        %v3002 = vadd.f32 %v2706, %v2966
        %v3003 = vadd.f32 %v2707, %v2967
        %v3004 = vadd.f32 %v2708, %v2968
        %v3005 = vadd.f32 %v2709, %v2969
        %v3006 = vld [vmem:[%s638 + $0x26] sm:$0xff]
        %v3007 = vld [vmem:[%s638 + $0x2e] sm:$0xff]
        %v3008 = vld [vmem:[%s638 + $0x36] sm:$0xff]
        %v3009 = vld [vmem:[%s638 + $0x3e] sm:$0xff]
        %v3010 = vld [vmem:[%s638 + $0x46] sm:$0xff]
        %v3011 = vld [vmem:[%s638 + $0x4e] sm:$0xff]
        %v3012 = vld [vmem:[%s638 + $0x56] sm:$0xff]
        %v3013 = vld [vmem:[%s638 + $0x5e] sm:$0xff]
        %v3014 = vld [vmem:[%s638 + $0x66] sm:$0xff]
        %v3015 = vld [vmem:[%s638 + $0x6e] sm:$0xff]
        %v3016 = vld [vmem:[%s638 + $0x76] sm:$0xff]
        %v3017 = vld [vmem:[%s638 + $0x7e] sm:$0xff]
        %v3018 = vld [vmem:[%s638 + $0x86] sm:$0xff]
        %v3019 = vld [vmem:[%s638 + $0x8e] sm:$0xff]
        %v3020 = vld [vmem:[%s638 + $0x96] sm:$0xff]
        %v3021 = vld [vmem:[%s638 + $0x9e] sm:$0xff]
        %v3022 = vld [vmem:[%s638 + $0xa6] sm:$0xff]
        %v3023 = vld [vmem:[%s638 + $0xae] sm:$0xff]
        %v3024 = vld [vmem:[%s638 + $0xb6] sm:$0xff]
        %v3025 = vld [vmem:[%s638 + $0xbe] sm:$0xff]
        %v3026 = vld [vmem:[%s638 + $0xc6] sm:$0xff]
        %v3027 = vld [vmem:[%s638 + $0xce] sm:$0xff]
        %v3028 = vld [vmem:[%s638 + $0xd6] sm:$0xff]
        %v3029 = vld [vmem:[%s638 + $0xde] sm:$0xff]
        %v3030 = vld [vmem:[%s638 + $0xe6] sm:$0xff]
        %v3031 = vld [vmem:[%s638 + $0xee] sm:$0xff]
        %v3032 = vld [vmem:[%s638 + $0xf6] sm:$0xff]
        %v3033 = vld [vmem:[%s638 + $0xfe] sm:$0xff]
        %v3034 = vld [vmem:[%s638 + $0x106] sm:$0xff]
        %v3035 = vld [vmem:[%s638 + $0x10e] sm:$0xff]
        %v3036 = vld [vmem:[%s638 + $0x116] sm:$0xff]
        %v3037 = vld [vmem:[%s638 + $0x11e] sm:$0xff]
        %v3038 = vld [vmem:[%s638 + $0x126] sm:$0xff]
        %v3039 = vld [vmem:[%s638 + $0x12e] sm:$0xff]
        %v3040 = vld [vmem:[%s638 + $0x136] sm:$0xff]
        %v3041 = vld [vmem:[%s638 + $0x13e] sm:$0x3f]
        %s3042 = scalar_lea.vmem %s1, 8
        %v3043 = vld [vmem:[%s3042] sm:$0x1]
        %3045 = vset.pattern.permute.xlu0 0
        %3046 = vperm.xlu0 %3045, %v3006
        %v3047 = vpop.permute.xlu0 %3046
        %3050 = vset.pattern.permute.xlu0 0
        %3051 = vperm.xlu0 %3050, %v3007
        %v3052 = vpop.permute.xlu0 %3051
        %3055 = vset.pattern.permute.xlu0 0
        %3056 = vperm.xlu0 %3055, %v3008
        %v3057 = vpop.permute.xlu0 %3056
        %3060 = vset.pattern.permute.xlu0 0
        %3061 = vperm.xlu0 %3060, %v3009
        %v3062 = vpop.permute.xlu0 %3061
        %3065 = vset.pattern.permute.xlu0 0
        %3066 = vperm.xlu0 %3065, %v3010
        %v3067 = vpop.permute.xlu0 %3066
        %3070 = vset.pattern.permute.xlu0 0
        %3071 = vperm.xlu0 %3070, %v3011
        %v3072 = vpop.permute.xlu0 %3071
        %3075 = vset.pattern.permute.xlu0 0
        %3076 = vperm.xlu0 %3075, %v3012
        %v3077 = vpop.permute.xlu0 %3076
        %3080 = vset.pattern.permute.xlu0 0
        %3081 = vperm.xlu0 %3080, %v3013
        %v3082 = vpop.permute.xlu0 %3081
        %3085 = vset.pattern.permute.xlu0 0
        %3086 = vperm.xlu0 %3085, %v3014
        %v3087 = vpop.permute.xlu0 %3086
        %3090 = vset.pattern.permute.xlu0 0
        %3091 = vperm.xlu0 %3090, %v3015
        %v3092 = vpop.permute.xlu0 %3091
        %3095 = vset.pattern.permute.xlu0 0
        %3096 = vperm.xlu0 %3095, %v3016
        %v3097 = vpop.permute.xlu0 %3096
        %3100 = vset.pattern.permute.xlu0 0
        %3101 = vperm.xlu0 %3100, %v3017
        %v3102 = vpop.permute.xlu0 %3101
        %3105 = vset.pattern.permute.xlu0 0
        %3106 = vperm.xlu0 %3105, %v3018
        %v3107 = vpop.permute.xlu0 %3106
        %3110 = vset.pattern.permute.xlu0 0
        %3111 = vperm.xlu0 %3110, %v3019
        %v3112 = vpop.permute.xlu0 %3111
        %3115 = vset.pattern.permute.xlu0 0
        %3116 = vperm.xlu0 %3115, %v3020
        %v3117 = vpop.permute.xlu0 %3116
        %3120 = vset.pattern.permute.xlu0 0
        %3121 = vperm.xlu0 %3120, %v3021
        %v3122 = vpop.permute.xlu0 %3121
        %3125 = vset.pattern.permute.xlu0 0
        %3126 = vperm.xlu0 %3125, %v3022
        %v3127 = vpop.permute.xlu0 %3126
        %3130 = vset.pattern.permute.xlu0 0
        %3131 = vperm.xlu0 %3130, %v3023
        %v3132 = vpop.permute.xlu0 %3131
        %3135 = vset.pattern.permute.xlu0 0
        %3136 = vperm.xlu0 %3135, %v3024
        %v3137 = vpop.permute.xlu0 %3136
        %3140 = vset.pattern.permute.xlu0 0
        %3141 = vperm.xlu0 %3140, %v3025
        %v3142 = vpop.permute.xlu0 %3141
        %3145 = vset.pattern.permute.xlu0 0
        %3146 = vperm.xlu0 %3145, %v3026
        %v3147 = vpop.permute.xlu0 %3146
        %3150 = vset.pattern.permute.xlu0 0
        %3151 = vperm.xlu0 %3150, %v3027
        %v3152 = vpop.permute.xlu0 %3151
        %3155 = vset.pattern.permute.xlu0 0
        %3156 = vperm.xlu0 %3155, %v3028
        %v3157 = vpop.permute.xlu0 %3156
        %3160 = vset.pattern.permute.xlu0 0
        %3161 = vperm.xlu0 %3160, %v3029
        %v3162 = vpop.permute.xlu0 %3161
        %3165 = vset.pattern.permute.xlu0 0
        %3166 = vperm.xlu0 %3165, %v3030
        %v3167 = vpop.permute.xlu0 %3166
        %3170 = vset.pattern.permute.xlu0 0
        %3171 = vperm.xlu0 %3170, %v3031
        %v3172 = vpop.permute.xlu0 %3171
        %3175 = vset.pattern.permute.xlu0 0
        %3176 = vperm.xlu0 %3175, %v3032
        %v3177 = vpop.permute.xlu0 %3176
        %3180 = vset.pattern.permute.xlu0 0
        %3181 = vperm.xlu0 %3180, %v3033
        %v3182 = vpop.permute.xlu0 %3181
        %3185 = vset.pattern.permute.xlu0 0
        %3186 = vperm.xlu0 %3185, %v3034
        %v3187 = vpop.permute.xlu0 %3186
        %3190 = vset.pattern.permute.xlu0 0
        %3191 = vperm.xlu0 %3190, %v3035
        %v3192 = vpop.permute.xlu0 %3191
        %3195 = vset.pattern.permute.xlu0 0
        %3196 = vperm.xlu0 %3195, %v3036
        %v3197 = vpop.permute.xlu0 %3196
        %3200 = vset.pattern.permute.xlu0 0
        %3201 = vperm.xlu0 %3200, %v3037
        %v3202 = vpop.permute.xlu0 %3201
        %3205 = vset.pattern.permute.xlu0 0
        %3206 = vperm.xlu0 %3205, %v3038
        %v3207 = vpop.permute.xlu0 %3206
        %3210 = vset.pattern.permute.xlu0 0
        %3211 = vperm.xlu0 %3210, %v3039
        %v3212 = vpop.permute.xlu0 %3211
        %3215 = vset.pattern.permute.xlu0 0
        %3216 = vperm.xlu0 %3215, %v3040
        %v3217 = vpop.permute.xlu0 %3216
        %3220 = vset.pattern.permute.xlu0 0
        %3221 = vperm.xlu0 %3220, %v3041
        %v3222 = vpop.permute.xlu0 %3221
        %v3225 = vlaneseq
        %v3226 = vshrl.u32 %v3225, 7
        %v3227 = vsub.s32 0, %v3226
        %v3228 = vrot.slane %v3043, %v3227
        %v3230 = vmul.f32 %v3047, %v3228
        %v3231 = vmul.f32 %v3052, %v3228
        %v3232 = vmul.f32 %v3057, %v3228
        %v3233 = vmul.f32 %v3062, %v3228
        %v3234 = vmul.f32 %v3067, %v3228
        %v3235 = vmul.f32 %v3072, %v3228
        %v3236 = vmul.f32 %v3077, %v3228
        %v3237 = vmul.f32 %v3082, %v3228
        %v3238 = vmul.f32 %v3087, %v3228
        %v3239 = vmul.f32 %v3092, %v3228
        %v3240 = vmul.f32 %v3097, %v3228
        %v3241 = vmul.f32 %v3102, %v3228
        %v3242 = vmul.f32 %v3107, %v3228
        %v3243 = vmul.f32 %v3112, %v3228
        %v3244 = vmul.f32 %v3117, %v3228
        %v3245 = vmul.f32 %v3122, %v3228
        %v3246 = vmul.f32 %v3127, %v3228
        %v3247 = vmul.f32 %v3132, %v3228
        %v3248 = vmul.f32 %v3137, %v3228
        %v3249 = vmul.f32 %v3142, %v3228
        %v3250 = vmul.f32 %v3147, %v3228
        %v3251 = vmul.f32 %v3152, %v3228
        %v3252 = vmul.f32 %v3157, %v3228
        %v3253 = vmul.f32 %v3162, %v3228
        %v3254 = vmul.f32 %v3167, %v3228
        %v3255 = vmul.f32 %v3172, %v3228
        %v3256 = vmul.f32 %v3177, %v3228
        %v3257 = vmul.f32 %v3182, %v3228
        %v3258 = vmul.f32 %v3187, %v3228
        %v3259 = vmul.f32 %v3192, %v3228
        %v3260 = vmul.f32 %v3197, %v3228
        %v3261 = vmul.f32 %v3202, %v3228
        %v3262 = vmul.f32 %v3207, %v3228
        %v3263 = vmul.f32 %v3212, %v3228
        %v3264 = vmul.f32 %v3217, %v3228
        %v3265 = vmul.f32 %v3222, %v3228
        %v3266 = vadd.f32 %v2970, %v3230
        %v3267 = vadd.f32 %v2971, %v3231
        %v3268 = vadd.f32 %v2972, %v3232
        %v3269 = vadd.f32 %v2973, %v3233
        %v3270 = vadd.f32 %v2974, %v3234
        %v3271 = vadd.f32 %v2975, %v3235
        %v3272 = vadd.f32 %v2976, %v3236
        %v3273 = vadd.f32 %v2977, %v3237
        %v3274 = vadd.f32 %v2978, %v3238
        %v3275 = vadd.f32 %v2979, %v3239
        %v3276 = vadd.f32 %v2980, %v3240
        %v3277 = vadd.f32 %v2981, %v3241
        %v3278 = vadd.f32 %v2982, %v3242
        %v3279 = vadd.f32 %v2983, %v3243
        %v3280 = vadd.f32 %v2984, %v3244
        %v3281 = vadd.f32 %v2985, %v3245
        %v3282 = vadd.f32 %v2986, %v3246
        %v3283 = vadd.f32 %v2987, %v3247
        %v3284 = vadd.f32 %v2988, %v3248
        %v3285 = vadd.f32 %v2989, %v3249
        %v3286 = vadd.f32 %v2990, %v3250
        %v3287 = vadd.f32 %v2991, %v3251
        %v3288 = vadd.f32 %v2992, %v3252
        %v3289 = vadd.f32 %v2993, %v3253
        %v3290 = vadd.f32 %v2994, %v3254
        %v3291 = vadd.f32 %v2995, %v3255
        %v3292 = vadd.f32 %v2996, %v3256
        %v3293 = vadd.f32 %v2997, %v3257
        %v3294 = vadd.f32 %v2998, %v3258
        %v3295 = vadd.f32 %v2999, %v3259
        %v3296 = vadd.f32 %v3000, %v3260
        %v3297 = vadd.f32 %v3001, %v3261
        %v3298 = vadd.f32 %v3002, %v3262
        %v3299 = vadd.f32 %v3003, %v3263
        %v3300 = vadd.f32 %v3004, %v3264
        %v3301 = vadd.f32 %v3005, %v3265
        %v3302 = vld [vmem:[%s2] sm:$0x1]
        %v3304 = vlaneseq
        %v3305 = vshrl.u32 %v3304, 7
        %v3306 = vsub.s32 0, %v3305
        %v3307 = vrot.slane %v3302, %v3306
        %v3309 = vadd.f32 %v3266, %v3307
        %v3310 = vadd.f32 %v3267, %v3307
        %v3311 = vadd.f32 %v3268, %v3307
        %v3312 = vadd.f32 %v3269, %v3307
        %v3313 = vadd.f32 %v3270, %v3307
        %v3314 = vadd.f32 %v3271, %v3307
        %v3315 = vadd.f32 %v3272, %v3307
        %v3316 = vadd.f32 %v3273, %v3307
        %v3317 = vadd.f32 %v3274, %v3307
        %v3318 = vadd.f32 %v3275, %v3307
        %v3319 = vadd.f32 %v3276, %v3307
        %v3320 = vadd.f32 %v3277, %v3307
        %v3321 = vadd.f32 %v3278, %v3307
        %v3322 = vadd.f32 %v3279, %v3307
        %v3323 = vadd.f32 %v3280, %v3307
        %v3324 = vadd.f32 %v3281, %v3307
        %v3325 = vadd.f32 %v3282, %v3307
        %v3326 = vadd.f32 %v3283, %v3307
        %v3327 = vadd.f32 %v3284, %v3307
        %v3328 = vadd.f32 %v3285, %v3307
        %v3329 = vadd.f32 %v3286, %v3307
        %v3330 = vadd.f32 %v3287, %v3307
        %v3331 = vadd.f32 %v3288, %v3307
        %v3332 = vadd.f32 %v3289, %v3307
        %v3333 = vadd.f32 %v3290, %v3307
        %v3334 = vadd.f32 %v3291, %v3307
        %v3335 = vadd.f32 %v3292, %v3307
        %v3336 = vadd.f32 %v3293, %v3307
        %v3337 = vadd.f32 %v3294, %v3307
        %v3338 = vadd.f32 %v3295, %v3307
        %v3339 = vadd.f32 %v3296, %v3307
        %v3340 = vadd.f32 %v3297, %v3307
        %v3341 = vadd.f32 %v3298, %v3307
        %v3342 = vadd.f32 %v3299, %v3307
        %v3343 = vadd.f32 %v3300, %v3307
        %v3344 = vadd.f32 %v3301, %v3307
        %s3345 = sld [smem:[#allocation7]]
        %vm3346 = vcmp.ge.f32.partialorder %v3309, 0.0
        %vm3347 = vcmp.ge.f32.partialorder %v3310, 0.0
        %vm3348 = vcmp.ge.f32.partialorder %v3311, 0.0
        %vm3349 = vcmp.ge.f32.partialorder %v3312, 0.0
        %vm3350 = vcmp.ge.f32.partialorder %v3313, 0.0
        %vm3351 = vcmp.ge.f32.partialorder %v3314, 0.0
        %vm3352 = vcmp.ge.f32.partialorder %v3315, 0.0
        %vm3353 = vcmp.ge.f32.partialorder %v3316, 0.0
        %vm3354 = vcmp.ge.f32.partialorder %v3317, 0.0
        %vm3355 = vcmp.ge.f32.partialorder %v3318, 0.0
        %vm3356 = vcmp.ge.f32.partialorder %v3319, 0.0
        %vm3357 = vcmp.ge.f32.partialorder %v3320, 0.0
        %vm3358 = vcmp.ge.f32.partialorder %v3321, 0.0
        %vm3359 = vcmp.ge.f32.partialorder %v3322, 0.0
        %vm3360 = vcmp.ge.f32.partialorder %v3323, 0.0
        %vm3361 = vcmp.ge.f32.partialorder %v3324, 0.0
        %vm3362 = vcmp.ge.f32.partialorder %v3325, 0.0
        %vm3363 = vcmp.ge.f32.partialorder %v3326, 0.0
        %vm3364 = vcmp.ge.f32.partialorder %v3327, 0.0
        %vm3365 = vcmp.ge.f32.partialorder %v3328, 0.0
        %vm3366 = vcmp.ge.f32.partialorder %v3329, 0.0
        %vm3367 = vcmp.ge.f32.partialorder %v3330, 0.0
        %vm3368 = vcmp.ge.f32.partialorder %v3331, 0.0
        %vm3369 = vcmp.ge.f32.partialorder %v3332, 0.0
        %vm3370 = vcmp.ge.f32.partialorder %v3333, 0.0
        %vm3371 = vcmp.ge.f32.partialorder %v3334, 0.0
        %vm3372 = vcmp.ge.f32.partialorder %v3335, 0.0
        %vm3373 = vcmp.ge.f32.partialorder %v3336, 0.0
        %vm3374 = vcmp.ge.f32.partialorder %v3337, 0.0
        %vm3375 = vcmp.ge.f32.partialorder %v3338, 0.0
        %vm3376 = vcmp.ge.f32.partialorder %v3339, 0.0
        %vm3377 = vcmp.ge.f32.partialorder %v3340, 0.0
        %vm3378 = vcmp.ge.f32.partialorder %v3341, 0.0
        %vm3379 = vcmp.ge.f32.partialorder %v3342, 0.0
        %vm3380 = vcmp.ge.f32.partialorder %v3343, 0.0
        %vm3381 = vcmp.ge.f32.partialorder %v3344, 0.0
        %v3382 = vstv %s3345
        %v3383 = vmul.f32 %v3382, %v3309
        %v3384 = vmul.f32 %v3382, %v3310
        %v3385 = vmul.f32 %v3382, %v3311
        %v3386 = vmul.f32 %v3382, %v3312
        %v3387 = vmul.f32 %v3382, %v3313
        %v3388 = vmul.f32 %v3382, %v3314
        %v3389 = vmul.f32 %v3382, %v3315
        %v3390 = vmul.f32 %v3382, %v3316
        %v3391 = vmul.f32 %v3382, %v3317
        %v3392 = vmul.f32 %v3382, %v3318
        %v3393 = vmul.f32 %v3382, %v3319
        %v3394 = vmul.f32 %v3382, %v3320
        %v3395 = vmul.f32 %v3382, %v3321
        %v3396 = vmul.f32 %v3382, %v3322
        %v3397 = vmul.f32 %v3382, %v3323
        %v3398 = vmul.f32 %v3382, %v3324
        %v3399 = vmul.f32 %v3382, %v3325
        %v3400 = vmul.f32 %v3382, %v3326
        %v3401 = vmul.f32 %v3382, %v3327
        %v3402 = vmul.f32 %v3382, %v3328
        %v3403 = vmul.f32 %v3382, %v3329
        %v3404 = vmul.f32 %v3382, %v3330
        %v3405 = vmul.f32 %v3382, %v3331
        %v3406 = vmul.f32 %v3382, %v3332
        %v3407 = vmul.f32 %v3382, %v3333
        %v3408 = vmul.f32 %v3382, %v3334
        %v3409 = vmul.f32 %v3382, %v3335
        %v3410 = vmul.f32 %v3382, %v3336
        %v3411 = vmul.f32 %v3382, %v3337
        %v3412 = vmul.f32 %v3382, %v3338
        %v3413 = vmul.f32 %v3382, %v3339
        %v3414 = vmul.f32 %v3382, %v3340
        %v3415 = vmul.f32 %v3382, %v3341
        %v3416 = vmul.f32 %v3382, %v3342
        %v3417 = vmul.f32 %v3382, %v3343
        %v3418 = vmul.f32 %v3382, %v3344
        %v3419 = vsel %vm3346, %v3309, %v3383
        %v3420 = vsel %vm3347, %v3310, %v3384
        %v3421 = vsel %vm3348, %v3311, %v3385
        %v3422 = vsel %vm3349, %v3312, %v3386
        %v3423 = vsel %vm3350, %v3313, %v3387
        %v3424 = vsel %vm3351, %v3314, %v3388
        %v3425 = vsel %vm3352, %v3315, %v3389
        %v3426 = vsel %vm3353, %v3316, %v3390
        %v3427 = vsel %vm3354, %v3317, %v3391
        %v3428 = vsel %vm3355, %v3318, %v3392
        %v3429 = vsel %vm3356, %v3319, %v3393
        %v3430 = vsel %vm3357, %v3320, %v3394
        %v3431 = vsel %vm3358, %v3321, %v3395
        %v3432 = vsel %vm3359, %v3322, %v3396
        %v3433 = vsel %vm3360, %v3323, %v3397
        %v3434 = vsel %vm3361, %v3324, %v3398
        %v3435 = vsel %vm3362, %v3325, %v3399
        %v3436 = vsel %vm3363, %v3326, %v3400
        %v3437 = vsel %vm3364, %v3327, %v3401
        %v3438 = vsel %vm3365, %v3328, %v3402
        %v3439 = vsel %vm3366, %v3329, %v3403
        %v3440 = vsel %vm3367, %v3330, %v3404
        %v3441 = vsel %vm3368, %v3331, %v3405
        %v3442 = vsel %vm3369, %v3332, %v3406
        %v3443 = vsel %vm3370, %v3333, %v3407
        %v3444 = vsel %vm3371, %v3334, %v3408
        %v3445 = vsel %vm3372, %v3335, %v3409
        %v3446 = vsel %vm3373, %v3336, %v3410
        %v3447 = vsel %vm3374, %v3337, %v3411
        %v3448 = vsel %vm3375, %v3338, %v3412
        %v3449 = vsel %vm3376, %v3339, %v3413
        %v3450 = vsel %vm3377, %v3340, %v3414
        %v3451 = vsel %vm3378, %v3341, %v3415
        %v3452 = vsel %vm3379, %v3342, %v3416
        %v3453 = vsel %vm3380, %v3343, %v3417
        %v3454 = vsel %vm3381, %v3344, %v3418
        %vm3455 = vcmask 261120
        %3456 = vst.msk [vmem:[#allocation2] sm:$0xff] %vm3455, 0.0
        %3457 = vst.msk [vmem:[#allocation2 + $0x8] sm:$0xff] %vm3455, 0.0
        %3458 = vst.msk [vmem:[#allocation2 + $0x10] sm:$0xff] %vm3455, 0.0
        %3459 = vst.msk [vmem:[#allocation2 + $0x18] sm:$0xff] %vm3455, 0.0
        %3460 = vst.msk [vmem:[#allocation2 + $0x20] sm:$0xff] %vm3455, 0.0
        %3461 = vst.msk [vmem:[#allocation2 + $0x28] sm:$0xff] %vm3455, 0.0
        %3462 = vst.msk [vmem:[#allocation2 + $0x30] sm:$0xff] %vm3455, 0.0
        %3463 = vst.msk [vmem:[#allocation2 + $0x38] sm:$0xff] %vm3455, 0.0
        %3464 = vst.msk [vmem:[#allocation2 + $0x40] sm:$0xff] %vm3455, 0.0
        %3465 = vst.msk [vmem:[#allocation2 + $0x48] sm:$0xff] %vm3455, 0.0
        %3466 = vst.msk [vmem:[#allocation2 + $0x50] sm:$0xff] %vm3455, 0.0
        %3467 = vst.msk [vmem:[#allocation2 + $0x58] sm:$0xff] %vm3455, 0.0
        %3468 = vst.msk [vmem:[#allocation2 + $0x60] sm:$0xff] %vm3455, 0.0
        %3469 = vst.msk [vmem:[#allocation2 + $0x68] sm:$0xff] %vm3455, 0.0
        %3470 = vst.msk [vmem:[#allocation2 + $0x70] sm:$0xff] %vm3455, 0.0
        %3471 = vst.msk [vmem:[#allocation2 + $0x78] sm:$0xff] %vm3455, 0.0
        %3472 = vst.msk [vmem:[#allocation2 + $0x80] sm:$0xff] %vm3455, 0.0
        %3473 = vst.msk [vmem:[#allocation2 + $0x88] sm:$0xff] %vm3455, 0.0
        %3474 = vst.msk [vmem:[#allocation2 + $0x90] sm:$0xff] %vm3455, 0.0
        %3475 = vst.msk [vmem:[#allocation2 + $0x98] sm:$0xff] %vm3455, 0.0
        %3476 = vst.msk [vmem:[#allocation2 + $0xa0] sm:$0xff] %vm3455, 0.0
        %3477 = vst.msk [vmem:[#allocation2 + $0xa8] sm:$0xff] %vm3455, 0.0
        %3478 = vst.msk [vmem:[#allocation2 + $0xb0] sm:$0xff] %vm3455, 0.0
        %3479 = vst.msk [vmem:[#allocation2 + $0xb8] sm:$0xff] %vm3455, 0.0
        %3480 = vst.msk [vmem:[#allocation2 + $0xc0] sm:$0xff] %vm3455, 0.0
        %3481 = vst.msk [vmem:[#allocation2 + $0xc8] sm:$0xff] %vm3455, 0.0
        %3482 = vst.msk [vmem:[#allocation2 + $0xd0] sm:$0xff] %vm3455, 0.0
        %3483 = vst.msk [vmem:[#allocation2 + $0xd8] sm:$0xff] %vm3455, 0.0
        %3484 = vst.msk [vmem:[#allocation2 + $0xe0] sm:$0xff] %vm3455, 0.0
        %3485 = vst.msk [vmem:[#allocation2 + $0xe8] sm:$0xff] %vm3455, 0.0
        %3486 = vst.msk [vmem:[#allocation2 + $0xf0] sm:$0xff] %vm3455, 0.0
        %3487 = vst.msk [vmem:[#allocation2 + $0xf8] sm:$0xff] %vm3455, 0.0
        %3488 = vst.msk [vmem:[#allocation2 + $0x100] sm:$0xff] %vm3455, 0.0
        %3489 = vst.msk [vmem:[#allocation2 + $0x108] sm:$0xff] %vm3455, 0.0
        %3490 = vst.msk [vmem:[#allocation2 + $0x110] sm:$0xff] %vm3455, 0.0
        %3491 = vst.msk [vmem:[#allocation2 + $0x118] sm:$0xff] %vm3455, 0.0
        %3492 = vst.msk [vmem:[#allocation2 + $0x120] sm:$0xff] %vm3455, 0.0
        %3493 = vst.msk [vmem:[#allocation2 + $0x128] sm:$0xff] %vm3455, 0.0
        %3494 = vst.msk [vmem:[#allocation2 + $0x130] sm:$0xff] %vm3455, 0.0
        %3495 = vst.msk [vmem:[#allocation2 + $0x138] sm:$0xff] %vm3455, 0.0
        %vm3496 = vcmask 257024
        %3497 = vst.msk [vmem:[#allocation2 + $0x140] sm:$0xf] %vm3496, 0.0
        %3498 = vst.msk [vmem:[#allocation2 + $0x13] sm:$0xff] %vm3455, %v3419
        %3499 = vst.msk [vmem:[#allocation2 + $0x1b] sm:$0xff] %vm3455, %v3420
        %vm3500 = vcmask 261122
        %3501 = vst.msk [vmem:[#allocation2 + $0x23] sm:$0xfc] %vm3500, %v3421
        %3502 = vst.msk [vmem:[#allocation2 + $0x2b] sm:$0xff] %vm3455, %v3422
        %vm3503 = vcmask 254976
        %3504 = vst.msk [vmem:[#allocation2 + $0x33] sm:$0x3] %vm3503, %v3423
        %vm3505 = vcmask 261124
        %3506 = vst.msk [vmem:[#allocation2 + $0x33] sm:$0xf0] %vm3505, %v3423
        %3507 = vst.msk [vmem:[#allocation2 + $0x3b] sm:$0xff] %vm3455, %v3424
        %3508 = vst.msk [vmem:[#allocation2 + $0x43] sm:$0xf] %vm3496, %v3425
        %vm3509 = vcmask 261126
        %3510 = vst.msk [vmem:[#allocation2 + $0x43] sm:$0xc0] %vm3509, %v3425
        %3511 = vst.msk [vmem:[#allocation2 + $0x4b] sm:$0xff] %vm3455, %v3426
        %vm3512 = vcmask 259072
        %3513 = vst.msk [vmem:[#allocation2 + $0x53] sm:$0x3f] %vm3512, %v3427
        %3514 = vst.msk [vmem:[#allocation2 + $0x5b] sm:$0xff] %vm3455, %v3428
        %3515 = vst.msk [vmem:[#allocation2 + $0x63] sm:$0xff] %vm3455, %v3429
        %3516 = vst.msk [vmem:[#allocation2 + $0x6b] sm:$0xfc] %vm3500, %v3430
        %3517 = vst.msk [vmem:[#allocation2 + $0x73] sm:$0xff] %vm3455, %v3431
        %3518 = vst.msk [vmem:[#allocation2 + $0x7b] sm:$0x3] %vm3503, %v3432
        %3519 = vst.msk [vmem:[#allocation2 + $0x7b] sm:$0xf0] %vm3505, %v3432
        %3520 = vst.msk [vmem:[#allocation2 + $0x83] sm:$0xff] %vm3455, %v3433
        %3521 = vst.msk [vmem:[#allocation2 + $0x8b] sm:$0xf] %vm3496, %v3434
        %3522 = vst.msk [vmem:[#allocation2 + $0x8b] sm:$0xc0] %vm3509, %v3434
        %3523 = vst.msk [vmem:[#allocation2 + $0x93] sm:$0xff] %vm3455, %v3435
        %3524 = vst.msk [vmem:[#allocation2 + $0x9b] sm:$0x3f] %vm3512, %v3436
        %3525 = vst.msk [vmem:[#allocation2 + $0xa3] sm:$0xff] %vm3455, %v3437
        %3526 = vst.msk [vmem:[#allocation2 + $0xab] sm:$0xff] %vm3455, %v3438
        %3527 = vst.msk [vmem:[#allocation2 + $0xb3] sm:$0xfc] %vm3500, %v3439
        %3528 = vst.msk [vmem:[#allocation2 + $0xbb] sm:$0xff] %vm3455, %v3440
        %3529 = vst.msk [vmem:[#allocation2 + $0xc3] sm:$0x3] %vm3503, %v3441
        %3530 = vst.msk [vmem:[#allocation2 + $0xc3] sm:$0xf0] %vm3505, %v3441
        %3531 = vst.msk [vmem:[#allocation2 + $0xcb] sm:$0xff] %vm3455, %v3442
        %3532 = vst.msk [vmem:[#allocation2 + $0xd3] sm:$0xf] %vm3496, %v3443
        %3533 = vst.msk [vmem:[#allocation2 + $0xd3] sm:$0xc0] %vm3509, %v3443
        %3534 = vst.msk [vmem:[#allocation2 + $0xdb] sm:$0xff] %vm3455, %v3444
        %3535 = vst.msk [vmem:[#allocation2 + $0xe3] sm:$0x3f] %vm3512, %v3445
        %3536 = vst.msk [vmem:[#allocation2 + $0xeb] sm:$0xff] %vm3455, %v3446
        %3537 = vst.msk [vmem:[#allocation2 + $0xf3] sm:$0xff] %vm3455, %v3447
        %3538 = vst.msk [vmem:[#allocation2 + $0xfb] sm:$0xfc] %vm3500, %v3448
        %3539 = vst.msk [vmem:[#allocation2 + $0x103] sm:$0xff] %vm3455, %v3449
        %3540 = vst.msk [vmem:[#allocation2 + $0x10b] sm:$0x3] %vm3503, %v3450
        %3541 = vst.msk [vmem:[#allocation2 + $0x10b] sm:$0xf0] %vm3505, %v3450
        %3542 = vst.msk [vmem:[#allocation2 + $0x113] sm:$0xff] %vm3455, %v3451
        %3543 = vst.msk [vmem:[#allocation2 + $0x11b] sm:$0xf] %vm3496, %v3452
        %3544 = vst.msk [vmem:[#allocation2 + $0x11b] sm:$0xc0] %vm3509, %v3452
        %3545 = vst.msk [vmem:[#allocation2 + $0x123] sm:$0xff] %vm3455, %v3453
        %3546 = vst.msk [vmem:[#allocation2 + $0x12b] sm:$0x3f] %vm3512, %v3454
        %v3547 = vld [vmem:[#allocation2] ss:$2 sm:$0xff]
        %s3548 = scalar_lea.vmem [#allocation2], 16
        %v3549 = vld [vmem:[%s3548] ss:$2 sm:$0xff]
        %s3550 = scalar_lea.vmem [#allocation2], 32
        %v3551 = vld [vmem:[%s3550] ss:$2 sm:$0xff]
        %s3552 = scalar_lea.vmem [#allocation2], 48
        %v3553 = vld [vmem:[%s3552] ss:$2 sm:$0xff]
        %s3554 = scalar_lea.vmem [#allocation2], 64
        %v3555 = vld [vmem:[%s3554] ss:$2 sm:$0xff]
        %s3556 = scalar_lea.vmem [#allocation2], 80
        %v3557 = vld [vmem:[%s3556] ss:$2 sm:$0xff]
        %s3558 = scalar_lea.vmem [#allocation2], 96
        %v3559 = vld [vmem:[%s3558] ss:$2 sm:$0xff]
        %s3560 = scalar_lea.vmem [#allocation2], 112
        %v3561 = vld [vmem:[%s3560] ss:$2 sm:$0xff]
        %s3562 = scalar_lea.vmem [#allocation2], 128
        %v3563 = vld [vmem:[%s3562] ss:$2 sm:$0xff]
        %s3564 = scalar_lea.vmem [#allocation2], 144
        %v3565 = vld [vmem:[%s3564] ss:$2 sm:$0xff]
        %s3566 = scalar_lea.vmem [#allocation2], 160
        %v3567 = vld [vmem:[%s3566] ss:$2 sm:$0xff]
        %s3568 = scalar_lea.vmem [#allocation2], 176
        %v3569 = vld [vmem:[%s3568] ss:$2 sm:$0xff]
        %s3570 = scalar_lea.vmem [#allocation2], 192
        %v3571 = vld [vmem:[%s3570] ss:$2 sm:$0xff]
        %s3572 = scalar_lea.vmem [#allocation2], 208
        %v3573 = vld [vmem:[%s3572] ss:$2 sm:$0xff]
        %s3574 = scalar_lea.vmem [#allocation2], 224
        %v3575 = vld [vmem:[%s3574] ss:$2 sm:$0xff]
        %s3576 = scalar_lea.vmem [#allocation2], 240
        %v3577 = vld [vmem:[%s3576] ss:$2 sm:$0xff]
        %s3578 = scalar_lea.vmem [#allocation2], 256
        %v3579 = vld [vmem:[%s3578] ss:$2 sm:$0x3f]
        %v3580 = vld [vmem:[%s4] sm:$0xff]
        %v3581 = vld [vmem:[%s4 + $0x8] sm:$0xff]
        %v3582 = vld [vmem:[%s4 + $0x10] sm:$0xff]
        %v3583 = vld [vmem:[%s4 + $0x18] sm:$0xff]
        %s3584 = scalar_lea.vmem [#allocation2], 1
        %v3585 = vld [vmem:[%s3584] ss:$2 sm:$0xff]
        %s3586 = scalar_lea.vmem [#allocation2], 17
        %v3587 = vld [vmem:[%s3586] ss:$2 sm:$0xff]
        %s3588 = scalar_lea.vmem [#allocation2], 33
        %v3589 = vld [vmem:[%s3588] ss:$2 sm:$0xff]
        %s3590 = scalar_lea.vmem [#allocation2], 49
        %v3591 = vld [vmem:[%s3590] ss:$2 sm:$0xff]
        %s3592 = scalar_lea.vmem [#allocation2], 65
        %v3593 = vld [vmem:[%s3592] ss:$2 sm:$0xff]
        %s3594 = scalar_lea.vmem [#allocation2], 81
        %v3595 = vld [vmem:[%s3594] ss:$2 sm:$0xff]
        %s3596 = scalar_lea.vmem [#allocation2], 97
        %v3597 = vld [vmem:[%s3596] ss:$2 sm:$0xff]
        %s3598 = scalar_lea.vmem [#allocation2], 113
        %v3599 = vld [vmem:[%s3598] ss:$2 sm:$0xff]
        %s3600 = scalar_lea.vmem [#allocation2], 129
        %v3601 = vld [vmem:[%s3600] ss:$2 sm:$0xff]
        %s3602 = scalar_lea.vmem [#allocation2], 145
        %v3603 = vld [vmem:[%s3602] ss:$2 sm:$0xff]
        %s3604 = scalar_lea.vmem [#allocation2], 161
        %v3605 = vld [vmem:[%s3604] ss:$2 sm:$0xff]
        %s3606 = scalar_lea.vmem [#allocation2], 177
        %v3607 = vld [vmem:[%s3606] ss:$2 sm:$0xff]
        %s3608 = scalar_lea.vmem [#allocation2], 193
        %v3609 = vld [vmem:[%s3608] ss:$2 sm:$0xff]
        %s3610 = scalar_lea.vmem [#allocation2], 209
        %v3611 = vld [vmem:[%s3610] ss:$2 sm:$0xff]
        %s3612 = scalar_lea.vmem [#allocation2], 225
        %v3613 = vld [vmem:[%s3612] ss:$2 sm:$0xff]
        %s3614 = scalar_lea.vmem [#allocation2], 241
        %v3615 = vld [vmem:[%s3614] ss:$2 sm:$0xff]
        %s3616 = scalar_lea.vmem [#allocation2], 257
        %v3617 = vld [vmem:[%s3616] ss:$2 sm:$0x3f]
        %s3618 = scalar_lea.vmem %s4, 32
        %v3619 = vld [vmem:[%s3618] sm:$0xff]
        %v3620 = vld [vmem:[%s3618 + $0x8] sm:$0xff]
        %v3621 = vld [vmem:[%s3618 + $0x10] sm:$0xff]
        %v3622 = vld [vmem:[%s3618 + $0x18] sm:$0xff]
        %v3624 = vsel %vm3455, %v3585, 0
        %v3627 = vsel %vm3455, %v3587, 0
        %v3630 = vsel %vm3455, %v3589, 0
        %v3633 = vsel %vm3455, %v3591, 0
        %v3636 = vsel %vm3455, %v3593, 0
        %v3639 = vsel %vm3455, %v3595, 0
        %v3642 = vsel %vm3455, %v3597, 0
        %v3645 = vsel %vm3455, %v3599, 0
        %v3648 = vsel %vm3455, %v3601, 0
        %v3651 = vsel %vm3455, %v3603, 0
        %v3654 = vsel %vm3455, %v3605, 0
        %v3657 = vsel %vm3455, %v3607, 0
        %v3660 = vsel %vm3455, %v3609, 0
        %v3663 = vsel %vm3455, %v3611, 0
        %v3666 = vsel %vm3455, %v3613, 0
        %v3669 = vsel %vm3455, %v3615, 0
        %v3672 = vsel %vm3455, %v3617, 0
        %3674 = vmatprep.subr.mxu0 0.0
        %3675 = vmatpush1.msra.mxu0 0.0
        %3676 = vmatprep.subr.mxu0 0.0
        %3677 = vmatpush1.msra.mxu0 0.0
        %3678 = vmatprep.subr.mxu0 0.0
        %3679 = vmatpush1.msra.mxu0 0.0
        %3680 = vmatprep.subr.mxu0 0.0
        %3681 = vmatpush1.msra.mxu0 0.0
        %3682 = vmatprep.subr.mxu0 0.0
        %3683 = vmatpush1.msra.mxu0 0.0
        %3684 = vmatprep.subr.mxu0 0.0
        %3685 = vmatpush1.msra.mxu0 0.0
        %3686 = vmatprep.subr.mxu0 0.0
        %3687 = vmatpush1.msra.mxu0 0.0
        %3688 = vmatprep.subr.mxu0 0.0
        %3689 = vmatpush1.msra.mxu0 0.0
        %3690 = vmatprep.subr.mxu0 0.0
        %3691 = vmatpush1.msra.mxu0 0.0
        %3692 = vmatprep.subr.mxu0 0.0
        %3693 = vmatpush1.msra.mxu0 0.0
        %3694 = vmatprep.subr.mxu0 0.0
        %3695 = vmatpush1.msra.mxu0 0.0
        %3696 = vmatprep.subr.mxu0 0.0
        %3697 = vmatpush1.msra.mxu0 0.0
        %3698 = vmatprep.subr.mxu0 0.0
        %3699 = vmatpush1.msra.mxu0 %v3622
        %3700 = vmatprep.subr.mxu0 0.0
        %3701 = vmatpush1.msra.mxu0 %v3621
        %3702 = vmatprep.subr.mxu0 0.0
        %3703 = vmatpush1.msra.mxu0 %v3620
        %3704 = vmatprep.subr.mxu0 0.0
        %3705 = vmatpush1.msra.mxu0 %v3619
        %3706 = vmatprep.subr.mxu0 0.0
        %3707 = vmatpush2.msra.mxu0 0.0
        %3708 = vmatprep.subr.mxu0 0.0
        %3709 = vmatpush2.msra.mxu0 0.0
        %3710 = vmatprep.subr.mxu0 0.0
        %3711 = vmatpush2.msra.mxu0 0.0
        %3712 = vmatprep.subr.mxu0 0.0
        %3713 = vmatpush2.msra.mxu0 0.0
        %3714 = vmatprep.subr.mxu0 0.0
        %3715 = vmatpush2.msra.mxu0 0.0
        %3716 = vmatprep.subr.mxu0 0.0
        %3717 = vmatpush2.msra.mxu0 0.0
        %3718 = vmatprep.subr.mxu0 0.0
        %3719 = vmatpush2.msra.mxu0 0.0
        %3720 = vmatprep.subr.mxu0 0.0
        %3721 = vmatpush2.msra.mxu0 0.0
        %3722 = vmatprep.subr.mxu0 0.0
        %3723 = vmatpush2.msra.mxu0 0.0
        %3724 = vmatprep.subr.mxu0 0.0
        %3725 = vmatpush2.msra.mxu0 0.0
        %3726 = vmatprep.subr.mxu0 0.0
        %3727 = vmatpush2.msra.mxu0 0.0
        %3728 = vmatprep.subr.mxu0 0.0
        %3729 = vmatpush2.msra.mxu0 0.0
        %3730 = vmatprep.subr.mxu0 0.0
        %3731 = vmatpush2.msra.mxu0 0.0
        %3732 = vmatprep.subr.mxu0 0.0
        %3733 = vmatpush2.msra.mxu0 0.0
        %3734 = vmatprep.subr.mxu0 0.0
        %3735 = vmatpush2.msra.mxu0 0.0
        %3736 = vmatprep.subr.mxu0 0.0
        %3737 = vmatpush2.msra.mxu0 0.0
        %3738 = vmatprep.mubr.f32.mxu0 0.0
        %3739 = vmatmul.mubr.f32.gmra.mxu0 %v3624
        %v3740 = vpop.f32.mrf.mxu0
        %v3741 = vadd.f32 0.0, %v3740
        %v3742 = vpop.f32.mrf.mxu0
        %3743 = vmatprep.mubr.f32.mxu0 0.0
        %3744 = vmatmul.mubr.f32.gmra.mxu0 %v3627
        %v3745 = vpop.f32.mrf.mxu0
        %v3746 = vpop.f32.mrf.mxu0
        %3747 = vmatprep.mubr.f32.mxu0 0.0
        %3748 = vmatmul.mubr.f32.gmra.mxu0 %v3630
        %v3749 = vpop.f32.mrf.mxu0
        %v3750 = vadd.f32 0.0, %v3749
        %v3751 = vpop.f32.mrf.mxu0
        %3752 = vmatprep.mubr.f32.mxu0 0.0
        %3753 = vmatmul.mubr.f32.gmra.mxu0 %v3633
        %v3754 = vpop.f32.mrf.mxu0
        %v3755 = vadd.f32 0.0, %v3754
        %v3756 = vpop.f32.mrf.mxu0
        %3757 = vmatprep.mubr.f32.mxu0 0.0
        %3758 = vmatmul.mubr.f32.gmra.mxu0 %v3636
        %v3759 = vpop.f32.mrf.mxu0
        %v3760 = vadd.f32 0.0, %v3759
        %v3761 = vpop.f32.mrf.mxu0
        %3762 = vmatprep.mubr.f32.mxu0 0.0
        %3763 = vmatmul.mubr.f32.gmra.mxu0 %v3639
        %v3764 = vpop.f32.mrf.mxu0
        %v3765 = vadd.f32 0.0, %v3764
        %v3766 = vpop.f32.mrf.mxu0
        %3767 = vmatprep.mubr.f32.mxu0 0.0
        %3768 = vmatmul.mubr.f32.gmra.mxu0 %v3642
        %v3769 = vpop.f32.mrf.mxu0
        %v3770 = vadd.f32 0.0, %v3769
        %v3771 = vpop.f32.mrf.mxu0
        %3772 = vmatprep.mubr.f32.mxu0 0.0
        %3773 = vmatmul.mubr.f32.gmra.mxu0 %v3645
        %v3774 = vpop.f32.mrf.mxu0
        %v3775 = vadd.f32 0.0, %v3774
        %v3776 = vpop.f32.mrf.mxu0
        %3777 = vmatprep.mubr.f32.mxu0 0.0
        %3778 = vmatmul.mubr.f32.gmra.mxu0 %v3648
        %v3779 = vpop.f32.mrf.mxu0
        %v3780 = vpop.f32.mrf.mxu0
        %3781 = vmatprep.mubr.f32.mxu0 0.0
        %3782 = vmatmul.mubr.f32.gmra.mxu0 %v3651
        %v3783 = vpop.f32.mrf.mxu0
        %v3784 = vadd.f32 0.0, %v3783
        %v3785 = vpop.f32.mrf.mxu0
        %3786 = vmatprep.mubr.f32.mxu0 0.0
        %3787 = vmatmul.mubr.f32.gmra.mxu0 %v3654
        %v3788 = vpop.f32.mrf.mxu0
        %v3789 = vpop.f32.mrf.mxu0
        %3790 = vmatprep.mubr.f32.mxu0 0.0
        %3791 = vmatmul.mubr.f32.gmra.mxu0 %v3657
        %v3792 = vpop.f32.mrf.mxu0
        %v3793 = vadd.f32 0.0, %v3792
        %v3794 = vpop.f32.mrf.mxu0
        %3795 = vmatprep.mubr.f32.mxu0 0.0
        %3796 = vmatmul.mubr.f32.gmra.mxu0 %v3660
        %v3797 = vpop.f32.mrf.mxu0
        %v3798 = vadd.f32 0.0, %v3797
        %v3799 = vpop.f32.mrf.mxu0
        %3800 = vmatprep.mubr.f32.mxu0 0.0
        %3801 = vmatmul.mubr.f32.gmra.mxu0 %v3663
        %v3802 = vpop.f32.mrf.mxu0
        %v3803 = vadd.f32 0.0, %v3802
        %v3804 = vpop.f32.mrf.mxu0
        %3805 = vmatprep.mubr.f32.mxu0 0.0
        %3806 = vmatmul.mubr.f32.gmra.mxu0 %v3666
        %v3807 = vpop.f32.mrf.mxu0
        %v3808 = vadd.f32 0.0, %v3807
        %v3809 = vpop.f32.mrf.mxu0
        %3810 = vmatprep.mubr.f32.mxu0 0.0
        %3811 = vmatmul.mubr.f32.gmra.mxu0 %v3669
        %v3812 = vpop.f32.mrf.mxu0
        %v3813 = vadd.f32 0.0, %v3812
        %v3814 = vpop.f32.mrf.mxu0
        %3815 = vmatprep.mubr.f32.mxu0 0.0
        %3816 = vmatmul.mubr.f32.gmra.mxu0 %v3672
        %v3817 = vpop.f32.mrf.mxu0
        %v3818 = vadd.f32 0.0, %v3817
        %v3819 = vpop.f32.mrf.mxu0
        %3820 = vdwg.mxu0
        %v3822 = vsel %vm3455, %v3547, 0
        %v3825 = vsel %vm3455, %v3549, 0
        %v3828 = vsel %vm3455, %v3551, 0
        %v3831 = vsel %vm3455, %v3553, 0
        %v3834 = vsel %vm3455, %v3555, 0
        %v3837 = vsel %vm3455, %v3557, 0
        %v3840 = vsel %vm3455, %v3559, 0
        %v3843 = vsel %vm3455, %v3561, 0
        %v3846 = vsel %vm3455, %v3563, 0
        %v3849 = vsel %vm3455, %v3565, 0
        %v3852 = vsel %vm3455, %v3567, 0
        %v3855 = vsel %vm3455, %v3569, 0
        %v3858 = vsel %vm3455, %v3571, 0
        %v3861 = vsel %vm3455, %v3573, 0
        %v3864 = vsel %vm3455, %v3575, 0
        %v3867 = vsel %vm3455, %v3577, 0
        %v3870 = vsel %vm3455, %v3579, 0
        %3872 = vmatprep.subr.mxu0 0.0
        %3873 = vmatpush1.msra.mxu0 0.0
        %3874 = vmatprep.subr.mxu0 0.0
        %3875 = vmatpush1.msra.mxu0 0.0
        %3876 = vmatprep.subr.mxu0 0.0
        %3877 = vmatpush1.msra.mxu0 0.0
        %3878 = vmatprep.subr.mxu0 0.0
        %3879 = vmatpush1.msra.mxu0 0.0
        %3880 = vmatprep.subr.mxu0 0.0
        %3881 = vmatpush1.msra.mxu0 0.0
        %3882 = vmatprep.subr.mxu0 0.0
        %3883 = vmatpush1.msra.mxu0 0.0
        %3884 = vmatprep.subr.mxu0 0.0
        %3885 = vmatpush1.msra.mxu0 0.0
        %3886 = vmatprep.subr.mxu0 0.0
        %3887 = vmatpush1.msra.mxu0 0.0
        %3888 = vmatprep.subr.mxu0 0.0
        %3889 = vmatpush1.msra.mxu0 0.0
        %3890 = vmatprep.subr.mxu0 0.0
        %3891 = vmatpush1.msra.mxu0 0.0
        %3892 = vmatprep.subr.mxu0 0.0
        %3893 = vmatpush1.msra.mxu0 0.0
        %3894 = vmatprep.subr.mxu0 0.0
        %3895 = vmatpush1.msra.mxu0 0.0
        %3896 = vmatprep.subr.mxu0 0.0
        %3897 = vmatpush1.msra.mxu0 %v3583
        %3898 = vmatprep.subr.mxu0 0.0
        %3899 = vmatpush1.msra.mxu0 %v3582
        %3900 = vmatprep.subr.mxu0 0.0
        %3901 = vmatpush1.msra.mxu0 %v3581
        %3902 = vmatprep.subr.mxu0 0.0
        %3903 = vmatpush1.msra.mxu0 %v3580
        %3904 = vmatprep.subr.mxu0 0.0
        %3905 = vmatpush2.msra.mxu0 0.0
        %3906 = vmatprep.subr.mxu0 0.0
        %3907 = vmatpush2.msra.mxu0 0.0
        %3908 = vmatprep.subr.mxu0 0.0
        %3909 = vmatpush2.msra.mxu0 0.0
        %3910 = vmatprep.subr.mxu0 0.0
        %3911 = vmatpush2.msra.mxu0 0.0
        %3912 = vmatprep.subr.mxu0 0.0
        %3913 = vmatpush2.msra.mxu0 0.0
        %3914 = vmatprep.subr.mxu0 0.0
        %3915 = vmatpush2.msra.mxu0 0.0
        %3916 = vmatprep.subr.mxu0 0.0
        %3917 = vmatpush2.msra.mxu0 0.0
        %3918 = vmatprep.subr.mxu0 0.0
        %3919 = vmatpush2.msra.mxu0 0.0
        %3920 = vmatprep.subr.mxu0 0.0
        %3921 = vmatpush2.msra.mxu0 0.0
        %3922 = vmatprep.subr.mxu0 0.0
        %3923 = vmatpush2.msra.mxu0 0.0
        %3924 = vmatprep.subr.mxu0 0.0
        %3925 = vmatpush2.msra.mxu0 0.0
        %3926 = vmatprep.subr.mxu0 0.0
        %3927 = vmatpush2.msra.mxu0 0.0
        %3928 = vmatprep.subr.mxu0 0.0
        %3929 = vmatpush2.msra.mxu0 0.0
        %3930 = vmatprep.subr.mxu0 0.0
        %3931 = vmatpush2.msra.mxu0 0.0
        %3932 = vmatprep.subr.mxu0 0.0
        %3933 = vmatpush2.msra.mxu0 0.0
        %3934 = vmatprep.subr.mxu0 0.0
        %3935 = vmatpush2.msra.mxu0 0.0
        %3936 = vmatprep.mubr.f32.mxu0 0.0
        %3937 = vmatmul.mubr.f32.gmra.mxu0 %v3822
        %v3938 = vpop.f32.mrf.mxu0
        %v3939 = vadd.f32 %v3741, %v3938
        %v3940 = vpop.f32.mrf.mxu0
        %3941 = vmatprep.mubr.f32.mxu0 0.0
        %3942 = vmatmul.mubr.f32.gmra.mxu0 %v3825
        %v3943 = vpop.f32.mrf.mxu0
        %v3944 = vpop.f32.mrf.mxu0
        %3945 = vmatprep.mubr.f32.mxu0 0.0
        %3946 = vmatmul.mubr.f32.gmra.mxu0 %v3828
        %v3947 = vpop.f32.mrf.mxu0
        %v3948 = vadd.f32 %v3750, %v3947
        %v3949 = vpop.f32.mrf.mxu0
        %3950 = vmatprep.mubr.f32.mxu0 0.0
        %3951 = vmatmul.mubr.f32.gmra.mxu0 %v3831
        %v3952 = vpop.f32.mrf.mxu0
        %v3953 = vadd.f32 %v3755, %v3952
        %v3954 = vpop.f32.mrf.mxu0
        %3955 = vmatprep.mubr.f32.mxu0 0.0
        %3956 = vmatmul.mubr.f32.gmra.mxu0 %v3834
        %v3957 = vpop.f32.mrf.mxu0
        %v3958 = vadd.f32 %v3760, %v3957
        %v3959 = vpop.f32.mrf.mxu0
        %3960 = vmatprep.mubr.f32.mxu0 0.0
        %3961 = vmatmul.mubr.f32.gmra.mxu0 %v3837
        %v3962 = vpop.f32.mrf.mxu0
        %v3963 = vadd.f32 %v3765, %v3962
        %v3964 = vpop.f32.mrf.mxu0
        %3965 = vmatprep.mubr.f32.mxu0 0.0
        %3966 = vmatmul.mubr.f32.gmra.mxu0 %v3840
        %v3967 = vpop.f32.mrf.mxu0
        %v3968 = vadd.f32 %v3770, %v3967
        %v3969 = vpop.f32.mrf.mxu0
        %3970 = vmatprep.mubr.f32.mxu0 0.0
        %3971 = vmatmul.mubr.f32.gmra.mxu0 %v3843
        %v3972 = vpop.f32.mrf.mxu0
        %v3973 = vadd.f32 %v3775, %v3972
        %v3974 = vpop.f32.mrf.mxu0
        %3975 = vmatprep.mubr.f32.mxu0 0.0
        %3976 = vmatmul.mubr.f32.gmra.mxu0 %v3846
        %v3977 = vpop.f32.mrf.mxu0
        %v3978 = vpop.f32.mrf.mxu0
        %3979 = vmatprep.mubr.f32.mxu0 0.0
        %3980 = vmatmul.mubr.f32.gmra.mxu0 %v3849
        %v3981 = vpop.f32.mrf.mxu0
        %v3982 = vadd.f32 %v3784, %v3981
        %v3983 = vpop.f32.mrf.mxu0
        %3984 = vmatprep.mubr.f32.mxu0 0.0
        %3985 = vmatmul.mubr.f32.gmra.mxu0 %v3852
        %v3986 = vpop.f32.mrf.mxu0
        %v3987 = vpop.f32.mrf.mxu0
        %3988 = vmatprep.mubr.f32.mxu0 0.0
        %3989 = vmatmul.mubr.f32.gmra.mxu0 %v3855
        %v3990 = vpop.f32.mrf.mxu0
        %v3991 = vadd.f32 %v3793, %v3990
        %v3992 = vpop.f32.mrf.mxu0
        %3993 = vmatprep.mubr.f32.mxu0 0.0
        %3994 = vmatmul.mubr.f32.gmra.mxu0 %v3858
        %v3995 = vpop.f32.mrf.mxu0
        %v3996 = vadd.f32 %v3798, %v3995
        %v3997 = vpop.f32.mrf.mxu0
        %3998 = vmatprep.mubr.f32.mxu0 0.0
        %3999 = vmatmul.mubr.f32.gmra.mxu0 %v3861
        %v4000 = vpop.f32.mrf.mxu0
        %v4001 = vadd.f32 %v3803, %v4000
        %v4002 = vpop.f32.mrf.mxu0
        %4003 = vmatprep.mubr.f32.mxu0 0.0
        %4004 = vmatmul.mubr.f32.gmra.mxu0 %v3864
        %v4005 = vpop.f32.mrf.mxu0
        %v4006 = vadd.f32 %v3808, %v4005
        %v4007 = vpop.f32.mrf.mxu0
        %4008 = vmatprep.mubr.f32.mxu0 0.0
        %4009 = vmatmul.mubr.f32.gmra.mxu0 %v3867
        %v4010 = vpop.f32.mrf.mxu0
        %v4011 = vadd.f32 %v3813, %v4010
        %v4012 = vpop.f32.mrf.mxu0
        %4013 = vmatprep.mubr.f32.mxu0 0.0
        %4014 = vmatmul.mubr.f32.gmra.mxu0 %v3870
        %v4015 = vpop.f32.mrf.mxu0
        %v4016 = vadd.f32 %v3818, %v4015
        %v4017 = vpop.f32.mrf.mxu0
        %4018 = vdwg.mxu0
        %s4019 = scalar_lea.vmem [#allocation2], 2
        %v4020 = vld [vmem:[%s4019] ss:$2 sm:$0xff]
        %s4021 = scalar_lea.vmem [#allocation2], 18
        %v4022 = vld [vmem:[%s4021] ss:$2 sm:$0xff]
        %s4023 = scalar_lea.vmem [#allocation2], 34
        %v4024 = vld [vmem:[%s4023] ss:$2 sm:$0xff]
        %s4025 = scalar_lea.vmem [#allocation2], 50
        %v4026 = vld [vmem:[%s4025] ss:$2 sm:$0xff]
        %s4027 = scalar_lea.vmem [#allocation2], 66
        %v4028 = vld [vmem:[%s4027] ss:$2 sm:$0xff]
        %s4029 = scalar_lea.vmem [#allocation2], 82
        %v4030 = vld [vmem:[%s4029] ss:$2 sm:$0xff]
        %s4031 = scalar_lea.vmem [#allocation2], 98
        %v4032 = vld [vmem:[%s4031] ss:$2 sm:$0xff]
        %s4033 = scalar_lea.vmem [#allocation2], 114
        %v4034 = vld [vmem:[%s4033] ss:$2 sm:$0xff]
        %s4035 = scalar_lea.vmem [#allocation2], 130
        %v4036 = vld [vmem:[%s4035] ss:$2 sm:$0xff]
        %s4037 = scalar_lea.vmem [#allocation2], 146
        %v4038 = vld [vmem:[%s4037] ss:$2 sm:$0xff]
        %s4039 = scalar_lea.vmem [#allocation2], 162
        %v4040 = vld [vmem:[%s4039] ss:$2 sm:$0xff]
        %s4041 = scalar_lea.vmem [#allocation2], 178
        %v4042 = vld [vmem:[%s4041] ss:$2 sm:$0xff]
        %s4043 = scalar_lea.vmem [#allocation2], 194
        %v4044 = vld [vmem:[%s4043] ss:$2 sm:$0xff]
        %s4045 = scalar_lea.vmem [#allocation2], 210
        %v4046 = vld [vmem:[%s4045] ss:$2 sm:$0xff]
        %s4047 = scalar_lea.vmem [#allocation2], 226
        %v4048 = vld [vmem:[%s4047] ss:$2 sm:$0xff]
        %s4049 = scalar_lea.vmem [#allocation2], 242
        %v4050 = vld [vmem:[%s4049] ss:$2 sm:$0xff]
        %s4051 = scalar_lea.vmem [#allocation2], 258
        %v4052 = vld [vmem:[%s4051] ss:$2 sm:$0x3f]
        %s4053 = scalar_lea.vmem %s4, 64
        %v4054 = vld [vmem:[%s4053] sm:$0xff]
        %v4055 = vld [vmem:[%s4053 + $0x8] sm:$0xff]
        %v4056 = vld [vmem:[%s4053 + $0x10] sm:$0xff]
        %v4057 = vld [vmem:[%s4053 + $0x18] sm:$0xff]
        %v4059 = vsel %vm3455, %v4020, 0
        %v4062 = vsel %vm3455, %v4022, 0
        %v4065 = vsel %vm3455, %v4024, 0
        %v4068 = vsel %vm3455, %v4026, 0
        %v4071 = vsel %vm3455, %v4028, 0
        %v4074 = vsel %vm3455, %v4030, 0
        %v4077 = vsel %vm3455, %v4032, 0
        %v4080 = vsel %vm3455, %v4034, 0
        %v4083 = vsel %vm3455, %v4036, 0
        %v4086 = vsel %vm3455, %v4038, 0
        %v4089 = vsel %vm3455, %v4040, 0
        %v4092 = vsel %vm3455, %v4042, 0
        %v4095 = vsel %vm3455, %v4044, 0
        %v4098 = vsel %vm3455, %v4046, 0
        %v4101 = vsel %vm3455, %v4048, 0
        %v4104 = vsel %vm3455, %v4050, 0
        %v4107 = vsel %vm3455, %v4052, 0
        %4109 = vmatprep.subr.mxu0 0.0
        %4110 = vmatpush1.msra.mxu0 0.0
        %4111 = vmatprep.subr.mxu0 0.0
        %4112 = vmatpush1.msra.mxu0 0.0
        %4113 = vmatprep.subr.mxu0 0.0
        %4114 = vmatpush1.msra.mxu0 0.0
        %4115 = vmatprep.subr.mxu0 0.0
        %4116 = vmatpush1.msra.mxu0 0.0
        %4117 = vmatprep.subr.mxu0 0.0
        %4118 = vmatpush1.msra.mxu0 0.0
        %4119 = vmatprep.subr.mxu0 0.0
        %4120 = vmatpush1.msra.mxu0 0.0
        %4121 = vmatprep.subr.mxu0 0.0
        %4122 = vmatpush1.msra.mxu0 0.0
        %4123 = vmatprep.subr.mxu0 0.0
        %4124 = vmatpush1.msra.mxu0 0.0
        %4125 = vmatprep.subr.mxu0 0.0
        %4126 = vmatpush1.msra.mxu0 0.0
        %4127 = vmatprep.subr.mxu0 0.0
        %4128 = vmatpush1.msra.mxu0 0.0
        %4129 = vmatprep.subr.mxu0 0.0
        %4130 = vmatpush1.msra.mxu0 0.0
        %4131 = vmatprep.subr.mxu0 0.0
        %4132 = vmatpush1.msra.mxu0 0.0
        %4133 = vmatprep.subr.mxu0 0.0
        %4134 = vmatpush1.msra.mxu0 %v4057
        %4135 = vmatprep.subr.mxu0 0.0
        %4136 = vmatpush1.msra.mxu0 %v4056
        %4137 = vmatprep.subr.mxu0 0.0
        %4138 = vmatpush1.msra.mxu0 %v4055
        %4139 = vmatprep.subr.mxu0 0.0
        %4140 = vmatpush1.msra.mxu0 %v4054
        %4141 = vmatprep.subr.mxu0 0.0
        %4142 = vmatpush2.msra.mxu0 0.0
        %4143 = vmatprep.subr.mxu0 0.0
        %4144 = vmatpush2.msra.mxu0 0.0
        %4145 = vmatprep.subr.mxu0 0.0
        %4146 = vmatpush2.msra.mxu0 0.0
        %4147 = vmatprep.subr.mxu0 0.0
        %4148 = vmatpush2.msra.mxu0 0.0
        %4149 = vmatprep.subr.mxu0 0.0
        %4150 = vmatpush2.msra.mxu0 0.0
        %4151 = vmatprep.subr.mxu0 0.0
        %4152 = vmatpush2.msra.mxu0 0.0
        %4153 = vmatprep.subr.mxu0 0.0
        %4154 = vmatpush2.msra.mxu0 0.0
        %4155 = vmatprep.subr.mxu0 0.0
        %4156 = vmatpush2.msra.mxu0 0.0
        %4157 = vmatprep.subr.mxu0 0.0
        %4158 = vmatpush2.msra.mxu0 0.0
        %4159 = vmatprep.subr.mxu0 0.0
        %4160 = vmatpush2.msra.mxu0 0.0
        %4161 = vmatprep.subr.mxu0 0.0
        %4162 = vmatpush2.msra.mxu0 0.0
        %4163 = vmatprep.subr.mxu0 0.0
        %4164 = vmatpush2.msra.mxu0 0.0
        %4165 = vmatprep.subr.mxu0 0.0
        %4166 = vmatpush2.msra.mxu0 0.0
        %4167 = vmatprep.subr.mxu0 0.0
        %4168 = vmatpush2.msra.mxu0 0.0
        %4169 = vmatprep.subr.mxu0 0.0
        %4170 = vmatpush2.msra.mxu0 0.0
        %4171 = vmatprep.subr.mxu0 0.0
        %4172 = vmatpush2.msra.mxu0 0.0
        %4173 = vmatprep.mubr.f32.mxu0 0.0
        %4174 = vmatmul.mubr.f32.gmra.mxu0 %v4059
        %v4175 = vpop.f32.mrf.mxu0
        %v4176 = vadd.f32 0.0, %v4175
        %v4177 = vpop.f32.mrf.mxu0
        %4178 = vmatprep.mubr.f32.mxu0 0.0
        %4179 = vmatmul.mubr.f32.gmra.mxu0 %v4062
        %v4180 = vpop.f32.mrf.mxu0
        %v4181 = vpop.f32.mrf.mxu0
        %4182 = vmatprep.mubr.f32.mxu0 0.0
        %4183 = vmatmul.mubr.f32.gmra.mxu0 %v4065
        %v4184 = vpop.f32.mrf.mxu0
        %v4185 = vadd.f32 0.0, %v4184
        %v4186 = vpop.f32.mrf.mxu0
        %4187 = vmatprep.mubr.f32.mxu0 0.0
        %4188 = vmatmul.mubr.f32.gmra.mxu0 %v4068
        %v4189 = vpop.f32.mrf.mxu0
        %v4190 = vadd.f32 0.0, %v4189
        %v4191 = vpop.f32.mrf.mxu0
        %4192 = vmatprep.mubr.f32.mxu0 0.0
        %4193 = vmatmul.mubr.f32.gmra.mxu0 %v4071
        %v4194 = vpop.f32.mrf.mxu0
        %v4195 = vadd.f32 0.0, %v4194
        %v4196 = vpop.f32.mrf.mxu0
        %4197 = vmatprep.mubr.f32.mxu0 0.0
        %4198 = vmatmul.mubr.f32.gmra.mxu0 %v4074
        %v4199 = vpop.f32.mrf.mxu0
        %v4200 = vadd.f32 0.0, %v4199
        %v4201 = vpop.f32.mrf.mxu0
        %4202 = vmatprep.mubr.f32.mxu0 0.0
        %4203 = vmatmul.mubr.f32.gmra.mxu0 %v4077
        %v4204 = vpop.f32.mrf.mxu0
        %v4205 = vadd.f32 0.0, %v4204
        %v4206 = vpop.f32.mrf.mxu0
        %4207 = vmatprep.mubr.f32.mxu0 0.0
        %4208 = vmatmul.mubr.f32.gmra.mxu0 %v4080
        %v4209 = vpop.f32.mrf.mxu0
        %v4210 = vadd.f32 0.0, %v4209
        %v4211 = vpop.f32.mrf.mxu0
        %4212 = vmatprep.mubr.f32.mxu0 0.0
        %4213 = vmatmul.mubr.f32.gmra.mxu0 %v4083
        %v4214 = vpop.f32.mrf.mxu0
        %v4215 = vpop.f32.mrf.mxu0
        %4216 = vmatprep.mubr.f32.mxu0 0.0
        %4217 = vmatmul.mubr.f32.gmra.mxu0 %v4086
        %v4218 = vpop.f32.mrf.mxu0
        %v4219 = vadd.f32 0.0, %v4218
        %v4220 = vpop.f32.mrf.mxu0
        %4221 = vmatprep.mubr.f32.mxu0 0.0
        %4222 = vmatmul.mubr.f32.gmra.mxu0 %v4089
        %v4223 = vpop.f32.mrf.mxu0
        %v4224 = vpop.f32.mrf.mxu0
        %4225 = vmatprep.mubr.f32.mxu0 0.0
        %4226 = vmatmul.mubr.f32.gmra.mxu0 %v4092
        %v4227 = vpop.f32.mrf.mxu0
        %v4228 = vadd.f32 0.0, %v4227
        %v4229 = vpop.f32.mrf.mxu0
        %4230 = vmatprep.mubr.f32.mxu0 0.0
        %4231 = vmatmul.mubr.f32.gmra.mxu0 %v4095
        %v4232 = vpop.f32.mrf.mxu0
        %v4233 = vadd.f32 0.0, %v4232
        %v4234 = vpop.f32.mrf.mxu0
        %4235 = vmatprep.mubr.f32.mxu0 0.0
        %4236 = vmatmul.mubr.f32.gmra.mxu0 %v4098
        %v4237 = vpop.f32.mrf.mxu0
        %v4238 = vadd.f32 0.0, %v4237
        %v4239 = vpop.f32.mrf.mxu0
        %4240 = vmatprep.mubr.f32.mxu0 0.0
        %4241 = vmatmul.mubr.f32.gmra.mxu0 %v4101
        %v4242 = vpop.f32.mrf.mxu0
        %v4243 = vadd.f32 0.0, %v4242
        %v4244 = vpop.f32.mrf.mxu0
        %4245 = vmatprep.mubr.f32.mxu0 0.0
        %4246 = vmatmul.mubr.f32.gmra.mxu0 %v4104
        %v4247 = vpop.f32.mrf.mxu0
        %v4248 = vadd.f32 0.0, %v4247
        %v4249 = vpop.f32.mrf.mxu0
        %4250 = vmatprep.mubr.f32.mxu0 0.0
        %4251 = vmatmul.mubr.f32.gmra.mxu0 %v4107
        %v4252 = vpop.f32.mrf.mxu0
        %v4253 = vadd.f32 0.0, %v4252
        %v4254 = vpop.f32.mrf.mxu0
        %4255 = vdwg.mxu0
        %v4256 = vadd.f32 %v3939, %v4176
        %v4257 = vadd.f32 %v3948, %v4185
        %v4258 = vadd.f32 %v3953, %v4190
        %v4259 = vadd.f32 %v3958, %v4195
        %v4260 = vadd.f32 %v3963, %v4200
        %v4261 = vadd.f32 %v3968, %v4205
        %v4262 = vadd.f32 %v3973, %v4210
        %v4263 = vadd.f32 %v3982, %v4219
        %v4264 = vadd.f32 %v3991, %v4228
        %v4265 = vadd.f32 %v3996, %v4233
        %v4266 = vadd.f32 %v4001, %v4238
        %v4267 = vadd.f32 %v4006, %v4243
        %v4268 = vadd.f32 %v4011, %v4248
        %v4269 = vadd.f32 %v4016, %v4253
        %v4270 = vld [vmem:[%s4021] ss:$2 sm:$0xff]
        %v4271 = vld [vmem:[%s4023] ss:$2 sm:$0xff]
        %v4272 = vld [vmem:[%s4025] ss:$2 sm:$0xff]
        %v4273 = vld [vmem:[%s4027] ss:$2 sm:$0xff]
        %v4274 = vld [vmem:[%s4029] ss:$2 sm:$0xff]
        %v4275 = vld [vmem:[%s4031] ss:$2 sm:$0xff]
        %v4276 = vld [vmem:[%s4033] ss:$2 sm:$0xff]
        %v4277 = vld [vmem:[%s4035] ss:$2 sm:$0xff]
        %v4278 = vld [vmem:[%s4037] ss:$2 sm:$0xff]
        %v4279 = vld [vmem:[%s4039] ss:$2 sm:$0xff]
        %v4280 = vld [vmem:[%s4041] ss:$2 sm:$0xff]
        %v4281 = vld [vmem:[%s4043] ss:$2 sm:$0xff]
        %v4282 = vld [vmem:[%s4045] ss:$2 sm:$0xff]
        %v4283 = vld [vmem:[%s4047] ss:$2 sm:$0xff]
        %v4284 = vld [vmem:[%s4049] ss:$2 sm:$0xff]
        %v4285 = vld [vmem:[%s4051] ss:$2 sm:$0xff]
        %s4286 = scalar_lea.vmem [#allocation2], 274
        %v4287 = vld [vmem:[%s4286] ss:$2 sm:$0x3f]
        %s4288 = scalar_lea.vmem %s4, 96
        %v4289 = vld [vmem:[%s4288] sm:$0xff]
        %v4290 = vld [vmem:[%s4288 + $0x8] sm:$0xff]
        %v4291 = vld [vmem:[%s4288 + $0x10] sm:$0xff]
        %v4292 = vld [vmem:[%s4288 + $0x18] sm:$0xff]
        %v4294 = vsel %vm3455, %v4270, 0
        %v4297 = vsel %vm3455, %v4271, 0
        %v4300 = vsel %vm3455, %v4272, 0
        %v4303 = vsel %vm3455, %v4273, 0
        %v4306 = vsel %vm3455, %v4274, 0
        %v4309 = vsel %vm3455, %v4275, 0
        %v4312 = vsel %vm3455, %v4276, 0
        %v4315 = vsel %vm3455, %v4277, 0
        %v4318 = vsel %vm3455, %v4278, 0
        %v4321 = vsel %vm3455, %v4279, 0
        %v4324 = vsel %vm3455, %v4280, 0
        %v4327 = vsel %vm3455, %v4281, 0
        %v4330 = vsel %vm3455, %v4282, 0
        %v4333 = vsel %vm3455, %v4283, 0
        %v4336 = vsel %vm3455, %v4284, 0
        %v4339 = vsel %vm3455, %v4285, 0
        %v4342 = vsel %vm3455, %v4287, 0
        %4344 = vmatprep.subr.mxu0 0.0
        %4345 = vmatpush1.msra.mxu0 0.0
        %4346 = vmatprep.subr.mxu0 0.0
        %4347 = vmatpush1.msra.mxu0 0.0
        %4348 = vmatprep.subr.mxu0 0.0
        %4349 = vmatpush1.msra.mxu0 0.0
        %4350 = vmatprep.subr.mxu0 0.0
        %4351 = vmatpush1.msra.mxu0 0.0
        %4352 = vmatprep.subr.mxu0 0.0
        %4353 = vmatpush1.msra.mxu0 0.0
        %4354 = vmatprep.subr.mxu0 0.0
        %4355 = vmatpush1.msra.mxu0 0.0
        %4356 = vmatprep.subr.mxu0 0.0
        %4357 = vmatpush1.msra.mxu0 0.0
        %4358 = vmatprep.subr.mxu0 0.0
        %4359 = vmatpush1.msra.mxu0 0.0
        %4360 = vmatprep.subr.mxu0 0.0
        %4361 = vmatpush1.msra.mxu0 0.0
        %4362 = vmatprep.subr.mxu0 0.0
        %4363 = vmatpush1.msra.mxu0 0.0
        %4364 = vmatprep.subr.mxu0 0.0
        %4365 = vmatpush1.msra.mxu0 0.0
        %4366 = vmatprep.subr.mxu0 0.0
        %4367 = vmatpush1.msra.mxu0 0.0
        %4368 = vmatprep.subr.mxu0 0.0
        %4369 = vmatpush1.msra.mxu0 %v4292
        %4370 = vmatprep.subr.mxu0 0.0
        %4371 = vmatpush1.msra.mxu0 %v4291
        %4372 = vmatprep.subr.mxu0 0.0
        %4373 = vmatpush1.msra.mxu0 %v4290
        %4374 = vmatprep.subr.mxu0 0.0
        %4375 = vmatpush1.msra.mxu0 %v4289
        %4376 = vmatprep.subr.mxu0 0.0
        %4377 = vmatpush2.msra.mxu0 0.0
        %4378 = vmatprep.subr.mxu0 0.0
        %4379 = vmatpush2.msra.mxu0 0.0
        %4380 = vmatprep.subr.mxu0 0.0
        %4381 = vmatpush2.msra.mxu0 0.0
        %4382 = vmatprep.subr.mxu0 0.0
        %4383 = vmatpush2.msra.mxu0 0.0
        %4384 = vmatprep.subr.mxu0 0.0
        %4385 = vmatpush2.msra.mxu0 0.0
        %4386 = vmatprep.subr.mxu0 0.0
        %4387 = vmatpush2.msra.mxu0 0.0
        %4388 = vmatprep.subr.mxu0 0.0
        %4389 = vmatpush2.msra.mxu0 0.0
        %4390 = vmatprep.subr.mxu0 0.0
        %4391 = vmatpush2.msra.mxu0 0.0
        %4392 = vmatprep.subr.mxu0 0.0
        %4393 = vmatpush2.msra.mxu0 0.0
        %4394 = vmatprep.subr.mxu0 0.0
        %4395 = vmatpush2.msra.mxu0 0.0
        %4396 = vmatprep.subr.mxu0 0.0
        %4397 = vmatpush2.msra.mxu0 0.0
        %4398 = vmatprep.subr.mxu0 0.0
        %4399 = vmatpush2.msra.mxu0 0.0
        %4400 = vmatprep.subr.mxu0 0.0
        %4401 = vmatpush2.msra.mxu0 0.0
        %4402 = vmatprep.subr.mxu0 0.0
        %4403 = vmatpush2.msra.mxu0 0.0
        %4404 = vmatprep.subr.mxu0 0.0
        %4405 = vmatpush2.msra.mxu0 0.0
        %4406 = vmatprep.subr.mxu0 0.0
        %4407 = vmatpush2.msra.mxu0 0.0
        %4408 = vmatprep.mubr.f32.mxu0 0.0
        %4409 = vmatmul.mubr.f32.gmra.mxu0 %v4294
        %v4410 = vpop.f32.mrf.mxu0
        %v4411 = vadd.f32 0.0, %v4410
        %v4412 = vpop.f32.mrf.mxu0
        %4413 = vmatprep.mubr.f32.mxu0 0.0
        %4414 = vmatmul.mubr.f32.gmra.mxu0 %v4297
        %v4415 = vpop.f32.mrf.mxu0
        %v4416 = vpop.f32.mrf.mxu0
        %4417 = vmatprep.mubr.f32.mxu0 0.0
        %4418 = vmatmul.mubr.f32.gmra.mxu0 %v4300
        %v4419 = vpop.f32.mrf.mxu0
        %v4420 = vadd.f32 0.0, %v4419
        %v4421 = vpop.f32.mrf.mxu0
        %4422 = vmatprep.mubr.f32.mxu0 0.0
        %4423 = vmatmul.mubr.f32.gmra.mxu0 %v4303
        %v4424 = vpop.f32.mrf.mxu0
        %v4425 = vadd.f32 0.0, %v4424
        %v4426 = vpop.f32.mrf.mxu0
        %4427 = vmatprep.mubr.f32.mxu0 0.0
        %4428 = vmatmul.mubr.f32.gmra.mxu0 %v4306
        %v4429 = vpop.f32.mrf.mxu0
        %v4430 = vadd.f32 0.0, %v4429
        %v4431 = vpop.f32.mrf.mxu0
        %4432 = vmatprep.mubr.f32.mxu0 0.0
        %4433 = vmatmul.mubr.f32.gmra.mxu0 %v4309
        %v4434 = vpop.f32.mrf.mxu0
        %v4435 = vadd.f32 0.0, %v4434
        %v4436 = vpop.f32.mrf.mxu0
        %4437 = vmatprep.mubr.f32.mxu0 0.0
        %4438 = vmatmul.mubr.f32.gmra.mxu0 %v4312
        %v4439 = vpop.f32.mrf.mxu0
        %v4440 = vadd.f32 0.0, %v4439
        %v4441 = vpop.f32.mrf.mxu0
        %4442 = vmatprep.mubr.f32.mxu0 0.0
        %4443 = vmatmul.mubr.f32.gmra.mxu0 %v4315
        %v4444 = vpop.f32.mrf.mxu0
        %v4445 = vadd.f32 0.0, %v4444
        %v4446 = vpop.f32.mrf.mxu0
        %4447 = vmatprep.mubr.f32.mxu0 0.0
        %4448 = vmatmul.mubr.f32.gmra.mxu0 %v4318
        %v4449 = vpop.f32.mrf.mxu0
        %v4450 = vpop.f32.mrf.mxu0
        %4451 = vmatprep.mubr.f32.mxu0 0.0
        %4452 = vmatmul.mubr.f32.gmra.mxu0 %v4321
        %v4453 = vpop.f32.mrf.mxu0
        %v4454 = vadd.f32 0.0, %v4453
        %v4455 = vpop.f32.mrf.mxu0
        %4456 = vmatprep.mubr.f32.mxu0 0.0
        %4457 = vmatmul.mubr.f32.gmra.mxu0 %v4324
        %v4458 = vpop.f32.mrf.mxu0
        %v4459 = vpop.f32.mrf.mxu0
        %4460 = vmatprep.mubr.f32.mxu0 0.0
        %4461 = vmatmul.mubr.f32.gmra.mxu0 %v4327
        %v4462 = vpop.f32.mrf.mxu0
        %v4463 = vadd.f32 0.0, %v4462
        %v4464 = vpop.f32.mrf.mxu0
        %4465 = vmatprep.mubr.f32.mxu0 0.0
        %4466 = vmatmul.mubr.f32.gmra.mxu0 %v4330
        %v4467 = vpop.f32.mrf.mxu0
        %v4468 = vadd.f32 0.0, %v4467
        %v4469 = vpop.f32.mrf.mxu0
        %4470 = vmatprep.mubr.f32.mxu0 0.0
        %4471 = vmatmul.mubr.f32.gmra.mxu0 %v4333
        %v4472 = vpop.f32.mrf.mxu0
        %v4473 = vadd.f32 0.0, %v4472
        %v4474 = vpop.f32.mrf.mxu0
        %4475 = vmatprep.mubr.f32.mxu0 0.0
        %4476 = vmatmul.mubr.f32.gmra.mxu0 %v4336
        %v4477 = vpop.f32.mrf.mxu0
        %v4478 = vadd.f32 0.0, %v4477
        %v4479 = vpop.f32.mrf.mxu0
        %4480 = vmatprep.mubr.f32.mxu0 0.0
        %4481 = vmatmul.mubr.f32.gmra.mxu0 %v4339
        %v4482 = vpop.f32.mrf.mxu0
        %v4483 = vadd.f32 0.0, %v4482
        %v4484 = vpop.f32.mrf.mxu0
        %4485 = vmatprep.mubr.f32.mxu0 0.0
        %4486 = vmatmul.mubr.f32.gmra.mxu0 %v4342
        %v4487 = vpop.f32.mrf.mxu0
        %v4488 = vadd.f32 0.0, %v4487
        %v4489 = vpop.f32.mrf.mxu0
        %4490 = vdwg.mxu0
        %v4491 = vadd.f32 %v4256, %v4411
        %v4492 = vadd.f32 %v4257, %v4420
        %v4493 = vadd.f32 %v4258, %v4425
        %v4494 = vadd.f32 %v4259, %v4430
        %v4495 = vadd.f32 %v4260, %v4435
        %v4496 = vadd.f32 %v4261, %v4440
        %v4497 = vadd.f32 %v4262, %v4445
        %v4498 = vadd.f32 %v4263, %v4454
        %v4499 = vadd.f32 %v4264, %v4463
        %v4500 = vadd.f32 %v4265, %v4468
        %v4501 = vadd.f32 %v4266, %v4473
        %v4502 = vadd.f32 %v4267, %v4478
        %v4503 = vadd.f32 %v4268, %v4483
        %v4504 = vadd.f32 %v4269, %v4488
        %s4505 = scalar_lea.vmem [#allocation2], 19
        %v4506 = vld [vmem:[%s4505] ss:$2 sm:$0xff]
        %s4507 = scalar_lea.vmem [#allocation2], 35
        %v4508 = vld [vmem:[%s4507] ss:$2 sm:$0xff]
        %s4509 = scalar_lea.vmem [#allocation2], 51
        %v4510 = vld [vmem:[%s4509] ss:$2 sm:$0xff]
        %s4511 = scalar_lea.vmem [#allocation2], 67
        %v4512 = vld [vmem:[%s4511] ss:$2 sm:$0xff]
        %s4513 = scalar_lea.vmem [#allocation2], 83
        %v4514 = vld [vmem:[%s4513] ss:$2 sm:$0xff]
        %s4515 = scalar_lea.vmem [#allocation2], 99
        %v4516 = vld [vmem:[%s4515] ss:$2 sm:$0xff]
        %s4517 = scalar_lea.vmem [#allocation2], 115
        %v4518 = vld [vmem:[%s4517] ss:$2 sm:$0xff]
        %s4519 = scalar_lea.vmem [#allocation2], 131
        %v4520 = vld [vmem:[%s4519] ss:$2 sm:$0xff]
        %s4521 = scalar_lea.vmem [#allocation2], 147
        %v4522 = vld [vmem:[%s4521] ss:$2 sm:$0xff]
        %s4523 = scalar_lea.vmem [#allocation2], 163
        %v4524 = vld [vmem:[%s4523] ss:$2 sm:$0xff]
        %s4525 = scalar_lea.vmem [#allocation2], 179
        %v4526 = vld [vmem:[%s4525] ss:$2 sm:$0xff]
        %s4527 = scalar_lea.vmem [#allocation2], 195
        %v4528 = vld [vmem:[%s4527] ss:$2 sm:$0xff]
        %s4529 = scalar_lea.vmem [#allocation2], 211
        %v4530 = vld [vmem:[%s4529] ss:$2 sm:$0xff]
        %s4531 = scalar_lea.vmem [#allocation2], 227
        %v4532 = vld [vmem:[%s4531] ss:$2 sm:$0xff]
        %s4533 = scalar_lea.vmem [#allocation2], 243
        %v4534 = vld [vmem:[%s4533] ss:$2 sm:$0xff]
        %s4535 = scalar_lea.vmem [#allocation2], 259
        %v4536 = vld [vmem:[%s4535] ss:$2 sm:$0xff]
        %s4537 = scalar_lea.vmem [#allocation2], 275
        %v4538 = vld [vmem:[%s4537] ss:$2 sm:$0x3f]
        %s4539 = scalar_lea.vmem %s4, 128
        %v4540 = vld [vmem:[%s4539] sm:$0xff]
        %v4541 = vld [vmem:[%s4539 + $0x8] sm:$0xff]
        %v4542 = vld [vmem:[%s4539 + $0x10] sm:$0xff]
        %v4543 = vld [vmem:[%s4539 + $0x18] sm:$0xff]
        %v4545 = vsel %vm3455, %v4506, 0
        %v4548 = vsel %vm3455, %v4508, 0
        %v4551 = vsel %vm3455, %v4510, 0
        %v4554 = vsel %vm3455, %v4512, 0
        %v4557 = vsel %vm3455, %v4514, 0
        %v4560 = vsel %vm3455, %v4516, 0
        %v4563 = vsel %vm3455, %v4518, 0
        %v4566 = vsel %vm3455, %v4520, 0
        %v4569 = vsel %vm3455, %v4522, 0
        %v4572 = vsel %vm3455, %v4524, 0
        %v4575 = vsel %vm3455, %v4526, 0
        %v4578 = vsel %vm3455, %v4528, 0
        %v4581 = vsel %vm3455, %v4530, 0
        %v4584 = vsel %vm3455, %v4532, 0
        %v4587 = vsel %vm3455, %v4534, 0
        %v4590 = vsel %vm3455, %v4536, 0
        %v4593 = vsel %vm3455, %v4538, 0
        %4595 = vmatprep.subr.mxu0 0.0
        %4596 = vmatpush1.msra.mxu0 0.0
        %4597 = vmatprep.subr.mxu0 0.0
        %4598 = vmatpush1.msra.mxu0 0.0
        %4599 = vmatprep.subr.mxu0 0.0
        %4600 = vmatpush1.msra.mxu0 0.0
        %4601 = vmatprep.subr.mxu0 0.0
        %4602 = vmatpush1.msra.mxu0 0.0
        %4603 = vmatprep.subr.mxu0 0.0
        %4604 = vmatpush1.msra.mxu0 0.0
        %4605 = vmatprep.subr.mxu0 0.0
        %4606 = vmatpush1.msra.mxu0 0.0
        %4607 = vmatprep.subr.mxu0 0.0
        %4608 = vmatpush1.msra.mxu0 0.0
        %4609 = vmatprep.subr.mxu0 0.0
        %4610 = vmatpush1.msra.mxu0 0.0
        %4611 = vmatprep.subr.mxu0 0.0
        %4612 = vmatpush1.msra.mxu0 0.0
        %4613 = vmatprep.subr.mxu0 0.0
        %4614 = vmatpush1.msra.mxu0 0.0
        %4615 = vmatprep.subr.mxu0 0.0
        %4616 = vmatpush1.msra.mxu0 0.0
        %4617 = vmatprep.subr.mxu0 0.0
        %4618 = vmatpush1.msra.mxu0 0.0
        %4619 = vmatprep.subr.mxu0 0.0
        %4620 = vmatpush1.msra.mxu0 %v4543
        %4621 = vmatprep.subr.mxu0 0.0
        %4622 = vmatpush1.msra.mxu0 %v4542
        %4623 = vmatprep.subr.mxu0 0.0
        %4624 = vmatpush1.msra.mxu0 %v4541
        %4625 = vmatprep.subr.mxu0 0.0
        %4626 = vmatpush1.msra.mxu0 %v4540
        %4627 = vmatprep.subr.mxu0 0.0
        %4628 = vmatpush2.msra.mxu0 0.0
        %4629 = vmatprep.subr.mxu0 0.0
        %4630 = vmatpush2.msra.mxu0 0.0
        %4631 = vmatprep.subr.mxu0 0.0
        %4632 = vmatpush2.msra.mxu0 0.0
        %4633 = vmatprep.subr.mxu0 0.0
        %4634 = vmatpush2.msra.mxu0 0.0
        %4635 = vmatprep.subr.mxu0 0.0
        %4636 = vmatpush2.msra.mxu0 0.0
        %4637 = vmatprep.subr.mxu0 0.0
        %4638 = vmatpush2.msra.mxu0 0.0
        %4639 = vmatprep.subr.mxu0 0.0
        %4640 = vmatpush2.msra.mxu0 0.0
        %4641 = vmatprep.subr.mxu0 0.0
        %4642 = vmatpush2.msra.mxu0 0.0
        %4643 = vmatprep.subr.mxu0 0.0
        %4644 = vmatpush2.msra.mxu0 0.0
        %4645 = vmatprep.subr.mxu0 0.0
        %4646 = vmatpush2.msra.mxu0 0.0
        %4647 = vmatprep.subr.mxu0 0.0
        %4648 = vmatpush2.msra.mxu0 0.0
        %4649 = vmatprep.subr.mxu0 0.0
        %4650 = vmatpush2.msra.mxu0 0.0
        %4651 = vmatprep.subr.mxu0 0.0
        %4652 = vmatpush2.msra.mxu0 0.0
        %4653 = vmatprep.subr.mxu0 0.0
        %4654 = vmatpush2.msra.mxu0 0.0
        %4655 = vmatprep.subr.mxu0 0.0
        %4656 = vmatpush2.msra.mxu0 0.0
        %4657 = vmatprep.subr.mxu0 0.0
        %4658 = vmatpush2.msra.mxu0 0.0
        %4659 = vmatprep.mubr.f32.mxu0 0.0
        %4660 = vmatmul.mubr.f32.gmra.mxu0 %v4545
        %v4661 = vpop.f32.mrf.mxu0
        %v4662 = vadd.f32 0.0, %v4661
        %v4663 = vpop.f32.mrf.mxu0
        %4664 = vmatprep.mubr.f32.mxu0 0.0
        %4665 = vmatmul.mubr.f32.gmra.mxu0 %v4548
        %v4666 = vpop.f32.mrf.mxu0
        %v4667 = vpop.f32.mrf.mxu0
        %4668 = vmatprep.mubr.f32.mxu0 0.0
        %4669 = vmatmul.mubr.f32.gmra.mxu0 %v4551
        %v4670 = vpop.f32.mrf.mxu0
        %v4671 = vadd.f32 0.0, %v4670
        %v4672 = vpop.f32.mrf.mxu0
        %4673 = vmatprep.mubr.f32.mxu0 0.0
        %4674 = vmatmul.mubr.f32.gmra.mxu0 %v4554
        %v4675 = vpop.f32.mrf.mxu0
        %v4676 = vadd.f32 0.0, %v4675
        %v4677 = vpop.f32.mrf.mxu0
        %4678 = vmatprep.mubr.f32.mxu0 0.0
        %4679 = vmatmul.mubr.f32.gmra.mxu0 %v4557
        %v4680 = vpop.f32.mrf.mxu0
        %v4681 = vadd.f32 0.0, %v4680
        %v4682 = vpop.f32.mrf.mxu0
        %4683 = vmatprep.mubr.f32.mxu0 0.0
        %4684 = vmatmul.mubr.f32.gmra.mxu0 %v4560
        %v4685 = vpop.f32.mrf.mxu0
        %v4686 = vadd.f32 0.0, %v4685
        %v4687 = vpop.f32.mrf.mxu0
        %4688 = vmatprep.mubr.f32.mxu0 0.0
        %4689 = vmatmul.mubr.f32.gmra.mxu0 %v4563
        %v4690 = vpop.f32.mrf.mxu0
        %v4691 = vadd.f32 0.0, %v4690
        %v4692 = vpop.f32.mrf.mxu0
        %4693 = vmatprep.mubr.f32.mxu0 0.0
        %4694 = vmatmul.mubr.f32.gmra.mxu0 %v4566
        %v4695 = vpop.f32.mrf.mxu0
        %v4696 = vadd.f32 0.0, %v4695
        %v4697 = vpop.f32.mrf.mxu0
        %4698 = vmatprep.mubr.f32.mxu0 0.0
        %4699 = vmatmul.mubr.f32.gmra.mxu0 %v4569
        %v4700 = vpop.f32.mrf.mxu0
        %v4701 = vpop.f32.mrf.mxu0
        %4702 = vmatprep.mubr.f32.mxu0 0.0
        %4703 = vmatmul.mubr.f32.gmra.mxu0 %v4572
        %v4704 = vpop.f32.mrf.mxu0
        %v4705 = vadd.f32 0.0, %v4704
        %v4706 = vpop.f32.mrf.mxu0
        %4707 = vmatprep.mubr.f32.mxu0 0.0
        %4708 = vmatmul.mubr.f32.gmra.mxu0 %v4575
        %v4709 = vpop.f32.mrf.mxu0
        %v4710 = vpop.f32.mrf.mxu0
        %4711 = vmatprep.mubr.f32.mxu0 0.0
        %4712 = vmatmul.mubr.f32.gmra.mxu0 %v4578
        %v4713 = vpop.f32.mrf.mxu0
        %v4714 = vadd.f32 0.0, %v4713
        %v4715 = vpop.f32.mrf.mxu0
        %4716 = vmatprep.mubr.f32.mxu0 0.0
        %4717 = vmatmul.mubr.f32.gmra.mxu0 %v4581
        %v4718 = vpop.f32.mrf.mxu0
        %v4719 = vadd.f32 0.0, %v4718
        %v4720 = vpop.f32.mrf.mxu0
        %4721 = vmatprep.mubr.f32.mxu0 0.0
        %4722 = vmatmul.mubr.f32.gmra.mxu0 %v4584
        %v4723 = vpop.f32.mrf.mxu0
        %v4724 = vadd.f32 0.0, %v4723
        %v4725 = vpop.f32.mrf.mxu0
        %4726 = vmatprep.mubr.f32.mxu0 0.0
        %4727 = vmatmul.mubr.f32.gmra.mxu0 %v4587
        %v4728 = vpop.f32.mrf.mxu0
        %v4729 = vadd.f32 0.0, %v4728
        %v4730 = vpop.f32.mrf.mxu0
        %4731 = vmatprep.mubr.f32.mxu0 0.0
        %4732 = vmatmul.mubr.f32.gmra.mxu0 %v4590
        %v4733 = vpop.f32.mrf.mxu0
        %v4734 = vadd.f32 0.0, %v4733
        %v4735 = vpop.f32.mrf.mxu0
        %4736 = vmatprep.mubr.f32.mxu0 0.0
        %4737 = vmatmul.mubr.f32.gmra.mxu0 %v4593
        %v4738 = vpop.f32.mrf.mxu0
        %v4739 = vadd.f32 0.0, %v4738
        %v4740 = vpop.f32.mrf.mxu0
        %4741 = vdwg.mxu0
        %v4742 = vadd.f32 %v4491, %v4662
        %v4743 = vadd.f32 %v4492, %v4671
        %v4744 = vadd.f32 %v4493, %v4676
        %v4745 = vadd.f32 %v4494, %v4681
        %v4746 = vadd.f32 %v4495, %v4686
        %v4747 = vadd.f32 %v4496, %v4691
        %v4748 = vadd.f32 %v4497, %v4696
        %v4749 = vadd.f32 %v4498, %v4705
        %v4750 = vadd.f32 %v4499, %v4714
        %v4751 = vadd.f32 %v4500, %v4719
        %v4752 = vadd.f32 %v4501, %v4724
        %v4753 = vadd.f32 %v4502, %v4729
        %v4754 = vadd.f32 %v4503, %v4734
        %v4755 = vadd.f32 %v4504, %v4739
        %s4756 = scalar_lea.vmem [#allocation2], 20
        %v4757 = vld [vmem:[%s4756] ss:$2 sm:$0xff]
        %s4758 = scalar_lea.vmem [#allocation2], 36
        %v4759 = vld [vmem:[%s4758] ss:$2 sm:$0xff]
        %s4760 = scalar_lea.vmem [#allocation2], 52
        %v4761 = vld [vmem:[%s4760] ss:$2 sm:$0xff]
        %s4762 = scalar_lea.vmem [#allocation2], 68
        %v4763 = vld [vmem:[%s4762] ss:$2 sm:$0xff]
        %s4764 = scalar_lea.vmem [#allocation2], 84
        %v4765 = vld [vmem:[%s4764] ss:$2 sm:$0xff]
        %s4766 = scalar_lea.vmem [#allocation2], 100
        %v4767 = vld [vmem:[%s4766] ss:$2 sm:$0xff]
        %s4768 = scalar_lea.vmem [#allocation2], 116
        %v4769 = vld [vmem:[%s4768] ss:$2 sm:$0xff]
        %s4770 = scalar_lea.vmem [#allocation2], 132
        %v4771 = vld [vmem:[%s4770] ss:$2 sm:$0xff]
        %s4772 = scalar_lea.vmem [#allocation2], 148
        %v4773 = vld [vmem:[%s4772] ss:$2 sm:$0xff]
        %s4774 = scalar_lea.vmem [#allocation2], 164
        %v4775 = vld [vmem:[%s4774] ss:$2 sm:$0xff]
        %s4776 = scalar_lea.vmem [#allocation2], 180
        %v4777 = vld [vmem:[%s4776] ss:$2 sm:$0xff]
        %s4778 = scalar_lea.vmem [#allocation2], 196
        %v4779 = vld [vmem:[%s4778] ss:$2 sm:$0xff]
        %s4780 = scalar_lea.vmem [#allocation2], 212
        %v4781 = vld [vmem:[%s4780] ss:$2 sm:$0xff]
        %s4782 = scalar_lea.vmem [#allocation2], 228
        %v4783 = vld [vmem:[%s4782] ss:$2 sm:$0xff]
        %s4784 = scalar_lea.vmem [#allocation2], 244
        %v4785 = vld [vmem:[%s4784] ss:$2 sm:$0xff]
        %s4786 = scalar_lea.vmem [#allocation2], 260
        %v4787 = vld [vmem:[%s4786] ss:$2 sm:$0xff]
        %s4788 = scalar_lea.vmem [#allocation2], 276
        %v4789 = vld [vmem:[%s4788] ss:$2 sm:$0x3f]
        %s4790 = scalar_lea.vmem %s4, 160
        %v4791 = vld [vmem:[%s4790] sm:$0xff]
        %v4792 = vld [vmem:[%s4790 + $0x8] sm:$0xff]
        %v4793 = vld [vmem:[%s4790 + $0x10] sm:$0xff]
        %v4794 = vld [vmem:[%s4790 + $0x18] sm:$0xff]
        %v4796 = vsel %vm3455, %v4757, 0
        %v4799 = vsel %vm3455, %v4759, 0
        %v4802 = vsel %vm3455, %v4761, 0
        %v4805 = vsel %vm3455, %v4763, 0
        %v4808 = vsel %vm3455, %v4765, 0
        %v4811 = vsel %vm3455, %v4767, 0
        %v4814 = vsel %vm3455, %v4769, 0
        %v4817 = vsel %vm3455, %v4771, 0
        %v4820 = vsel %vm3455, %v4773, 0
        %v4823 = vsel %vm3455, %v4775, 0
        %v4826 = vsel %vm3455, %v4777, 0
        %v4829 = vsel %vm3455, %v4779, 0
        %v4832 = vsel %vm3455, %v4781, 0
        %v4835 = vsel %vm3455, %v4783, 0
        %v4838 = vsel %vm3455, %v4785, 0
        %v4841 = vsel %vm3455, %v4787, 0
        %v4844 = vsel %vm3455, %v4789, 0
        %4846 = vmatprep.subr.mxu0 0.0
        %4847 = vmatpush1.msra.mxu0 0.0
        %4848 = vmatprep.subr.mxu0 0.0
        %4849 = vmatpush1.msra.mxu0 0.0
        %4850 = vmatprep.subr.mxu0 0.0
        %4851 = vmatpush1.msra.mxu0 0.0
        %4852 = vmatprep.subr.mxu0 0.0
        %4853 = vmatpush1.msra.mxu0 0.0
        %4854 = vmatprep.subr.mxu0 0.0
        %4855 = vmatpush1.msra.mxu0 0.0
        %4856 = vmatprep.subr.mxu0 0.0
        %4857 = vmatpush1.msra.mxu0 0.0
        %4858 = vmatprep.subr.mxu0 0.0
        %4859 = vmatpush1.msra.mxu0 0.0
        %4860 = vmatprep.subr.mxu0 0.0
        %4861 = vmatpush1.msra.mxu0 0.0
        %4862 = vmatprep.subr.mxu0 0.0
        %4863 = vmatpush1.msra.mxu0 0.0
        %4864 = vmatprep.subr.mxu0 0.0
        %4865 = vmatpush1.msra.mxu0 0.0
        %4866 = vmatprep.subr.mxu0 0.0
        %4867 = vmatpush1.msra.mxu0 0.0
        %4868 = vmatprep.subr.mxu0 0.0
        %4869 = vmatpush1.msra.mxu0 0.0
        %4870 = vmatprep.subr.mxu0 0.0
        %4871 = vmatpush1.msra.mxu0 %v4794
        %4872 = vmatprep.subr.mxu0 0.0
        %4873 = vmatpush1.msra.mxu0 %v4793
        %4874 = vmatprep.subr.mxu0 0.0
        %4875 = vmatpush1.msra.mxu0 %v4792
        %4876 = vmatprep.subr.mxu0 0.0
        %4877 = vmatpush1.msra.mxu0 %v4791
        %4878 = vmatprep.subr.mxu0 0.0
        %4879 = vmatpush2.msra.mxu0 0.0
        %4880 = vmatprep.subr.mxu0 0.0
        %4881 = vmatpush2.msra.mxu0 0.0
        %4882 = vmatprep.subr.mxu0 0.0
        %4883 = vmatpush2.msra.mxu0 0.0
        %4884 = vmatprep.subr.mxu0 0.0
        %4885 = vmatpush2.msra.mxu0 0.0
        %4886 = vmatprep.subr.mxu0 0.0
        %4887 = vmatpush2.msra.mxu0 0.0
        %4888 = vmatprep.subr.mxu0 0.0
        %4889 = vmatpush2.msra.mxu0 0.0
        %4890 = vmatprep.subr.mxu0 0.0
        %4891 = vmatpush2.msra.mxu0 0.0
        %4892 = vmatprep.subr.mxu0 0.0
        %4893 = vmatpush2.msra.mxu0 0.0
        %4894 = vmatprep.subr.mxu0 0.0
        %4895 = vmatpush2.msra.mxu0 0.0
        %4896 = vmatprep.subr.mxu0 0.0
        %4897 = vmatpush2.msra.mxu0 0.0
        %4898 = vmatprep.subr.mxu0 0.0
        %4899 = vmatpush2.msra.mxu0 0.0
        %4900 = vmatprep.subr.mxu0 0.0
        %4901 = vmatpush2.msra.mxu0 0.0
        %4902 = vmatprep.subr.mxu0 0.0
        %4903 = vmatpush2.msra.mxu0 0.0
        %4904 = vmatprep.subr.mxu0 0.0
        %4905 = vmatpush2.msra.mxu0 0.0
        %4906 = vmatprep.subr.mxu0 0.0
        %4907 = vmatpush2.msra.mxu0 0.0
        %4908 = vmatprep.subr.mxu0 0.0
        %4909 = vmatpush2.msra.mxu0 0.0
        %4910 = vmatprep.mubr.f32.mxu0 0.0
        %4911 = vmatmul.mubr.f32.gmra.mxu0 %v4796
        %v4912 = vpop.f32.mrf.mxu0
        %v4913 = vadd.f32 0.0, %v4912
        %v4914 = vpop.f32.mrf.mxu0
        %4915 = vmatprep.mubr.f32.mxu0 0.0
        %4916 = vmatmul.mubr.f32.gmra.mxu0 %v4799
        %v4917 = vpop.f32.mrf.mxu0
        %v4918 = vpop.f32.mrf.mxu0
        %4919 = vmatprep.mubr.f32.mxu0 0.0
        %4920 = vmatmul.mubr.f32.gmra.mxu0 %v4802
        %v4921 = vpop.f32.mrf.mxu0
        %v4922 = vadd.f32 0.0, %v4921
        %v4923 = vpop.f32.mrf.mxu0
        %4924 = vmatprep.mubr.f32.mxu0 0.0
        %4925 = vmatmul.mubr.f32.gmra.mxu0 %v4805
        %v4926 = vpop.f32.mrf.mxu0
        %v4927 = vadd.f32 0.0, %v4926
        %v4928 = vpop.f32.mrf.mxu0
        %4929 = vmatprep.mubr.f32.mxu0 0.0
        %4930 = vmatmul.mubr.f32.gmra.mxu0 %v4808
        %v4931 = vpop.f32.mrf.mxu0
        %v4932 = vadd.f32 0.0, %v4931
        %v4933 = vpop.f32.mrf.mxu0
        %4934 = vmatprep.mubr.f32.mxu0 0.0
        %4935 = vmatmul.mubr.f32.gmra.mxu0 %v4811
        %v4936 = vpop.f32.mrf.mxu0
        %v4937 = vadd.f32 0.0, %v4936
        %v4938 = vpop.f32.mrf.mxu0
        %4939 = vmatprep.mubr.f32.mxu0 0.0
        %4940 = vmatmul.mubr.f32.gmra.mxu0 %v4814
        %v4941 = vpop.f32.mrf.mxu0
        %v4942 = vadd.f32 0.0, %v4941
        %v4943 = vpop.f32.mrf.mxu0
        %4944 = vmatprep.mubr.f32.mxu0 0.0
        %4945 = vmatmul.mubr.f32.gmra.mxu0 %v4817
        %v4946 = vpop.f32.mrf.mxu0
        %v4947 = vadd.f32 0.0, %v4946
        %v4948 = vpop.f32.mrf.mxu0
        %4949 = vmatprep.mubr.f32.mxu0 0.0
        %4950 = vmatmul.mubr.f32.gmra.mxu0 %v4820
        %v4951 = vpop.f32.mrf.mxu0
        %v4952 = vpop.f32.mrf.mxu0
        %4953 = vmatprep.mubr.f32.mxu0 0.0
        %4954 = vmatmul.mubr.f32.gmra.mxu0 %v4823
        %v4955 = vpop.f32.mrf.mxu0
        %v4956 = vadd.f32 0.0, %v4955
        %v4957 = vpop.f32.mrf.mxu0
        %4958 = vmatprep.mubr.f32.mxu0 0.0
        %4959 = vmatmul.mubr.f32.gmra.mxu0 %v4826
        %v4960 = vpop.f32.mrf.mxu0
        %v4961 = vpop.f32.mrf.mxu0
        %4962 = vmatprep.mubr.f32.mxu0 0.0
        %4963 = vmatmul.mubr.f32.gmra.mxu0 %v4829
        %v4964 = vpop.f32.mrf.mxu0
        %v4965 = vadd.f32 0.0, %v4964
        %v4966 = vpop.f32.mrf.mxu0
        %4967 = vmatprep.mubr.f32.mxu0 0.0
        %4968 = vmatmul.mubr.f32.gmra.mxu0 %v4832
        %v4969 = vpop.f32.mrf.mxu0
        %v4970 = vadd.f32 0.0, %v4969
        %v4971 = vpop.f32.mrf.mxu0
        %4972 = vmatprep.mubr.f32.mxu0 0.0
        %4973 = vmatmul.mubr.f32.gmra.mxu0 %v4835
        %v4974 = vpop.f32.mrf.mxu0
        %v4975 = vadd.f32 0.0, %v4974
        %v4976 = vpop.f32.mrf.mxu0
        %4977 = vmatprep.mubr.f32.mxu0 0.0
        %4978 = vmatmul.mubr.f32.gmra.mxu0 %v4838
        %v4979 = vpop.f32.mrf.mxu0
        %v4980 = vadd.f32 0.0, %v4979
        %v4981 = vpop.f32.mrf.mxu0
        %4982 = vmatprep.mubr.f32.mxu0 0.0
        %4983 = vmatmul.mubr.f32.gmra.mxu0 %v4841
        %v4984 = vpop.f32.mrf.mxu0
        %v4985 = vadd.f32 0.0, %v4984
        %v4986 = vpop.f32.mrf.mxu0
        %4987 = vmatprep.mubr.f32.mxu0 0.0
        %4988 = vmatmul.mubr.f32.gmra.mxu0 %v4844
        %v4989 = vpop.f32.mrf.mxu0
        %v4990 = vadd.f32 0.0, %v4989
        %v4991 = vpop.f32.mrf.mxu0
        %4992 = vdwg.mxu0
        %v4993 = vadd.f32 %v4742, %v4913
        %v4994 = vadd.f32 %v4743, %v4922
        %v4995 = vadd.f32 %v4744, %v4927
        %v4996 = vadd.f32 %v4745, %v4932
        %v4997 = vadd.f32 %v4746, %v4937
        %v4998 = vadd.f32 %v4747, %v4942
        %v4999 = vadd.f32 %v4748, %v4947
        %v5000 = vadd.f32 %v4749, %v4956
        %v5001 = vadd.f32 %v4750, %v4965
        %v5002 = vadd.f32 %v4751, %v4970
        %v5003 = vadd.f32 %v4752, %v4975
        %v5004 = vadd.f32 %v4753, %v4980
        %v5005 = vadd.f32 %v4754, %v4985
        %v5006 = vadd.f32 %v4755, %v4990
        %v5007 = vld [vmem:[%s4758] ss:$2 sm:$0xff]
        %v5008 = vld [vmem:[%s4760] ss:$2 sm:$0xff]
        %v5009 = vld [vmem:[%s4762] ss:$2 sm:$0xff]
        %v5010 = vld [vmem:[%s4764] ss:$2 sm:$0xff]
        %v5011 = vld [vmem:[%s4766] ss:$2 sm:$0xff]
        %v5012 = vld [vmem:[%s4768] ss:$2 sm:$0xff]
        %v5013 = vld [vmem:[%s4770] ss:$2 sm:$0xff]
        %v5014 = vld [vmem:[%s4772] ss:$2 sm:$0xff]
        %v5015 = vld [vmem:[%s4774] ss:$2 sm:$0xff]
        %v5016 = vld [vmem:[%s4776] ss:$2 sm:$0xff]
        %v5017 = vld [vmem:[%s4778] ss:$2 sm:$0xff]
        %v5018 = vld [vmem:[%s4780] ss:$2 sm:$0xff]
        %v5019 = vld [vmem:[%s4782] ss:$2 sm:$0xff]
        %v5020 = vld [vmem:[%s4784] ss:$2 sm:$0xff]
        %v5021 = vld [vmem:[%s4786] ss:$2 sm:$0xff]
        %v5022 = vld [vmem:[%s4788] ss:$2 sm:$0xff]
        %s5023 = scalar_lea.vmem [#allocation2], 292
        %v5024 = vld [vmem:[%s5023] ss:$2 sm:$0x3f]
        %s5025 = scalar_lea.vmem %s4, 192
        %v5026 = vld [vmem:[%s5025] sm:$0xff]
        %v5027 = vld [vmem:[%s5025 + $0x8] sm:$0xff]
        %v5028 = vld [vmem:[%s5025 + $0x10] sm:$0xff]
        %v5029 = vld [vmem:[%s5025 + $0x18] sm:$0xff]
        %v5031 = vsel %vm3455, %v5007, 0
        %v5034 = vsel %vm3455, %v5008, 0
        %v5037 = vsel %vm3455, %v5009, 0
        %v5040 = vsel %vm3455, %v5010, 0
        %v5043 = vsel %vm3455, %v5011, 0
        %v5046 = vsel %vm3455, %v5012, 0
        %v5049 = vsel %vm3455, %v5013, 0
        %v5052 = vsel %vm3455, %v5014, 0
        %v5055 = vsel %vm3455, %v5015, 0
        %v5058 = vsel %vm3455, %v5016, 0
        %v5061 = vsel %vm3455, %v5017, 0
        %v5064 = vsel %vm3455, %v5018, 0
        %v5067 = vsel %vm3455, %v5019, 0
        %v5070 = vsel %vm3455, %v5020, 0
        %v5073 = vsel %vm3455, %v5021, 0
        %v5076 = vsel %vm3455, %v5022, 0
        %v5079 = vsel %vm3455, %v5024, 0
        %5081 = vmatprep.subr.mxu0 0.0
        %5082 = vmatpush1.msra.mxu0 0.0
        %5083 = vmatprep.subr.mxu0 0.0
        %5084 = vmatpush1.msra.mxu0 0.0
        %5085 = vmatprep.subr.mxu0 0.0
        %5086 = vmatpush1.msra.mxu0 0.0
        %5087 = vmatprep.subr.mxu0 0.0
        %5088 = vmatpush1.msra.mxu0 0.0
        %5089 = vmatprep.subr.mxu0 0.0
        %5090 = vmatpush1.msra.mxu0 0.0
        %5091 = vmatprep.subr.mxu0 0.0
        %5092 = vmatpush1.msra.mxu0 0.0
        %5093 = vmatprep.subr.mxu0 0.0
        %5094 = vmatpush1.msra.mxu0 0.0
        %5095 = vmatprep.subr.mxu0 0.0
        %5096 = vmatpush1.msra.mxu0 0.0
        %5097 = vmatprep.subr.mxu0 0.0
        %5098 = vmatpush1.msra.mxu0 0.0
        %5099 = vmatprep.subr.mxu0 0.0
        %5100 = vmatpush1.msra.mxu0 0.0
        %5101 = vmatprep.subr.mxu0 0.0
        %5102 = vmatpush1.msra.mxu0 0.0
        %5103 = vmatprep.subr.mxu0 0.0
        %5104 = vmatpush1.msra.mxu0 0.0
        %5105 = vmatprep.subr.mxu0 0.0
        %5106 = vmatpush1.msra.mxu0 %v5029
        %5107 = vmatprep.subr.mxu0 0.0
        %5108 = vmatpush1.msra.mxu0 %v5028
        %5109 = vmatprep.subr.mxu0 0.0
        %5110 = vmatpush1.msra.mxu0 %v5027
        %5111 = vmatprep.subr.mxu0 0.0
        %5112 = vmatpush1.msra.mxu0 %v5026
        %5113 = vmatprep.subr.mxu0 0.0
        %5114 = vmatpush2.msra.mxu0 0.0
        %5115 = vmatprep.subr.mxu0 0.0
        %5116 = vmatpush2.msra.mxu0 0.0
        %5117 = vmatprep.subr.mxu0 0.0
        %5118 = vmatpush2.msra.mxu0 0.0
        %5119 = vmatprep.subr.mxu0 0.0
        %5120 = vmatpush2.msra.mxu0 0.0
        %5121 = vmatprep.subr.mxu0 0.0
        %5122 = vmatpush2.msra.mxu0 0.0
        %5123 = vmatprep.subr.mxu0 0.0
        %5124 = vmatpush2.msra.mxu0 0.0
        %5125 = vmatprep.subr.mxu0 0.0
        %5126 = vmatpush2.msra.mxu0 0.0
        %5127 = vmatprep.subr.mxu0 0.0
        %5128 = vmatpush2.msra.mxu0 0.0
        %5129 = vmatprep.subr.mxu0 0.0
        %5130 = vmatpush2.msra.mxu0 0.0
        %5131 = vmatprep.subr.mxu0 0.0
        %5132 = vmatpush2.msra.mxu0 0.0
        %5133 = vmatprep.subr.mxu0 0.0
        %5134 = vmatpush2.msra.mxu0 0.0
        %5135 = vmatprep.subr.mxu0 0.0
        %5136 = vmatpush2.msra.mxu0 0.0
        %5137 = vmatprep.subr.mxu0 0.0
        %5138 = vmatpush2.msra.mxu0 0.0
        %5139 = vmatprep.subr.mxu0 0.0
        %5140 = vmatpush2.msra.mxu0 0.0
        %5141 = vmatprep.subr.mxu0 0.0
        %5142 = vmatpush2.msra.mxu0 0.0
        %5143 = vmatprep.subr.mxu0 0.0
        %5144 = vmatpush2.msra.mxu0 0.0
        %5145 = vmatprep.mubr.f32.mxu0 0.0
        %5146 = vmatmul.mubr.f32.gmra.mxu0 %v5031
        %v5147 = vpop.f32.mrf.mxu0
        %v5148 = vadd.f32 0.0, %v5147
        %v5149 = vpop.f32.mrf.mxu0
        %5150 = vmatprep.mubr.f32.mxu0 0.0
        %5151 = vmatmul.mubr.f32.gmra.mxu0 %v5034
        %v5152 = vpop.f32.mrf.mxu0
        %v5153 = vpop.f32.mrf.mxu0
        %5154 = vmatprep.mubr.f32.mxu0 0.0
        %5155 = vmatmul.mubr.f32.gmra.mxu0 %v5037
        %v5156 = vpop.f32.mrf.mxu0
        %v5157 = vadd.f32 0.0, %v5156
        %v5158 = vpop.f32.mrf.mxu0
        %5159 = vmatprep.mubr.f32.mxu0 0.0
        %5160 = vmatmul.mubr.f32.gmra.mxu0 %v5040
        %v5161 = vpop.f32.mrf.mxu0
        %v5162 = vadd.f32 0.0, %v5161
        %v5163 = vpop.f32.mrf.mxu0
        %5164 = vmatprep.mubr.f32.mxu0 0.0
        %5165 = vmatmul.mubr.f32.gmra.mxu0 %v5043
        %v5166 = vpop.f32.mrf.mxu0
        %v5167 = vadd.f32 0.0, %v5166
        %v5168 = vpop.f32.mrf.mxu0
        %5169 = vmatprep.mubr.f32.mxu0 0.0
        %5170 = vmatmul.mubr.f32.gmra.mxu0 %v5046
        %v5171 = vpop.f32.mrf.mxu0
        %v5172 = vadd.f32 0.0, %v5171
        %v5173 = vpop.f32.mrf.mxu0
        %5174 = vmatprep.mubr.f32.mxu0 0.0
        %5175 = vmatmul.mubr.f32.gmra.mxu0 %v5049
        %v5176 = vpop.f32.mrf.mxu0
        %v5177 = vadd.f32 0.0, %v5176
        %v5178 = vpop.f32.mrf.mxu0
        %5179 = vmatprep.mubr.f32.mxu0 0.0
        %5180 = vmatmul.mubr.f32.gmra.mxu0 %v5052
        %v5181 = vpop.f32.mrf.mxu0
        %v5182 = vadd.f32 0.0, %v5181
        %v5183 = vpop.f32.mrf.mxu0
        %5184 = vmatprep.mubr.f32.mxu0 0.0
        %5185 = vmatmul.mubr.f32.gmra.mxu0 %v5055
        %v5186 = vpop.f32.mrf.mxu0
        %v5187 = vpop.f32.mrf.mxu0
        %5188 = vmatprep.mubr.f32.mxu0 0.0
        %5189 = vmatmul.mubr.f32.gmra.mxu0 %v5058
        %v5190 = vpop.f32.mrf.mxu0
        %v5191 = vadd.f32 0.0, %v5190
        %v5192 = vpop.f32.mrf.mxu0
        %5193 = vmatprep.mubr.f32.mxu0 0.0
        %5194 = vmatmul.mubr.f32.gmra.mxu0 %v5061
        %v5195 = vpop.f32.mrf.mxu0
        %v5196 = vpop.f32.mrf.mxu0
        %5197 = vmatprep.mubr.f32.mxu0 0.0
        %5198 = vmatmul.mubr.f32.gmra.mxu0 %v5064
        %v5199 = vpop.f32.mrf.mxu0
        %v5200 = vadd.f32 0.0, %v5199
        %v5201 = vpop.f32.mrf.mxu0
        %5202 = vmatprep.mubr.f32.mxu0 0.0
        %5203 = vmatmul.mubr.f32.gmra.mxu0 %v5067
        %v5204 = vpop.f32.mrf.mxu0
        %v5205 = vadd.f32 0.0, %v5204
        %v5206 = vpop.f32.mrf.mxu0
        %5207 = vmatprep.mubr.f32.mxu0 0.0
        %5208 = vmatmul.mubr.f32.gmra.mxu0 %v5070
        %v5209 = vpop.f32.mrf.mxu0
        %v5210 = vadd.f32 0.0, %v5209
        %v5211 = vpop.f32.mrf.mxu0
        %5212 = vmatprep.mubr.f32.mxu0 0.0
        %5213 = vmatmul.mubr.f32.gmra.mxu0 %v5073
        %v5214 = vpop.f32.mrf.mxu0
        %v5215 = vadd.f32 0.0, %v5214
        %v5216 = vpop.f32.mrf.mxu0
        %5217 = vmatprep.mubr.f32.mxu0 0.0
        %5218 = vmatmul.mubr.f32.gmra.mxu0 %v5076
        %v5219 = vpop.f32.mrf.mxu0
        %v5220 = vadd.f32 0.0, %v5219
        %v5221 = vpop.f32.mrf.mxu0
        %5222 = vmatprep.mubr.f32.mxu0 0.0
        %5223 = vmatmul.mubr.f32.gmra.mxu0 %v5079
        %v5224 = vpop.f32.mrf.mxu0
        %v5225 = vadd.f32 0.0, %v5224
        %v5226 = vpop.f32.mrf.mxu0
        %5227 = vdwg.mxu0
        %v5228 = vadd.f32 %v4993, %v5148
        %v5229 = vadd.f32 %v4994, %v5157
        %v5230 = vadd.f32 %v4995, %v5162
        %v5231 = vadd.f32 %v4996, %v5167
        %v5232 = vadd.f32 %v4997, %v5172
        %v5233 = vadd.f32 %v4998, %v5177
        %v5234 = vadd.f32 %v4999, %v5182
        %v5235 = vadd.f32 %v5000, %v5191
        %v5236 = vadd.f32 %v5001, %v5200
        %v5237 = vadd.f32 %v5002, %v5205
        %v5238 = vadd.f32 %v5003, %v5210
        %v5239 = vadd.f32 %v5004, %v5215
        %v5240 = vadd.f32 %v5005, %v5220
        %v5241 = vadd.f32 %v5006, %v5225
        %s5242 = scalar_lea.vmem [#allocation2], 37
        %v5243 = vld [vmem:[%s5242] ss:$2 sm:$0xff]
        %s5244 = scalar_lea.vmem [#allocation2], 53
        %v5245 = vld [vmem:[%s5244] ss:$2 sm:$0xff]
        %s5246 = scalar_lea.vmem [#allocation2], 69
        %v5247 = vld [vmem:[%s5246] ss:$2 sm:$0xff]
        %s5248 = scalar_lea.vmem [#allocation2], 85
        %v5249 = vld [vmem:[%s5248] ss:$2 sm:$0xff]
        %s5250 = scalar_lea.vmem [#allocation2], 101
        %v5251 = vld [vmem:[%s5250] ss:$2 sm:$0xff]
        %s5252 = scalar_lea.vmem [#allocation2], 117
        %v5253 = vld [vmem:[%s5252] ss:$2 sm:$0xff]
        %s5254 = scalar_lea.vmem [#allocation2], 133
        %v5255 = vld [vmem:[%s5254] ss:$2 sm:$0xff]
        %s5256 = scalar_lea.vmem [#allocation2], 149
        %v5257 = vld [vmem:[%s5256] ss:$2 sm:$0xff]
        %s5258 = scalar_lea.vmem [#allocation2], 165
        %v5259 = vld [vmem:[%s5258] ss:$2 sm:$0xff]
        %s5260 = scalar_lea.vmem [#allocation2], 181
        %v5261 = vld [vmem:[%s5260] ss:$2 sm:$0xff]
        %s5262 = scalar_lea.vmem [#allocation2], 197
        %v5263 = vld [vmem:[%s5262] ss:$2 sm:$0xff]
        %s5264 = scalar_lea.vmem [#allocation2], 213
        %v5265 = vld [vmem:[%s5264] ss:$2 sm:$0xff]
        %s5266 = scalar_lea.vmem [#allocation2], 229
        %v5267 = vld [vmem:[%s5266] ss:$2 sm:$0xff]
        %s5268 = scalar_lea.vmem [#allocation2], 245
        %v5269 = vld [vmem:[%s5268] ss:$2 sm:$0xff]
        %s5270 = scalar_lea.vmem [#allocation2], 261
        %v5271 = vld [vmem:[%s5270] ss:$2 sm:$0xff]
        %s5272 = scalar_lea.vmem [#allocation2], 277
        %v5273 = vld [vmem:[%s5272] ss:$2 sm:$0xff]
        %s5274 = scalar_lea.vmem [#allocation2], 293
        %v5275 = vld [vmem:[%s5274] ss:$2 sm:$0x3f]
        %s5276 = scalar_lea.vmem %s4, 224
        %v5277 = vld [vmem:[%s5276] sm:$0xff]
        %v5278 = vld [vmem:[%s5276 + $0x8] sm:$0xff]
        %v5279 = vld [vmem:[%s5276 + $0x10] sm:$0xff]
        %v5280 = vld [vmem:[%s5276 + $0x18] sm:$0xff]
        %v5282 = vsel %vm3455, %v5243, 0
        %v5285 = vsel %vm3455, %v5245, 0
        %v5288 = vsel %vm3455, %v5247, 0
        %v5291 = vsel %vm3455, %v5249, 0
        %v5294 = vsel %vm3455, %v5251, 0
        %v5297 = vsel %vm3455, %v5253, 0
        %v5300 = vsel %vm3455, %v5255, 0
        %v5303 = vsel %vm3455, %v5257, 0
        %v5306 = vsel %vm3455, %v5259, 0
        %v5309 = vsel %vm3455, %v5261, 0
        %v5312 = vsel %vm3455, %v5263, 0
        %v5315 = vsel %vm3455, %v5265, 0
        %v5318 = vsel %vm3455, %v5267, 0
        %v5321 = vsel %vm3455, %v5269, 0
        %v5324 = vsel %vm3455, %v5271, 0
        %v5327 = vsel %vm3455, %v5273, 0
        %v5330 = vsel %vm3455, %v5275, 0
        %5332 = vmatprep.subr.mxu0 0.0
        %5333 = vmatpush1.msra.mxu0 0.0
        %5334 = vmatprep.subr.mxu0 0.0
        %5335 = vmatpush1.msra.mxu0 0.0
        %5336 = vmatprep.subr.mxu0 0.0
        %5337 = vmatpush1.msra.mxu0 0.0
        %5338 = vmatprep.subr.mxu0 0.0
        %5339 = vmatpush1.msra.mxu0 0.0
        %5340 = vmatprep.subr.mxu0 0.0
        %5341 = vmatpush1.msra.mxu0 0.0
        %5342 = vmatprep.subr.mxu0 0.0
        %5343 = vmatpush1.msra.mxu0 0.0
        %5344 = vmatprep.subr.mxu0 0.0
        %5345 = vmatpush1.msra.mxu0 0.0
        %5346 = vmatprep.subr.mxu0 0.0
        %5347 = vmatpush1.msra.mxu0 0.0
        %5348 = vmatprep.subr.mxu0 0.0
        %5349 = vmatpush1.msra.mxu0 0.0
        %5350 = vmatprep.subr.mxu0 0.0
        %5351 = vmatpush1.msra.mxu0 0.0
        %5352 = vmatprep.subr.mxu0 0.0
        %5353 = vmatpush1.msra.mxu0 0.0
        %5354 = vmatprep.subr.mxu0 0.0
        %5355 = vmatpush1.msra.mxu0 0.0
        %5356 = vmatprep.subr.mxu0 0.0
        %5357 = vmatpush1.msra.mxu0 %v5280
        %5358 = vmatprep.subr.mxu0 0.0
        %5359 = vmatpush1.msra.mxu0 %v5279
        %5360 = vmatprep.subr.mxu0 0.0
        %5361 = vmatpush1.msra.mxu0 %v5278
        %5362 = vmatprep.subr.mxu0 0.0
        %5363 = vmatpush1.msra.mxu0 %v5277
        %5364 = vmatprep.subr.mxu0 0.0
        %5365 = vmatpush2.msra.mxu0 0.0
        %5366 = vmatprep.subr.mxu0 0.0
        %5367 = vmatpush2.msra.mxu0 0.0
        %5368 = vmatprep.subr.mxu0 0.0
        %5369 = vmatpush2.msra.mxu0 0.0
        %5370 = vmatprep.subr.mxu0 0.0
        %5371 = vmatpush2.msra.mxu0 0.0
        %5372 = vmatprep.subr.mxu0 0.0
        %5373 = vmatpush2.msra.mxu0 0.0
        %5374 = vmatprep.subr.mxu0 0.0
        %5375 = vmatpush2.msra.mxu0 0.0
        %5376 = vmatprep.subr.mxu0 0.0
        %5377 = vmatpush2.msra.mxu0 0.0
        %5378 = vmatprep.subr.mxu0 0.0
        %5379 = vmatpush2.msra.mxu0 0.0
        %5380 = vmatprep.subr.mxu0 0.0
        %5381 = vmatpush2.msra.mxu0 0.0
        %5382 = vmatprep.subr.mxu0 0.0
        %5383 = vmatpush2.msra.mxu0 0.0
        %5384 = vmatprep.subr.mxu0 0.0
        %5385 = vmatpush2.msra.mxu0 0.0
        %5386 = vmatprep.subr.mxu0 0.0
        %5387 = vmatpush2.msra.mxu0 0.0
        %5388 = vmatprep.subr.mxu0 0.0
        %5389 = vmatpush2.msra.mxu0 0.0
        %5390 = vmatprep.subr.mxu0 0.0
        %5391 = vmatpush2.msra.mxu0 0.0
        %5392 = vmatprep.subr.mxu0 0.0
        %5393 = vmatpush2.msra.mxu0 0.0
        %5394 = vmatprep.subr.mxu0 0.0
        %5395 = vmatpush2.msra.mxu0 0.0
        %5396 = vmatprep.mubr.f32.mxu0 0.0
        %5397 = vmatmul.mubr.f32.gmra.mxu0 %v5282
        %v5398 = vpop.f32.mrf.mxu0
        %v5399 = vadd.f32 0.0, %v5398
        %v5400 = vpop.f32.mrf.mxu0
        %5401 = vmatprep.mubr.f32.mxu0 0.0
        %5402 = vmatmul.mubr.f32.gmra.mxu0 %v5285
        %v5403 = vpop.f32.mrf.mxu0
        %v5404 = vpop.f32.mrf.mxu0
        %5405 = vmatprep.mubr.f32.mxu0 0.0
        %5406 = vmatmul.mubr.f32.gmra.mxu0 %v5288
        %v5407 = vpop.f32.mrf.mxu0
        %v5408 = vadd.f32 0.0, %v5407
        %v5409 = vpop.f32.mrf.mxu0
        %5410 = vmatprep.mubr.f32.mxu0 0.0
        %5411 = vmatmul.mubr.f32.gmra.mxu0 %v5291
        %v5412 = vpop.f32.mrf.mxu0
        %v5413 = vadd.f32 0.0, %v5412
        %v5414 = vpop.f32.mrf.mxu0
        %5415 = vmatprep.mubr.f32.mxu0 0.0
        %5416 = vmatmul.mubr.f32.gmra.mxu0 %v5294
        %v5417 = vpop.f32.mrf.mxu0
        %v5418 = vadd.f32 0.0, %v5417
        %v5419 = vpop.f32.mrf.mxu0
        %5420 = vmatprep.mubr.f32.mxu0 0.0
        %5421 = vmatmul.mubr.f32.gmra.mxu0 %v5297
        %v5422 = vpop.f32.mrf.mxu0
        %v5423 = vadd.f32 0.0, %v5422
        %v5424 = vpop.f32.mrf.mxu0
        %5425 = vmatprep.mubr.f32.mxu0 0.0
        %5426 = vmatmul.mubr.f32.gmra.mxu0 %v5300
        %v5427 = vpop.f32.mrf.mxu0
        %v5428 = vadd.f32 0.0, %v5427
        %v5429 = vpop.f32.mrf.mxu0
        %5430 = vmatprep.mubr.f32.mxu0 0.0
        %5431 = vmatmul.mubr.f32.gmra.mxu0 %v5303
        %v5432 = vpop.f32.mrf.mxu0
        %v5433 = vadd.f32 0.0, %v5432
        %v5434 = vpop.f32.mrf.mxu0
        %5435 = vmatprep.mubr.f32.mxu0 0.0
        %5436 = vmatmul.mubr.f32.gmra.mxu0 %v5306
        %v5437 = vpop.f32.mrf.mxu0
        %v5438 = vpop.f32.mrf.mxu0
        %5439 = vmatprep.mubr.f32.mxu0 0.0
        %5440 = vmatmul.mubr.f32.gmra.mxu0 %v5309
        %v5441 = vpop.f32.mrf.mxu0
        %v5442 = vadd.f32 0.0, %v5441
        %v5443 = vpop.f32.mrf.mxu0
        %5444 = vmatprep.mubr.f32.mxu0 0.0
        %5445 = vmatmul.mubr.f32.gmra.mxu0 %v5312
        %v5446 = vpop.f32.mrf.mxu0
        %v5447 = vpop.f32.mrf.mxu0
        %5448 = vmatprep.mubr.f32.mxu0 0.0
        %5449 = vmatmul.mubr.f32.gmra.mxu0 %v5315
        %v5450 = vpop.f32.mrf.mxu0
        %v5451 = vadd.f32 0.0, %v5450
        %v5452 = vpop.f32.mrf.mxu0
        %5453 = vmatprep.mubr.f32.mxu0 0.0
        %5454 = vmatmul.mubr.f32.gmra.mxu0 %v5318
        %v5455 = vpop.f32.mrf.mxu0
        %v5456 = vadd.f32 0.0, %v5455
        %v5457 = vpop.f32.mrf.mxu0
        %5458 = vmatprep.mubr.f32.mxu0 0.0
        %5459 = vmatmul.mubr.f32.gmra.mxu0 %v5321
        %v5460 = vpop.f32.mrf.mxu0
        %v5461 = vadd.f32 0.0, %v5460
        %v5462 = vpop.f32.mrf.mxu0
        %5463 = vmatprep.mubr.f32.mxu0 0.0
        %5464 = vmatmul.mubr.f32.gmra.mxu0 %v5324
        %v5465 = vpop.f32.mrf.mxu0
        %v5466 = vadd.f32 0.0, %v5465
        %v5467 = vpop.f32.mrf.mxu0
        %5468 = vmatprep.mubr.f32.mxu0 0.0
        %5469 = vmatmul.mubr.f32.gmra.mxu0 %v5327
        %v5470 = vpop.f32.mrf.mxu0
        %v5471 = vadd.f32 0.0, %v5470
        %v5472 = vpop.f32.mrf.mxu0
        %5473 = vmatprep.mubr.f32.mxu0 0.0
        %5474 = vmatmul.mubr.f32.gmra.mxu0 %v5330
        %v5475 = vpop.f32.mrf.mxu0
        %v5476 = vadd.f32 0.0, %v5475
        %v5477 = vpop.f32.mrf.mxu0
        %5478 = vdwg.mxu0
        %v5479 = vadd.f32 %v5228, %v5399
        %v5480 = vadd.f32 %v5229, %v5408
        %v5481 = vadd.f32 %v5230, %v5413
        %v5482 = vadd.f32 %v5231, %v5418
        %v5483 = vadd.f32 %v5232, %v5423
        %v5484 = vadd.f32 %v5233, %v5428
        %v5485 = vadd.f32 %v5234, %v5433
        %v5486 = vadd.f32 %v5235, %v5442
        %v5487 = vadd.f32 %v5236, %v5451
        %v5488 = vadd.f32 %v5237, %v5456
        %v5489 = vadd.f32 %v5238, %v5461
        %v5490 = vadd.f32 %v5239, %v5466
        %v5491 = vadd.f32 %v5240, %v5471
        %v5492 = vadd.f32 %v5241, %v5476
        %s5493 = scalar_lea.vmem [#allocation2], 38
        %v5494 = vld [vmem:[%s5493] ss:$2 sm:$0xff]
        %s5495 = scalar_lea.vmem [#allocation2], 54
        %v5496 = vld [vmem:[%s5495] ss:$2 sm:$0xff]
        %s5497 = scalar_lea.vmem [#allocation2], 70
        %v5498 = vld [vmem:[%s5497] ss:$2 sm:$0xff]
        %s5499 = scalar_lea.vmem [#allocation2], 86
        %v5500 = vld [vmem:[%s5499] ss:$2 sm:$0xff]
        %s5501 = scalar_lea.vmem [#allocation2], 102
        %v5502 = vld [vmem:[%s5501] ss:$2 sm:$0xff]
        %s5503 = scalar_lea.vmem [#allocation2], 118
        %v5504 = vld [vmem:[%s5503] ss:$2 sm:$0xff]
        %s5505 = scalar_lea.vmem [#allocation2], 134
        %v5506 = vld [vmem:[%s5505] ss:$2 sm:$0xff]
        %s5507 = scalar_lea.vmem [#allocation2], 150
        %v5508 = vld [vmem:[%s5507] ss:$2 sm:$0xff]
        %s5509 = scalar_lea.vmem [#allocation2], 166
        %v5510 = vld [vmem:[%s5509] ss:$2 sm:$0xff]
        %s5511 = scalar_lea.vmem [#allocation2], 182
        %v5512 = vld [vmem:[%s5511] ss:$2 sm:$0xff]
        %s5513 = scalar_lea.vmem [#allocation2], 198
        %v5514 = vld [vmem:[%s5513] ss:$2 sm:$0xff]
        %s5515 = scalar_lea.vmem [#allocation2], 214
        %v5516 = vld [vmem:[%s5515] ss:$2 sm:$0xff]
        %s5517 = scalar_lea.vmem [#allocation2], 230
        %v5518 = vld [vmem:[%s5517] ss:$2 sm:$0xff]
        %s5519 = scalar_lea.vmem [#allocation2], 246
        %v5520 = vld [vmem:[%s5519] ss:$2 sm:$0xff]
        %s5521 = scalar_lea.vmem [#allocation2], 262
        %v5522 = vld [vmem:[%s5521] ss:$2 sm:$0xff]
        %s5523 = scalar_lea.vmem [#allocation2], 278
        %v5524 = vld [vmem:[%s5523] ss:$2 sm:$0xff]
        %s5525 = scalar_lea.vmem [#allocation2], 294
        %v5526 = vld [vmem:[%s5525] ss:$2 sm:$0x3f]
        %s5527 = scalar_lea.vmem %s4, 256
        %v5528 = vld [vmem:[%s5527] sm:$0xff]
        %v5529 = vld [vmem:[%s5527 + $0x8] sm:$0xff]
        %v5530 = vld [vmem:[%s5527 + $0x10] sm:$0xff]
        %v5531 = vld [vmem:[%s5527 + $0x18] sm:$0xff]
        %v5533 = vsel %vm3455, %v5494, 0
        %v5536 = vsel %vm3455, %v5496, 0
        %v5539 = vsel %vm3455, %v5498, 0
        %v5542 = vsel %vm3455, %v5500, 0
        %v5545 = vsel %vm3455, %v5502, 0
        %v5548 = vsel %vm3455, %v5504, 0
        %v5551 = vsel %vm3455, %v5506, 0
        %v5554 = vsel %vm3455, %v5508, 0
        %v5557 = vsel %vm3455, %v5510, 0
        %v5560 = vsel %vm3455, %v5512, 0
        %v5563 = vsel %vm3455, %v5514, 0
        %v5566 = vsel %vm3455, %v5516, 0
        %v5569 = vsel %vm3455, %v5518, 0
        %v5572 = vsel %vm3455, %v5520, 0
        %v5575 = vsel %vm3455, %v5522, 0
        %v5578 = vsel %vm3455, %v5524, 0
        %v5581 = vsel %vm3455, %v5526, 0
        %5583 = vmatprep.subr.mxu0 0.0
        %5584 = vmatpush1.msra.mxu0 0.0
        %5585 = vmatprep.subr.mxu0 0.0
        %5586 = vmatpush1.msra.mxu0 0.0
        %5587 = vmatprep.subr.mxu0 0.0
        %5588 = vmatpush1.msra.mxu0 0.0
        %5589 = vmatprep.subr.mxu0 0.0
        %5590 = vmatpush1.msra.mxu0 0.0
        %5591 = vmatprep.subr.mxu0 0.0
        %5592 = vmatpush1.msra.mxu0 0.0
        %5593 = vmatprep.subr.mxu0 0.0
        %5594 = vmatpush1.msra.mxu0 0.0
        %5595 = vmatprep.subr.mxu0 0.0
        %5596 = vmatpush1.msra.mxu0 0.0
        %5597 = vmatprep.subr.mxu0 0.0
        %5598 = vmatpush1.msra.mxu0 0.0
        %5599 = vmatprep.subr.mxu0 0.0
        %5600 = vmatpush1.msra.mxu0 0.0
        %5601 = vmatprep.subr.mxu0 0.0
        %5602 = vmatpush1.msra.mxu0 0.0
        %5603 = vmatprep.subr.mxu0 0.0
        %5604 = vmatpush1.msra.mxu0 0.0
        %5605 = vmatprep.subr.mxu0 0.0
        %5606 = vmatpush1.msra.mxu0 0.0
        %5607 = vmatprep.subr.mxu0 0.0
        %5608 = vmatpush1.msra.mxu0 %v5531
        %5609 = vmatprep.subr.mxu0 0.0
        %5610 = vmatpush1.msra.mxu0 %v5530
        %5611 = vmatprep.subr.mxu0 0.0
        %5612 = vmatpush1.msra.mxu0 %v5529
        %5613 = vmatprep.subr.mxu0 0.0
        %5614 = vmatpush1.msra.mxu0 %v5528
        %5615 = vmatprep.subr.mxu0 0.0
        %5616 = vmatpush2.msra.mxu0 0.0
        %5617 = vmatprep.subr.mxu0 0.0
        %5618 = vmatpush2.msra.mxu0 0.0
        %5619 = vmatprep.subr.mxu0 0.0
        %5620 = vmatpush2.msra.mxu0 0.0
        %5621 = vmatprep.subr.mxu0 0.0
        %5622 = vmatpush2.msra.mxu0 0.0
        %5623 = vmatprep.subr.mxu0 0.0
        %5624 = vmatpush2.msra.mxu0 0.0
        %5625 = vmatprep.subr.mxu0 0.0
        %5626 = vmatpush2.msra.mxu0 0.0
        %5627 = vmatprep.subr.mxu0 0.0
        %5628 = vmatpush2.msra.mxu0 0.0
        %5629 = vmatprep.subr.mxu0 0.0
        %5630 = vmatpush2.msra.mxu0 0.0
        %5631 = vmatprep.subr.mxu0 0.0
        %5632 = vmatpush2.msra.mxu0 0.0
        %5633 = vmatprep.subr.mxu0 0.0
        %5634 = vmatpush2.msra.mxu0 0.0
        %5635 = vmatprep.subr.mxu0 0.0
        %5636 = vmatpush2.msra.mxu0 0.0
        %5637 = vmatprep.subr.mxu0 0.0
        %5638 = vmatpush2.msra.mxu0 0.0
        %5639 = vmatprep.subr.mxu0 0.0
        %5640 = vmatpush2.msra.mxu0 0.0
        %5641 = vmatprep.subr.mxu0 0.0
        %5642 = vmatpush2.msra.mxu0 0.0
        %5643 = vmatprep.subr.mxu0 0.0
        %5644 = vmatpush2.msra.mxu0 0.0
        %5645 = vmatprep.subr.mxu0 0.0
        %5646 = vmatpush2.msra.mxu0 0.0
        %5647 = vmatprep.mubr.f32.mxu0 0.0
        %5648 = vmatmul.mubr.f32.gmra.mxu0 %v5533
        %v5649 = vpop.f32.mrf.mxu0
        %v5650 = vadd.f32 0.0, %v5649
        %v5651 = vpop.f32.mrf.mxu0
        %5652 = vmatprep.mubr.f32.mxu0 0.0
        %5653 = vmatmul.mubr.f32.gmra.mxu0 %v5536
        %v5654 = vpop.f32.mrf.mxu0
        %v5655 = vpop.f32.mrf.mxu0
        %5656 = vmatprep.mubr.f32.mxu0 0.0
        %5657 = vmatmul.mubr.f32.gmra.mxu0 %v5539
        %v5658 = vpop.f32.mrf.mxu0
        %v5659 = vadd.f32 0.0, %v5658
        %v5660 = vpop.f32.mrf.mxu0
        %5661 = vmatprep.mubr.f32.mxu0 0.0
        %5662 = vmatmul.mubr.f32.gmra.mxu0 %v5542
        %v5663 = vpop.f32.mrf.mxu0
        %v5664 = vadd.f32 0.0, %v5663
        %v5665 = vpop.f32.mrf.mxu0
        %5666 = vmatprep.mubr.f32.mxu0 0.0
        %5667 = vmatmul.mubr.f32.gmra.mxu0 %v5545
        %v5668 = vpop.f32.mrf.mxu0
        %v5669 = vadd.f32 0.0, %v5668
        %v5670 = vpop.f32.mrf.mxu0
        %5671 = vmatprep.mubr.f32.mxu0 0.0
        %5672 = vmatmul.mubr.f32.gmra.mxu0 %v5548
        %v5673 = vpop.f32.mrf.mxu0
        %v5674 = vadd.f32 0.0, %v5673
        %v5675 = vpop.f32.mrf.mxu0
        %5676 = vmatprep.mubr.f32.mxu0 0.0
        %5677 = vmatmul.mubr.f32.gmra.mxu0 %v5551
        %v5678 = vpop.f32.mrf.mxu0
        %v5679 = vadd.f32 0.0, %v5678
        %v5680 = vpop.f32.mrf.mxu0
        %5681 = vmatprep.mubr.f32.mxu0 0.0
        %5682 = vmatmul.mubr.f32.gmra.mxu0 %v5554
        %v5683 = vpop.f32.mrf.mxu0
        %v5684 = vadd.f32 0.0, %v5683
        %v5685 = vpop.f32.mrf.mxu0
        %5686 = vmatprep.mubr.f32.mxu0 0.0
        %5687 = vmatmul.mubr.f32.gmra.mxu0 %v5557
        %v5688 = vpop.f32.mrf.mxu0
        %v5689 = vpop.f32.mrf.mxu0
        %5690 = vmatprep.mubr.f32.mxu0 0.0
        %5691 = vmatmul.mubr.f32.gmra.mxu0 %v5560
        %v5692 = vpop.f32.mrf.mxu0
        %v5693 = vadd.f32 0.0, %v5692
        %v5694 = vpop.f32.mrf.mxu0
        %5695 = vmatprep.mubr.f32.mxu0 0.0
        %5696 = vmatmul.mubr.f32.gmra.mxu0 %v5563
        %v5697 = vpop.f32.mrf.mxu0
        %v5698 = vpop.f32.mrf.mxu0
        %5699 = vmatprep.mubr.f32.mxu0 0.0
        %5700 = vmatmul.mubr.f32.gmra.mxu0 %v5566
        %v5701 = vpop.f32.mrf.mxu0
        %v5702 = vadd.f32 0.0, %v5701
        %v5703 = vpop.f32.mrf.mxu0
        %5704 = vmatprep.mubr.f32.mxu0 0.0
        %5705 = vmatmul.mubr.f32.gmra.mxu0 %v5569
        %v5706 = vpop.f32.mrf.mxu0
        %v5707 = vadd.f32 0.0, %v5706
        %v5708 = vpop.f32.mrf.mxu0
        %5709 = vmatprep.mubr.f32.mxu0 0.0
        %5710 = vmatmul.mubr.f32.gmra.mxu0 %v5572
        %v5711 = vpop.f32.mrf.mxu0
        %v5712 = vadd.f32 0.0, %v5711
        %v5713 = vpop.f32.mrf.mxu0
        %5714 = vmatprep.mubr.f32.mxu0 0.0
        %5715 = vmatmul.mubr.f32.gmra.mxu0 %v5575
        %v5716 = vpop.f32.mrf.mxu0
        %v5717 = vadd.f32 0.0, %v5716
        %v5718 = vpop.f32.mrf.mxu0
        %5719 = vmatprep.mubr.f32.mxu0 0.0
        %5720 = vmatmul.mubr.f32.gmra.mxu0 %v5578
        %v5721 = vpop.f32.mrf.mxu0
        %v5722 = vadd.f32 0.0, %v5721
        %v5723 = vpop.f32.mrf.mxu0
        %5724 = vmatprep.mubr.f32.mxu0 0.0
        %5725 = vmatmul.mubr.f32.gmra.mxu0 %v5581
        %v5726 = vpop.f32.mrf.mxu0
        %v5727 = vadd.f32 0.0, %v5726
        %v5728 = vpop.f32.mrf.mxu0
        %5729 = vdwg.mxu0
        %v5730 = vadd.f32 %v5479, %v5650
        %v5731 = vadd.f32 %v5480, %v5659
        %v5732 = vadd.f32 %v5481, %v5664
        %v5733 = vadd.f32 %v5482, %v5669
        %v5734 = vadd.f32 %v5483, %v5674
        %v5735 = vadd.f32 %v5484, %v5679
        %v5736 = vadd.f32 %v5485, %v5684
        %v5737 = vadd.f32 %v5486, %v5693
        %v5738 = vadd.f32 %v5487, %v5702
        %v5739 = vadd.f32 %v5488, %v5707
        %v5740 = vadd.f32 %v5489, %v5712
        %v5741 = vadd.f32 %v5490, %v5717
        %v5742 = vadd.f32 %v5491, %v5722
        %v5743 = vadd.f32 %v5492, %v5727
        %v5744 = vld [vmem:[%s5] sm:$0x1]
        %v5746 = vlaneseq
        %v5747 = vshrl.u32 %v5746, 7
        %v5748 = vsub.s32 0, %v5747
        %v5749 = vrot.slane %v5744, %v5748
        %v5751 = vadd.f32 %v5730, %v5749
        %v5752 = vadd.f32 %v5731, %v5749
        %v5753 = vadd.f32 %v5732, %v5749
        %v5754 = vadd.f32 %v5733, %v5749
        %v5755 = vadd.f32 %v5734, %v5749
        %v5756 = vadd.f32 %v5735, %v5749
        %v5757 = vadd.f32 %v5736, %v5749
        %v5758 = vadd.f32 %v5737, %v5749
        %v5759 = vadd.f32 %v5738, %v5749
        %v5760 = vadd.f32 %v5739, %v5749
        %v5761 = vadd.f32 %v5740, %v5749
        %v5762 = vadd.f32 %v5741, %v5749
        %v5763 = vadd.f32 %v5742, %v5749
        %v5764 = vadd.f32 %v5743, %v5749
        %5765 = vst.msk [vmem:[%s619] sm:$0xff] %vm3455, %v5751
        %s5766 = scalar_lea.vmem %s619, 8 [#allocation16]
        %5767 = vst.msk [vmem:[%s5766 - $0x2] sm:$0xfc] %vm3500, %v5752
        %5768 = vst.msk [vmem:[%s5766 + $0x6] sm:$0x3] %vm3503, %v5753
        %s5769 = scalar_lea.vmem %s619, 16 [#allocation16]
        %5770 = vst.msk [vmem:[%s5769 - $0x4] sm:$0xf0] %vm3505, %v5754
        %5771 = vst.msk [vmem:[%s5769 + $0x4] sm:$0xf] %vm3496, %v5755
        %s5772 = scalar_lea.vmem %s619, 24 [#allocation16]
        %5773 = vst.msk [vmem:[%s5772 - $0x6] sm:$0xc0] %vm3509, %v5756
        %5774 = vst.msk [vmem:[%s5772 + $0x2] sm:$0x3f] %vm3512, %v5757
        %s5775 = scalar_lea.vmem %s619, 32 [#allocation16]
        %5776 = vst.msk [vmem:[%s5775] sm:$0xff] %vm3455, %v5758
        %s5777 = scalar_lea.vmem %s619, 40 [#allocation16]
        %5778 = vst.msk [vmem:[%s5777 - $0x2] sm:$0xfc] %vm3500, %v5759
        %5779 = vst.msk [vmem:[%s5777 + $0x6] sm:$0x3] %vm3503, %v5760
        %s5780 = scalar_lea.vmem %s619, 48 [#allocation16]
        %5781 = vst.msk [vmem:[%s5780 - $0x4] sm:$0xf0] %vm3505, %v5761
        %5782 = vst.msk [vmem:[%s5780 + $0x4] sm:$0xf] %vm3496, %v5762
        %s5783 = scalar_lea.vmem %s619, 56 [#allocation16]
        %5784 = vst.msk [vmem:[%s5783 - $0x6] sm:$0xc0] %vm3509, %v5763
        %5785 = vst.msk [vmem:[%s5783 + $0x2] sm:$0x3f] %vm3512, %v5764
        %5786 = vst.msk [vmem:[#allocation3] sm:$0xff] %vm3455, 0.0
        %5787 = vst.msk [vmem:[#allocation3 + $0x8] sm:$0xff] %vm3455, 0.0
        %5788 = vst.msk [vmem:[#allocation3 + $0x10] sm:$0xff] %vm3455, 0.0
        %5789 = vst.msk [vmem:[#allocation3 + $0x18] sm:$0xff] %vm3455, 0.0
        %5790 = vst.msk [vmem:[#allocation3 + $0x20] sm:$0xff] %vm3455, 0.0
        %5791 = vst.msk [vmem:[#allocation3 + $0x28] sm:$0xff] %vm3455, 0.0
        %5792 = vst.msk [vmem:[#allocation3 + $0x30] sm:$0xff] %vm3455, 0.0
        %5793 = vst.msk [vmem:[#allocation3 + $0x38] sm:$0xff] %vm3455, 0.0
        %5794 = vst.msk [vmem:[#allocation3 + $0x40] sm:$0xff] %vm3455, 0.0
        %5795 = vst.msk [vmem:[#allocation3 + $0x48] sm:$0xff] %vm3455, 0.0
        %5796 = vst.msk [vmem:[#allocation3 + $0x50] sm:$0xff] %vm3455, 0.0
        %5797 = vst.msk [vmem:[#allocation3 + $0x58] sm:$0xff] %vm3455, 0.0
        %5798 = vst.msk [vmem:[#allocation3 + $0x60] sm:$0xf] %vm3496, 0.0
        %5799 = vst.msk [vmem:[#allocation3 + $0xb] sm:$0xff] %vm3455, %v5751
        %5800 = vst.msk [vmem:[#allocation3 + $0x13] sm:$0xfc] %vm3500, %v5752
        %5801 = vst.msk [vmem:[#allocation3 + $0x1b] sm:$0x3] %vm3503, %v5753
        %5802 = vst.msk [vmem:[#allocation3 + $0x1b] sm:$0xf0] %vm3505, %v5754
        %5803 = vst.msk [vmem:[#allocation3 + $0x23] sm:$0xf] %vm3496, %v5755
        %5804 = vst.msk [vmem:[#allocation3 + $0x23] sm:$0xc0] %vm3509, %v5756
        %5805 = vst.msk [vmem:[#allocation3 + $0x2b] sm:$0x3f] %vm3512, %v5757
        %5806 = vst.msk [vmem:[#allocation3 + $0x33] sm:$0xff] %vm3455, %v5758
        %5807 = vst.msk [vmem:[#allocation3 + $0x3b] sm:$0xfc] %vm3500, %v5759
        %5808 = vst.msk [vmem:[#allocation3 + $0x43] sm:$0x3] %vm3503, %v5760
        %5809 = vst.msk [vmem:[#allocation3 + $0x43] sm:$0xf0] %vm3505, %v5761
        %5810 = vst.msk [vmem:[#allocation3 + $0x4b] sm:$0xf] %vm3496, %v5762
        %5811 = vst.msk [vmem:[#allocation3 + $0x4b] sm:$0xc0] %vm3509, %v5763
        %5812 = vst.msk [vmem:[#allocation3 + $0x53] sm:$0x3f] %vm3512, %v5764
        %v5813 = vld [vmem:[#allocation3] sm:$0xff]
        %v5814 = vld [vmem:[#allocation3 + $0x8] sm:$0xff]
        %v5815 = vld [vmem:[#allocation3 + $0x10] sm:$0xff]
        %v5816 = vld [vmem:[#allocation3 + $0x18] sm:$0xff]
        %v5817 = vld [vmem:[#allocation3 + $0x20] sm:$0xff]
        %v5818 = vld [vmem:[#allocation3 + $0x28] sm:$0xff]
        %v5819 = vld [vmem:[#allocation3 + $0x30] sm:$0xff]
        %v5820 = vld [vmem:[#allocation3 + $0x38] sm:$0xff]
        %v5821 = vld [vmem:[#allocation3 + $0x40] sm:$0xff]
        %v5822 = vld [vmem:[#allocation3 + $0x48] sm:$0x3f]
        %v5823 = vld [vmem:[%s6] sm:$0xff]
        %v5824 = vld [vmem:[%s6 + $0x8] sm:$0xff]
        %v5825 = vld [vmem:[%s6 + $0x10] sm:$0xff]
        %v5826 = vld [vmem:[%s6 + $0x18] sm:$0xff]
        %v5827 = vld [vmem:[#allocation3 + $0x1] sm:$0xff]
        %v5828 = vld [vmem:[#allocation3 + $0x9] sm:$0xff]
        %v5829 = vld [vmem:[#allocation3 + $0x11] sm:$0xff]
        %v5830 = vld [vmem:[#allocation3 + $0x19] sm:$0xff]
        %v5831 = vld [vmem:[#allocation3 + $0x21] sm:$0xff]
        %v5832 = vld [vmem:[#allocation3 + $0x29] sm:$0xff]
        %v5833 = vld [vmem:[#allocation3 + $0x31] sm:$0xff]
        %v5834 = vld [vmem:[#allocation3 + $0x39] sm:$0xff]
        %v5835 = vld [vmem:[#allocation3 + $0x41] sm:$0xff]
        %v5836 = vld [vmem:[#allocation3 + $0x49] sm:$0x3f]
        %s5837 = scalar_lea.vmem %s6, 32
        %v5838 = vld [vmem:[%s5837] sm:$0xff]
        %v5839 = vld [vmem:[%s5837 + $0x8] sm:$0xff]
        %v5840 = vld [vmem:[%s5837 + $0x10] sm:$0xff]
        %v5841 = vld [vmem:[%s5837 + $0x18] sm:$0xff]
        %v5843 = vsel %vm3455, %v5827, 0
        %v5846 = vsel %vm3455, %v5828, 0
        %v5849 = vsel %vm3455, %v5829, 0
        %v5852 = vsel %vm3455, %v5830, 0
        %v5855 = vsel %vm3455, %v5831, 0
        %v5858 = vsel %vm3455, %v5832, 0
        %v5861 = vsel %vm3455, %v5833, 0
        %v5864 = vsel %vm3455, %v5834, 0
        %v5867 = vsel %vm3455, %v5835, 0
        %v5870 = vsel %vm3455, %v5836, 0
        %5872 = vmatprep.subr.mxu0 0.0
        %5873 = vmatpush1.msra.mxu0 0.0
        %5874 = vmatprep.subr.mxu0 0.0
        %5875 = vmatpush1.msra.mxu0 0.0
        %5876 = vmatprep.subr.mxu0 0.0
        %5877 = vmatpush1.msra.mxu0 0.0
        %5878 = vmatprep.subr.mxu0 0.0
        %5879 = vmatpush1.msra.mxu0 0.0
        %5880 = vmatprep.subr.mxu0 0.0
        %5881 = vmatpush1.msra.mxu0 0.0
        %5882 = vmatprep.subr.mxu0 0.0
        %5883 = vmatpush1.msra.mxu0 0.0
        %5884 = vmatprep.subr.mxu0 0.0
        %5885 = vmatpush1.msra.mxu0 0.0
        %5886 = vmatprep.subr.mxu0 0.0
        %5887 = vmatpush1.msra.mxu0 0.0
        %5888 = vmatprep.subr.mxu0 0.0
        %5889 = vmatpush1.msra.mxu0 0.0
        %5890 = vmatprep.subr.mxu0 0.0
        %5891 = vmatpush1.msra.mxu0 0.0
        %5892 = vmatprep.subr.mxu0 0.0
        %5893 = vmatpush1.msra.mxu0 0.0
        %5894 = vmatprep.subr.mxu0 0.0
        %5895 = vmatpush1.msra.mxu0 0.0
        %5896 = vmatprep.subr.mxu0 0.0
        %5897 = vmatpush1.msra.mxu0 %v5841
        %5898 = vmatprep.subr.mxu0 0.0
        %5899 = vmatpush1.msra.mxu0 %v5840
        %5900 = vmatprep.subr.mxu0 0.0
        %5901 = vmatpush1.msra.mxu0 %v5839
        %5902 = vmatprep.subr.mxu0 0.0
        %5903 = vmatpush1.msra.mxu0 %v5838
        %5904 = vmatprep.subr.mxu0 0.0
        %5905 = vmatpush2.msra.mxu0 0.0
        %5906 = vmatprep.subr.mxu0 0.0
        %5907 = vmatpush2.msra.mxu0 0.0
        %5908 = vmatprep.subr.mxu0 0.0
        %5909 = vmatpush2.msra.mxu0 0.0
        %5910 = vmatprep.subr.mxu0 0.0
        %5911 = vmatpush2.msra.mxu0 0.0
        %5912 = vmatprep.subr.mxu0 0.0
        %5913 = vmatpush2.msra.mxu0 0.0
        %5914 = vmatprep.subr.mxu0 0.0
        %5915 = vmatpush2.msra.mxu0 0.0
        %5916 = vmatprep.subr.mxu0 0.0
        %5917 = vmatpush2.msra.mxu0 0.0
        %5918 = vmatprep.subr.mxu0 0.0
        %5919 = vmatpush2.msra.mxu0 0.0
        %5920 = vmatprep.subr.mxu0 0.0
        %5921 = vmatpush2.msra.mxu0 0.0
        %5922 = vmatprep.subr.mxu0 0.0
        %5923 = vmatpush2.msra.mxu0 0.0
        %5924 = vmatprep.subr.mxu0 0.0
        %5925 = vmatpush2.msra.mxu0 0.0
        %5926 = vmatprep.subr.mxu0 0.0
        %5927 = vmatpush2.msra.mxu0 0.0
        %5928 = vmatprep.subr.mxu0 0.0
        %5929 = vmatpush2.msra.mxu0 0.0
        %5930 = vmatprep.subr.mxu0 0.0
        %5931 = vmatpush2.msra.mxu0 0.0
        %5932 = vmatprep.subr.mxu0 0.0
        %5933 = vmatpush2.msra.mxu0 0.0
        %5934 = vmatprep.subr.mxu0 0.0
        %5935 = vmatpush2.msra.mxu0 0.0
        %5936 = vmatprep.mubr.f32.mxu0 0.0
        %5937 = vmatmul.mubr.f32.gmra.mxu0 %v5843
        %v5938 = vpop.f32.mrf.mxu0
        %v5939 = vadd.f32 0.0, %v5938
        %v5940 = vpop.f32.mrf.mxu0
        %5941 = vmatprep.mubr.f32.mxu0 0.0
        %5942 = vmatmul.mubr.f32.gmra.mxu0 %v5846
        %v5943 = vpop.f32.mrf.mxu0
        %v5944 = vadd.f32 0.0, %v5943
        %v5945 = vpop.f32.mrf.mxu0
        %5946 = vmatprep.mubr.f32.mxu0 0.0
        %5947 = vmatmul.mubr.f32.gmra.mxu0 %v5849
        %v5948 = vpop.f32.mrf.mxu0
        %v5949 = vadd.f32 0.0, %v5948
        %v5950 = vpop.f32.mrf.mxu0
        %5951 = vmatprep.mubr.f32.mxu0 0.0
        %5952 = vmatmul.mubr.f32.gmra.mxu0 %v5852
        %v5953 = vpop.f32.mrf.mxu0
        %v5954 = vadd.f32 0.0, %v5953
        %v5955 = vpop.f32.mrf.mxu0
        %5956 = vmatprep.mubr.f32.mxu0 0.0
        %5957 = vmatmul.mubr.f32.gmra.mxu0 %v5855
        %v5958 = vpop.f32.mrf.mxu0
        %v5959 = vadd.f32 0.0, %v5958
        %v5960 = vpop.f32.mrf.mxu0
        %5961 = vmatprep.mubr.f32.mxu0 0.0
        %5962 = vmatmul.mubr.f32.gmra.mxu0 %v5858
        %v5963 = vpop.f32.mrf.mxu0
        %v5964 = vadd.f32 0.0, %v5963
        %v5965 = vpop.f32.mrf.mxu0
        %5966 = vmatprep.mubr.f32.mxu0 0.0
        %5967 = vmatmul.mubr.f32.gmra.mxu0 %v5861
        %v5968 = vpop.f32.mrf.mxu0
        %v5969 = vadd.f32 0.0, %v5968
        %v5970 = vpop.f32.mrf.mxu0
        %5971 = vmatprep.mubr.f32.mxu0 0.0
        %5972 = vmatmul.mubr.f32.gmra.mxu0 %v5864
        %v5973 = vpop.f32.mrf.mxu0
        %v5974 = vadd.f32 0.0, %v5973
        %v5975 = vpop.f32.mrf.mxu0
        %5976 = vmatprep.mubr.f32.mxu0 0.0
        %5977 = vmatmul.mubr.f32.gmra.mxu0 %v5867
        %v5978 = vpop.f32.mrf.mxu0
        %v5979 = vadd.f32 0.0, %v5978
        %v5980 = vpop.f32.mrf.mxu0
        %5981 = vmatprep.mubr.f32.mxu0 0.0
        %5982 = vmatmul.mubr.f32.gmra.mxu0 %v5870
        %v5983 = vpop.f32.mrf.mxu0
        %v5984 = vadd.f32 0.0, %v5983
        %v5985 = vpop.f32.mrf.mxu0
        %5986 = vdwg.mxu0
        %v5988 = vsel %vm3455, %v5813, 0
        %v5991 = vsel %vm3455, %v5814, 0
        %v5994 = vsel %vm3455, %v5815, 0
        %v5997 = vsel %vm3455, %v5816, 0
        %v6000 = vsel %vm3455, %v5817, 0
        %v6003 = vsel %vm3455, %v5818, 0
        %v6006 = vsel %vm3455, %v5819, 0
        %v6009 = vsel %vm3455, %v5820, 0
        %v6012 = vsel %vm3455, %v5821, 0
        %v6015 = vsel %vm3455, %v5822, 0
        %6017 = vmatprep.subr.mxu0 0.0
        %6018 = vmatpush1.msra.mxu0 0.0
        %6019 = vmatprep.subr.mxu0 0.0
        %6020 = vmatpush1.msra.mxu0 0.0
        %6021 = vmatprep.subr.mxu0 0.0
        %6022 = vmatpush1.msra.mxu0 0.0
        %6023 = vmatprep.subr.mxu0 0.0
        %6024 = vmatpush1.msra.mxu0 0.0
        %6025 = vmatprep.subr.mxu0 0.0
        %6026 = vmatpush1.msra.mxu0 0.0
        %6027 = vmatprep.subr.mxu0 0.0
        %6028 = vmatpush1.msra.mxu0 0.0
        %6029 = vmatprep.subr.mxu0 0.0
        %6030 = vmatpush1.msra.mxu0 0.0
        %6031 = vmatprep.subr.mxu0 0.0
        %6032 = vmatpush1.msra.mxu0 0.0
        %6033 = vmatprep.subr.mxu0 0.0
        %6034 = vmatpush1.msra.mxu0 0.0
        %6035 = vmatprep.subr.mxu0 0.0
        %6036 = vmatpush1.msra.mxu0 0.0
        %6037 = vmatprep.subr.mxu0 0.0
        %6038 = vmatpush1.msra.mxu0 0.0
        %6039 = vmatprep.subr.mxu0 0.0
        %6040 = vmatpush1.msra.mxu0 0.0
        %6041 = vmatprep.subr.mxu0 0.0
        %6042 = vmatpush1.msra.mxu0 %v5826
        %6043 = vmatprep.subr.mxu0 0.0
        %6044 = vmatpush1.msra.mxu0 %v5825
        %6045 = vmatprep.subr.mxu0 0.0
        %6046 = vmatpush1.msra.mxu0 %v5824
        %6047 = vmatprep.subr.mxu0 0.0
        %6048 = vmatpush1.msra.mxu0 %v5823
        %6049 = vmatprep.subr.mxu0 0.0
        %6050 = vmatpush2.msra.mxu0 0.0
        %6051 = vmatprep.subr.mxu0 0.0
        %6052 = vmatpush2.msra.mxu0 0.0
        %6053 = vmatprep.subr.mxu0 0.0
        %6054 = vmatpush2.msra.mxu0 0.0
        %6055 = vmatprep.subr.mxu0 0.0
        %6056 = vmatpush2.msra.mxu0 0.0
        %6057 = vmatprep.subr.mxu0 0.0
        %6058 = vmatpush2.msra.mxu0 0.0
        %6059 = vmatprep.subr.mxu0 0.0
        %6060 = vmatpush2.msra.mxu0 0.0
        %6061 = vmatprep.subr.mxu0 0.0
        %6062 = vmatpush2.msra.mxu0 0.0
        %6063 = vmatprep.subr.mxu0 0.0
        %6064 = vmatpush2.msra.mxu0 0.0
        %6065 = vmatprep.subr.mxu0 0.0
        %6066 = vmatpush2.msra.mxu0 0.0
        %6067 = vmatprep.subr.mxu0 0.0
        %6068 = vmatpush2.msra.mxu0 0.0
        %6069 = vmatprep.subr.mxu0 0.0
        %6070 = vmatpush2.msra.mxu0 0.0
        %6071 = vmatprep.subr.mxu0 0.0
        %6072 = vmatpush2.msra.mxu0 0.0
        %6073 = vmatprep.subr.mxu0 0.0
        %6074 = vmatpush2.msra.mxu0 0.0
        %6075 = vmatprep.subr.mxu0 0.0
        %6076 = vmatpush2.msra.mxu0 0.0
        %6077 = vmatprep.subr.mxu0 0.0
        %6078 = vmatpush2.msra.mxu0 0.0
        %6079 = vmatprep.subr.mxu0 0.0
        %6080 = vmatpush2.msra.mxu0 0.0
        %6081 = vmatprep.mubr.f32.mxu0 0.0
        %6082 = vmatmul.mubr.f32.gmra.mxu0 %v5988
        %v6083 = vpop.f32.mrf.mxu0
        %v6084 = vadd.f32 %v5939, %v6083
        %v6085 = vpop.f32.mrf.mxu0
        %6086 = vmatprep.mubr.f32.mxu0 0.0
        %6087 = vmatmul.mubr.f32.gmra.mxu0 %v5991
        %v6088 = vpop.f32.mrf.mxu0
        %v6089 = vadd.f32 %v5944, %v6088
        %v6090 = vpop.f32.mrf.mxu0
        %6091 = vmatprep.mubr.f32.mxu0 0.0
        %6092 = vmatmul.mubr.f32.gmra.mxu0 %v5994
        %v6093 = vpop.f32.mrf.mxu0
        %v6094 = vadd.f32 %v5949, %v6093
        %v6095 = vpop.f32.mrf.mxu0
        %6096 = vmatprep.mubr.f32.mxu0 0.0
        %6097 = vmatmul.mubr.f32.gmra.mxu0 %v5997
        %v6098 = vpop.f32.mrf.mxu0
        %v6099 = vadd.f32 %v5954, %v6098
        %v6100 = vpop.f32.mrf.mxu0
        %6101 = vmatprep.mubr.f32.mxu0 0.0
        %6102 = vmatmul.mubr.f32.gmra.mxu0 %v6000
        %v6103 = vpop.f32.mrf.mxu0
        %v6104 = vadd.f32 %v5959, %v6103
        %v6105 = vpop.f32.mrf.mxu0
        %6106 = vmatprep.mubr.f32.mxu0 0.0
        %6107 = vmatmul.mubr.f32.gmra.mxu0 %v6003
        %v6108 = vpop.f32.mrf.mxu0
        %v6109 = vadd.f32 %v5964, %v6108
        %v6110 = vpop.f32.mrf.mxu0
        %6111 = vmatprep.mubr.f32.mxu0 0.0
        %6112 = vmatmul.mubr.f32.gmra.mxu0 %v6006
        %v6113 = vpop.f32.mrf.mxu0
        %v6114 = vadd.f32 %v5969, %v6113
        %v6115 = vpop.f32.mrf.mxu0
        %6116 = vmatprep.mubr.f32.mxu0 0.0
        %6117 = vmatmul.mubr.f32.gmra.mxu0 %v6009
        %v6118 = vpop.f32.mrf.mxu0
        %v6119 = vadd.f32 %v5974, %v6118
        %v6120 = vpop.f32.mrf.mxu0
        %6121 = vmatprep.mubr.f32.mxu0 0.0
        %6122 = vmatmul.mubr.f32.gmra.mxu0 %v6012
        %v6123 = vpop.f32.mrf.mxu0
        %v6124 = vadd.f32 %v5979, %v6123
        %v6125 = vpop.f32.mrf.mxu0
        %6126 = vmatprep.mubr.f32.mxu0 0.0
        %6127 = vmatmul.mubr.f32.gmra.mxu0 %v6015
        %v6128 = vpop.f32.mrf.mxu0
        %v6129 = vadd.f32 %v5984, %v6128
        %v6130 = vpop.f32.mrf.mxu0
        %6131 = vdwg.mxu0
        %v6132 = vld [vmem:[#allocation3 + $0x2] sm:$0xff]
        %v6133 = vld [vmem:[#allocation3 + $0xa] sm:$0xff]
        %v6134 = vld [vmem:[#allocation3 + $0x12] sm:$0xff]
        %v6135 = vld [vmem:[#allocation3 + $0x1a] sm:$0xff]
        %v6136 = vld [vmem:[#allocation3 + $0x22] sm:$0xff]
        %v6137 = vld [vmem:[#allocation3 + $0x2a] sm:$0xff]
        %v6138 = vld [vmem:[#allocation3 + $0x32] sm:$0xff]
        %v6139 = vld [vmem:[#allocation3 + $0x3a] sm:$0xff]
        %v6140 = vld [vmem:[#allocation3 + $0x42] sm:$0xff]
        %v6141 = vld [vmem:[#allocation3 + $0x4a] sm:$0x3f]
        %s6142 = scalar_lea.vmem %s6, 64
        %v6143 = vld [vmem:[%s6142] sm:$0xff]
        %v6144 = vld [vmem:[%s6142 + $0x8] sm:$0xff]
        %v6145 = vld [vmem:[%s6142 + $0x10] sm:$0xff]
        %v6146 = vld [vmem:[%s6142 + $0x18] sm:$0xff]
        %v6148 = vsel %vm3455, %v6132, 0
        %v6151 = vsel %vm3455, %v6133, 0
        %v6154 = vsel %vm3455, %v6134, 0
        %v6157 = vsel %vm3455, %v6135, 0
        %v6160 = vsel %vm3455, %v6136, 0
        %v6163 = vsel %vm3455, %v6137, 0
        %v6166 = vsel %vm3455, %v6138, 0
        %v6169 = vsel %vm3455, %v6139, 0
        %v6172 = vsel %vm3455, %v6140, 0
        %v6175 = vsel %vm3455, %v6141, 0
        %6177 = vmatprep.subr.mxu0 0.0
        %6178 = vmatpush1.msra.mxu0 0.0
        %6179 = vmatprep.subr.mxu0 0.0
        %6180 = vmatpush1.msra.mxu0 0.0
        %6181 = vmatprep.subr.mxu0 0.0
        %6182 = vmatpush1.msra.mxu0 0.0
        %6183 = vmatprep.subr.mxu0 0.0
        %6184 = vmatpush1.msra.mxu0 0.0
        %6185 = vmatprep.subr.mxu0 0.0
        %6186 = vmatpush1.msra.mxu0 0.0
        %6187 = vmatprep.subr.mxu0 0.0
        %6188 = vmatpush1.msra.mxu0 0.0
        %6189 = vmatprep.subr.mxu0 0.0
        %6190 = vmatpush1.msra.mxu0 0.0
        %6191 = vmatprep.subr.mxu0 0.0
        %6192 = vmatpush1.msra.mxu0 0.0
        %6193 = vmatprep.subr.mxu0 0.0
        %6194 = vmatpush1.msra.mxu0 0.0
        %6195 = vmatprep.subr.mxu0 0.0
        %6196 = vmatpush1.msra.mxu0 0.0
        %6197 = vmatprep.subr.mxu0 0.0
        %6198 = vmatpush1.msra.mxu0 0.0
        %6199 = vmatprep.subr.mxu0 0.0
        %6200 = vmatpush1.msra.mxu0 0.0
        %6201 = vmatprep.subr.mxu0 0.0
        %6202 = vmatpush1.msra.mxu0 %v6146
        %6203 = vmatprep.subr.mxu0 0.0
        %6204 = vmatpush1.msra.mxu0 %v6145
        %6205 = vmatprep.subr.mxu0 0.0
        %6206 = vmatpush1.msra.mxu0 %v6144
        %6207 = vmatprep.subr.mxu0 0.0
        %6208 = vmatpush1.msra.mxu0 %v6143
        %6209 = vmatprep.subr.mxu0 0.0
        %6210 = vmatpush2.msra.mxu0 0.0
        %6211 = vmatprep.subr.mxu0 0.0
        %6212 = vmatpush2.msra.mxu0 0.0
        %6213 = vmatprep.subr.mxu0 0.0
        %6214 = vmatpush2.msra.mxu0 0.0
        %6215 = vmatprep.subr.mxu0 0.0
        %6216 = vmatpush2.msra.mxu0 0.0
        %6217 = vmatprep.subr.mxu0 0.0
        %6218 = vmatpush2.msra.mxu0 0.0
        %6219 = vmatprep.subr.mxu0 0.0
        %6220 = vmatpush2.msra.mxu0 0.0
        %6221 = vmatprep.subr.mxu0 0.0
        %6222 = vmatpush2.msra.mxu0 0.0
        %6223 = vmatprep.subr.mxu0 0.0
        %6224 = vmatpush2.msra.mxu0 0.0
        %6225 = vmatprep.subr.mxu0 0.0
        %6226 = vmatpush2.msra.mxu0 0.0
        %6227 = vmatprep.subr.mxu0 0.0
        %6228 = vmatpush2.msra.mxu0 0.0
        %6229 = vmatprep.subr.mxu0 0.0
        %6230 = vmatpush2.msra.mxu0 0.0
        %6231 = vmatprep.subr.mxu0 0.0
        %6232 = vmatpush2.msra.mxu0 0.0
        %6233 = vmatprep.subr.mxu0 0.0
        %6234 = vmatpush2.msra.mxu0 0.0
        %6235 = vmatprep.subr.mxu0 0.0
        %6236 = vmatpush2.msra.mxu0 0.0
        %6237 = vmatprep.subr.mxu0 0.0
        %6238 = vmatpush2.msra.mxu0 0.0
        %6239 = vmatprep.subr.mxu0 0.0
        %6240 = vmatpush2.msra.mxu0 0.0
        %6241 = vmatprep.mubr.f32.mxu0 0.0
        %6242 = vmatmul.mubr.f32.gmra.mxu0 %v6148
        %v6243 = vpop.f32.mrf.mxu0
        %v6244 = vadd.f32 0.0, %v6243
        %v6245 = vpop.f32.mrf.mxu0
        %6246 = vmatprep.mubr.f32.mxu0 0.0
        %6247 = vmatmul.mubr.f32.gmra.mxu0 %v6151
        %v6248 = vpop.f32.mrf.mxu0
        %v6249 = vadd.f32 0.0, %v6248
        %v6250 = vpop.f32.mrf.mxu0
        %6251 = vmatprep.mubr.f32.mxu0 0.0
        %6252 = vmatmul.mubr.f32.gmra.mxu0 %v6154
        %v6253 = vpop.f32.mrf.mxu0
        %v6254 = vadd.f32 0.0, %v6253
        %v6255 = vpop.f32.mrf.mxu0
        %6256 = vmatprep.mubr.f32.mxu0 0.0
        %6257 = vmatmul.mubr.f32.gmra.mxu0 %v6157
        %v6258 = vpop.f32.mrf.mxu0
        %v6259 = vadd.f32 0.0, %v6258
        %v6260 = vpop.f32.mrf.mxu0
        %6261 = vmatprep.mubr.f32.mxu0 0.0
        %6262 = vmatmul.mubr.f32.gmra.mxu0 %v6160
        %v6263 = vpop.f32.mrf.mxu0
        %v6264 = vadd.f32 0.0, %v6263
        %v6265 = vpop.f32.mrf.mxu0
        %6266 = vmatprep.mubr.f32.mxu0 0.0
        %6267 = vmatmul.mubr.f32.gmra.mxu0 %v6163
        %v6268 = vpop.f32.mrf.mxu0
        %v6269 = vadd.f32 0.0, %v6268
        %v6270 = vpop.f32.mrf.mxu0
        %6271 = vmatprep.mubr.f32.mxu0 0.0
        %6272 = vmatmul.mubr.f32.gmra.mxu0 %v6166
        %v6273 = vpop.f32.mrf.mxu0
        %v6274 = vadd.f32 0.0, %v6273
        %v6275 = vpop.f32.mrf.mxu0
        %6276 = vmatprep.mubr.f32.mxu0 0.0
        %6277 = vmatmul.mubr.f32.gmra.mxu0 %v6169
        %v6278 = vpop.f32.mrf.mxu0
        %v6279 = vadd.f32 0.0, %v6278
        %v6280 = vpop.f32.mrf.mxu0
        %6281 = vmatprep.mubr.f32.mxu0 0.0
        %6282 = vmatmul.mubr.f32.gmra.mxu0 %v6172
        %v6283 = vpop.f32.mrf.mxu0
        %v6284 = vadd.f32 0.0, %v6283
        %v6285 = vpop.f32.mrf.mxu0
        %6286 = vmatprep.mubr.f32.mxu0 0.0
        %6287 = vmatmul.mubr.f32.gmra.mxu0 %v6175
        %v6288 = vpop.f32.mrf.mxu0
        %v6289 = vadd.f32 0.0, %v6288
        %v6290 = vpop.f32.mrf.mxu0
        %6291 = vdwg.mxu0
        %v6292 = vadd.f32 %v6084, %v6244
        %v6293 = vadd.f32 %v6089, %v6249
        %v6294 = vadd.f32 %v6094, %v6254
        %v6295 = vadd.f32 %v6099, %v6259
        %v6296 = vadd.f32 %v6104, %v6264
        %v6297 = vadd.f32 %v6109, %v6269
        %v6298 = vadd.f32 %v6114, %v6274
        %v6299 = vadd.f32 %v6119, %v6279
        %v6300 = vadd.f32 %v6124, %v6284
        %v6301 = vadd.f32 %v6129, %v6289
        %v6302 = vld [vmem:[#allocation3 + $0xa] sm:$0xff]
        %v6303 = vld [vmem:[#allocation3 + $0x12] sm:$0xff]
        %v6304 = vld [vmem:[#allocation3 + $0x1a] sm:$0xff]
        %v6305 = vld [vmem:[#allocation3 + $0x22] sm:$0xff]
        %v6306 = vld [vmem:[#allocation3 + $0x2a] sm:$0xff]
        %v6307 = vld [vmem:[#allocation3 + $0x32] sm:$0xff]
        %v6308 = vld [vmem:[#allocation3 + $0x3a] sm:$0xff]
        %v6309 = vld [vmem:[#allocation3 + $0x42] sm:$0xff]
        %v6310 = vld [vmem:[#allocation3 + $0x4a] sm:$0xff]
        %v6311 = vld [vmem:[#allocation3 + $0x52] sm:$0x3f]
        %s6312 = scalar_lea.vmem %s6, 96
        %v6313 = vld [vmem:[%s6312] sm:$0xff]
        %v6314 = vld [vmem:[%s6312 + $0x8] sm:$0xff]
        %v6315 = vld [vmem:[%s6312 + $0x10] sm:$0xff]
        %v6316 = vld [vmem:[%s6312 + $0x18] sm:$0xff]
        %v6318 = vsel %vm3455, %v6302, 0
        %v6321 = vsel %vm3455, %v6303, 0
        %v6324 = vsel %vm3455, %v6304, 0
        %v6327 = vsel %vm3455, %v6305, 0
        %v6330 = vsel %vm3455, %v6306, 0
        %v6333 = vsel %vm3455, %v6307, 0
        %v6336 = vsel %vm3455, %v6308, 0
        %v6339 = vsel %vm3455, %v6309, 0
        %v6342 = vsel %vm3455, %v6310, 0
        %v6345 = vsel %vm3455, %v6311, 0
        %6347 = vmatprep.subr.mxu0 0.0
        %6348 = vmatpush1.msra.mxu0 0.0
        %6349 = vmatprep.subr.mxu0 0.0
        %6350 = vmatpush1.msra.mxu0 0.0
        %6351 = vmatprep.subr.mxu0 0.0
        %6352 = vmatpush1.msra.mxu0 0.0
        %6353 = vmatprep.subr.mxu0 0.0
        %6354 = vmatpush1.msra.mxu0 0.0
        %6355 = vmatprep.subr.mxu0 0.0
        %6356 = vmatpush1.msra.mxu0 0.0
        %6357 = vmatprep.subr.mxu0 0.0
        %6358 = vmatpush1.msra.mxu0 0.0
        %6359 = vmatprep.subr.mxu0 0.0
        %6360 = vmatpush1.msra.mxu0 0.0
        %6361 = vmatprep.subr.mxu0 0.0
        %6362 = vmatpush1.msra.mxu0 0.0
        %6363 = vmatprep.subr.mxu0 0.0
        %6364 = vmatpush1.msra.mxu0 0.0
        %6365 = vmatprep.subr.mxu0 0.0
        %6366 = vmatpush1.msra.mxu0 0.0
        %6367 = vmatprep.subr.mxu0 0.0
        %6368 = vmatpush1.msra.mxu0 0.0
        %6369 = vmatprep.subr.mxu0 0.0
        %6370 = vmatpush1.msra.mxu0 0.0
        %6371 = vmatprep.subr.mxu0 0.0
        %6372 = vmatpush1.msra.mxu0 %v6316
        %6373 = vmatprep.subr.mxu0 0.0
        %6374 = vmatpush1.msra.mxu0 %v6315
        %6375 = vmatprep.subr.mxu0 0.0
        %6376 = vmatpush1.msra.mxu0 %v6314
        %6377 = vmatprep.subr.mxu0 0.0
        %6378 = vmatpush1.msra.mxu0 %v6313
        %6379 = vmatprep.subr.mxu0 0.0
        %6380 = vmatpush2.msra.mxu0 0.0
        %6381 = vmatprep.subr.mxu0 0.0
        %6382 = vmatpush2.msra.mxu0 0.0
        %6383 = vmatprep.subr.mxu0 0.0
        %6384 = vmatpush2.msra.mxu0 0.0
        %6385 = vmatprep.subr.mxu0 0.0
        %6386 = vmatpush2.msra.mxu0 0.0
        %6387 = vmatprep.subr.mxu0 0.0
        %6388 = vmatpush2.msra.mxu0 0.0
        %6389 = vmatprep.subr.mxu0 0.0
        %6390 = vmatpush2.msra.mxu0 0.0
        %6391 = vmatprep.subr.mxu0 0.0
        %6392 = vmatpush2.msra.mxu0 0.0
        %6393 = vmatprep.subr.mxu0 0.0
        %6394 = vmatpush2.msra.mxu0 0.0
        %6395 = vmatprep.subr.mxu0 0.0
        %6396 = vmatpush2.msra.mxu0 0.0
        %6397 = vmatprep.subr.mxu0 0.0
        %6398 = vmatpush2.msra.mxu0 0.0
        %6399 = vmatprep.subr.mxu0 0.0
        %6400 = vmatpush2.msra.mxu0 0.0
        %6401 = vmatprep.subr.mxu0 0.0
        %6402 = vmatpush2.msra.mxu0 0.0
        %6403 = vmatprep.subr.mxu0 0.0
        %6404 = vmatpush2.msra.mxu0 0.0
        %6405 = vmatprep.subr.mxu0 0.0
        %6406 = vmatpush2.msra.mxu0 0.0
        %6407 = vmatprep.subr.mxu0 0.0
        %6408 = vmatpush2.msra.mxu0 0.0
        %6409 = vmatprep.subr.mxu0 0.0
        %6410 = vmatpush2.msra.mxu0 0.0
        %6411 = vmatprep.mubr.f32.mxu0 0.0
        %6412 = vmatmul.mubr.f32.gmra.mxu0 %v6318
        %v6413 = vpop.f32.mrf.mxu0
        %v6414 = vadd.f32 0.0, %v6413
        %v6415 = vpop.f32.mrf.mxu0
        %6416 = vmatprep.mubr.f32.mxu0 0.0
        %6417 = vmatmul.mubr.f32.gmra.mxu0 %v6321
        %v6418 = vpop.f32.mrf.mxu0
        %v6419 = vadd.f32 0.0, %v6418
        %v6420 = vpop.f32.mrf.mxu0
        %6421 = vmatprep.mubr.f32.mxu0 0.0
        %6422 = vmatmul.mubr.f32.gmra.mxu0 %v6324
        %v6423 = vpop.f32.mrf.mxu0
        %v6424 = vadd.f32 0.0, %v6423
        %v6425 = vpop.f32.mrf.mxu0
        %6426 = vmatprep.mubr.f32.mxu0 0.0
        %6427 = vmatmul.mubr.f32.gmra.mxu0 %v6327
        %v6428 = vpop.f32.mrf.mxu0
        %v6429 = vadd.f32 0.0, %v6428
        %v6430 = vpop.f32.mrf.mxu0
        %6431 = vmatprep.mubr.f32.mxu0 0.0
        %6432 = vmatmul.mubr.f32.gmra.mxu0 %v6330
        %v6433 = vpop.f32.mrf.mxu0
        %v6434 = vadd.f32 0.0, %v6433
        %v6435 = vpop.f32.mrf.mxu0
        %6436 = vmatprep.mubr.f32.mxu0 0.0
        %6437 = vmatmul.mubr.f32.gmra.mxu0 %v6333
        %v6438 = vpop.f32.mrf.mxu0
        %v6439 = vadd.f32 0.0, %v6438
        %v6440 = vpop.f32.mrf.mxu0
        %6441 = vmatprep.mubr.f32.mxu0 0.0
        %6442 = vmatmul.mubr.f32.gmra.mxu0 %v6336
        %v6443 = vpop.f32.mrf.mxu0
        %v6444 = vadd.f32 0.0, %v6443
        %v6445 = vpop.f32.mrf.mxu0
        %6446 = vmatprep.mubr.f32.mxu0 0.0
        %6447 = vmatmul.mubr.f32.gmra.mxu0 %v6339
        %v6448 = vpop.f32.mrf.mxu0
        %v6449 = vadd.f32 0.0, %v6448
        %v6450 = vpop.f32.mrf.mxu0
        %6451 = vmatprep.mubr.f32.mxu0 0.0
        %6452 = vmatmul.mubr.f32.gmra.mxu0 %v6342
        %v6453 = vpop.f32.mrf.mxu0
        %v6454 = vadd.f32 0.0, %v6453
        %v6455 = vpop.f32.mrf.mxu0
        %6456 = vmatprep.mubr.f32.mxu0 0.0
        %6457 = vmatmul.mubr.f32.gmra.mxu0 %v6345
        %v6458 = vpop.f32.mrf.mxu0
        %v6459 = vadd.f32 0.0, %v6458
        %v6460 = vpop.f32.mrf.mxu0
        %6461 = vdwg.mxu0
        %v6462 = vadd.f32 %v6292, %v6414
        %v6463 = vadd.f32 %v6293, %v6419
        %v6464 = vadd.f32 %v6294, %v6424
        %v6465 = vadd.f32 %v6295, %v6429
        %v6466 = vadd.f32 %v6296, %v6434
        %v6467 = vadd.f32 %v6297, %v6439
        %v6468 = vadd.f32 %v6298, %v6444
        %v6469 = vadd.f32 %v6299, %v6449
        %v6470 = vadd.f32 %v6300, %v6454
        %v6471 = vadd.f32 %v6301, %v6459
        %v6472 = vld [vmem:[#allocation3 + $0xb] sm:$0xff]
        %v6473 = vld [vmem:[#allocation3 + $0x13] sm:$0xff]
        %v6474 = vld [vmem:[#allocation3 + $0x1b] sm:$0xff]
        %v6475 = vld [vmem:[#allocation3 + $0x23] sm:$0xff]
        %v6476 = vld [vmem:[#allocation3 + $0x2b] sm:$0xff]
        %v6477 = vld [vmem:[#allocation3 + $0x33] sm:$0xff]
        %v6478 = vld [vmem:[#allocation3 + $0x3b] sm:$0xff]
        %v6479 = vld [vmem:[#allocation3 + $0x43] sm:$0xff]
        %v6480 = vld [vmem:[#allocation3 + $0x4b] sm:$0xff]
        %v6481 = vld [vmem:[#allocation3 + $0x53] sm:$0x3f]
        %s6482 = scalar_lea.vmem %s6, 128
        %v6483 = vld [vmem:[%s6482] sm:$0xff]
        %v6484 = vld [vmem:[%s6482 + $0x8] sm:$0xff]
        %v6485 = vld [vmem:[%s6482 + $0x10] sm:$0xff]
        %v6486 = vld [vmem:[%s6482 + $0x18] sm:$0xff]
        %v6488 = vsel %vm3455, %v6472, 0
        %v6491 = vsel %vm3455, %v6473, 0
        %v6494 = vsel %vm3455, %v6474, 0
        %v6497 = vsel %vm3455, %v6475, 0
        %v6500 = vsel %vm3455, %v6476, 0
        %v6503 = vsel %vm3455, %v6477, 0
        %v6506 = vsel %vm3455, %v6478, 0
        %v6509 = vsel %vm3455, %v6479, 0
        %v6512 = vsel %vm3455, %v6480, 0
        %v6515 = vsel %vm3455, %v6481, 0
        %6517 = vmatprep.subr.mxu0 0.0
        %6518 = vmatpush1.msra.mxu0 0.0
        %6519 = vmatprep.subr.mxu0 0.0
        %6520 = vmatpush1.msra.mxu0 0.0
        %6521 = vmatprep.subr.mxu0 0.0
        %6522 = vmatpush1.msra.mxu0 0.0
        %6523 = vmatprep.subr.mxu0 0.0
        %6524 = vmatpush1.msra.mxu0 0.0
        %6525 = vmatprep.subr.mxu0 0.0
        %6526 = vmatpush1.msra.mxu0 0.0
        %6527 = vmatprep.subr.mxu0 0.0
        %6528 = vmatpush1.msra.mxu0 0.0
        %6529 = vmatprep.subr.mxu0 0.0
        %6530 = vmatpush1.msra.mxu0 0.0
        %6531 = vmatprep.subr.mxu0 0.0
        %6532 = vmatpush1.msra.mxu0 0.0
        %6533 = vmatprep.subr.mxu0 0.0
        %6534 = vmatpush1.msra.mxu0 0.0
        %6535 = vmatprep.subr.mxu0 0.0
        %6536 = vmatpush1.msra.mxu0 0.0
        %6537 = vmatprep.subr.mxu0 0.0
        %6538 = vmatpush1.msra.mxu0 0.0
        %6539 = vmatprep.subr.mxu0 0.0
        %6540 = vmatpush1.msra.mxu0 0.0
        %6541 = vmatprep.subr.mxu0 0.0
        %6542 = vmatpush1.msra.mxu0 %v6486
        %6543 = vmatprep.subr.mxu0 0.0
        %6544 = vmatpush1.msra.mxu0 %v6485
        %6545 = vmatprep.subr.mxu0 0.0
        %6546 = vmatpush1.msra.mxu0 %v6484
        %6547 = vmatprep.subr.mxu0 0.0
        %6548 = vmatpush1.msra.mxu0 %v6483
        %6549 = vmatprep.subr.mxu0 0.0
        %6550 = vmatpush2.msra.mxu0 0.0
        %6551 = vmatprep.subr.mxu0 0.0
        %6552 = vmatpush2.msra.mxu0 0.0
        %6553 = vmatprep.subr.mxu0 0.0
        %6554 = vmatpush2.msra.mxu0 0.0
        %6555 = vmatprep.subr.mxu0 0.0
        %6556 = vmatpush2.msra.mxu0 0.0
        %6557 = vmatprep.subr.mxu0 0.0
        %6558 = vmatpush2.msra.mxu0 0.0
        %6559 = vmatprep.subr.mxu0 0.0
        %6560 = vmatpush2.msra.mxu0 0.0
        %6561 = vmatprep.subr.mxu0 0.0
        %6562 = vmatpush2.msra.mxu0 0.0
        %6563 = vmatprep.subr.mxu0 0.0
        %6564 = vmatpush2.msra.mxu0 0.0
        %6565 = vmatprep.subr.mxu0 0.0
        %6566 = vmatpush2.msra.mxu0 0.0
        %6567 = vmatprep.subr.mxu0 0.0
        %6568 = vmatpush2.msra.mxu0 0.0
        %6569 = vmatprep.subr.mxu0 0.0
        %6570 = vmatpush2.msra.mxu0 0.0
        %6571 = vmatprep.subr.mxu0 0.0
        %6572 = vmatpush2.msra.mxu0 0.0
        %6573 = vmatprep.subr.mxu0 0.0
        %6574 = vmatpush2.msra.mxu0 0.0
        %6575 = vmatprep.subr.mxu0 0.0
        %6576 = vmatpush2.msra.mxu0 0.0
        %6577 = vmatprep.subr.mxu0 0.0
        %6578 = vmatpush2.msra.mxu0 0.0
        %6579 = vmatprep.subr.mxu0 0.0
        %6580 = vmatpush2.msra.mxu0 0.0
        %6581 = vmatprep.mubr.f32.mxu0 0.0
        %6582 = vmatmul.mubr.f32.gmra.mxu0 %v6488
        %v6583 = vpop.f32.mrf.mxu0
        %v6584 = vadd.f32 0.0, %v6583
        %v6585 = vpop.f32.mrf.mxu0
        %6586 = vmatprep.mubr.f32.mxu0 0.0
        %6587 = vmatmul.mubr.f32.gmra.mxu0 %v6491
        %v6588 = vpop.f32.mrf.mxu0
        %v6589 = vadd.f32 0.0, %v6588
        %v6590 = vpop.f32.mrf.mxu0
        %6591 = vmatprep.mubr.f32.mxu0 0.0
        %6592 = vmatmul.mubr.f32.gmra.mxu0 %v6494
        %v6593 = vpop.f32.mrf.mxu0
        %v6594 = vadd.f32 0.0, %v6593
        %v6595 = vpop.f32.mrf.mxu0
        %6596 = vmatprep.mubr.f32.mxu0 0.0
        %6597 = vmatmul.mubr.f32.gmra.mxu0 %v6497
        %v6598 = vpop.f32.mrf.mxu0
        %v6599 = vadd.f32 0.0, %v6598
        %v6600 = vpop.f32.mrf.mxu0
        %6601 = vmatprep.mubr.f32.mxu0 0.0
        %6602 = vmatmul.mubr.f32.gmra.mxu0 %v6500
        %v6603 = vpop.f32.mrf.mxu0
        %v6604 = vadd.f32 0.0, %v6603
        %v6605 = vpop.f32.mrf.mxu0
        %6606 = vmatprep.mubr.f32.mxu0 0.0
        %6607 = vmatmul.mubr.f32.gmra.mxu0 %v6503
        %v6608 = vpop.f32.mrf.mxu0
        %v6609 = vadd.f32 0.0, %v6608
        %v6610 = vpop.f32.mrf.mxu0
        %6611 = vmatprep.mubr.f32.mxu0 0.0
        %6612 = vmatmul.mubr.f32.gmra.mxu0 %v6506
        %v6613 = vpop.f32.mrf.mxu0
        %v6614 = vadd.f32 0.0, %v6613
        %v6615 = vpop.f32.mrf.mxu0
        %6616 = vmatprep.mubr.f32.mxu0 0.0
        %6617 = vmatmul.mubr.f32.gmra.mxu0 %v6509
        %v6618 = vpop.f32.mrf.mxu0
        %v6619 = vadd.f32 0.0, %v6618
        %v6620 = vpop.f32.mrf.mxu0
        %6621 = vmatprep.mubr.f32.mxu0 0.0
        %6622 = vmatmul.mubr.f32.gmra.mxu0 %v6512
        %v6623 = vpop.f32.mrf.mxu0
        %v6624 = vadd.f32 0.0, %v6623
        %v6625 = vpop.f32.mrf.mxu0
        %6626 = vmatprep.mubr.f32.mxu0 0.0
        %6627 = vmatmul.mubr.f32.gmra.mxu0 %v6515
        %v6628 = vpop.f32.mrf.mxu0
        %v6629 = vadd.f32 0.0, %v6628
        %v6630 = vpop.f32.mrf.mxu0
        %6631 = vdwg.mxu0
        %v6632 = vadd.f32 %v6462, %v6584
        %v6633 = vadd.f32 %v6463, %v6589
        %v6634 = vadd.f32 %v6464, %v6594
        %v6635 = vadd.f32 %v6465, %v6599
        %v6636 = vadd.f32 %v6466, %v6604
        %v6637 = vadd.f32 %v6467, %v6609
        %v6638 = vadd.f32 %v6468, %v6614
        %v6639 = vadd.f32 %v6469, %v6619
        %v6640 = vadd.f32 %v6470, %v6624
        %v6641 = vadd.f32 %v6471, %v6629
        %v6642 = vld [vmem:[#allocation3 + $0xc] sm:$0xff]
        %v6643 = vld [vmem:[#allocation3 + $0x14] sm:$0xff]
        %v6644 = vld [vmem:[#allocation3 + $0x1c] sm:$0xff]
        %v6645 = vld [vmem:[#allocation3 + $0x24] sm:$0xff]
        %v6646 = vld [vmem:[#allocation3 + $0x2c] sm:$0xff]
        %v6647 = vld [vmem:[#allocation3 + $0x34] sm:$0xff]
        %v6648 = vld [vmem:[#allocation3 + $0x3c] sm:$0xff]
        %v6649 = vld [vmem:[#allocation3 + $0x44] sm:$0xff]
        %v6650 = vld [vmem:[#allocation3 + $0x4c] sm:$0xff]
        %v6651 = vld [vmem:[#allocation3 + $0x54] sm:$0x3f]
        %s6652 = scalar_lea.vmem %s6, 160
        %v6653 = vld [vmem:[%s6652] sm:$0xff]
        %v6654 = vld [vmem:[%s6652 + $0x8] sm:$0xff]
        %v6655 = vld [vmem:[%s6652 + $0x10] sm:$0xff]
        %v6656 = vld [vmem:[%s6652 + $0x18] sm:$0xff]
        %v6658 = vsel %vm3455, %v6642, 0
        %v6661 = vsel %vm3455, %v6643, 0
        %v6664 = vsel %vm3455, %v6644, 0
        %v6667 = vsel %vm3455, %v6645, 0
        %v6670 = vsel %vm3455, %v6646, 0
        %v6673 = vsel %vm3455, %v6647, 0
        %v6676 = vsel %vm3455, %v6648, 0
        %v6679 = vsel %vm3455, %v6649, 0
        %v6682 = vsel %vm3455, %v6650, 0
        %v6685 = vsel %vm3455, %v6651, 0
        %6687 = vmatprep.subr.mxu0 0.0
        %6688 = vmatpush1.msra.mxu0 0.0
        %6689 = vmatprep.subr.mxu0 0.0
        %6690 = vmatpush1.msra.mxu0 0.0
        %6691 = vmatprep.subr.mxu0 0.0
        %6692 = vmatpush1.msra.mxu0 0.0
        %6693 = vmatprep.subr.mxu0 0.0
        %6694 = vmatpush1.msra.mxu0 0.0
        %6695 = vmatprep.subr.mxu0 0.0
        %6696 = vmatpush1.msra.mxu0 0.0
        %6697 = vmatprep.subr.mxu0 0.0
        %6698 = vmatpush1.msra.mxu0 0.0
        %6699 = vmatprep.subr.mxu0 0.0
        %6700 = vmatpush1.msra.mxu0 0.0
        %6701 = vmatprep.subr.mxu0 0.0
        %6702 = vmatpush1.msra.mxu0 0.0
        %6703 = vmatprep.subr.mxu0 0.0
        %6704 = vmatpush1.msra.mxu0 0.0
        %6705 = vmatprep.subr.mxu0 0.0
        %6706 = vmatpush1.msra.mxu0 0.0
        %6707 = vmatprep.subr.mxu0 0.0
        %6708 = vmatpush1.msra.mxu0 0.0
        %6709 = vmatprep.subr.mxu0 0.0
        %6710 = vmatpush1.msra.mxu0 0.0
        %6711 = vmatprep.subr.mxu0 0.0
        %6712 = vmatpush1.msra.mxu0 %v6656
        %6713 = vmatprep.subr.mxu0 0.0
        %6714 = vmatpush1.msra.mxu0 %v6655
        %6715 = vmatprep.subr.mxu0 0.0
        %6716 = vmatpush1.msra.mxu0 %v6654
        %6717 = vmatprep.subr.mxu0 0.0
        %6718 = vmatpush1.msra.mxu0 %v6653
        %6719 = vmatprep.subr.mxu0 0.0
        %6720 = vmatpush2.msra.mxu0 0.0
        %6721 = vmatprep.subr.mxu0 0.0
        %6722 = vmatpush2.msra.mxu0 0.0
        %6723 = vmatprep.subr.mxu0 0.0
        %6724 = vmatpush2.msra.mxu0 0.0
        %6725 = vmatprep.subr.mxu0 0.0
        %6726 = vmatpush2.msra.mxu0 0.0
        %6727 = vmatprep.subr.mxu0 0.0
        %6728 = vmatpush2.msra.mxu0 0.0
        %6729 = vmatprep.subr.mxu0 0.0
        %6730 = vmatpush2.msra.mxu0 0.0
        %6731 = vmatprep.subr.mxu0 0.0
        %6732 = vmatpush2.msra.mxu0 0.0
        %6733 = vmatprep.subr.mxu0 0.0
        %6734 = vmatpush2.msra.mxu0 0.0
        %6735 = vmatprep.subr.mxu0 0.0
        %6736 = vmatpush2.msra.mxu0 0.0
        %6737 = vmatprep.subr.mxu0 0.0
        %6738 = vmatpush2.msra.mxu0 0.0
        %6739 = vmatprep.subr.mxu0 0.0
        %6740 = vmatpush2.msra.mxu0 0.0
        %6741 = vmatprep.subr.mxu0 0.0
        %6742 = vmatpush2.msra.mxu0 0.0
        %6743 = vmatprep.subr.mxu0 0.0
        %6744 = vmatpush2.msra.mxu0 0.0
        %6745 = vmatprep.subr.mxu0 0.0
        %6746 = vmatpush2.msra.mxu0 0.0
        %6747 = vmatprep.subr.mxu0 0.0
        %6748 = vmatpush2.msra.mxu0 0.0
        %6749 = vmatprep.subr.mxu0 0.0
        %6750 = vmatpush2.msra.mxu0 0.0
        %6751 = vmatprep.mubr.f32.mxu0 0.0
        %6752 = vmatmul.mubr.f32.gmra.mxu0 %v6658
        %v6753 = vpop.f32.mrf.mxu0
        %v6754 = vadd.f32 0.0, %v6753
        %v6755 = vpop.f32.mrf.mxu0
        %6756 = vmatprep.mubr.f32.mxu0 0.0
        %6757 = vmatmul.mubr.f32.gmra.mxu0 %v6661
        %v6758 = vpop.f32.mrf.mxu0
        %v6759 = vadd.f32 0.0, %v6758
        %v6760 = vpop.f32.mrf.mxu0
        %6761 = vmatprep.mubr.f32.mxu0 0.0
        %6762 = vmatmul.mubr.f32.gmra.mxu0 %v6664
        %v6763 = vpop.f32.mrf.mxu0
        %v6764 = vadd.f32 0.0, %v6763
        %v6765 = vpop.f32.mrf.mxu0
        %6766 = vmatprep.mubr.f32.mxu0 0.0
        %6767 = vmatmul.mubr.f32.gmra.mxu0 %v6667
        %v6768 = vpop.f32.mrf.mxu0
        %v6769 = vadd.f32 0.0, %v6768
        %v6770 = vpop.f32.mrf.mxu0
        %6771 = vmatprep.mubr.f32.mxu0 0.0
        %6772 = vmatmul.mubr.f32.gmra.mxu0 %v6670
        %v6773 = vpop.f32.mrf.mxu0
        %v6774 = vadd.f32 0.0, %v6773
        %v6775 = vpop.f32.mrf.mxu0
        %6776 = vmatprep.mubr.f32.mxu0 0.0
        %6777 = vmatmul.mubr.f32.gmra.mxu0 %v6673
        %v6778 = vpop.f32.mrf.mxu0
        %v6779 = vadd.f32 0.0, %v6778
        %v6780 = vpop.f32.mrf.mxu0
        %6781 = vmatprep.mubr.f32.mxu0 0.0
        %6782 = vmatmul.mubr.f32.gmra.mxu0 %v6676
        %v6783 = vpop.f32.mrf.mxu0
        %v6784 = vadd.f32 0.0, %v6783
        %v6785 = vpop.f32.mrf.mxu0
        %6786 = vmatprep.mubr.f32.mxu0 0.0
        %6787 = vmatmul.mubr.f32.gmra.mxu0 %v6679
        %v6788 = vpop.f32.mrf.mxu0
        %v6789 = vadd.f32 0.0, %v6788
        %v6790 = vpop.f32.mrf.mxu0
        %6791 = vmatprep.mubr.f32.mxu0 0.0
        %6792 = vmatmul.mubr.f32.gmra.mxu0 %v6682
        %v6793 = vpop.f32.mrf.mxu0
        %v6794 = vadd.f32 0.0, %v6793
        %v6795 = vpop.f32.mrf.mxu0
        %6796 = vmatprep.mubr.f32.mxu0 0.0
        %6797 = vmatmul.mubr.f32.gmra.mxu0 %v6685
        %v6798 = vpop.f32.mrf.mxu0
        %v6799 = vadd.f32 0.0, %v6798
        %v6800 = vpop.f32.mrf.mxu0
        %6801 = vdwg.mxu0
        %v6802 = vadd.f32 %v6632, %v6754
        %v6803 = vadd.f32 %v6633, %v6759
        %v6804 = vadd.f32 %v6634, %v6764
        %v6805 = vadd.f32 %v6635, %v6769
        %v6806 = vadd.f32 %v6636, %v6774
        %v6807 = vadd.f32 %v6637, %v6779
        %v6808 = vadd.f32 %v6638, %v6784
        %v6809 = vadd.f32 %v6639, %v6789
        %v6810 = vadd.f32 %v6640, %v6794
        %v6811 = vadd.f32 %v6641, %v6799
        %v6812 = vld [vmem:[#allocation3 + $0x14] sm:$0xff]
        %v6813 = vld [vmem:[#allocation3 + $0x1c] sm:$0xff]
        %v6814 = vld [vmem:[#allocation3 + $0x24] sm:$0xff]
        %v6815 = vld [vmem:[#allocation3 + $0x2c] sm:$0xff]
        %v6816 = vld [vmem:[#allocation3 + $0x34] sm:$0xff]
        %v6817 = vld [vmem:[#allocation3 + $0x3c] sm:$0xff]
        %v6818 = vld [vmem:[#allocation3 + $0x44] sm:$0xff]
        %v6819 = vld [vmem:[#allocation3 + $0x4c] sm:$0xff]
        %v6820 = vld [vmem:[#allocation3 + $0x54] sm:$0xff]
        %v6821 = vld [vmem:[#allocation3 + $0x5c] sm:$0x3f]
        %s6822 = scalar_lea.vmem %s6, 192
        %v6823 = vld [vmem:[%s6822] sm:$0xff]
        %v6824 = vld [vmem:[%s6822 + $0x8] sm:$0xff]
        %v6825 = vld [vmem:[%s6822 + $0x10] sm:$0xff]
        %v6826 = vld [vmem:[%s6822 + $0x18] sm:$0xff]
        %v6828 = vsel %vm3455, %v6812, 0
        %v6831 = vsel %vm3455, %v6813, 0
        %v6834 = vsel %vm3455, %v6814, 0
        %v6837 = vsel %vm3455, %v6815, 0
        %v6840 = vsel %vm3455, %v6816, 0
        %v6843 = vsel %vm3455, %v6817, 0
        %v6846 = vsel %vm3455, %v6818, 0
        %v6849 = vsel %vm3455, %v6819, 0
        %v6852 = vsel %vm3455, %v6820, 0
        %v6855 = vsel %vm3455, %v6821, 0
        %6857 = vmatprep.subr.mxu0 0.0
        %6858 = vmatpush1.msra.mxu0 0.0
        %6859 = vmatprep.subr.mxu0 0.0
        %6860 = vmatpush1.msra.mxu0 0.0
        %6861 = vmatprep.subr.mxu0 0.0
        %6862 = vmatpush1.msra.mxu0 0.0
        %6863 = vmatprep.subr.mxu0 0.0
        %6864 = vmatpush1.msra.mxu0 0.0
        %6865 = vmatprep.subr.mxu0 0.0
        %6866 = vmatpush1.msra.mxu0 0.0
        %6867 = vmatprep.subr.mxu0 0.0
        %6868 = vmatpush1.msra.mxu0 0.0
        %6869 = vmatprep.subr.mxu0 0.0
        %6870 = vmatpush1.msra.mxu0 0.0
        %6871 = vmatprep.subr.mxu0 0.0
        %6872 = vmatpush1.msra.mxu0 0.0
        %6873 = vmatprep.subr.mxu0 0.0
        %6874 = vmatpush1.msra.mxu0 0.0
        %6875 = vmatprep.subr.mxu0 0.0
        %6876 = vmatpush1.msra.mxu0 0.0
        %6877 = vmatprep.subr.mxu0 0.0
        %6878 = vmatpush1.msra.mxu0 0.0
        %6879 = vmatprep.subr.mxu0 0.0
        %6880 = vmatpush1.msra.mxu0 0.0
        %6881 = vmatprep.subr.mxu0 0.0
        %6882 = vmatpush1.msra.mxu0 %v6826
        %6883 = vmatprep.subr.mxu0 0.0
        %6884 = vmatpush1.msra.mxu0 %v6825
        %6885 = vmatprep.subr.mxu0 0.0
        %6886 = vmatpush1.msra.mxu0 %v6824
        %6887 = vmatprep.subr.mxu0 0.0
        %6888 = vmatpush1.msra.mxu0 %v6823
        %6889 = vmatprep.subr.mxu0 0.0
        %6890 = vmatpush2.msra.mxu0 0.0
        %6891 = vmatprep.subr.mxu0 0.0
        %6892 = vmatpush2.msra.mxu0 0.0
        %6893 = vmatprep.subr.mxu0 0.0
        %6894 = vmatpush2.msra.mxu0 0.0
        %6895 = vmatprep.subr.mxu0 0.0
        %6896 = vmatpush2.msra.mxu0 0.0
        %6897 = vmatprep.subr.mxu0 0.0
        %6898 = vmatpush2.msra.mxu0 0.0
        %6899 = vmatprep.subr.mxu0 0.0
        %6900 = vmatpush2.msra.mxu0 0.0
        %6901 = vmatprep.subr.mxu0 0.0
        %6902 = vmatpush2.msra.mxu0 0.0
        %6903 = vmatprep.subr.mxu0 0.0
        %6904 = vmatpush2.msra.mxu0 0.0
        %6905 = vmatprep.subr.mxu0 0.0
        %6906 = vmatpush2.msra.mxu0 0.0
        %6907 = vmatprep.subr.mxu0 0.0
        %6908 = vmatpush2.msra.mxu0 0.0
        %6909 = vmatprep.subr.mxu0 0.0
        %6910 = vmatpush2.msra.mxu0 0.0
        %6911 = vmatprep.subr.mxu0 0.0
        %6912 = vmatpush2.msra.mxu0 0.0
        %6913 = vmatprep.subr.mxu0 0.0
        %6914 = vmatpush2.msra.mxu0 0.0
        %6915 = vmatprep.subr.mxu0 0.0
        %6916 = vmatpush2.msra.mxu0 0.0
        %6917 = vmatprep.subr.mxu0 0.0
        %6918 = vmatpush2.msra.mxu0 0.0
        %6919 = vmatprep.subr.mxu0 0.0
        %6920 = vmatpush2.msra.mxu0 0.0
        %6921 = vmatprep.mubr.f32.mxu0 0.0
        %6922 = vmatmul.mubr.f32.gmra.mxu0 %v6828
        %v6923 = vpop.f32.mrf.mxu0
        %v6924 = vadd.f32 0.0, %v6923
        %v6925 = vpop.f32.mrf.mxu0
        %6926 = vmatprep.mubr.f32.mxu0 0.0
        %6927 = vmatmul.mubr.f32.gmra.mxu0 %v6831
        %v6928 = vpop.f32.mrf.mxu0
        %v6929 = vadd.f32 0.0, %v6928
        %v6930 = vpop.f32.mrf.mxu0
        %6931 = vmatprep.mubr.f32.mxu0 0.0
        %6932 = vmatmul.mubr.f32.gmra.mxu0 %v6834
        %v6933 = vpop.f32.mrf.mxu0
        %v6934 = vadd.f32 0.0, %v6933
        %v6935 = vpop.f32.mrf.mxu0
        %6936 = vmatprep.mubr.f32.mxu0 0.0
        %6937 = vmatmul.mubr.f32.gmra.mxu0 %v6837
        %v6938 = vpop.f32.mrf.mxu0
        %v6939 = vadd.f32 0.0, %v6938
        %v6940 = vpop.f32.mrf.mxu0
        %6941 = vmatprep.mubr.f32.mxu0 0.0
        %6942 = vmatmul.mubr.f32.gmra.mxu0 %v6840
        %v6943 = vpop.f32.mrf.mxu0
        %v6944 = vadd.f32 0.0, %v6943
        %v6945 = vpop.f32.mrf.mxu0
        %6946 = vmatprep.mubr.f32.mxu0 0.0
        %6947 = vmatmul.mubr.f32.gmra.mxu0 %v6843
        %v6948 = vpop.f32.mrf.mxu0
        %v6949 = vadd.f32 0.0, %v6948
        %v6950 = vpop.f32.mrf.mxu0
        %6951 = vmatprep.mubr.f32.mxu0 0.0
        %6952 = vmatmul.mubr.f32.gmra.mxu0 %v6846
        %v6953 = vpop.f32.mrf.mxu0
        %v6954 = vadd.f32 0.0, %v6953
        %v6955 = vpop.f32.mrf.mxu0
        %6956 = vmatprep.mubr.f32.mxu0 0.0
        %6957 = vmatmul.mubr.f32.gmra.mxu0 %v6849
        %v6958 = vpop.f32.mrf.mxu0
        %v6959 = vadd.f32 0.0, %v6958
        %v6960 = vpop.f32.mrf.mxu0
        %6961 = vmatprep.mubr.f32.mxu0 0.0
        %6962 = vmatmul.mubr.f32.gmra.mxu0 %v6852
        %v6963 = vpop.f32.mrf.mxu0
        %v6964 = vadd.f32 0.0, %v6963
        %v6965 = vpop.f32.mrf.mxu0
        %6966 = vmatprep.mubr.f32.mxu0 0.0
        %6967 = vmatmul.mubr.f32.gmra.mxu0 %v6855
        %v6968 = vpop.f32.mrf.mxu0
        %v6969 = vadd.f32 0.0, %v6968
        %v6970 = vpop.f32.mrf.mxu0
        %6971 = vdwg.mxu0
        %v6972 = vadd.f32 %v6802, %v6924
        %v6973 = vadd.f32 %v6803, %v6929
        %v6974 = vadd.f32 %v6804, %v6934
        %v6975 = vadd.f32 %v6805, %v6939
        %v6976 = vadd.f32 %v6806, %v6944
        %v6977 = vadd.f32 %v6807, %v6949
        %v6978 = vadd.f32 %v6808, %v6954
        %v6979 = vadd.f32 %v6809, %v6959
        %v6980 = vadd.f32 %v6810, %v6964
        %v6981 = vadd.f32 %v6811, %v6969
        %v6982 = vld [vmem:[#allocation3 + $0x15] sm:$0xff]
        %v6983 = vld [vmem:[#allocation3 + $0x1d] sm:$0xff]
        %v6984 = vld [vmem:[#allocation3 + $0x25] sm:$0xff]
        %v6985 = vld [vmem:[#allocation3 + $0x2d] sm:$0xff]
        %v6986 = vld [vmem:[#allocation3 + $0x35] sm:$0xff]
        %v6987 = vld [vmem:[#allocation3 + $0x3d] sm:$0xff]
        %v6988 = vld [vmem:[#allocation3 + $0x45] sm:$0xff]
        %v6989 = vld [vmem:[#allocation3 + $0x4d] sm:$0xff]
        %v6990 = vld [vmem:[#allocation3 + $0x55] sm:$0xff]
        %v6991 = vld [vmem:[#allocation3 + $0x5d] sm:$0x3f]
        %s6992 = scalar_lea.vmem %s6, 224
        %v6993 = vld [vmem:[%s6992] sm:$0xff]
        %v6994 = vld [vmem:[%s6992 + $0x8] sm:$0xff]
        %v6995 = vld [vmem:[%s6992 + $0x10] sm:$0xff]
        %v6996 = vld [vmem:[%s6992 + $0x18] sm:$0xff]
        %v6998 = vsel %vm3455, %v6982, 0
        %v7001 = vsel %vm3455, %v6983, 0
        %v7004 = vsel %vm3455, %v6984, 0
        %v7007 = vsel %vm3455, %v6985, 0
        %v7010 = vsel %vm3455, %v6986, 0
        %v7013 = vsel %vm3455, %v6987, 0
        %v7016 = vsel %vm3455, %v6988, 0
        %v7019 = vsel %vm3455, %v6989, 0
        %v7022 = vsel %vm3455, %v6990, 0
        %v7025 = vsel %vm3455, %v6991, 0
        %7027 = vmatprep.subr.mxu0 0.0
        %7028 = vmatpush1.msra.mxu0 0.0
        %7029 = vmatprep.subr.mxu0 0.0
        %7030 = vmatpush1.msra.mxu0 0.0
        %7031 = vmatprep.subr.mxu0 0.0
        %7032 = vmatpush1.msra.mxu0 0.0
        %7033 = vmatprep.subr.mxu0 0.0
        %7034 = vmatpush1.msra.mxu0 0.0
        %7035 = vmatprep.subr.mxu0 0.0
        %7036 = vmatpush1.msra.mxu0 0.0
        %7037 = vmatprep.subr.mxu0 0.0
        %7038 = vmatpush1.msra.mxu0 0.0
        %7039 = vmatprep.subr.mxu0 0.0
        %7040 = vmatpush1.msra.mxu0 0.0
        %7041 = vmatprep.subr.mxu0 0.0
        %7042 = vmatpush1.msra.mxu0 0.0
        %7043 = vmatprep.subr.mxu0 0.0
        %7044 = vmatpush1.msra.mxu0 0.0
        %7045 = vmatprep.subr.mxu0 0.0
        %7046 = vmatpush1.msra.mxu0 0.0
        %7047 = vmatprep.subr.mxu0 0.0
        %7048 = vmatpush1.msra.mxu0 0.0
        %7049 = vmatprep.subr.mxu0 0.0
        %7050 = vmatpush1.msra.mxu0 0.0
        %7051 = vmatprep.subr.mxu0 0.0
        %7052 = vmatpush1.msra.mxu0 %v6996
        %7053 = vmatprep.subr.mxu0 0.0
        %7054 = vmatpush1.msra.mxu0 %v6995
        %7055 = vmatprep.subr.mxu0 0.0
        %7056 = vmatpush1.msra.mxu0 %v6994
        %7057 = vmatprep.subr.mxu0 0.0
        %7058 = vmatpush1.msra.mxu0 %v6993
        %7059 = vmatprep.subr.mxu0 0.0
        %7060 = vmatpush2.msra.mxu0 0.0
        %7061 = vmatprep.subr.mxu0 0.0
        %7062 = vmatpush2.msra.mxu0 0.0
        %7063 = vmatprep.subr.mxu0 0.0
        %7064 = vmatpush2.msra.mxu0 0.0
        %7065 = vmatprep.subr.mxu0 0.0
        %7066 = vmatpush2.msra.mxu0 0.0
        %7067 = vmatprep.subr.mxu0 0.0
        %7068 = vmatpush2.msra.mxu0 0.0
        %7069 = vmatprep.subr.mxu0 0.0
        %7070 = vmatpush2.msra.mxu0 0.0
        %7071 = vmatprep.subr.mxu0 0.0
        %7072 = vmatpush2.msra.mxu0 0.0
        %7073 = vmatprep.subr.mxu0 0.0
        %7074 = vmatpush2.msra.mxu0 0.0
        %7075 = vmatprep.subr.mxu0 0.0
        %7076 = vmatpush2.msra.mxu0 0.0
        %7077 = vmatprep.subr.mxu0 0.0
        %7078 = vmatpush2.msra.mxu0 0.0
        %7079 = vmatprep.subr.mxu0 0.0
        %7080 = vmatpush2.msra.mxu0 0.0
        %7081 = vmatprep.subr.mxu0 0.0
        %7082 = vmatpush2.msra.mxu0 0.0
        %7083 = vmatprep.subr.mxu0 0.0
        %7084 = vmatpush2.msra.mxu0 0.0
        %7085 = vmatprep.subr.mxu0 0.0
        %7086 = vmatpush2.msra.mxu0 0.0
        %7087 = vmatprep.subr.mxu0 0.0
        %7088 = vmatpush2.msra.mxu0 0.0
        %7089 = vmatprep.subr.mxu0 0.0
        %7090 = vmatpush2.msra.mxu0 0.0
        %7091 = vmatprep.mubr.f32.mxu0 0.0
        %7092 = vmatmul.mubr.f32.gmra.mxu0 %v6998
        %v7093 = vpop.f32.mrf.mxu0
        %v7094 = vadd.f32 0.0, %v7093
        %v7095 = vpop.f32.mrf.mxu0
        %7096 = vmatprep.mubr.f32.mxu0 0.0
        %7097 = vmatmul.mubr.f32.gmra.mxu0 %v7001
        %v7098 = vpop.f32.mrf.mxu0
        %v7099 = vadd.f32 0.0, %v7098
        %v7100 = vpop.f32.mrf.mxu0
        %7101 = vmatprep.mubr.f32.mxu0 0.0
        %7102 = vmatmul.mubr.f32.gmra.mxu0 %v7004
        %v7103 = vpop.f32.mrf.mxu0
        %v7104 = vadd.f32 0.0, %v7103
        %v7105 = vpop.f32.mrf.mxu0
        %7106 = vmatprep.mubr.f32.mxu0 0.0
        %7107 = vmatmul.mubr.f32.gmra.mxu0 %v7007
        %v7108 = vpop.f32.mrf.mxu0
        %v7109 = vadd.f32 0.0, %v7108
        %v7110 = vpop.f32.mrf.mxu0
        %7111 = vmatprep.mubr.f32.mxu0 0.0
        %7112 = vmatmul.mubr.f32.gmra.mxu0 %v7010
        %v7113 = vpop.f32.mrf.mxu0
        %v7114 = vadd.f32 0.0, %v7113
        %v7115 = vpop.f32.mrf.mxu0
        %7116 = vmatprep.mubr.f32.mxu0 0.0
        %7117 = vmatmul.mubr.f32.gmra.mxu0 %v7013
        %v7118 = vpop.f32.mrf.mxu0
        %v7119 = vadd.f32 0.0, %v7118
        %v7120 = vpop.f32.mrf.mxu0
        %7121 = vmatprep.mubr.f32.mxu0 0.0
        %7122 = vmatmul.mubr.f32.gmra.mxu0 %v7016
        %v7123 = vpop.f32.mrf.mxu0
        %v7124 = vadd.f32 0.0, %v7123
        %v7125 = vpop.f32.mrf.mxu0
        %7126 = vmatprep.mubr.f32.mxu0 0.0
        %7127 = vmatmul.mubr.f32.gmra.mxu0 %v7019
        %v7128 = vpop.f32.mrf.mxu0
        %v7129 = vadd.f32 0.0, %v7128
        %v7130 = vpop.f32.mrf.mxu0
        %7131 = vmatprep.mubr.f32.mxu0 0.0
        %7132 = vmatmul.mubr.f32.gmra.mxu0 %v7022
        %v7133 = vpop.f32.mrf.mxu0
        %v7134 = vadd.f32 0.0, %v7133
        %v7135 = vpop.f32.mrf.mxu0
        %7136 = vmatprep.mubr.f32.mxu0 0.0
        %7137 = vmatmul.mubr.f32.gmra.mxu0 %v7025
        %v7138 = vpop.f32.mrf.mxu0
        %v7139 = vadd.f32 0.0, %v7138
        %v7140 = vpop.f32.mrf.mxu0
        %7141 = vdwg.mxu0
        %v7142 = vadd.f32 %v6972, %v7094
        %v7143 = vadd.f32 %v6973, %v7099
        %v7144 = vadd.f32 %v6974, %v7104
        %v7145 = vadd.f32 %v6975, %v7109
        %v7146 = vadd.f32 %v6976, %v7114
        %v7147 = vadd.f32 %v6977, %v7119
        %v7148 = vadd.f32 %v6978, %v7124
        %v7149 = vadd.f32 %v6979, %v7129
        %v7150 = vadd.f32 %v6980, %v7134
        %v7151 = vadd.f32 %v6981, %v7139
        %v7152 = vld [vmem:[#allocation3 + $0x16] sm:$0xff]
        %v7153 = vld [vmem:[#allocation3 + $0x1e] sm:$0xff]
        %v7154 = vld [vmem:[#allocation3 + $0x26] sm:$0xff]
        %v7155 = vld [vmem:[#allocation3 + $0x2e] sm:$0xff]
        %v7156 = vld [vmem:[#allocation3 + $0x36] sm:$0xff]
        %v7157 = vld [vmem:[#allocation3 + $0x3e] sm:$0xff]
        %v7158 = vld [vmem:[#allocation3 + $0x46] sm:$0xff]
        %v7159 = vld [vmem:[#allocation3 + $0x4e] sm:$0xff]
        %v7160 = vld [vmem:[#allocation3 + $0x56] sm:$0xff]
        %v7161 = vld [vmem:[#allocation3 + $0x5e] sm:$0x3f]
        %s7162 = scalar_lea.vmem %s6, 256
        %v7163 = vld [vmem:[%s7162] sm:$0xff]
        %v7164 = vld [vmem:[%s7162 + $0x8] sm:$0xff]
        %v7165 = vld [vmem:[%s7162 + $0x10] sm:$0xff]
        %v7166 = vld [vmem:[%s7162 + $0x18] sm:$0xff]
        %v7168 = vsel %vm3455, %v7152, 0
        %v7171 = vsel %vm3455, %v7153, 0
        %v7174 = vsel %vm3455, %v7154, 0
        %v7177 = vsel %vm3455, %v7155, 0
        %v7180 = vsel %vm3455, %v7156, 0
        %v7183 = vsel %vm3455, %v7157, 0
        %v7186 = vsel %vm3455, %v7158, 0
        %v7189 = vsel %vm3455, %v7159, 0
        %v7192 = vsel %vm3455, %v7160, 0
        %v7195 = vsel %vm3455, %v7161, 0
        %7197 = vmatprep.subr.mxu0 0.0
        %7198 = vmatpush1.msra.mxu0 0.0
        %7199 = vmatprep.subr.mxu0 0.0
        %7200 = vmatpush1.msra.mxu0 0.0
        %7201 = vmatprep.subr.mxu0 0.0
        %7202 = vmatpush1.msra.mxu0 0.0
        %7203 = vmatprep.subr.mxu0 0.0
        %7204 = vmatpush1.msra.mxu0 0.0
        %7205 = vmatprep.subr.mxu0 0.0
        %7206 = vmatpush1.msra.mxu0 0.0
        %7207 = vmatprep.subr.mxu0 0.0
        %7208 = vmatpush1.msra.mxu0 0.0
        %7209 = vmatprep.subr.mxu0 0.0
        %7210 = vmatpush1.msra.mxu0 0.0
        %7211 = vmatprep.subr.mxu0 0.0
        %7212 = vmatpush1.msra.mxu0 0.0
        %7213 = vmatprep.subr.mxu0 0.0
        %7214 = vmatpush1.msra.mxu0 0.0
        %7215 = vmatprep.subr.mxu0 0.0
        %7216 = vmatpush1.msra.mxu0 0.0
        %7217 = vmatprep.subr.mxu0 0.0
        %7218 = vmatpush1.msra.mxu0 0.0
        %7219 = vmatprep.subr.mxu0 0.0
        %7220 = vmatpush1.msra.mxu0 0.0
        %7221 = vmatprep.subr.mxu0 0.0
        %7222 = vmatpush1.msra.mxu0 %v7166
        %7223 = vmatprep.subr.mxu0 0.0
        %7224 = vmatpush1.msra.mxu0 %v7165
        %7225 = vmatprep.subr.mxu0 0.0
        %7226 = vmatpush1.msra.mxu0 %v7164
        %7227 = vmatprep.subr.mxu0 0.0
        %7228 = vmatpush1.msra.mxu0 %v7163
        %7229 = vmatprep.subr.mxu0 0.0
        %7230 = vmatpush2.msra.mxu0 0.0
        %7231 = vmatprep.subr.mxu0 0.0
        %7232 = vmatpush2.msra.mxu0 0.0
        %7233 = vmatprep.subr.mxu0 0.0
        %7234 = vmatpush2.msra.mxu0 0.0
        %7235 = vmatprep.subr.mxu0 0.0
        %7236 = vmatpush2.msra.mxu0 0.0
        %7237 = vmatprep.subr.mxu0 0.0
        %7238 = vmatpush2.msra.mxu0 0.0
        %7239 = vmatprep.subr.mxu0 0.0
        %7240 = vmatpush2.msra.mxu0 0.0
        %7241 = vmatprep.subr.mxu0 0.0
        %7242 = vmatpush2.msra.mxu0 0.0
        %7243 = vmatprep.subr.mxu0 0.0
        %7244 = vmatpush2.msra.mxu0 0.0
        %7245 = vmatprep.subr.mxu0 0.0
        %7246 = vmatpush2.msra.mxu0 0.0
        %7247 = vmatprep.subr.mxu0 0.0
        %7248 = vmatpush2.msra.mxu0 0.0
        %7249 = vmatprep.subr.mxu0 0.0
        %7250 = vmatpush2.msra.mxu0 0.0
        %7251 = vmatprep.subr.mxu0 0.0
        %7252 = vmatpush2.msra.mxu0 0.0
        %7253 = vmatprep.subr.mxu0 0.0
        %7254 = vmatpush2.msra.mxu0 0.0
        %7255 = vmatprep.subr.mxu0 0.0
        %7256 = vmatpush2.msra.mxu0 0.0
        %7257 = vmatprep.subr.mxu0 0.0
        %7258 = vmatpush2.msra.mxu0 0.0
        %7259 = vmatprep.subr.mxu0 0.0
        %7260 = vmatpush2.msra.mxu0 0.0
        %7261 = vmatprep.mubr.f32.mxu0 0.0
        %7262 = vmatmul.mubr.f32.gmra.mxu0 %v7168
        %v7263 = vpop.f32.mrf.mxu0
        %v7264 = vadd.f32 0.0, %v7263
        %v7265 = vpop.f32.mrf.mxu0
        %7266 = vmatprep.mubr.f32.mxu0 0.0
        %7267 = vmatmul.mubr.f32.gmra.mxu0 %v7171
        %v7268 = vpop.f32.mrf.mxu0
        %v7269 = vadd.f32 0.0, %v7268
        %v7270 = vpop.f32.mrf.mxu0
        %7271 = vmatprep.mubr.f32.mxu0 0.0
        %7272 = vmatmul.mubr.f32.gmra.mxu0 %v7174
        %v7273 = vpop.f32.mrf.mxu0
        %v7274 = vadd.f32 0.0, %v7273
        %v7275 = vpop.f32.mrf.mxu0
        %7276 = vmatprep.mubr.f32.mxu0 0.0
        %7277 = vmatmul.mubr.f32.gmra.mxu0 %v7177
        %v7278 = vpop.f32.mrf.mxu0
        %v7279 = vadd.f32 0.0, %v7278
        %v7280 = vpop.f32.mrf.mxu0
        %7281 = vmatprep.mubr.f32.mxu0 0.0
        %7282 = vmatmul.mubr.f32.gmra.mxu0 %v7180
        %v7283 = vpop.f32.mrf.mxu0
        %v7284 = vadd.f32 0.0, %v7283
        %v7285 = vpop.f32.mrf.mxu0
        %7286 = vmatprep.mubr.f32.mxu0 0.0
        %7287 = vmatmul.mubr.f32.gmra.mxu0 %v7183
        %v7288 = vpop.f32.mrf.mxu0
        %v7289 = vadd.f32 0.0, %v7288
        %v7290 = vpop.f32.mrf.mxu0
        %7291 = vmatprep.mubr.f32.mxu0 0.0
        %7292 = vmatmul.mubr.f32.gmra.mxu0 %v7186
        %v7293 = vpop.f32.mrf.mxu0
        %v7294 = vadd.f32 0.0, %v7293
        %v7295 = vpop.f32.mrf.mxu0
        %7296 = vmatprep.mubr.f32.mxu0 0.0
        %7297 = vmatmul.mubr.f32.gmra.mxu0 %v7189
        %v7298 = vpop.f32.mrf.mxu0
        %v7299 = vadd.f32 0.0, %v7298
        %v7300 = vpop.f32.mrf.mxu0
        %7301 = vmatprep.mubr.f32.mxu0 0.0
        %7302 = vmatmul.mubr.f32.gmra.mxu0 %v7192
        %v7303 = vpop.f32.mrf.mxu0
        %v7304 = vadd.f32 0.0, %v7303
        %v7305 = vpop.f32.mrf.mxu0
        %7306 = vmatprep.mubr.f32.mxu0 0.0
        %7307 = vmatmul.mubr.f32.gmra.mxu0 %v7195
        %v7308 = vpop.f32.mrf.mxu0
        %v7309 = vadd.f32 0.0, %v7308
        %v7310 = vpop.f32.mrf.mxu0
        %7311 = vdwg.mxu0
        %v7312 = vadd.f32 %v7142, %v7264
        %v7313 = vadd.f32 %v7143, %v7269
        %v7314 = vadd.f32 %v7144, %v7274
        %v7315 = vadd.f32 %v7145, %v7279
        %v7316 = vadd.f32 %v7146, %v7284
        %v7317 = vadd.f32 %v7147, %v7289
        %v7318 = vadd.f32 %v7148, %v7294
        %v7319 = vadd.f32 %v7149, %v7299
        %v7320 = vadd.f32 %v7150, %v7304
        %v7321 = vadd.f32 %v7151, %v7309
        %v7322 = vld [vmem:[%s7] sm:$0x1]
        %v7324 = vlaneseq
        %v7325 = vshrl.u32 %v7324, 7
        %v7326 = vsub.s32 0, %v7325
        %v7327 = vrot.slane %v7322, %v7326
        %v7329 = vadd.f32 %v7312, %v7327
        %v7330 = vadd.f32 %v7313, %v7327
        %v7331 = vadd.f32 %v7314, %v7327
        %v7332 = vadd.f32 %v7315, %v7327
        %v7333 = vadd.f32 %v7316, %v7327
        %v7334 = vadd.f32 %v7317, %v7327
        %v7335 = vadd.f32 %v7318, %v7327
        %v7336 = vadd.f32 %v7319, %v7327
        %v7337 = vadd.f32 %v7320, %v7327
        %v7338 = vadd.f32 %v7321, %v7327
        %s7339 = sld [smem:[#allocation8]]
        %vm7340 = vcmp.ge.f32.partialorder %v7329, 0.0
        %vm7341 = vcmp.ge.f32.partialorder %v7330, 0.0
        %vm7342 = vcmp.ge.f32.partialorder %v7331, 0.0
        %vm7343 = vcmp.ge.f32.partialorder %v7332, 0.0
        %vm7344 = vcmp.ge.f32.partialorder %v7333, 0.0
        %vm7345 = vcmp.ge.f32.partialorder %v7334, 0.0
        %vm7346 = vcmp.ge.f32.partialorder %v7335, 0.0
        %vm7347 = vcmp.ge.f32.partialorder %v7336, 0.0
        %vm7348 = vcmp.ge.f32.partialorder %v7337, 0.0
        %vm7349 = vcmp.ge.f32.partialorder %v7338, 0.0
        %v7350 = vstv %s7339
        %v7351 = vmul.f32 %v7350, %v7329
        %v7352 = vmul.f32 %v7350, %v7330
        %v7353 = vmul.f32 %v7350, %v7331
        %v7354 = vmul.f32 %v7350, %v7332
        %v7355 = vmul.f32 %v7350, %v7333
        %v7356 = vmul.f32 %v7350, %v7334
        %v7357 = vmul.f32 %v7350, %v7335
        %v7358 = vmul.f32 %v7350, %v7336
        %v7359 = vmul.f32 %v7350, %v7337
        %v7360 = vmul.f32 %v7350, %v7338
        %v7361 = vsel %vm7340, %v7329, %v7351
        %v7362 = vsel %vm7341, %v7330, %v7352
        %v7363 = vsel %vm7342, %v7331, %v7353
        %v7364 = vsel %vm7343, %v7332, %v7354
        %v7365 = vsel %vm7344, %v7333, %v7355
        %v7366 = vsel %vm7345, %v7334, %v7356
        %v7367 = vsel %vm7346, %v7335, %v7357
        %v7368 = vsel %vm7347, %v7336, %v7358
        %v7369 = vsel %vm7348, %v7337, %v7359
        %v7370 = vsel %vm7349, %v7338, %v7360
        %7371 = vst.msk [vmem:[#allocation4] sm:$0xff] %vm3455, 0.0
        %7372 = vst.msk [vmem:[#allocation4 + $0x8] sm:$0xff] %vm3455, 0.0
        %7373 = vst.msk [vmem:[#allocation4 + $0x10] sm:$0xff] %vm3455, 0.0
        %7374 = vst.msk [vmem:[#allocation4 + $0x18] sm:$0xff] %vm3455, 0.0
        %7375 = vst.msk [vmem:[#allocation4 + $0x20] sm:$0xff] %vm3455, 0.0
        %7376 = vst.msk [vmem:[#allocation4 + $0x28] sm:$0xff] %vm3455, 0.0
        %7377 = vst.msk [vmem:[#allocation4 + $0x30] sm:$0xff] %vm3455, 0.0
        %7378 = vst.msk [vmem:[#allocation4 + $0x38] sm:$0xff] %vm3455, 0.0
        %7379 = vst.msk [vmem:[#allocation4 + $0x40] sm:$0xff] %vm3455, 0.0
        %7380 = vst.msk [vmem:[#allocation4 + $0x48] sm:$0xff] %vm3455, 0.0
        %7381 = vst.msk [vmem:[#allocation4 + $0x50] sm:$0xff] %vm3455, 0.0
        %7382 = vst.msk [vmem:[#allocation4 + $0x58] sm:$0xff] %vm3455, 0.0
        %7383 = vst.msk [vmem:[#allocation4 + $0x60] sm:$0xf] %vm3496, 0.0
        %7384 = vst.msk [vmem:[#allocation4 + $0xb] sm:$0xff] %vm3455, %v7361
        %7385 = vst.msk [vmem:[#allocation4 + $0x13] sm:$0xfc] %vm3500, %v7362
        %7386 = vst.msk [vmem:[#allocation4 + $0x1b] sm:$0x3] %vm3503, %v7363
        %7387 = vst.msk [vmem:[#allocation4 + $0x1b] sm:$0xf0] %vm3505, %v7363
        %7388 = vst.msk [vmem:[#allocation4 + $0x23] sm:$0xf] %vm3496, %v7364
        %7389 = vst.msk [vmem:[#allocation4 + $0x23] sm:$0xc0] %vm3509, %v7364
        %7390 = vst.msk [vmem:[#allocation4 + $0x2b] sm:$0x3f] %vm3512, %v7365
        %7391 = vst.msk [vmem:[#allocation4 + $0x33] sm:$0xff] %vm3455, %v7366
        %7392 = vst.msk [vmem:[#allocation4 + $0x3b] sm:$0xfc] %vm3500, %v7367
        %7393 = vst.msk [vmem:[#allocation4 + $0x43] sm:$0x3] %vm3503, %v7368
        %7394 = vst.msk [vmem:[#allocation4 + $0x43] sm:$0xf0] %vm3505, %v7368
        %7395 = vst.msk [vmem:[#allocation4 + $0x4b] sm:$0xf] %vm3496, %v7369
        %7396 = vst.msk [vmem:[#allocation4 + $0x4b] sm:$0xc0] %vm3509, %v7369
        %7397 = vst.msk [vmem:[#allocation4 + $0x53] sm:$0x3f] %vm3512, %v7370
        %v7398 = vld [vmem:[#allocation4] ss:$2 sm:$0xff]
        %s7399 = scalar_lea.vmem [#allocation4], 16
        %v7400 = vld [vmem:[%s7399] ss:$2 sm:$0xff]
        %s7401 = scalar_lea.vmem [#allocation4], 32
        %v7402 = vld [vmem:[%s7401] ss:$2 sm:$0xff]
        %s7403 = scalar_lea.vmem [#allocation4], 48
        %v7404 = vld [vmem:[%s7403] ss:$2 sm:$0xff]
        %s7405 = scalar_lea.vmem [#allocation4], 64
        %v7406 = vld [vmem:[%s7405] ss:$2 sm:$0x3]
        %v7407 = vld [vmem:[#allocation10] sm:$0xff]
        %v7408 = vld [vmem:[#allocation10 + $0x8] sm:$0xff]
        %v7409 = vld [vmem:[#allocation10 + $0x10] sm:$0xff]
        %v7410 = vld [vmem:[#allocation10 + $0x18] sm:$0xff]
        %s7411 = scalar_lea.vmem [#allocation4], 1
        %v7412 = vld [vmem:[%s7411] ss:$2 sm:$0xff]
        %s7413 = scalar_lea.vmem [#allocation4], 17
        %v7414 = vld [vmem:[%s7413] ss:$2 sm:$0xff]
        %s7415 = scalar_lea.vmem [#allocation4], 33
        %v7416 = vld [vmem:[%s7415] ss:$2 sm:$0xff]
        %s7417 = scalar_lea.vmem [#allocation4], 49
        %v7418 = vld [vmem:[%s7417] ss:$2 sm:$0xff]
        %s7419 = scalar_lea.vmem [#allocation4], 65
        %v7420 = vld [vmem:[%s7419] ss:$2 sm:$0x3]
        %s7421 = scalar_lea.vmem [#allocation10], 32
        %v7422 = vld [vmem:[%s7421] sm:$0xff]
        %v7423 = vld [vmem:[%s7421 + $0x8] sm:$0xff]
        %v7424 = vld [vmem:[%s7421 + $0x10] sm:$0xff]
        %v7425 = vld [vmem:[%s7421 + $0x18] sm:$0xff]
        %v7427 = vsel %vm3455, %v7412, 0
        %v7430 = vsel %vm3455, %v7414, 0
        %v7433 = vsel %vm3455, %v7416, 0
        %v7436 = vsel %vm3455, %v7418, 0
        %v7439 = vsel %vm3455, %v7420, 0
        %7441 = vmatprep.subr.mxu0 0.0
        %7442 = vmatpush1.msra.mxu0 0.0
        %7443 = vmatprep.subr.mxu0 0.0
        %7444 = vmatpush1.msra.mxu0 0.0
        %7445 = vmatprep.subr.mxu0 0.0
        %7446 = vmatpush1.msra.mxu0 0.0
        %7447 = vmatprep.subr.mxu0 0.0
        %7448 = vmatpush1.msra.mxu0 0.0
        %7449 = vmatprep.subr.mxu0 0.0
        %7450 = vmatpush1.msra.mxu0 0.0
        %7451 = vmatprep.subr.mxu0 0.0
        %7452 = vmatpush1.msra.mxu0 0.0
        %7453 = vmatprep.subr.mxu0 0.0
        %7454 = vmatpush1.msra.mxu0 0.0
        %7455 = vmatprep.subr.mxu0 0.0
        %7456 = vmatpush1.msra.mxu0 0.0
        %7457 = vmatprep.subr.mxu0 0.0
        %7458 = vmatpush1.msra.mxu0 0.0
        %7459 = vmatprep.subr.mxu0 0.0
        %7460 = vmatpush1.msra.mxu0 0.0
        %7461 = vmatprep.subr.mxu0 0.0
        %7462 = vmatpush1.msra.mxu0 0.0
        %7463 = vmatprep.subr.mxu0 0.0
        %7464 = vmatpush1.msra.mxu0 0.0
        %7465 = vmatprep.subr.mxu0 0.0
        %7466 = vmatpush1.msra.mxu0 %v7425
        %7467 = vmatprep.subr.mxu0 0.0
        %7468 = vmatpush1.msra.mxu0 %v7424
        %7469 = vmatprep.subr.mxu0 0.0
        %7470 = vmatpush1.msra.mxu0 %v7423
        %7471 = vmatprep.subr.mxu0 0.0
        %7472 = vmatpush1.msra.mxu0 %v7422
        %7473 = vmatprep.subr.mxu0 0.0
        %7474 = vmatpush2.msra.mxu0 0.0
        %7475 = vmatprep.subr.mxu0 0.0
        %7476 = vmatpush2.msra.mxu0 0.0
        %7477 = vmatprep.subr.mxu0 0.0
        %7478 = vmatpush2.msra.mxu0 0.0
        %7479 = vmatprep.subr.mxu0 0.0
        %7480 = vmatpush2.msra.mxu0 0.0
        %7481 = vmatprep.subr.mxu0 0.0
        %7482 = vmatpush2.msra.mxu0 0.0
        %7483 = vmatprep.subr.mxu0 0.0
        %7484 = vmatpush2.msra.mxu0 0.0
        %7485 = vmatprep.subr.mxu0 0.0
        %7486 = vmatpush2.msra.mxu0 0.0
        %7487 = vmatprep.subr.mxu0 0.0
        %7488 = vmatpush2.msra.mxu0 0.0
        %7489 = vmatprep.subr.mxu0 0.0
        %7490 = vmatpush2.msra.mxu0 0.0
        %7491 = vmatprep.subr.mxu0 0.0
        %7492 = vmatpush2.msra.mxu0 0.0
        %7493 = vmatprep.subr.mxu0 0.0
        %7494 = vmatpush2.msra.mxu0 0.0
        %7495 = vmatprep.subr.mxu0 0.0
        %7496 = vmatpush2.msra.mxu0 0.0
        %7497 = vmatprep.subr.mxu0 0.0
        %7498 = vmatpush2.msra.mxu0 0.0
        %7499 = vmatprep.subr.mxu0 0.0
        %7500 = vmatpush2.msra.mxu0 0.0
        %7501 = vmatprep.subr.mxu0 0.0
        %7502 = vmatpush2.msra.mxu0 0.0
        %7503 = vmatprep.subr.mxu0 0.0
        %7504 = vmatpush2.msra.mxu0 0.0
        %7505 = vmatprep.mubr.f32.mxu0 0.0
        %7506 = vmatmul.mubr.f32.gmra.mxu0 %v7427
        %v7507 = vpop.f32.mrf.mxu0
        %v7508 = vadd.f32 0.0, %v7507
        %v7509 = vpop.f32.mrf.mxu0
        %7510 = vmatprep.mubr.f32.mxu0 0.0
        %7511 = vmatmul.mubr.f32.gmra.mxu0 %v7430
        %v7512 = vpop.f32.mrf.mxu0
        %v7513 = vadd.f32 0.0, %v7512
        %v7514 = vpop.f32.mrf.mxu0
        %7515 = vmatprep.mubr.f32.mxu0 0.0
        %7516 = vmatmul.mubr.f32.gmra.mxu0 %v7433
        %v7517 = vpop.f32.mrf.mxu0
        %v7518 = vadd.f32 0.0, %v7517
        %v7519 = vpop.f32.mrf.mxu0
        %7520 = vmatprep.mubr.f32.mxu0 0.0
        %7521 = vmatmul.mubr.f32.gmra.mxu0 %v7436
        %v7522 = vpop.f32.mrf.mxu0
        %v7523 = vadd.f32 0.0, %v7522
        %v7524 = vpop.f32.mrf.mxu0
        %7525 = vmatprep.mubr.f32.mxu0 0.0
        %7526 = vmatmul.mubr.f32.gmra.mxu0 %v7439
        %v7527 = vpop.f32.mrf.mxu0
        %v7528 = vadd.f32 0.0, %v7527
        %v7529 = vpop.f32.mrf.mxu0
        %7530 = vdwg.mxu0
        %v7532 = vsel %vm3455, %v7398, 0
        %v7535 = vsel %vm3455, %v7400, 0
        %v7538 = vsel %vm3455, %v7402, 0
        %v7541 = vsel %vm3455, %v7404, 0
        %v7544 = vsel %vm3455, %v7406, 0
        %7546 = vmatprep.subr.mxu0 0.0
        %7547 = vmatpush1.msra.mxu0 0.0
        %7548 = vmatprep.subr.mxu0 0.0
        %7549 = vmatpush1.msra.mxu0 0.0
        %7550 = vmatprep.subr.mxu0 0.0
        %7551 = vmatpush1.msra.mxu0 0.0
        %7552 = vmatprep.subr.mxu0 0.0
        %7553 = vmatpush1.msra.mxu0 0.0
        %7554 = vmatprep.subr.mxu0 0.0
        %7555 = vmatpush1.msra.mxu0 0.0
        %7556 = vmatprep.subr.mxu0 0.0
        %7557 = vmatpush1.msra.mxu0 0.0
        %7558 = vmatprep.subr.mxu0 0.0
        %7559 = vmatpush1.msra.mxu0 0.0
        %7560 = vmatprep.subr.mxu0 0.0
        %7561 = vmatpush1.msra.mxu0 0.0
        %7562 = vmatprep.subr.mxu0 0.0
        %7563 = vmatpush1.msra.mxu0 0.0
        %7564 = vmatprep.subr.mxu0 0.0
        %7565 = vmatpush1.msra.mxu0 0.0
        %7566 = vmatprep.subr.mxu0 0.0
        %7567 = vmatpush1.msra.mxu0 0.0
        %7568 = vmatprep.subr.mxu0 0.0
        %7569 = vmatpush1.msra.mxu0 0.0
        %7570 = vmatprep.subr.mxu0 0.0
        %7571 = vmatpush1.msra.mxu0 %v7410
        %7572 = vmatprep.subr.mxu0 0.0
        %7573 = vmatpush1.msra.mxu0 %v7409
        %7574 = vmatprep.subr.mxu0 0.0
        %7575 = vmatpush1.msra.mxu0 %v7408
        %7576 = vmatprep.subr.mxu0 0.0
        %7577 = vmatpush1.msra.mxu0 %v7407
        %7578 = vmatprep.subr.mxu0 0.0
        %7579 = vmatpush2.msra.mxu0 0.0
        %7580 = vmatprep.subr.mxu0 0.0
        %7581 = vmatpush2.msra.mxu0 0.0
        %7582 = vmatprep.subr.mxu0 0.0
        %7583 = vmatpush2.msra.mxu0 0.0
        %7584 = vmatprep.subr.mxu0 0.0
        %7585 = vmatpush2.msra.mxu0 0.0
        %7586 = vmatprep.subr.mxu0 0.0
        %7587 = vmatpush2.msra.mxu0 0.0
        %7588 = vmatprep.subr.mxu0 0.0
        %7589 = vmatpush2.msra.mxu0 0.0
        %7590 = vmatprep.subr.mxu0 0.0
        %7591 = vmatpush2.msra.mxu0 0.0
        %7592 = vmatprep.subr.mxu0 0.0
        %7593 = vmatpush2.msra.mxu0 0.0
        %7594 = vmatprep.subr.mxu0 0.0
        %7595 = vmatpush2.msra.mxu0 0.0
        %7596 = vmatprep.subr.mxu0 0.0
        %7597 = vmatpush2.msra.mxu0 0.0
        %7598 = vmatprep.subr.mxu0 0.0
        %7599 = vmatpush2.msra.mxu0 0.0
        %7600 = vmatprep.subr.mxu0 0.0
        %7601 = vmatpush2.msra.mxu0 0.0
        %7602 = vmatprep.subr.mxu0 0.0
        %7603 = vmatpush2.msra.mxu0 0.0
        %7604 = vmatprep.subr.mxu0 0.0
        %7605 = vmatpush2.msra.mxu0 0.0
        %7606 = vmatprep.subr.mxu0 0.0
        %7607 = vmatpush2.msra.mxu0 0.0
        %7608 = vmatprep.subr.mxu0 0.0
        %7609 = vmatpush2.msra.mxu0 0.0
        %7610 = vmatprep.mubr.f32.mxu0 0.0
        %7611 = vmatmul.mubr.f32.gmra.mxu0 %v7532
        %v7612 = vpop.f32.mrf.mxu0
        %v7613 = vadd.f32 %v7508, %v7612
        %v7614 = vpop.f32.mrf.mxu0
        %7615 = vmatprep.mubr.f32.mxu0 0.0
        %7616 = vmatmul.mubr.f32.gmra.mxu0 %v7535
        %v7617 = vpop.f32.mrf.mxu0
        %v7618 = vadd.f32 %v7513, %v7617
        %v7619 = vpop.f32.mrf.mxu0
        %7620 = vmatprep.mubr.f32.mxu0 0.0
        %7621 = vmatmul.mubr.f32.gmra.mxu0 %v7538
        %v7622 = vpop.f32.mrf.mxu0
        %v7623 = vadd.f32 %v7518, %v7622
        %v7624 = vpop.f32.mrf.mxu0
        %7625 = vmatprep.mubr.f32.mxu0 0.0
        %7626 = vmatmul.mubr.f32.gmra.mxu0 %v7541
        %v7627 = vpop.f32.mrf.mxu0
        %v7628 = vadd.f32 %v7523, %v7627
        %v7629 = vpop.f32.mrf.mxu0
        %7630 = vmatprep.mubr.f32.mxu0 0.0
        %7631 = vmatmul.mubr.f32.gmra.mxu0 %v7544
        %v7632 = vpop.f32.mrf.mxu0
        %v7633 = vadd.f32 %v7528, %v7632
        %v7634 = vpop.f32.mrf.mxu0
        %7635 = vdwg.mxu0
        %s7636 = scalar_lea.vmem [#allocation4], 2
        %v7637 = vld [vmem:[%s7636] ss:$2 sm:$0xff]
        %s7638 = scalar_lea.vmem [#allocation4], 18
        %v7639 = vld [vmem:[%s7638] ss:$2 sm:$0xff]
        %s7640 = scalar_lea.vmem [#allocation4], 34
        %v7641 = vld [vmem:[%s7640] ss:$2 sm:$0xff]
        %s7642 = scalar_lea.vmem [#allocation4], 50
        %v7643 = vld [vmem:[%s7642] ss:$2 sm:$0xff]
        %s7644 = scalar_lea.vmem [#allocation4], 66
        %v7645 = vld [vmem:[%s7644] ss:$2 sm:$0x3]
        %s7646 = scalar_lea.vmem [#allocation10], 64
        %v7647 = vld [vmem:[%s7646] sm:$0xff]
        %v7648 = vld [vmem:[%s7646 + $0x8] sm:$0xff]
        %v7649 = vld [vmem:[%s7646 + $0x10] sm:$0xff]
        %v7650 = vld [vmem:[%s7646 + $0x18] sm:$0xff]
        %v7652 = vsel %vm3455, %v7637, 0
        %v7655 = vsel %vm3455, %v7639, 0
        %v7658 = vsel %vm3455, %v7641, 0
        %v7661 = vsel %vm3455, %v7643, 0
        %v7664 = vsel %vm3455, %v7645, 0
        %7666 = vmatprep.subr.mxu0 0.0
        %7667 = vmatpush1.msra.mxu0 0.0
        %7668 = vmatprep.subr.mxu0 0.0
        %7669 = vmatpush1.msra.mxu0 0.0
        %7670 = vmatprep.subr.mxu0 0.0
        %7671 = vmatpush1.msra.mxu0 0.0
        %7672 = vmatprep.subr.mxu0 0.0
        %7673 = vmatpush1.msra.mxu0 0.0
        %7674 = vmatprep.subr.mxu0 0.0
        %7675 = vmatpush1.msra.mxu0 0.0
        %7676 = vmatprep.subr.mxu0 0.0
        %7677 = vmatpush1.msra.mxu0 0.0
        %7678 = vmatprep.subr.mxu0 0.0
        %7679 = vmatpush1.msra.mxu0 0.0
        %7680 = vmatprep.subr.mxu0 0.0
        %7681 = vmatpush1.msra.mxu0 0.0
        %7682 = vmatprep.subr.mxu0 0.0
        %7683 = vmatpush1.msra.mxu0 0.0
        %7684 = vmatprep.subr.mxu0 0.0
        %7685 = vmatpush1.msra.mxu0 0.0
        %7686 = vmatprep.subr.mxu0 0.0
        %7687 = vmatpush1.msra.mxu0 0.0
        %7688 = vmatprep.subr.mxu0 0.0
        %7689 = vmatpush1.msra.mxu0 0.0
        %7690 = vmatprep.subr.mxu0 0.0
        %7691 = vmatpush1.msra.mxu0 %v7650
        %7692 = vmatprep.subr.mxu0 0.0
        %7693 = vmatpush1.msra.mxu0 %v7649
        %7694 = vmatprep.subr.mxu0 0.0
        %7695 = vmatpush1.msra.mxu0 %v7648
        %7696 = vmatprep.subr.mxu0 0.0
        %7697 = vmatpush1.msra.mxu0 %v7647
        %7698 = vmatprep.subr.mxu0 0.0
        %7699 = vmatpush2.msra.mxu0 0.0
        %7700 = vmatprep.subr.mxu0 0.0
        %7701 = vmatpush2.msra.mxu0 0.0
        %7702 = vmatprep.subr.mxu0 0.0
        %7703 = vmatpush2.msra.mxu0 0.0
        %7704 = vmatprep.subr.mxu0 0.0
        %7705 = vmatpush2.msra.mxu0 0.0
        %7706 = vmatprep.subr.mxu0 0.0
        %7707 = vmatpush2.msra.mxu0 0.0
        %7708 = vmatprep.subr.mxu0 0.0
        %7709 = vmatpush2.msra.mxu0 0.0
        %7710 = vmatprep.subr.mxu0 0.0
        %7711 = vmatpush2.msra.mxu0 0.0
        %7712 = vmatprep.subr.mxu0 0.0
        %7713 = vmatpush2.msra.mxu0 0.0
        %7714 = vmatprep.subr.mxu0 0.0
        %7715 = vmatpush2.msra.mxu0 0.0
        %7716 = vmatprep.subr.mxu0 0.0
        %7717 = vmatpush2.msra.mxu0 0.0
        %7718 = vmatprep.subr.mxu0 0.0
        %7719 = vmatpush2.msra.mxu0 0.0
        %7720 = vmatprep.subr.mxu0 0.0
        %7721 = vmatpush2.msra.mxu0 0.0
        %7722 = vmatprep.subr.mxu0 0.0
        %7723 = vmatpush2.msra.mxu0 0.0
        %7724 = vmatprep.subr.mxu0 0.0
        %7725 = vmatpush2.msra.mxu0 0.0
        %7726 = vmatprep.subr.mxu0 0.0
        %7727 = vmatpush2.msra.mxu0 0.0
        %7728 = vmatprep.subr.mxu0 0.0
        %7729 = vmatpush2.msra.mxu0 0.0
        %7730 = vmatprep.mubr.f32.mxu0 0.0
        %7731 = vmatmul.mubr.f32.gmra.mxu0 %v7652
        %v7732 = vpop.f32.mrf.mxu0
        %v7733 = vadd.f32 0.0, %v7732
        %v7734 = vpop.f32.mrf.mxu0
        %7735 = vmatprep.mubr.f32.mxu0 0.0
        %7736 = vmatmul.mubr.f32.gmra.mxu0 %v7655
        %v7737 = vpop.f32.mrf.mxu0
        %v7738 = vadd.f32 0.0, %v7737
        %v7739 = vpop.f32.mrf.mxu0
        %7740 = vmatprep.mubr.f32.mxu0 0.0
        %7741 = vmatmul.mubr.f32.gmra.mxu0 %v7658
        %v7742 = vpop.f32.mrf.mxu0
        %v7743 = vadd.f32 0.0, %v7742
        %v7744 = vpop.f32.mrf.mxu0
        %7745 = vmatprep.mubr.f32.mxu0 0.0
        %7746 = vmatmul.mubr.f32.gmra.mxu0 %v7661
        %v7747 = vpop.f32.mrf.mxu0
        %v7748 = vadd.f32 0.0, %v7747
        %v7749 = vpop.f32.mrf.mxu0
        %7750 = vmatprep.mubr.f32.mxu0 0.0
        %7751 = vmatmul.mubr.f32.gmra.mxu0 %v7664
        %v7752 = vpop.f32.mrf.mxu0
        %v7753 = vadd.f32 0.0, %v7752
        %v7754 = vpop.f32.mrf.mxu0
        %7755 = vdwg.mxu0
        %v7756 = vadd.f32 %v7613, %v7733
        %v7757 = vadd.f32 %v7618, %v7738
        %v7758 = vadd.f32 %v7623, %v7743
        %v7759 = vadd.f32 %v7628, %v7748
        %v7760 = vadd.f32 %v7633, %v7753
        %s7761 = scalar_lea.vmem [#allocation4], 10
        %v7762 = vld [vmem:[%s7761] ss:$2 sm:$0xff]
        %s7763 = scalar_lea.vmem [#allocation4], 26
        %v7764 = vld [vmem:[%s7763] ss:$2 sm:$0xff]
        %s7765 = scalar_lea.vmem [#allocation4], 42
        %v7766 = vld [vmem:[%s7765] ss:$2 sm:$0xff]
        %s7767 = scalar_lea.vmem [#allocation4], 58
        %v7768 = vld [vmem:[%s7767] ss:$2 sm:$0xff]
        %s7769 = scalar_lea.vmem [#allocation4], 74
        %v7770 = vld [vmem:[%s7769] ss:$2 sm:$0x3]
        %s7771 = scalar_lea.vmem [#allocation10], 96
        %v7772 = vld [vmem:[%s7771] sm:$0xff]
        %v7773 = vld [vmem:[%s7771 + $0x8] sm:$0xff]
        %v7774 = vld [vmem:[%s7771 + $0x10] sm:$0xff]
        %v7775 = vld [vmem:[%s7771 + $0x18] sm:$0xff]
        %v7777 = vsel %vm3455, %v7762, 0
        %v7780 = vsel %vm3455, %v7764, 0
        %v7783 = vsel %vm3455, %v7766, 0
        %v7786 = vsel %vm3455, %v7768, 0
        %v7789 = vsel %vm3455, %v7770, 0
        %7791 = vmatprep.subr.mxu0 0.0
        %7792 = vmatpush1.msra.mxu0 0.0
        %7793 = vmatprep.subr.mxu0 0.0
        %7794 = vmatpush1.msra.mxu0 0.0
        %7795 = vmatprep.subr.mxu0 0.0
        %7796 = vmatpush1.msra.mxu0 0.0
        %7797 = vmatprep.subr.mxu0 0.0
        %7798 = vmatpush1.msra.mxu0 0.0
        %7799 = vmatprep.subr.mxu0 0.0
        %7800 = vmatpush1.msra.mxu0 0.0
        %7801 = vmatprep.subr.mxu0 0.0
        %7802 = vmatpush1.msra.mxu0 0.0
        %7803 = vmatprep.subr.mxu0 0.0
        %7804 = vmatpush1.msra.mxu0 0.0
        %7805 = vmatprep.subr.mxu0 0.0
        %7806 = vmatpush1.msra.mxu0 0.0
        %7807 = vmatprep.subr.mxu0 0.0
        %7808 = vmatpush1.msra.mxu0 0.0
        %7809 = vmatprep.subr.mxu0 0.0
        %7810 = vmatpush1.msra.mxu0 0.0
        %7811 = vmatprep.subr.mxu0 0.0
        %7812 = vmatpush1.msra.mxu0 0.0
        %7813 = vmatprep.subr.mxu0 0.0
        %7814 = vmatpush1.msra.mxu0 0.0
        %7815 = vmatprep.subr.mxu0 0.0
        %7816 = vmatpush1.msra.mxu0 %v7775
        %7817 = vmatprep.subr.mxu0 0.0
        %7818 = vmatpush1.msra.mxu0 %v7774
        %7819 = vmatprep.subr.mxu0 0.0
        %7820 = vmatpush1.msra.mxu0 %v7773
        %7821 = vmatprep.subr.mxu0 0.0
        %7822 = vmatpush1.msra.mxu0 %v7772
        %7823 = vmatprep.subr.mxu0 0.0
        %7824 = vmatpush2.msra.mxu0 0.0
        %7825 = vmatprep.subr.mxu0 0.0
        %7826 = vmatpush2.msra.mxu0 0.0
        %7827 = vmatprep.subr.mxu0 0.0
        %7828 = vmatpush2.msra.mxu0 0.0
        %7829 = vmatprep.subr.mxu0 0.0
        %7830 = vmatpush2.msra.mxu0 0.0
        %7831 = vmatprep.subr.mxu0 0.0
        %7832 = vmatpush2.msra.mxu0 0.0
        %7833 = vmatprep.subr.mxu0 0.0
        %7834 = vmatpush2.msra.mxu0 0.0
        %7835 = vmatprep.subr.mxu0 0.0
        %7836 = vmatpush2.msra.mxu0 0.0
        %7837 = vmatprep.subr.mxu0 0.0
        %7838 = vmatpush2.msra.mxu0 0.0
        %7839 = vmatprep.subr.mxu0 0.0
        %7840 = vmatpush2.msra.mxu0 0.0
        %7841 = vmatprep.subr.mxu0 0.0
        %7842 = vmatpush2.msra.mxu0 0.0
        %7843 = vmatprep.subr.mxu0 0.0
        %7844 = vmatpush2.msra.mxu0 0.0
        %7845 = vmatprep.subr.mxu0 0.0
        %7846 = vmatpush2.msra.mxu0 0.0
        %7847 = vmatprep.subr.mxu0 0.0
        %7848 = vmatpush2.msra.mxu0 0.0
        %7849 = vmatprep.subr.mxu0 0.0
        %7850 = vmatpush2.msra.mxu0 0.0
        %7851 = vmatprep.subr.mxu0 0.0
        %7852 = vmatpush2.msra.mxu0 0.0
        %7853 = vmatprep.subr.mxu0 0.0
        %7854 = vmatpush2.msra.mxu0 0.0
        %7855 = vmatprep.mubr.f32.mxu0 0.0
        %7856 = vmatmul.mubr.f32.gmra.mxu0 %v7777
        %v7857 = vpop.f32.mrf.mxu0
        %v7858 = vadd.f32 0.0, %v7857
        %v7859 = vpop.f32.mrf.mxu0
        %7860 = vmatprep.mubr.f32.mxu0 0.0
        %7861 = vmatmul.mubr.f32.gmra.mxu0 %v7780
        %v7862 = vpop.f32.mrf.mxu0
        %v7863 = vadd.f32 0.0, %v7862
        %v7864 = vpop.f32.mrf.mxu0
        %7865 = vmatprep.mubr.f32.mxu0 0.0
        %7866 = vmatmul.mubr.f32.gmra.mxu0 %v7783
        %v7867 = vpop.f32.mrf.mxu0
        %v7868 = vadd.f32 0.0, %v7867
        %v7869 = vpop.f32.mrf.mxu0
        %7870 = vmatprep.mubr.f32.mxu0 0.0
        %7871 = vmatmul.mubr.f32.gmra.mxu0 %v7786
        %v7872 = vpop.f32.mrf.mxu0
        %v7873 = vadd.f32 0.0, %v7872
        %v7874 = vpop.f32.mrf.mxu0
        %7875 = vmatprep.mubr.f32.mxu0 0.0
        %7876 = vmatmul.mubr.f32.gmra.mxu0 %v7789
        %v7877 = vpop.f32.mrf.mxu0
        %v7878 = vadd.f32 0.0, %v7877
        %v7879 = vpop.f32.mrf.mxu0
        %7880 = vdwg.mxu0
        %v7881 = vadd.f32 %v7756, %v7858
        %v7882 = vadd.f32 %v7757, %v7863
        %v7883 = vadd.f32 %v7758, %v7868
        %v7884 = vadd.f32 %v7759, %v7873
        %v7885 = vadd.f32 %v7760, %v7878
        %s7886 = scalar_lea.vmem [#allocation4], 11
        %v7887 = vld [vmem:[%s7886] ss:$2 sm:$0xff]
        %s7888 = scalar_lea.vmem [#allocation4], 27
        %v7889 = vld [vmem:[%s7888] ss:$2 sm:$0xff]
        %s7890 = scalar_lea.vmem [#allocation4], 43
        %v7891 = vld [vmem:[%s7890] ss:$2 sm:$0xff]
        %s7892 = scalar_lea.vmem [#allocation4], 59
        %v7893 = vld [vmem:[%s7892] ss:$2 sm:$0xff]
        %s7894 = scalar_lea.vmem [#allocation4], 75
        %v7895 = vld [vmem:[%s7894] ss:$2 sm:$0x3]
        %s7896 = scalar_lea.vmem [#allocation10], 128
        %v7897 = vld [vmem:[%s7896] sm:$0xff]
        %v7898 = vld [vmem:[%s7896 + $0x8] sm:$0xff]
        %v7899 = vld [vmem:[%s7896 + $0x10] sm:$0xff]
        %v7900 = vld [vmem:[%s7896 + $0x18] sm:$0xff]
        %v7902 = vsel %vm3455, %v7887, 0
        %v7905 = vsel %vm3455, %v7889, 0
        %v7908 = vsel %vm3455, %v7891, 0
        %v7911 = vsel %vm3455, %v7893, 0
        %v7914 = vsel %vm3455, %v7895, 0
        %7916 = vmatprep.subr.mxu0 0.0
        %7917 = vmatpush1.msra.mxu0 0.0
        %7918 = vmatprep.subr.mxu0 0.0
        %7919 = vmatpush1.msra.mxu0 0.0
        %7920 = vmatprep.subr.mxu0 0.0
        %7921 = vmatpush1.msra.mxu0 0.0
        %7922 = vmatprep.subr.mxu0 0.0
        %7923 = vmatpush1.msra.mxu0 0.0
        %7924 = vmatprep.subr.mxu0 0.0
        %7925 = vmatpush1.msra.mxu0 0.0
        %7926 = vmatprep.subr.mxu0 0.0
        %7927 = vmatpush1.msra.mxu0 0.0
        %7928 = vmatprep.subr.mxu0 0.0
        %7929 = vmatpush1.msra.mxu0 0.0
        %7930 = vmatprep.subr.mxu0 0.0
        %7931 = vmatpush1.msra.mxu0 0.0
        %7932 = vmatprep.subr.mxu0 0.0
        %7933 = vmatpush1.msra.mxu0 0.0
        %7934 = vmatprep.subr.mxu0 0.0
        %7935 = vmatpush1.msra.mxu0 0.0
        %7936 = vmatprep.subr.mxu0 0.0
        %7937 = vmatpush1.msra.mxu0 0.0
        %7938 = vmatprep.subr.mxu0 0.0
        %7939 = vmatpush1.msra.mxu0 0.0
        %7940 = vmatprep.subr.mxu0 0.0
        %7941 = vmatpush1.msra.mxu0 %v7900
        %7942 = vmatprep.subr.mxu0 0.0
        %7943 = vmatpush1.msra.mxu0 %v7899
        %7944 = vmatprep.subr.mxu0 0.0
        %7945 = vmatpush1.msra.mxu0 %v7898
        %7946 = vmatprep.subr.mxu0 0.0
        %7947 = vmatpush1.msra.mxu0 %v7897
        %7948 = vmatprep.subr.mxu0 0.0
        %7949 = vmatpush2.msra.mxu0 0.0
        %7950 = vmatprep.subr.mxu0 0.0
        %7951 = vmatpush2.msra.mxu0 0.0
        %7952 = vmatprep.subr.mxu0 0.0
        %7953 = vmatpush2.msra.mxu0 0.0
        %7954 = vmatprep.subr.mxu0 0.0
        %7955 = vmatpush2.msra.mxu0 0.0
        %7956 = vmatprep.subr.mxu0 0.0
        %7957 = vmatpush2.msra.mxu0 0.0
        %7958 = vmatprep.subr.mxu0 0.0
        %7959 = vmatpush2.msra.mxu0 0.0
        %7960 = vmatprep.subr.mxu0 0.0
        %7961 = vmatpush2.msra.mxu0 0.0
        %7962 = vmatprep.subr.mxu0 0.0
        %7963 = vmatpush2.msra.mxu0 0.0
        %7964 = vmatprep.subr.mxu0 0.0
        %7965 = vmatpush2.msra.mxu0 0.0
        %7966 = vmatprep.subr.mxu0 0.0
        %7967 = vmatpush2.msra.mxu0 0.0
        %7968 = vmatprep.subr.mxu0 0.0
        %7969 = vmatpush2.msra.mxu0 0.0
        %7970 = vmatprep.subr.mxu0 0.0
        %7971 = vmatpush2.msra.mxu0 0.0
        %7972 = vmatprep.subr.mxu0 0.0
        %7973 = vmatpush2.msra.mxu0 0.0
        %7974 = vmatprep.subr.mxu0 0.0
        %7975 = vmatpush2.msra.mxu0 0.0
        %7976 = vmatprep.subr.mxu0 0.0
        %7977 = vmatpush2.msra.mxu0 0.0
        %7978 = vmatprep.subr.mxu0 0.0
        %7979 = vmatpush2.msra.mxu0 0.0
        %7980 = vmatprep.mubr.f32.mxu0 0.0
        %7981 = vmatmul.mubr.f32.gmra.mxu0 %v7902
        %v7982 = vpop.f32.mrf.mxu0
        %v7983 = vadd.f32 0.0, %v7982
        %v7984 = vpop.f32.mrf.mxu0
        %7985 = vmatprep.mubr.f32.mxu0 0.0
        %7986 = vmatmul.mubr.f32.gmra.mxu0 %v7905
        %v7987 = vpop.f32.mrf.mxu0
        %v7988 = vadd.f32 0.0, %v7987
        %v7989 = vpop.f32.mrf.mxu0
        %7990 = vmatprep.mubr.f32.mxu0 0.0
        %7991 = vmatmul.mubr.f32.gmra.mxu0 %v7908
        %v7992 = vpop.f32.mrf.mxu0
        %v7993 = vadd.f32 0.0, %v7992
        %v7994 = vpop.f32.mrf.mxu0
        %7995 = vmatprep.mubr.f32.mxu0 0.0
        %7996 = vmatmul.mubr.f32.gmra.mxu0 %v7911
        %v7997 = vpop.f32.mrf.mxu0
        %v7998 = vadd.f32 0.0, %v7997
        %v7999 = vpop.f32.mrf.mxu0
        %8000 = vmatprep.mubr.f32.mxu0 0.0
        %8001 = vmatmul.mubr.f32.gmra.mxu0 %v7914
        %v8002 = vpop.f32.mrf.mxu0
        %v8003 = vadd.f32 0.0, %v8002
        %v8004 = vpop.f32.mrf.mxu0
        %8005 = vdwg.mxu0
        %v8006 = vadd.f32 %v7881, %v7983
        %v8007 = vadd.f32 %v7882, %v7988
        %v8008 = vadd.f32 %v7883, %v7993
        %v8009 = vadd.f32 %v7884, %v7998
        %v8010 = vadd.f32 %v7885, %v8003
        %s8011 = scalar_lea.vmem [#allocation4], 12
        %v8012 = vld [vmem:[%s8011] ss:$2 sm:$0xff]
        %s8013 = scalar_lea.vmem [#allocation4], 28
        %v8014 = vld [vmem:[%s8013] ss:$2 sm:$0xff]
        %s8015 = scalar_lea.vmem [#allocation4], 44
        %v8016 = vld [vmem:[%s8015] ss:$2 sm:$0xff]
        %s8017 = scalar_lea.vmem [#allocation4], 60
        %v8018 = vld [vmem:[%s8017] ss:$2 sm:$0xff]
        %s8019 = scalar_lea.vmem [#allocation4], 76
        %v8020 = vld [vmem:[%s8019] ss:$2 sm:$0x3]
        %s8021 = scalar_lea.vmem [#allocation10], 160
        %v8022 = vld [vmem:[%s8021] sm:$0xff]
        %v8023 = vld [vmem:[%s8021 + $0x8] sm:$0xff]
        %v8024 = vld [vmem:[%s8021 + $0x10] sm:$0xff]
        %v8025 = vld [vmem:[%s8021 + $0x18] sm:$0xff]
        %v8027 = vsel %vm3455, %v8012, 0
        %v8030 = vsel %vm3455, %v8014, 0
        %v8033 = vsel %vm3455, %v8016, 0
        %v8036 = vsel %vm3455, %v8018, 0
        %v8039 = vsel %vm3455, %v8020, 0
        %8041 = vmatprep.subr.mxu0 0.0
        %8042 = vmatpush1.msra.mxu0 0.0
        %8043 = vmatprep.subr.mxu0 0.0
        %8044 = vmatpush1.msra.mxu0 0.0
        %8045 = vmatprep.subr.mxu0 0.0
        %8046 = vmatpush1.msra.mxu0 0.0
        %8047 = vmatprep.subr.mxu0 0.0
        %8048 = vmatpush1.msra.mxu0 0.0
        %8049 = vmatprep.subr.mxu0 0.0
        %8050 = vmatpush1.msra.mxu0 0.0
        %8051 = vmatprep.subr.mxu0 0.0
        %8052 = vmatpush1.msra.mxu0 0.0
        %8053 = vmatprep.subr.mxu0 0.0
        %8054 = vmatpush1.msra.mxu0 0.0
        %8055 = vmatprep.subr.mxu0 0.0
        %8056 = vmatpush1.msra.mxu0 0.0
        %8057 = vmatprep.subr.mxu0 0.0
        %8058 = vmatpush1.msra.mxu0 0.0
        %8059 = vmatprep.subr.mxu0 0.0
        %8060 = vmatpush1.msra.mxu0 0.0
        %8061 = vmatprep.subr.mxu0 0.0
        %8062 = vmatpush1.msra.mxu0 0.0
        %8063 = vmatprep.subr.mxu0 0.0
        %8064 = vmatpush1.msra.mxu0 0.0
        %8065 = vmatprep.subr.mxu0 0.0
        %8066 = vmatpush1.msra.mxu0 %v8025
        %8067 = vmatprep.subr.mxu0 0.0
        %8068 = vmatpush1.msra.mxu0 %v8024
        %8069 = vmatprep.subr.mxu0 0.0
        %8070 = vmatpush1.msra.mxu0 %v8023
        %8071 = vmatprep.subr.mxu0 0.0
        %8072 = vmatpush1.msra.mxu0 %v8022
        %8073 = vmatprep.subr.mxu0 0.0
        %8074 = vmatpush2.msra.mxu0 0.0
        %8075 = vmatprep.subr.mxu0 0.0
        %8076 = vmatpush2.msra.mxu0 0.0
        %8077 = vmatprep.subr.mxu0 0.0
        %8078 = vmatpush2.msra.mxu0 0.0
        %8079 = vmatprep.subr.mxu0 0.0
        %8080 = vmatpush2.msra.mxu0 0.0
        %8081 = vmatprep.subr.mxu0 0.0
        %8082 = vmatpush2.msra.mxu0 0.0
        %8083 = vmatprep.subr.mxu0 0.0
        %8084 = vmatpush2.msra.mxu0 0.0
        %8085 = vmatprep.subr.mxu0 0.0
        %8086 = vmatpush2.msra.mxu0 0.0
        %8087 = vmatprep.subr.mxu0 0.0
        %8088 = vmatpush2.msra.mxu0 0.0
        %8089 = vmatprep.subr.mxu0 0.0
        %8090 = vmatpush2.msra.mxu0 0.0
        %8091 = vmatprep.subr.mxu0 0.0
        %8092 = vmatpush2.msra.mxu0 0.0
        %8093 = vmatprep.subr.mxu0 0.0
        %8094 = vmatpush2.msra.mxu0 0.0
        %8095 = vmatprep.subr.mxu0 0.0
        %8096 = vmatpush2.msra.mxu0 0.0
        %8097 = vmatprep.subr.mxu0 0.0
        %8098 = vmatpush2.msra.mxu0 0.0
        %8099 = vmatprep.subr.mxu0 0.0
        %8100 = vmatpush2.msra.mxu0 0.0
        %8101 = vmatprep.subr.mxu0 0.0
        %8102 = vmatpush2.msra.mxu0 0.0
        %8103 = vmatprep.subr.mxu0 0.0
        %8104 = vmatpush2.msra.mxu0 0.0
        %8105 = vmatprep.mubr.f32.mxu0 0.0
        %8106 = vmatmul.mubr.f32.gmra.mxu0 %v8027
        %v8107 = vpop.f32.mrf.mxu0
        %v8108 = vadd.f32 0.0, %v8107
        %v8109 = vpop.f32.mrf.mxu0
        %8110 = vmatprep.mubr.f32.mxu0 0.0
        %8111 = vmatmul.mubr.f32.gmra.mxu0 %v8030
        %v8112 = vpop.f32.mrf.mxu0
        %v8113 = vadd.f32 0.0, %v8112
        %v8114 = vpop.f32.mrf.mxu0
        %8115 = vmatprep.mubr.f32.mxu0 0.0
        %8116 = vmatmul.mubr.f32.gmra.mxu0 %v8033
        %v8117 = vpop.f32.mrf.mxu0
        %v8118 = vadd.f32 0.0, %v8117
        %v8119 = vpop.f32.mrf.mxu0
        %8120 = vmatprep.mubr.f32.mxu0 0.0
        %8121 = vmatmul.mubr.f32.gmra.mxu0 %v8036
        %v8122 = vpop.f32.mrf.mxu0
        %v8123 = vadd.f32 0.0, %v8122
        %v8124 = vpop.f32.mrf.mxu0
        %8125 = vmatprep.mubr.f32.mxu0 0.0
        %8126 = vmatmul.mubr.f32.gmra.mxu0 %v8039
        %v8127 = vpop.f32.mrf.mxu0
        %v8128 = vadd.f32 0.0, %v8127
        %v8129 = vpop.f32.mrf.mxu0
        %8130 = vdwg.mxu0
        %v8131 = vadd.f32 %v8006, %v8108
        %v8132 = vadd.f32 %v8007, %v8113
        %v8133 = vadd.f32 %v8008, %v8118
        %v8134 = vadd.f32 %v8009, %v8123
        %v8135 = vadd.f32 %v8010, %v8128
        %s8136 = scalar_lea.vmem [#allocation4], 20
        %v8137 = vld [vmem:[%s8136] ss:$2 sm:$0xff]
        %s8138 = scalar_lea.vmem [#allocation4], 36
        %v8139 = vld [vmem:[%s8138] ss:$2 sm:$0xff]
        %s8140 = scalar_lea.vmem [#allocation4], 52
        %v8141 = vld [vmem:[%s8140] ss:$2 sm:$0xff]
        %s8142 = scalar_lea.vmem [#allocation4], 68
        %v8143 = vld [vmem:[%s8142] ss:$2 sm:$0xff]
        %s8144 = scalar_lea.vmem [#allocation4], 84
        %v8145 = vld [vmem:[%s8144] ss:$2 sm:$0x3]
        %s8146 = scalar_lea.vmem [#allocation10], 192
        %v8147 = vld [vmem:[%s8146] sm:$0xff]
        %v8148 = vld [vmem:[%s8146 + $0x8] sm:$0xff]
        %v8149 = vld [vmem:[%s8146 + $0x10] sm:$0xff]
        %v8150 = vld [vmem:[%s8146 + $0x18] sm:$0xff]
        %v8152 = vsel %vm3455, %v8137, 0
        %v8155 = vsel %vm3455, %v8139, 0
        %v8158 = vsel %vm3455, %v8141, 0
        %v8161 = vsel %vm3455, %v8143, 0
        %v8164 = vsel %vm3455, %v8145, 0
        %8166 = vmatprep.subr.mxu0 0.0
        %8167 = vmatpush1.msra.mxu0 0.0
        %8168 = vmatprep.subr.mxu0 0.0
        %8169 = vmatpush1.msra.mxu0 0.0
        %8170 = vmatprep.subr.mxu0 0.0
        %8171 = vmatpush1.msra.mxu0 0.0
        %8172 = vmatprep.subr.mxu0 0.0
        %8173 = vmatpush1.msra.mxu0 0.0
        %8174 = vmatprep.subr.mxu0 0.0
        %8175 = vmatpush1.msra.mxu0 0.0
        %8176 = vmatprep.subr.mxu0 0.0
        %8177 = vmatpush1.msra.mxu0 0.0
        %8178 = vmatprep.subr.mxu0 0.0
        %8179 = vmatpush1.msra.mxu0 0.0
        %8180 = vmatprep.subr.mxu0 0.0
        %8181 = vmatpush1.msra.mxu0 0.0
        %8182 = vmatprep.subr.mxu0 0.0
        %8183 = vmatpush1.msra.mxu0 0.0
        %8184 = vmatprep.subr.mxu0 0.0
        %8185 = vmatpush1.msra.mxu0 0.0
        %8186 = vmatprep.subr.mxu0 0.0
        %8187 = vmatpush1.msra.mxu0 0.0
        %8188 = vmatprep.subr.mxu0 0.0
        %8189 = vmatpush1.msra.mxu0 0.0
        %8190 = vmatprep.subr.mxu0 0.0
        %8191 = vmatpush1.msra.mxu0 %v8150
        %8192 = vmatprep.subr.mxu0 0.0
        %8193 = vmatpush1.msra.mxu0 %v8149
        %8194 = vmatprep.subr.mxu0 0.0
        %8195 = vmatpush1.msra.mxu0 %v8148
        %8196 = vmatprep.subr.mxu0 0.0
        %8197 = vmatpush1.msra.mxu0 %v8147
        %8198 = vmatprep.subr.mxu0 0.0
        %8199 = vmatpush2.msra.mxu0 0.0
        %8200 = vmatprep.subr.mxu0 0.0
        %8201 = vmatpush2.msra.mxu0 0.0
        %8202 = vmatprep.subr.mxu0 0.0
        %8203 = vmatpush2.msra.mxu0 0.0
        %8204 = vmatprep.subr.mxu0 0.0
        %8205 = vmatpush2.msra.mxu0 0.0
        %8206 = vmatprep.subr.mxu0 0.0
        %8207 = vmatpush2.msra.mxu0 0.0
        %8208 = vmatprep.subr.mxu0 0.0
        %8209 = vmatpush2.msra.mxu0 0.0
        %8210 = vmatprep.subr.mxu0 0.0
        %8211 = vmatpush2.msra.mxu0 0.0
        %8212 = vmatprep.subr.mxu0 0.0
        %8213 = vmatpush2.msra.mxu0 0.0
        %8214 = vmatprep.subr.mxu0 0.0
        %8215 = vmatpush2.msra.mxu0 0.0
        %8216 = vmatprep.subr.mxu0 0.0
        %8217 = vmatpush2.msra.mxu0 0.0
        %8218 = vmatprep.subr.mxu0 0.0
        %8219 = vmatpush2.msra.mxu0 0.0
        %8220 = vmatprep.subr.mxu0 0.0
        %8221 = vmatpush2.msra.mxu0 0.0
        %8222 = vmatprep.subr.mxu0 0.0
        %8223 = vmatpush2.msra.mxu0 0.0
        %8224 = vmatprep.subr.mxu0 0.0
        %8225 = vmatpush2.msra.mxu0 0.0
        %8226 = vmatprep.subr.mxu0 0.0
        %8227 = vmatpush2.msra.mxu0 0.0
        %8228 = vmatprep.subr.mxu0 0.0
        %8229 = vmatpush2.msra.mxu0 0.0
        %8230 = vmatprep.mubr.f32.mxu0 0.0
        %8231 = vmatmul.mubr.f32.gmra.mxu0 %v8152
        %v8232 = vpop.f32.mrf.mxu0
        %v8233 = vadd.f32 0.0, %v8232
        %v8234 = vpop.f32.mrf.mxu0
        %8235 = vmatprep.mubr.f32.mxu0 0.0
        %8236 = vmatmul.mubr.f32.gmra.mxu0 %v8155
        %v8237 = vpop.f32.mrf.mxu0
        %v8238 = vadd.f32 0.0, %v8237
        %v8239 = vpop.f32.mrf.mxu0
        %8240 = vmatprep.mubr.f32.mxu0 0.0
        %8241 = vmatmul.mubr.f32.gmra.mxu0 %v8158
        %v8242 = vpop.f32.mrf.mxu0
        %v8243 = vadd.f32 0.0, %v8242
        %v8244 = vpop.f32.mrf.mxu0
        %8245 = vmatprep.mubr.f32.mxu0 0.0
        %8246 = vmatmul.mubr.f32.gmra.mxu0 %v8161
        %v8247 = vpop.f32.mrf.mxu0
        %v8248 = vadd.f32 0.0, %v8247
        %v8249 = vpop.f32.mrf.mxu0
        %8250 = vmatprep.mubr.f32.mxu0 0.0
        %8251 = vmatmul.mubr.f32.gmra.mxu0 %v8164
        %v8252 = vpop.f32.mrf.mxu0
        %v8253 = vadd.f32 0.0, %v8252
        %v8254 = vpop.f32.mrf.mxu0
        %8255 = vdwg.mxu0
        %v8256 = vadd.f32 %v8131, %v8233
        %v8257 = vadd.f32 %v8132, %v8238
        %v8258 = vadd.f32 %v8133, %v8243
        %v8259 = vadd.f32 %v8134, %v8248
        %v8260 = vadd.f32 %v8135, %v8253
        %s8261 = scalar_lea.vmem [#allocation4], 21
        %v8262 = vld [vmem:[%s8261] ss:$2 sm:$0xff]
        %s8263 = scalar_lea.vmem [#allocation4], 37
        %v8264 = vld [vmem:[%s8263] ss:$2 sm:$0xff]
        %s8265 = scalar_lea.vmem [#allocation4], 53
        %v8266 = vld [vmem:[%s8265] ss:$2 sm:$0xff]
        %s8267 = scalar_lea.vmem [#allocation4], 69
        %v8268 = vld [vmem:[%s8267] ss:$2 sm:$0xff]
        %s8269 = scalar_lea.vmem [#allocation4], 85
        %v8270 = vld [vmem:[%s8269] ss:$2 sm:$0x3]
        %s8271 = scalar_lea.vmem [#allocation10], 224
        %v8272 = vld [vmem:[%s8271] sm:$0xff]
        %v8273 = vld [vmem:[%s8271 + $0x8] sm:$0xff]
        %v8274 = vld [vmem:[%s8271 + $0x10] sm:$0xff]
        %v8275 = vld [vmem:[%s8271 + $0x18] sm:$0xff]
        %v8277 = vsel %vm3455, %v8262, 0
        %v8280 = vsel %vm3455, %v8264, 0
        %v8283 = vsel %vm3455, %v8266, 0
        %v8286 = vsel %vm3455, %v8268, 0
        %v8289 = vsel %vm3455, %v8270, 0
        %8291 = vmatprep.subr.mxu0 0.0
        %8292 = vmatpush1.msra.mxu0 0.0
        %8293 = vmatprep.subr.mxu0 0.0
        %8294 = vmatpush1.msra.mxu0 0.0
        %8295 = vmatprep.subr.mxu0 0.0
        %8296 = vmatpush1.msra.mxu0 0.0
        %8297 = vmatprep.subr.mxu0 0.0
        %8298 = vmatpush1.msra.mxu0 0.0
        %8299 = vmatprep.subr.mxu0 0.0
        %8300 = vmatpush1.msra.mxu0 0.0
        %8301 = vmatprep.subr.mxu0 0.0
        %8302 = vmatpush1.msra.mxu0 0.0
        %8303 = vmatprep.subr.mxu0 0.0
        %8304 = vmatpush1.msra.mxu0 0.0
        %8305 = vmatprep.subr.mxu0 0.0
        %8306 = vmatpush1.msra.mxu0 0.0
        %8307 = vmatprep.subr.mxu0 0.0
        %8308 = vmatpush1.msra.mxu0 0.0
        %8309 = vmatprep.subr.mxu0 0.0
        %8310 = vmatpush1.msra.mxu0 0.0
        %8311 = vmatprep.subr.mxu0 0.0
        %8312 = vmatpush1.msra.mxu0 0.0
        %8313 = vmatprep.subr.mxu0 0.0
        %8314 = vmatpush1.msra.mxu0 0.0
        %8315 = vmatprep.subr.mxu0 0.0
        %8316 = vmatpush1.msra.mxu0 %v8275
        %8317 = vmatprep.subr.mxu0 0.0
        %8318 = vmatpush1.msra.mxu0 %v8274
        %8319 = vmatprep.subr.mxu0 0.0
        %8320 = vmatpush1.msra.mxu0 %v8273
        %8321 = vmatprep.subr.mxu0 0.0
        %8322 = vmatpush1.msra.mxu0 %v8272
        %8323 = vmatprep.subr.mxu0 0.0
        %8324 = vmatpush2.msra.mxu0 0.0
        %8325 = vmatprep.subr.mxu0 0.0
        %8326 = vmatpush2.msra.mxu0 0.0
        %8327 = vmatprep.subr.mxu0 0.0
        %8328 = vmatpush2.msra.mxu0 0.0
        %8329 = vmatprep.subr.mxu0 0.0
        %8330 = vmatpush2.msra.mxu0 0.0
        %8331 = vmatprep.subr.mxu0 0.0
        %8332 = vmatpush2.msra.mxu0 0.0
        %8333 = vmatprep.subr.mxu0 0.0
        %8334 = vmatpush2.msra.mxu0 0.0
        %8335 = vmatprep.subr.mxu0 0.0
        %8336 = vmatpush2.msra.mxu0 0.0
        %8337 = vmatprep.subr.mxu0 0.0
        %8338 = vmatpush2.msra.mxu0 0.0
        %8339 = vmatprep.subr.mxu0 0.0
        %8340 = vmatpush2.msra.mxu0 0.0
        %8341 = vmatprep.subr.mxu0 0.0
        %8342 = vmatpush2.msra.mxu0 0.0
        %8343 = vmatprep.subr.mxu0 0.0
        %8344 = vmatpush2.msra.mxu0 0.0
        %8345 = vmatprep.subr.mxu0 0.0
        %8346 = vmatpush2.msra.mxu0 0.0
        %8347 = vmatprep.subr.mxu0 0.0
        %8348 = vmatpush2.msra.mxu0 0.0
        %8349 = vmatprep.subr.mxu0 0.0
        %8350 = vmatpush2.msra.mxu0 0.0
        %8351 = vmatprep.subr.mxu0 0.0
        %8352 = vmatpush2.msra.mxu0 0.0
        %8353 = vmatprep.subr.mxu0 0.0
        %8354 = vmatpush2.msra.mxu0 0.0
        %8355 = vmatprep.mubr.f32.mxu0 0.0
        %8356 = vmatmul.mubr.f32.gmra.mxu0 %v8277
        %v8357 = vpop.f32.mrf.mxu0
        %v8358 = vadd.f32 0.0, %v8357
        %v8359 = vpop.f32.mrf.mxu0
        %8360 = vmatprep.mubr.f32.mxu0 0.0
        %8361 = vmatmul.mubr.f32.gmra.mxu0 %v8280
        %v8362 = vpop.f32.mrf.mxu0
        %v8363 = vadd.f32 0.0, %v8362
        %v8364 = vpop.f32.mrf.mxu0
        %8365 = vmatprep.mubr.f32.mxu0 0.0
        %8366 = vmatmul.mubr.f32.gmra.mxu0 %v8283
        %v8367 = vpop.f32.mrf.mxu0
        %v8368 = vadd.f32 0.0, %v8367
        %v8369 = vpop.f32.mrf.mxu0
        %8370 = vmatprep.mubr.f32.mxu0 0.0
        %8371 = vmatmul.mubr.f32.gmra.mxu0 %v8286
        %v8372 = vpop.f32.mrf.mxu0
        %v8373 = vadd.f32 0.0, %v8372
        %v8374 = vpop.f32.mrf.mxu0
        %8375 = vmatprep.mubr.f32.mxu0 0.0
        %8376 = vmatmul.mubr.f32.gmra.mxu0 %v8289
        %v8377 = vpop.f32.mrf.mxu0
        %v8378 = vadd.f32 0.0, %v8377
        %v8379 = vpop.f32.mrf.mxu0
        %8380 = vdwg.mxu0
        %v8381 = vadd.f32 %v8256, %v8358
        %v8382 = vadd.f32 %v8257, %v8363
        %v8383 = vadd.f32 %v8258, %v8368
        %v8384 = vadd.f32 %v8259, %v8373
        %v8385 = vadd.f32 %v8260, %v8378
        %s8386 = scalar_lea.vmem [#allocation4], 22
        %v8387 = vld [vmem:[%s8386] ss:$2 sm:$0xff]
        %s8388 = scalar_lea.vmem [#allocation4], 38
        %v8389 = vld [vmem:[%s8388] ss:$2 sm:$0xff]
        %s8390 = scalar_lea.vmem [#allocation4], 54
        %v8391 = vld [vmem:[%s8390] ss:$2 sm:$0xff]
        %s8392 = scalar_lea.vmem [#allocation4], 70
        %v8393 = vld [vmem:[%s8392] ss:$2 sm:$0xff]
        %s8394 = scalar_lea.vmem [#allocation4], 86
        %v8395 = vld [vmem:[%s8394] ss:$2 sm:$0x3]
        %s8396 = scalar_lea.vmem [#allocation10], 256
        %v8397 = vld [vmem:[%s8396] sm:$0xff]
        %v8398 = vld [vmem:[%s8396 + $0x8] sm:$0xff]
        %v8399 = vld [vmem:[%s8396 + $0x10] sm:$0xff]
        %v8400 = vld [vmem:[%s8396 + $0x18] sm:$0xff]
        %v8402 = vsel %vm3455, %v8387, 0
        %v8405 = vsel %vm3455, %v8389, 0
        %v8408 = vsel %vm3455, %v8391, 0
        %v8411 = vsel %vm3455, %v8393, 0
        %v8414 = vsel %vm3455, %v8395, 0
        %8416 = vmatprep.subr.mxu0 0.0
        %8417 = vmatpush1.msra.mxu0 0.0
        %8418 = vmatprep.subr.mxu0 0.0
        %8419 = vmatpush1.msra.mxu0 0.0
        %8420 = vmatprep.subr.mxu0 0.0
        %8421 = vmatpush1.msra.mxu0 0.0
        %8422 = vmatprep.subr.mxu0 0.0
        %8423 = vmatpush1.msra.mxu0 0.0
        %8424 = vmatprep.subr.mxu0 0.0
        %8425 = vmatpush1.msra.mxu0 0.0
        %8426 = vmatprep.subr.mxu0 0.0
        %8427 = vmatpush1.msra.mxu0 0.0
        %8428 = vmatprep.subr.mxu0 0.0
        %8429 = vmatpush1.msra.mxu0 0.0
        %8430 = vmatprep.subr.mxu0 0.0
        %8431 = vmatpush1.msra.mxu0 0.0
        %8432 = vmatprep.subr.mxu0 0.0
        %8433 = vmatpush1.msra.mxu0 0.0
        %8434 = vmatprep.subr.mxu0 0.0
        %8435 = vmatpush1.msra.mxu0 0.0
        %8436 = vmatprep.subr.mxu0 0.0
        %8437 = vmatpush1.msra.mxu0 0.0
        %8438 = vmatprep.subr.mxu0 0.0
        %8439 = vmatpush1.msra.mxu0 0.0
        %8440 = vmatprep.subr.mxu0 0.0
        %8441 = vmatpush1.msra.mxu0 %v8400
        %8442 = vmatprep.subr.mxu0 0.0
        %8443 = vmatpush1.msra.mxu0 %v8399
        %8444 = vmatprep.subr.mxu0 0.0
        %8445 = vmatpush1.msra.mxu0 %v8398
        %8446 = vmatprep.subr.mxu0 0.0
        %8447 = vmatpush1.msra.mxu0 %v8397
        %8448 = vmatprep.subr.mxu0 0.0
        %8449 = vmatpush2.msra.mxu0 0.0
        %8450 = vmatprep.subr.mxu0 0.0
        %8451 = vmatpush2.msra.mxu0 0.0
        %8452 = vmatprep.subr.mxu0 0.0
        %8453 = vmatpush2.msra.mxu0 0.0
        %8454 = vmatprep.subr.mxu0 0.0
        %8455 = vmatpush2.msra.mxu0 0.0
        %8456 = vmatprep.subr.mxu0 0.0
        %8457 = vmatpush2.msra.mxu0 0.0
        %8458 = vmatprep.subr.mxu0 0.0
        %8459 = vmatpush2.msra.mxu0 0.0
        %8460 = vmatprep.subr.mxu0 0.0
        %8461 = vmatpush2.msra.mxu0 0.0
        %8462 = vmatprep.subr.mxu0 0.0
        %8463 = vmatpush2.msra.mxu0 0.0
        %8464 = vmatprep.subr.mxu0 0.0
        %8465 = vmatpush2.msra.mxu0 0.0
        %8466 = vmatprep.subr.mxu0 0.0
        %8467 = vmatpush2.msra.mxu0 0.0
        %8468 = vmatprep.subr.mxu0 0.0
        %8469 = vmatpush2.msra.mxu0 0.0
        %8470 = vmatprep.subr.mxu0 0.0
        %8471 = vmatpush2.msra.mxu0 0.0
        %8472 = vmatprep.subr.mxu0 0.0
        %8473 = vmatpush2.msra.mxu0 0.0
        %8474 = vmatprep.subr.mxu0 0.0
        %8475 = vmatpush2.msra.mxu0 0.0
        %8476 = vmatprep.subr.mxu0 0.0
        %8477 = vmatpush2.msra.mxu0 0.0
        %8478 = vmatprep.subr.mxu0 0.0
        %8479 = vmatpush2.msra.mxu0 0.0
        %8480 = vmatprep.mubr.f32.mxu0 0.0
        %8481 = vmatmul.mubr.f32.gmra.mxu0 %v8402
        %v8482 = vpop.f32.mrf.mxu0
        %v8483 = vadd.f32 0.0, %v8482
        %v8484 = vpop.f32.mrf.mxu0
        %8485 = vmatprep.mubr.f32.mxu0 0.0
        %8486 = vmatmul.mubr.f32.gmra.mxu0 %v8405
        %v8487 = vpop.f32.mrf.mxu0
        %v8488 = vadd.f32 0.0, %v8487
        %v8489 = vpop.f32.mrf.mxu0
        %8490 = vmatprep.mubr.f32.mxu0 0.0
        %8491 = vmatmul.mubr.f32.gmra.mxu0 %v8408
        %v8492 = vpop.f32.mrf.mxu0
        %v8493 = vadd.f32 0.0, %v8492
        %v8494 = vpop.f32.mrf.mxu0
        %8495 = vmatprep.mubr.f32.mxu0 0.0
        %8496 = vmatmul.mubr.f32.gmra.mxu0 %v8411
        %v8497 = vpop.f32.mrf.mxu0
        %v8498 = vadd.f32 0.0, %v8497
        %v8499 = vpop.f32.mrf.mxu0
        %8500 = vmatprep.mubr.f32.mxu0 0.0
        %8501 = vmatmul.mubr.f32.gmra.mxu0 %v8414
        %v8502 = vpop.f32.mrf.mxu0
        %v8503 = vadd.f32 0.0, %v8502
        %v8504 = vpop.f32.mrf.mxu0
        %8505 = vdwg.mxu0
        %v8506 = vadd.f32 %v8381, %v8483
        %v8507 = vadd.f32 %v8382, %v8488
        %v8508 = vadd.f32 %v8383, %v8493
        %v8509 = vadd.f32 %v8384, %v8498
        %v8510 = vadd.f32 %v8385, %v8503
        %v8511 = vld [vmem:[%s10] sm:$0x1]
        %v8513 = vlaneseq
        %v8514 = vshrl.u32 %v8513, 7
        %v8515 = vsub.s32 0, %v8514
        %v8516 = vrot.slane %v8511, %v8515
        %v8518 = vadd.f32 %v8506, %v8516
        %v8519 = vadd.f32 %v8507, %v8516
        %v8520 = vadd.f32 %v8508, %v8516
        %v8521 = vadd.f32 %v8509, %v8516
        %v8522 = vadd.f32 %v8510, %v8516
        %8523 = vst.msk [vmem:[%s626] sm:$0xf] %vm3496, %v8518
        %s8524 = scalar_lea.vmem %s626, 4 [#allocation17]
        %vm8525 = vcmask 259074
        %8526 = vst.msk [vmem:[%s8524 - $0x2] sm:$0x3c] %vm8525, %v8519
        %s8527 = scalar_lea.vmem %s626, 8 [#allocation17]
        %8528 = vst.msk [vmem:[%s8527 - $0x4] sm:$0xf0] %vm3505, %v8520
        %s8529 = scalar_lea.vmem %s626, 12 [#allocation17]
        %8530 = vst.msk [vmem:[%s8529 - $0x6] sm:$0xc0] %vm3509, %v8521
        %8531 = vst.msk [vmem:[%s8529 + $0x2] sm:$0x3] %vm3503, %v8522
        %8532 = vst.msk [vmem:[#allocation5] sm:$0xff] %vm3455, 0.0
        %8533 = vst.msk [vmem:[#allocation5 + $0x8] sm:$0xff] %vm3455, 0.0
        %8534 = vst.msk [vmem:[#allocation5 + $0x10] sm:$0xff] %vm3455, 0.0
        %8535 = vst.msk [vmem:[#allocation5 + $0x18] sm:$0xff] %vm3455, 0.0
        %8536 = vst.msk [vmem:[#allocation5 + $0x20] sm:$0xf] %vm3496, 0.0
        %8537 = vst.msk [vmem:[#allocation5 + $0x7] sm:$0xf] %vm3496, %v8518
        %8538 = vst.msk [vmem:[#allocation5 + $0xb] sm:$0x3c] %vm8525, %v8519
        %8539 = vst.msk [vmem:[#allocation5 + $0xf] sm:$0xf0] %vm3505, %v8520
        %8540 = vst.msk [vmem:[#allocation5 + $0x13] sm:$0xc0] %vm3509, %v8521
        %8541 = vst.msk [vmem:[#allocation5 + $0x1b] sm:$0x3] %vm3503, %v8522
        %v8542 = vld [vmem:[#allocation5] sm:$0xff]
        %v8543 = vld [vmem:[#allocation5 + $0x8] sm:$0xff]
        %v8544 = vld [vmem:[#allocation5 + $0x10] sm:$0x3f]
        %v8545 = vld [vmem:[#allocation13] sm:$0xff]
        %v8546 = vld [vmem:[#allocation13 + $0x8] sm:$0xff]
        %v8547 = vld [vmem:[#allocation13 + $0x10] sm:$0xff]
        %v8548 = vld [vmem:[#allocation13 + $0x18] sm:$0xff]
        %v8549 = vld [vmem:[#allocation5 + $0x1] sm:$0xff]
        %v8550 = vld [vmem:[#allocation5 + $0x9] sm:$0xff]
        %v8551 = vld [vmem:[#allocation5 + $0x11] sm:$0x3f]
        %s8552 = scalar_lea.vmem [#allocation13], 32
        %v8553 = vld [vmem:[%s8552] sm:$0xff]
        %v8554 = vld [vmem:[%s8552 + $0x8] sm:$0xff]
        %v8555 = vld [vmem:[%s8552 + $0x10] sm:$0xff]
        %v8556 = vld [vmem:[%s8552 + $0x18] sm:$0xff]
        %v8558 = vsel %vm3455, %v8549, 0
        %v8561 = vsel %vm3455, %v8550, 0
        %v8564 = vsel %vm3455, %v8551, 0
        %8566 = vmatprep.subr.mxu0 0.0
        %8567 = vmatpush1.msra.mxu0 0.0
        %8568 = vmatprep.subr.mxu0 0.0
        %8569 = vmatpush1.msra.mxu0 0.0
        %8570 = vmatprep.subr.mxu0 0.0
        %8571 = vmatpush1.msra.mxu0 0.0
        %8572 = vmatprep.subr.mxu0 0.0
        %8573 = vmatpush1.msra.mxu0 0.0
        %8574 = vmatprep.subr.mxu0 0.0
        %8575 = vmatpush1.msra.mxu0 0.0
        %8576 = vmatprep.subr.mxu0 0.0
        %8577 = vmatpush1.msra.mxu0 0.0
        %8578 = vmatprep.subr.mxu0 0.0
        %8579 = vmatpush1.msra.mxu0 0.0
        %8580 = vmatprep.subr.mxu0 0.0
        %8581 = vmatpush1.msra.mxu0 0.0
        %8582 = vmatprep.subr.mxu0 0.0
        %8583 = vmatpush1.msra.mxu0 0.0
        %8584 = vmatprep.subr.mxu0 0.0
        %8585 = vmatpush1.msra.mxu0 0.0
        %8586 = vmatprep.subr.mxu0 0.0
        %8587 = vmatpush1.msra.mxu0 0.0
        %8588 = vmatprep.subr.mxu0 0.0
        %8589 = vmatpush1.msra.mxu0 0.0
        %8590 = vmatprep.subr.mxu0 0.0
        %8591 = vmatpush1.msra.mxu0 %v8556
        %8592 = vmatprep.subr.mxu0 0.0
        %8593 = vmatpush1.msra.mxu0 %v8555
        %8594 = vmatprep.subr.mxu0 0.0
        %8595 = vmatpush1.msra.mxu0 %v8554
        %8596 = vmatprep.subr.mxu0 0.0
        %8597 = vmatpush1.msra.mxu0 %v8553
        %8598 = vmatprep.subr.mxu0 0.0
        %8599 = vmatpush2.msra.mxu0 0.0
        %8600 = vmatprep.subr.mxu0 0.0
        %8601 = vmatpush2.msra.mxu0 0.0
        %8602 = vmatprep.subr.mxu0 0.0
        %8603 = vmatpush2.msra.mxu0 0.0
        %8604 = vmatprep.subr.mxu0 0.0
        %8605 = vmatpush2.msra.mxu0 0.0
        %8606 = vmatprep.subr.mxu0 0.0
        %8607 = vmatpush2.msra.mxu0 0.0
        %8608 = vmatprep.subr.mxu0 0.0
        %8609 = vmatpush2.msra.mxu0 0.0
        %8610 = vmatprep.subr.mxu0 0.0
        %8611 = vmatpush2.msra.mxu0 0.0
        %8612 = vmatprep.subr.mxu0 0.0
        %8613 = vmatpush2.msra.mxu0 0.0
        %8614 = vmatprep.subr.mxu0 0.0
        %8615 = vmatpush2.msra.mxu0 0.0
        %8616 = vmatprep.subr.mxu0 0.0
        %8617 = vmatpush2.msra.mxu0 0.0
        %8618 = vmatprep.subr.mxu0 0.0
        %8619 = vmatpush2.msra.mxu0 0.0
        %8620 = vmatprep.subr.mxu0 0.0
        %8621 = vmatpush2.msra.mxu0 0.0
        %8622 = vmatprep.subr.mxu0 0.0
        %8623 = vmatpush2.msra.mxu0 0.0
        %8624 = vmatprep.subr.mxu0 0.0
        %8625 = vmatpush2.msra.mxu0 0.0
        %8626 = vmatprep.subr.mxu0 0.0
        %8627 = vmatpush2.msra.mxu0 0.0
        %8628 = vmatprep.subr.mxu0 0.0
        %8629 = vmatpush2.msra.mxu0 0.0
        %8630 = vmatprep.mubr.f32.mxu0 0.0
        %8631 = vmatmul.mubr.f32.gmra.mxu0 %v8558
        %v8632 = vpop.f32.mrf.mxu0
        %v8633 = vadd.f32 0.0, %v8632
        %v8634 = vpop.f32.mrf.mxu0
        %8635 = vmatprep.mubr.f32.mxu0 0.0
        %8636 = vmatmul.mubr.f32.gmra.mxu0 %v8561
        %v8637 = vpop.f32.mrf.mxu0
        %v8638 = vadd.f32 0.0, %v8637
        %v8639 = vpop.f32.mrf.mxu0
        %8640 = vmatprep.mubr.f32.mxu0 0.0
        %8641 = vmatmul.mubr.f32.gmra.mxu0 %v8564
        %v8642 = vpop.f32.mrf.mxu0
        %v8643 = vadd.f32 0.0, %v8642
        %v8644 = vpop.f32.mrf.mxu0
        %8645 = vdwg.mxu0
        %v8647 = vsel %vm3455, %v8542, 0
        %v8650 = vsel %vm3455, %v8543, 0
        %v8653 = vsel %vm3455, %v8544, 0
        %8655 = vmatprep.subr.mxu0 0.0
        %8656 = vmatpush1.msra.mxu0 0.0
        %8657 = vmatprep.subr.mxu0 0.0
        %8658 = vmatpush1.msra.mxu0 0.0
        %8659 = vmatprep.subr.mxu0 0.0
        %8660 = vmatpush1.msra.mxu0 0.0
        %8661 = vmatprep.subr.mxu0 0.0
        %8662 = vmatpush1.msra.mxu0 0.0
        %8663 = vmatprep.subr.mxu0 0.0
        %8664 = vmatpush1.msra.mxu0 0.0
        %8665 = vmatprep.subr.mxu0 0.0
        %8666 = vmatpush1.msra.mxu0 0.0
        %8667 = vmatprep.subr.mxu0 0.0
        %8668 = vmatpush1.msra.mxu0 0.0
        %8669 = vmatprep.subr.mxu0 0.0
        %8670 = vmatpush1.msra.mxu0 0.0
        %8671 = vmatprep.subr.mxu0 0.0
        %8672 = vmatpush1.msra.mxu0 0.0
        %8673 = vmatprep.subr.mxu0 0.0
        %8674 = vmatpush1.msra.mxu0 0.0
        %8675 = vmatprep.subr.mxu0 0.0
        %8676 = vmatpush1.msra.mxu0 0.0
        %8677 = vmatprep.subr.mxu0 0.0
        %8678 = vmatpush1.msra.mxu0 0.0
        %8679 = vmatprep.subr.mxu0 0.0
        %8680 = vmatpush1.msra.mxu0 %v8548
        %8681 = vmatprep.subr.mxu0 0.0
        %8682 = vmatpush1.msra.mxu0 %v8547
        %8683 = vmatprep.subr.mxu0 0.0
        %8684 = vmatpush1.msra.mxu0 %v8546
        %8685 = vmatprep.subr.mxu0 0.0
        %8686 = vmatpush1.msra.mxu0 %v8545
        %8687 = vmatprep.subr.mxu0 0.0
        %8688 = vmatpush2.msra.mxu0 0.0
        %8689 = vmatprep.subr.mxu0 0.0
        %8690 = vmatpush2.msra.mxu0 0.0
        %8691 = vmatprep.subr.mxu0 0.0
        %8692 = vmatpush2.msra.mxu0 0.0
        %8693 = vmatprep.subr.mxu0 0.0
        %8694 = vmatpush2.msra.mxu0 0.0
        %8695 = vmatprep.subr.mxu0 0.0
        %8696 = vmatpush2.msra.mxu0 0.0
        %8697 = vmatprep.subr.mxu0 0.0
        %8698 = vmatpush2.msra.mxu0 0.0
        %8699 = vmatprep.subr.mxu0 0.0
        %8700 = vmatpush2.msra.mxu0 0.0
        %8701 = vmatprep.subr.mxu0 0.0
        %8702 = vmatpush2.msra.mxu0 0.0
        %8703 = vmatprep.subr.mxu0 0.0
        %8704 = vmatpush2.msra.mxu0 0.0
        %8705 = vmatprep.subr.mxu0 0.0
        %8706 = vmatpush2.msra.mxu0 0.0
        %8707 = vmatprep.subr.mxu0 0.0
        %8708 = vmatpush2.msra.mxu0 0.0
        %8709 = vmatprep.subr.mxu0 0.0
        %8710 = vmatpush2.msra.mxu0 0.0
        %8711 = vmatprep.subr.mxu0 0.0
        %8712 = vmatpush2.msra.mxu0 0.0
        %8713 = vmatprep.subr.mxu0 0.0
        %8714 = vmatpush2.msra.mxu0 0.0
        %8715 = vmatprep.subr.mxu0 0.0
        %8716 = vmatpush2.msra.mxu0 0.0
        %8717 = vmatprep.subr.mxu0 0.0
        %8718 = vmatpush2.msra.mxu0 0.0
        %8719 = vmatprep.mubr.f32.mxu0 0.0
        %8720 = vmatmul.mubr.f32.gmra.mxu0 %v8647
        %v8721 = vpop.f32.mrf.mxu0
        %v8722 = vadd.f32 %v8633, %v8721
        %v8723 = vpop.f32.mrf.mxu0
        %8724 = vmatprep.mubr.f32.mxu0 0.0
        %8725 = vmatmul.mubr.f32.gmra.mxu0 %v8650
        %v8726 = vpop.f32.mrf.mxu0
        %v8727 = vadd.f32 %v8638, %v8726
        %v8728 = vpop.f32.mrf.mxu0
        %8729 = vmatprep.mubr.f32.mxu0 0.0
        %8730 = vmatmul.mubr.f32.gmra.mxu0 %v8653
        %v8731 = vpop.f32.mrf.mxu0
        %v8732 = vadd.f32 %v8643, %v8731
        %v8733 = vpop.f32.mrf.mxu0
        %8734 = vdwg.mxu0
        %v8735 = vld [vmem:[#allocation5 + $0x2] sm:$0xff]
        %v8736 = vld [vmem:[#allocation5 + $0xa] sm:$0xff]
        %v8737 = vld [vmem:[#allocation5 + $0x12] sm:$0x3f]
        %s8738 = scalar_lea.vmem [#allocation13], 64
        %v8739 = vld [vmem:[%s8738] sm:$0xff]
        %v8740 = vld [vmem:[%s8738 + $0x8] sm:$0xff]
        %v8741 = vld [vmem:[%s8738 + $0x10] sm:$0xff]
        %v8742 = vld [vmem:[%s8738 + $0x18] sm:$0xff]
        %v8744 = vsel %vm3455, %v8735, 0
        %v8747 = vsel %vm3455, %v8736, 0
        %v8750 = vsel %vm3455, %v8737, 0
        %8752 = vmatprep.subr.mxu0 0.0
        %8753 = vmatpush1.msra.mxu0 0.0
        %8754 = vmatprep.subr.mxu0 0.0
        %8755 = vmatpush1.msra.mxu0 0.0
        %8756 = vmatprep.subr.mxu0 0.0
        %8757 = vmatpush1.msra.mxu0 0.0
        %8758 = vmatprep.subr.mxu0 0.0
        %8759 = vmatpush1.msra.mxu0 0.0
        %8760 = vmatprep.subr.mxu0 0.0
        %8761 = vmatpush1.msra.mxu0 0.0
        %8762 = vmatprep.subr.mxu0 0.0
        %8763 = vmatpush1.msra.mxu0 0.0
        %8764 = vmatprep.subr.mxu0 0.0
        %8765 = vmatpush1.msra.mxu0 0.0
        %8766 = vmatprep.subr.mxu0 0.0
        %8767 = vmatpush1.msra.mxu0 0.0
        %8768 = vmatprep.subr.mxu0 0.0
        %8769 = vmatpush1.msra.mxu0 0.0
        %8770 = vmatprep.subr.mxu0 0.0
        %8771 = vmatpush1.msra.mxu0 0.0
        %8772 = vmatprep.subr.mxu0 0.0
        %8773 = vmatpush1.msra.mxu0 0.0
        %8774 = vmatprep.subr.mxu0 0.0
        %8775 = vmatpush1.msra.mxu0 0.0
        %8776 = vmatprep.subr.mxu0 0.0
        %8777 = vmatpush1.msra.mxu0 %v8742
        %8778 = vmatprep.subr.mxu0 0.0
        %8779 = vmatpush1.msra.mxu0 %v8741
        %8780 = vmatprep.subr.mxu0 0.0
        %8781 = vmatpush1.msra.mxu0 %v8740
        %8782 = vmatprep.subr.mxu0 0.0
        %8783 = vmatpush1.msra.mxu0 %v8739
        %8784 = vmatprep.subr.mxu0 0.0
        %8785 = vmatpush2.msra.mxu0 0.0
        %8786 = vmatprep.subr.mxu0 0.0
        %8787 = vmatpush2.msra.mxu0 0.0
        %8788 = vmatprep.subr.mxu0 0.0
        %8789 = vmatpush2.msra.mxu0 0.0
        %8790 = vmatprep.subr.mxu0 0.0
        %8791 = vmatpush2.msra.mxu0 0.0
        %8792 = vmatprep.subr.mxu0 0.0
        %8793 = vmatpush2.msra.mxu0 0.0
        %8794 = vmatprep.subr.mxu0 0.0
        %8795 = vmatpush2.msra.mxu0 0.0
        %8796 = vmatprep.subr.mxu0 0.0
        %8797 = vmatpush2.msra.mxu0 0.0
        %8798 = vmatprep.subr.mxu0 0.0
        %8799 = vmatpush2.msra.mxu0 0.0
        %8800 = vmatprep.subr.mxu0 0.0
        %8801 = vmatpush2.msra.mxu0 0.0
        %8802 = vmatprep.subr.mxu0 0.0
        %8803 = vmatpush2.msra.mxu0 0.0
        %8804 = vmatprep.subr.mxu0 0.0
        %8805 = vmatpush2.msra.mxu0 0.0
        %8806 = vmatprep.subr.mxu0 0.0
        %8807 = vmatpush2.msra.mxu0 0.0
        %8808 = vmatprep.subr.mxu0 0.0
        %8809 = vmatpush2.msra.mxu0 0.0
        %8810 = vmatprep.subr.mxu0 0.0
        %8811 = vmatpush2.msra.mxu0 0.0
        %8812 = vmatprep.subr.mxu0 0.0
        %8813 = vmatpush2.msra.mxu0 0.0
        %8814 = vmatprep.subr.mxu0 0.0
        %8815 = vmatpush2.msra.mxu0 0.0
        %8816 = vmatprep.mubr.f32.mxu0 0.0
        %8817 = vmatmul.mubr.f32.gmra.mxu0 %v8744
        %v8818 = vpop.f32.mrf.mxu0
        %v8819 = vadd.f32 0.0, %v8818
        %v8820 = vpop.f32.mrf.mxu0
        %8821 = vmatprep.mubr.f32.mxu0 0.0
        %8822 = vmatmul.mubr.f32.gmra.mxu0 %v8747
        %v8823 = vpop.f32.mrf.mxu0
        %v8824 = vadd.f32 0.0, %v8823
        %v8825 = vpop.f32.mrf.mxu0
        %8826 = vmatprep.mubr.f32.mxu0 0.0
        %8827 = vmatmul.mubr.f32.gmra.mxu0 %v8750
        %v8828 = vpop.f32.mrf.mxu0
        %v8829 = vadd.f32 0.0, %v8828
        %v8830 = vpop.f32.mrf.mxu0
        %8831 = vdwg.mxu0
        %v8832 = vadd.f32 %v8722, %v8819
        %v8833 = vadd.f32 %v8727, %v8824
        %v8834 = vadd.f32 %v8732, %v8829
        %v8835 = vld [vmem:[#allocation5 + $0x6] sm:$0xff]
        %v8836 = vld [vmem:[#allocation5 + $0xe] sm:$0xff]
        %v8837 = vld [vmem:[#allocation5 + $0x16] sm:$0x3f]
        %s8838 = scalar_lea.vmem [#allocation13], 96
        %v8839 = vld [vmem:[%s8838] sm:$0xff]
        %v8840 = vld [vmem:[%s8838 + $0x8] sm:$0xff]
        %v8841 = vld [vmem:[%s8838 + $0x10] sm:$0xff]
        %v8842 = vld [vmem:[%s8838 + $0x18] sm:$0xff]
        %v8844 = vsel %vm3455, %v8835, 0
        %v8847 = vsel %vm3455, %v8836, 0
        %v8850 = vsel %vm3455, %v8837, 0
        %8852 = vmatprep.subr.mxu0 0.0
        %8853 = vmatpush1.msra.mxu0 0.0
        %8854 = vmatprep.subr.mxu0 0.0
        %8855 = vmatpush1.msra.mxu0 0.0
        %8856 = vmatprep.subr.mxu0 0.0
        %8857 = vmatpush1.msra.mxu0 0.0
        %8858 = vmatprep.subr.mxu0 0.0
        %8859 = vmatpush1.msra.mxu0 0.0
        %8860 = vmatprep.subr.mxu0 0.0
        %8861 = vmatpush1.msra.mxu0 0.0
        %8862 = vmatprep.subr.mxu0 0.0
        %8863 = vmatpush1.msra.mxu0 0.0
        %8864 = vmatprep.subr.mxu0 0.0
        %8865 = vmatpush1.msra.mxu0 0.0
        %8866 = vmatprep.subr.mxu0 0.0
        %8867 = vmatpush1.msra.mxu0 0.0
        %8868 = vmatprep.subr.mxu0 0.0
        %8869 = vmatpush1.msra.mxu0 0.0
        %8870 = vmatprep.subr.mxu0 0.0
        %8871 = vmatpush1.msra.mxu0 0.0
        %8872 = vmatprep.subr.mxu0 0.0
        %8873 = vmatpush1.msra.mxu0 0.0
        %8874 = vmatprep.subr.mxu0 0.0
        %8875 = vmatpush1.msra.mxu0 0.0
        %8876 = vmatprep.subr.mxu0 0.0
        %8877 = vmatpush1.msra.mxu0 %v8842
        %8878 = vmatprep.subr.mxu0 0.0
        %8879 = vmatpush1.msra.mxu0 %v8841
        %8880 = vmatprep.subr.mxu0 0.0
        %8881 = vmatpush1.msra.mxu0 %v8840
        %8882 = vmatprep.subr.mxu0 0.0
        %8883 = vmatpush1.msra.mxu0 %v8839
        %8884 = vmatprep.subr.mxu0 0.0
        %8885 = vmatpush2.msra.mxu0 0.0
        %8886 = vmatprep.subr.mxu0 0.0
        %8887 = vmatpush2.msra.mxu0 0.0
        %8888 = vmatprep.subr.mxu0 0.0
        %8889 = vmatpush2.msra.mxu0 0.0
        %8890 = vmatprep.subr.mxu0 0.0
        %8891 = vmatpush2.msra.mxu0 0.0
        %8892 = vmatprep.subr.mxu0 0.0
        %8893 = vmatpush2.msra.mxu0 0.0
        %8894 = vmatprep.subr.mxu0 0.0
        %8895 = vmatpush2.msra.mxu0 0.0
        %8896 = vmatprep.subr.mxu0 0.0
        %8897 = vmatpush2.msra.mxu0 0.0
        %8898 = vmatprep.subr.mxu0 0.0
        %8899 = vmatpush2.msra.mxu0 0.0
        %8900 = vmatprep.subr.mxu0 0.0
        %8901 = vmatpush2.msra.mxu0 0.0
        %8902 = vmatprep.subr.mxu0 0.0
        %8903 = vmatpush2.msra.mxu0 0.0
        %8904 = vmatprep.subr.mxu0 0.0
        %8905 = vmatpush2.msra.mxu0 0.0
        %8906 = vmatprep.subr.mxu0 0.0
        %8907 = vmatpush2.msra.mxu0 0.0
        %8908 = vmatprep.subr.mxu0 0.0
        %8909 = vmatpush2.msra.mxu0 0.0
        %8910 = vmatprep.subr.mxu0 0.0
        %8911 = vmatpush2.msra.mxu0 0.0
        %8912 = vmatprep.subr.mxu0 0.0
        %8913 = vmatpush2.msra.mxu0 0.0
        %8914 = vmatprep.subr.mxu0 0.0
        %8915 = vmatpush2.msra.mxu0 0.0
        %8916 = vmatprep.mubr.f32.mxu0 0.0
        %8917 = vmatmul.mubr.f32.gmra.mxu0 %v8844
        %v8918 = vpop.f32.mrf.mxu0
        %v8919 = vadd.f32 0.0, %v8918
        %v8920 = vpop.f32.mrf.mxu0
        %8921 = vmatprep.mubr.f32.mxu0 0.0
        %8922 = vmatmul.mubr.f32.gmra.mxu0 %v8847
        %v8923 = vpop.f32.mrf.mxu0
        %v8924 = vadd.f32 0.0, %v8923
        %v8925 = vpop.f32.mrf.mxu0
        %8926 = vmatprep.mubr.f32.mxu0 0.0
        %8927 = vmatmul.mubr.f32.gmra.mxu0 %v8850
        %v8928 = vpop.f32.mrf.mxu0
        %v8929 = vadd.f32 0.0, %v8928
        %v8930 = vpop.f32.mrf.mxu0
        %8931 = vdwg.mxu0
        %v8932 = vadd.f32 %v8832, %v8919
        %v8933 = vadd.f32 %v8833, %v8924
        %v8934 = vadd.f32 %v8834, %v8929
        %v8935 = vld [vmem:[#allocation5 + $0x7] sm:$0xff]
        %v8936 = vld [vmem:[#allocation5 + $0xf] sm:$0xff]
        %v8937 = vld [vmem:[#allocation5 + $0x17] sm:$0x3f]
        %s8938 = scalar_lea.vmem [#allocation13], 128
        %v8939 = vld [vmem:[%s8938] sm:$0xff]
        %v8940 = vld [vmem:[%s8938 + $0x8] sm:$0xff]
        %v8941 = vld [vmem:[%s8938 + $0x10] sm:$0xff]
        %v8942 = vld [vmem:[%s8938 + $0x18] sm:$0xff]
        %v8944 = vsel %vm3455, %v8935, 0
        %v8947 = vsel %vm3455, %v8936, 0
        %v8950 = vsel %vm3455, %v8937, 0
        %8952 = vmatprep.subr.mxu0 0.0
        %8953 = vmatpush1.msra.mxu0 0.0
        %8954 = vmatprep.subr.mxu0 0.0
        %8955 = vmatpush1.msra.mxu0 0.0
        %8956 = vmatprep.subr.mxu0 0.0
        %8957 = vmatpush1.msra.mxu0 0.0
        %8958 = vmatprep.subr.mxu0 0.0
        %8959 = vmatpush1.msra.mxu0 0.0
        %8960 = vmatprep.subr.mxu0 0.0
        %8961 = vmatpush1.msra.mxu0 0.0
        %8962 = vmatprep.subr.mxu0 0.0
        %8963 = vmatpush1.msra.mxu0 0.0
        %8964 = vmatprep.subr.mxu0 0.0
        %8965 = vmatpush1.msra.mxu0 0.0
        %8966 = vmatprep.subr.mxu0 0.0
        %8967 = vmatpush1.msra.mxu0 0.0
        %8968 = vmatprep.subr.mxu0 0.0
        %8969 = vmatpush1.msra.mxu0 0.0
        %8970 = vmatprep.subr.mxu0 0.0
        %8971 = vmatpush1.msra.mxu0 0.0
        %8972 = vmatprep.subr.mxu0 0.0
        %8973 = vmatpush1.msra.mxu0 0.0
        %8974 = vmatprep.subr.mxu0 0.0
        %8975 = vmatpush1.msra.mxu0 0.0
        %8976 = vmatprep.subr.mxu0 0.0
        %8977 = vmatpush1.msra.mxu0 %v8942
        %8978 = vmatprep.subr.mxu0 0.0
        %8979 = vmatpush1.msra.mxu0 %v8941
        %8980 = vmatprep.subr.mxu0 0.0
        %8981 = vmatpush1.msra.mxu0 %v8940
        %8982 = vmatprep.subr.mxu0 0.0
        %8983 = vmatpush1.msra.mxu0 %v8939
        %8984 = vmatprep.subr.mxu0 0.0
        %8985 = vmatpush2.msra.mxu0 0.0
        %8986 = vmatprep.subr.mxu0 0.0
        %8987 = vmatpush2.msra.mxu0 0.0
        %8988 = vmatprep.subr.mxu0 0.0
        %8989 = vmatpush2.msra.mxu0 0.0
        %8990 = vmatprep.subr.mxu0 0.0
        %8991 = vmatpush2.msra.mxu0 0.0
        %8992 = vmatprep.subr.mxu0 0.0
        %8993 = vmatpush2.msra.mxu0 0.0
        %8994 = vmatprep.subr.mxu0 0.0
        %8995 = vmatpush2.msra.mxu0 0.0
        %8996 = vmatprep.subr.mxu0 0.0
        %8997 = vmatpush2.msra.mxu0 0.0
        %8998 = vmatprep.subr.mxu0 0.0
        %8999 = vmatpush2.msra.mxu0 0.0
        %9000 = vmatprep.subr.mxu0 0.0
        %9001 = vmatpush2.msra.mxu0 0.0
        %9002 = vmatprep.subr.mxu0 0.0
        %9003 = vmatpush2.msra.mxu0 0.0
        %9004 = vmatprep.subr.mxu0 0.0
        %9005 = vmatpush2.msra.mxu0 0.0
        %9006 = vmatprep.subr.mxu0 0.0
        %9007 = vmatpush2.msra.mxu0 0.0
        %9008 = vmatprep.subr.mxu0 0.0
        %9009 = vmatpush2.msra.mxu0 0.0
        %9010 = vmatprep.subr.mxu0 0.0
        %9011 = vmatpush2.msra.mxu0 0.0
        %9012 = vmatprep.subr.mxu0 0.0
        %9013 = vmatpush2.msra.mxu0 0.0
        %9014 = vmatprep.subr.mxu0 0.0
        %9015 = vmatpush2.msra.mxu0 0.0
        %9016 = vmatprep.mubr.f32.mxu0 0.0
        %9017 = vmatmul.mubr.f32.gmra.mxu0 %v8944
        %v9018 = vpop.f32.mrf.mxu0
        %v9019 = vadd.f32 0.0, %v9018
        %v9020 = vpop.f32.mrf.mxu0
        %9021 = vmatprep.mubr.f32.mxu0 0.0
        %9022 = vmatmul.mubr.f32.gmra.mxu0 %v8947
        %v9023 = vpop.f32.mrf.mxu0
        %v9024 = vadd.f32 0.0, %v9023
        %v9025 = vpop.f32.mrf.mxu0
        %9026 = vmatprep.mubr.f32.mxu0 0.0
        %9027 = vmatmul.mubr.f32.gmra.mxu0 %v8950
        %v9028 = vpop.f32.mrf.mxu0
        %v9029 = vadd.f32 0.0, %v9028
        %v9030 = vpop.f32.mrf.mxu0
        %9031 = vdwg.mxu0
        %v9032 = vadd.f32 %v8932, %v9019
        %v9033 = vadd.f32 %v8933, %v9024
        %v9034 = vadd.f32 %v8934, %v9029
        %v9035 = vld [vmem:[#allocation5 + $0x8] sm:$0xff]
        %v9036 = vld [vmem:[#allocation5 + $0x10] sm:$0xff]
        %v9037 = vld [vmem:[#allocation5 + $0x18] sm:$0x3f]
        %s9038 = scalar_lea.vmem [#allocation13], 160
        %v9039 = vld [vmem:[%s9038] sm:$0xff]
        %v9040 = vld [vmem:[%s9038 + $0x8] sm:$0xff]
        %v9041 = vld [vmem:[%s9038 + $0x10] sm:$0xff]
        %v9042 = vld [vmem:[%s9038 + $0x18] sm:$0xff]
        %v9044 = vsel %vm3455, %v9035, 0
        %v9047 = vsel %vm3455, %v9036, 0
        %v9050 = vsel %vm3455, %v9037, 0
        %9052 = vmatprep.subr.mxu0 0.0
        %9053 = vmatpush1.msra.mxu0 0.0
        %9054 = vmatprep.subr.mxu0 0.0
        %9055 = vmatpush1.msra.mxu0 0.0
        %9056 = vmatprep.subr.mxu0 0.0
        %9057 = vmatpush1.msra.mxu0 0.0
        %9058 = vmatprep.subr.mxu0 0.0
        %9059 = vmatpush1.msra.mxu0 0.0
        %9060 = vmatprep.subr.mxu0 0.0
        %9061 = vmatpush1.msra.mxu0 0.0
        %9062 = vmatprep.subr.mxu0 0.0
        %9063 = vmatpush1.msra.mxu0 0.0
        %9064 = vmatprep.subr.mxu0 0.0
        %9065 = vmatpush1.msra.mxu0 0.0
        %9066 = vmatprep.subr.mxu0 0.0
        %9067 = vmatpush1.msra.mxu0 0.0
        %9068 = vmatprep.subr.mxu0 0.0
        %9069 = vmatpush1.msra.mxu0 0.0
        %9070 = vmatprep.subr.mxu0 0.0
        %9071 = vmatpush1.msra.mxu0 0.0
        %9072 = vmatprep.subr.mxu0 0.0
        %9073 = vmatpush1.msra.mxu0 0.0
        %9074 = vmatprep.subr.mxu0 0.0
        %9075 = vmatpush1.msra.mxu0 0.0
        %9076 = vmatprep.subr.mxu0 0.0
        %9077 = vmatpush1.msra.mxu0 %v9042
        %9078 = vmatprep.subr.mxu0 0.0
        %9079 = vmatpush1.msra.mxu0 %v9041
        %9080 = vmatprep.subr.mxu0 0.0
        %9081 = vmatpush1.msra.mxu0 %v9040
        %9082 = vmatprep.subr.mxu0 0.0
        %9083 = vmatpush1.msra.mxu0 %v9039
        %9084 = vmatprep.subr.mxu0 0.0
        %9085 = vmatpush2.msra.mxu0 0.0
        %9086 = vmatprep.subr.mxu0 0.0
        %9087 = vmatpush2.msra.mxu0 0.0
        %9088 = vmatprep.subr.mxu0 0.0
        %9089 = vmatpush2.msra.mxu0 0.0
        %9090 = vmatprep.subr.mxu0 0.0
        %9091 = vmatpush2.msra.mxu0 0.0
        %9092 = vmatprep.subr.mxu0 0.0
        %9093 = vmatpush2.msra.mxu0 0.0
        %9094 = vmatprep.subr.mxu0 0.0
        %9095 = vmatpush2.msra.mxu0 0.0
        %9096 = vmatprep.subr.mxu0 0.0
        %9097 = vmatpush2.msra.mxu0 0.0
        %9098 = vmatprep.subr.mxu0 0.0
        %9099 = vmatpush2.msra.mxu0 0.0
        %9100 = vmatprep.subr.mxu0 0.0
        %9101 = vmatpush2.msra.mxu0 0.0
        %9102 = vmatprep.subr.mxu0 0.0
        %9103 = vmatpush2.msra.mxu0 0.0
        %9104 = vmatprep.subr.mxu0 0.0
        %9105 = vmatpush2.msra.mxu0 0.0
        %9106 = vmatprep.subr.mxu0 0.0
        %9107 = vmatpush2.msra.mxu0 0.0
        %9108 = vmatprep.subr.mxu0 0.0
        %9109 = vmatpush2.msra.mxu0 0.0
        %9110 = vmatprep.subr.mxu0 0.0
        %9111 = vmatpush2.msra.mxu0 0.0
        %9112 = vmatprep.subr.mxu0 0.0
        %9113 = vmatpush2.msra.mxu0 0.0
        %9114 = vmatprep.subr.mxu0 0.0
        %9115 = vmatpush2.msra.mxu0 0.0
        %9116 = vmatprep.mubr.f32.mxu0 0.0
        %9117 = vmatmul.mubr.f32.gmra.mxu0 %v9044
        %v9118 = vpop.f32.mrf.mxu0
        %v9119 = vadd.f32 0.0, %v9118
        %v9120 = vpop.f32.mrf.mxu0
        %9121 = vmatprep.mubr.f32.mxu0 0.0
        %9122 = vmatmul.mubr.f32.gmra.mxu0 %v9047
        %v9123 = vpop.f32.mrf.mxu0
        %v9124 = vadd.f32 0.0, %v9123
        %v9125 = vpop.f32.mrf.mxu0
        %9126 = vmatprep.mubr.f32.mxu0 0.0
        %9127 = vmatmul.mubr.f32.gmra.mxu0 %v9050
        %v9128 = vpop.f32.mrf.mxu0
        %v9129 = vadd.f32 0.0, %v9128
        %v9130 = vpop.f32.mrf.mxu0
        %9131 = vdwg.mxu0
        %v9132 = vadd.f32 %v9032, %v9119
        %v9133 = vadd.f32 %v9033, %v9124
        %v9134 = vadd.f32 %v9034, %v9129
        %v9135 = vld [vmem:[#allocation5 + $0xc] sm:$0xff]
        %v9136 = vld [vmem:[#allocation5 + $0x14] sm:$0xff]
        %v9137 = vld [vmem:[#allocation5 + $0x1c] sm:$0x3f]
        %s9138 = scalar_lea.vmem [#allocation13], 192
        %v9139 = vld [vmem:[%s9138] sm:$0xff]
        %v9140 = vld [vmem:[%s9138 + $0x8] sm:$0xff]
        %v9141 = vld [vmem:[%s9138 + $0x10] sm:$0xff]
        %v9142 = vld [vmem:[%s9138 + $0x18] sm:$0xff]
        %v9144 = vsel %vm3455, %v9135, 0
        %v9147 = vsel %vm3455, %v9136, 0
        %v9150 = vsel %vm3455, %v9137, 0
        %9152 = vmatprep.subr.mxu0 0.0
        %9153 = vmatpush1.msra.mxu0 0.0
        %9154 = vmatprep.subr.mxu0 0.0
        %9155 = vmatpush1.msra.mxu0 0.0
        %9156 = vmatprep.subr.mxu0 0.0
        %9157 = vmatpush1.msra.mxu0 0.0
        %9158 = vmatprep.subr.mxu0 0.0
        %9159 = vmatpush1.msra.mxu0 0.0
        %9160 = vmatprep.subr.mxu0 0.0
        %9161 = vmatpush1.msra.mxu0 0.0
        %9162 = vmatprep.subr.mxu0 0.0
        %9163 = vmatpush1.msra.mxu0 0.0
        %9164 = vmatprep.subr.mxu0 0.0
        %9165 = vmatpush1.msra.mxu0 0.0
        %9166 = vmatprep.subr.mxu0 0.0
        %9167 = vmatpush1.msra.mxu0 0.0
        %9168 = vmatprep.subr.mxu0 0.0
        %9169 = vmatpush1.msra.mxu0 0.0
        %9170 = vmatprep.subr.mxu0 0.0
        %9171 = vmatpush1.msra.mxu0 0.0
        %9172 = vmatprep.subr.mxu0 0.0
        %9173 = vmatpush1.msra.mxu0 0.0
        %9174 = vmatprep.subr.mxu0 0.0
        %9175 = vmatpush1.msra.mxu0 0.0
        %9176 = vmatprep.subr.mxu0 0.0
        %9177 = vmatpush1.msra.mxu0 %v9142
        %9178 = vmatprep.subr.mxu0 0.0
        %9179 = vmatpush1.msra.mxu0 %v9141
        %9180 = vmatprep.subr.mxu0 0.0
        %9181 = vmatpush1.msra.mxu0 %v9140
        %9182 = vmatprep.subr.mxu0 0.0
        %9183 = vmatpush1.msra.mxu0 %v9139
        %9184 = vmatprep.subr.mxu0 0.0
        %9185 = vmatpush2.msra.mxu0 0.0
        %9186 = vmatprep.subr.mxu0 0.0
        %9187 = vmatpush2.msra.mxu0 0.0
        %9188 = vmatprep.subr.mxu0 0.0
        %9189 = vmatpush2.msra.mxu0 0.0
        %9190 = vmatprep.subr.mxu0 0.0
        %9191 = vmatpush2.msra.mxu0 0.0
        %9192 = vmatprep.subr.mxu0 0.0
        %9193 = vmatpush2.msra.mxu0 0.0
        %9194 = vmatprep.subr.mxu0 0.0
        %9195 = vmatpush2.msra.mxu0 0.0
        %9196 = vmatprep.subr.mxu0 0.0
        %9197 = vmatpush2.msra.mxu0 0.0
        %9198 = vmatprep.subr.mxu0 0.0
        %9199 = vmatpush2.msra.mxu0 0.0
        %9200 = vmatprep.subr.mxu0 0.0
        %9201 = vmatpush2.msra.mxu0 0.0
        %9202 = vmatprep.subr.mxu0 0.0
        %9203 = vmatpush2.msra.mxu0 0.0
        %9204 = vmatprep.subr.mxu0 0.0
        %9205 = vmatpush2.msra.mxu0 0.0
        %9206 = vmatprep.subr.mxu0 0.0
        %9207 = vmatpush2.msra.mxu0 0.0
        %9208 = vmatprep.subr.mxu0 0.0
        %9209 = vmatpush2.msra.mxu0 0.0
        %9210 = vmatprep.subr.mxu0 0.0
        %9211 = vmatpush2.msra.mxu0 0.0
        %9212 = vmatprep.subr.mxu0 0.0
        %9213 = vmatpush2.msra.mxu0 0.0
        %9214 = vmatprep.subr.mxu0 0.0
        %9215 = vmatpush2.msra.mxu0 0.0
        %9216 = vmatprep.mubr.f32.mxu0 0.0
        %9217 = vmatmul.mubr.f32.gmra.mxu0 %v9144
        %v9218 = vpop.f32.mrf.mxu0
        %v9219 = vadd.f32 0.0, %v9218
        %v9220 = vpop.f32.mrf.mxu0
        %9221 = vmatprep.mubr.f32.mxu0 0.0
        %9222 = vmatmul.mubr.f32.gmra.mxu0 %v9147
        %v9223 = vpop.f32.mrf.mxu0
        %v9224 = vadd.f32 0.0, %v9223
        %v9225 = vpop.f32.mrf.mxu0
        %9226 = vmatprep.mubr.f32.mxu0 0.0
        %9227 = vmatmul.mubr.f32.gmra.mxu0 %v9150
        %v9228 = vpop.f32.mrf.mxu0
        %v9229 = vadd.f32 0.0, %v9228
        %v9230 = vpop.f32.mrf.mxu0
        %9231 = vdwg.mxu0
        %v9232 = vadd.f32 %v9132, %v9219
        %v9233 = vadd.f32 %v9133, %v9224
        %v9234 = vadd.f32 %v9134, %v9229
        %v9235 = vld [vmem:[#allocation5 + $0xd] sm:$0xff]
        %v9236 = vld [vmem:[#allocation5 + $0x15] sm:$0xff]
        %v9237 = vld [vmem:[#allocation5 + $0x1d] sm:$0x3f]
        %s9238 = scalar_lea.vmem [#allocation13], 224
        %v9239 = vld [vmem:[%s9238] sm:$0xff]
        %v9240 = vld [vmem:[%s9238 + $0x8] sm:$0xff]
        %v9241 = vld [vmem:[%s9238 + $0x10] sm:$0xff]
        %v9242 = vld [vmem:[%s9238 + $0x18] sm:$0xff]
        %v9244 = vsel %vm3455, %v9235, 0
        %v9247 = vsel %vm3455, %v9236, 0
        %v9250 = vsel %vm3455, %v9237, 0
        %9252 = vmatprep.subr.mxu0 0.0
        %9253 = vmatpush1.msra.mxu0 0.0
        %9254 = vmatprep.subr.mxu0 0.0
        %9255 = vmatpush1.msra.mxu0 0.0
        %9256 = vmatprep.subr.mxu0 0.0
        %9257 = vmatpush1.msra.mxu0 0.0
        %9258 = vmatprep.subr.mxu0 0.0
        %9259 = vmatpush1.msra.mxu0 0.0
        %9260 = vmatprep.subr.mxu0 0.0
        %9261 = vmatpush1.msra.mxu0 0.0
        %9262 = vmatprep.subr.mxu0 0.0
        %9263 = vmatpush1.msra.mxu0 0.0
        %9264 = vmatprep.subr.mxu0 0.0
        %9265 = vmatpush1.msra.mxu0 0.0
        %9266 = vmatprep.subr.mxu0 0.0
        %9267 = vmatpush1.msra.mxu0 0.0
        %9268 = vmatprep.subr.mxu0 0.0
        %9269 = vmatpush1.msra.mxu0 0.0
        %9270 = vmatprep.subr.mxu0 0.0
        %9271 = vmatpush1.msra.mxu0 0.0
        %9272 = vmatprep.subr.mxu0 0.0
        %9273 = vmatpush1.msra.mxu0 0.0
        %9274 = vmatprep.subr.mxu0 0.0
        %9275 = vmatpush1.msra.mxu0 0.0
        %9276 = vmatprep.subr.mxu0 0.0
        %9277 = vmatpush1.msra.mxu0 %v9242
        %9278 = vmatprep.subr.mxu0 0.0
        %9279 = vmatpush1.msra.mxu0 %v9241
        %9280 = vmatprep.subr.mxu0 0.0
        %9281 = vmatpush1.msra.mxu0 %v9240
        %9282 = vmatprep.subr.mxu0 0.0
        %9283 = vmatpush1.msra.mxu0 %v9239
        %9284 = vmatprep.subr.mxu0 0.0
        %9285 = vmatpush2.msra.mxu0 0.0
        %9286 = vmatprep.subr.mxu0 0.0
        %9287 = vmatpush2.msra.mxu0 0.0
        %9288 = vmatprep.subr.mxu0 0.0
        %9289 = vmatpush2.msra.mxu0 0.0
        %9290 = vmatprep.subr.mxu0 0.0
        %9291 = vmatpush2.msra.mxu0 0.0
        %9292 = vmatprep.subr.mxu0 0.0
        %9293 = vmatpush2.msra.mxu0 0.0
        %9294 = vmatprep.subr.mxu0 0.0
        %9295 = vmatpush2.msra.mxu0 0.0
        %9296 = vmatprep.subr.mxu0 0.0
        %9297 = vmatpush2.msra.mxu0 0.0
        %9298 = vmatprep.subr.mxu0 0.0
        %9299 = vmatpush2.msra.mxu0 0.0
        %9300 = vmatprep.subr.mxu0 0.0
        %9301 = vmatpush2.msra.mxu0 0.0
        %9302 = vmatprep.subr.mxu0 0.0
        %9303 = vmatpush2.msra.mxu0 0.0
        %9304 = vmatprep.subr.mxu0 0.0
        %9305 = vmatpush2.msra.mxu0 0.0
        %9306 = vmatprep.subr.mxu0 0.0
        %9307 = vmatpush2.msra.mxu0 0.0
        %9308 = vmatprep.subr.mxu0 0.0
        %9309 = vmatpush2.msra.mxu0 0.0
        %9310 = vmatprep.subr.mxu0 0.0
        %9311 = vmatpush2.msra.mxu0 0.0
        %9312 = vmatprep.subr.mxu0 0.0
        %9313 = vmatpush2.msra.mxu0 0.0
        %9314 = vmatprep.subr.mxu0 0.0
        %9315 = vmatpush2.msra.mxu0 0.0
        %9316 = vmatprep.mubr.f32.mxu0 0.0
        %9317 = vmatmul.mubr.f32.gmra.mxu0 %v9244
        %v9318 = vpop.f32.mrf.mxu0
        %v9319 = vadd.f32 0.0, %v9318
        %v9320 = vpop.f32.mrf.mxu0
        %9321 = vmatprep.mubr.f32.mxu0 0.0
        %9322 = vmatmul.mubr.f32.gmra.mxu0 %v9247
        %v9323 = vpop.f32.mrf.mxu0
        %v9324 = vadd.f32 0.0, %v9323
        %v9325 = vpop.f32.mrf.mxu0
        %9326 = vmatprep.mubr.f32.mxu0 0.0
        %9327 = vmatmul.mubr.f32.gmra.mxu0 %v9250
        %v9328 = vpop.f32.mrf.mxu0
        %v9329 = vadd.f32 0.0, %v9328
        %v9330 = vpop.f32.mrf.mxu0
        %9331 = vdwg.mxu0
        %v9332 = vadd.f32 %v9232, %v9319
        %v9333 = vadd.f32 %v9233, %v9324
        %v9334 = vadd.f32 %v9234, %v9329
        %v9335 = vld [vmem:[#allocation5 + $0xe] sm:$0xff]
        %v9336 = vld [vmem:[#allocation5 + $0x16] sm:$0xff]
        %v9337 = vld [vmem:[#allocation5 + $0x1e] sm:$0x3f]
        %s9338 = scalar_lea.vmem [#allocation13], 256
        %v9339 = vld [vmem:[%s9338] sm:$0xff]
        %v9340 = vld [vmem:[%s9338 + $0x8] sm:$0xff]
        %v9341 = vld [vmem:[%s9338 + $0x10] sm:$0xff]
        %v9342 = vld [vmem:[%s9338 + $0x18] sm:$0xff]
        %v9344 = vsel %vm3455, %v9335, 0
        %v9347 = vsel %vm3455, %v9336, 0
        %v9350 = vsel %vm3455, %v9337, 0
        %9352 = vmatprep.subr.mxu0 0.0
        %9353 = vmatpush1.msra.mxu0 0.0
        %9354 = vmatprep.subr.mxu0 0.0
        %9355 = vmatpush1.msra.mxu0 0.0
        %9356 = vmatprep.subr.mxu0 0.0
        %9357 = vmatpush1.msra.mxu0 0.0
        %9358 = vmatprep.subr.mxu0 0.0
        %9359 = vmatpush1.msra.mxu0 0.0
        %9360 = vmatprep.subr.mxu0 0.0
        %9361 = vmatpush1.msra.mxu0 0.0
        %9362 = vmatprep.subr.mxu0 0.0
        %9363 = vmatpush1.msra.mxu0 0.0
        %9364 = vmatprep.subr.mxu0 0.0
        %9365 = vmatpush1.msra.mxu0 0.0
        %9366 = vmatprep.subr.mxu0 0.0
        %9367 = vmatpush1.msra.mxu0 0.0
        %9368 = vmatprep.subr.mxu0 0.0
        %9369 = vmatpush1.msra.mxu0 0.0
        %9370 = vmatprep.subr.mxu0 0.0
        %9371 = vmatpush1.msra.mxu0 0.0
        %9372 = vmatprep.subr.mxu0 0.0
        %9373 = vmatpush1.msra.mxu0 0.0
        %9374 = vmatprep.subr.mxu0 0.0
        %9375 = vmatpush1.msra.mxu0 0.0
        %9376 = vmatprep.subr.mxu0 0.0
        %9377 = vmatpush1.msra.mxu0 %v9342
        %9378 = vmatprep.subr.mxu0 0.0
        %9379 = vmatpush1.msra.mxu0 %v9341
        %9380 = vmatprep.subr.mxu0 0.0
        %9381 = vmatpush1.msra.mxu0 %v9340
        %9382 = vmatprep.subr.mxu0 0.0
        %9383 = vmatpush1.msra.mxu0 %v9339
        %9384 = vmatprep.subr.mxu0 0.0
        %9385 = vmatpush2.msra.mxu0 0.0
        %9386 = vmatprep.subr.mxu0 0.0
        %9387 = vmatpush2.msra.mxu0 0.0
        %9388 = vmatprep.subr.mxu0 0.0
        %9389 = vmatpush2.msra.mxu0 0.0
        %9390 = vmatprep.subr.mxu0 0.0
        %9391 = vmatpush2.msra.mxu0 0.0
        %9392 = vmatprep.subr.mxu0 0.0
        %9393 = vmatpush2.msra.mxu0 0.0
        %9394 = vmatprep.subr.mxu0 0.0
        %9395 = vmatpush2.msra.mxu0 0.0
        %9396 = vmatprep.subr.mxu0 0.0
        %9397 = vmatpush2.msra.mxu0 0.0
        %9398 = vmatprep.subr.mxu0 0.0
        %9399 = vmatpush2.msra.mxu0 0.0
        %9400 = vmatprep.subr.mxu0 0.0
        %9401 = vmatpush2.msra.mxu0 0.0
        %9402 = vmatprep.subr.mxu0 0.0
        %9403 = vmatpush2.msra.mxu0 0.0
        %9404 = vmatprep.subr.mxu0 0.0
        %9405 = vmatpush2.msra.mxu0 0.0
        %9406 = vmatprep.subr.mxu0 0.0
        %9407 = vmatpush2.msra.mxu0 0.0
        %9408 = vmatprep.subr.mxu0 0.0
        %9409 = vmatpush2.msra.mxu0 0.0
        %9410 = vmatprep.subr.mxu0 0.0
        %9411 = vmatpush2.msra.mxu0 0.0
        %9412 = vmatprep.subr.mxu0 0.0
        %9413 = vmatpush2.msra.mxu0 0.0
        %9414 = vmatprep.subr.mxu0 0.0
        %9415 = vmatpush2.msra.mxu0 0.0
        %9416 = vmatprep.mubr.f32.mxu0 0.0
        %9417 = vmatmul.mubr.f32.gmra.mxu0 %v9344
        %v9418 = vpop.f32.mrf.mxu0
        %v9419 = vadd.f32 0.0, %v9418
        %v9420 = vpop.f32.mrf.mxu0
        %9421 = vmatprep.mubr.f32.mxu0 0.0
        %9422 = vmatmul.mubr.f32.gmra.mxu0 %v9347
        %v9423 = vpop.f32.mrf.mxu0
        %v9424 = vadd.f32 0.0, %v9423
        %v9425 = vpop.f32.mrf.mxu0
        %9426 = vmatprep.mubr.f32.mxu0 0.0
        %9427 = vmatmul.mubr.f32.gmra.mxu0 %v9350
        %v9428 = vpop.f32.mrf.mxu0
        %v9429 = vadd.f32 0.0, %v9428
        %v9430 = vpop.f32.mrf.mxu0
        %9431 = vdwg.mxu0
        %v9432 = vadd.f32 %v9332, %v9419
        %v9433 = vadd.f32 %v9333, %v9424
        %v9434 = vadd.f32 %v9334, %v9429
        %v9435 = vld [vmem:[%s12] sm:$0x1]
        %v9437 = vlaneseq
        %v9438 = vshrl.u32 %v9437, 7
        %v9439 = vsub.s32 0, %v9438
        %v9440 = vrot.slane %v9435, %v9439
        %v9442 = vadd.f32 %v9432, %v9440
        %v9443 = vadd.f32 %v9433, %v9440
        %v9444 = vadd.f32 %v9434, %v9440
        %s9445 = sld [smem:[#allocation9]]
        %vm9446 = vcmp.ge.f32.partialorder %v9442, 0.0
        %vm9447 = vcmp.ge.f32.partialorder %v9443, 0.0
        %vm9448 = vcmp.ge.f32.partialorder %v9444, 0.0
        %v9449 = vstv %s9445
        %v9450 = vmul.f32 %v9449, %v9442
        %v9451 = vmul.f32 %v9449, %v9443
        %v9452 = vmul.f32 %v9449, %v9444
        %v9453 = vsel %vm9446, %v9442, %v9450
        %v9454 = vsel %vm9447, %v9443, %v9451
        %v9455 = vsel %vm9448, %v9444, %v9452
        %9456 = vst.msk [vmem:[#allocation6] sm:$0xff] %vm3455, 0.0
        %9457 = vst.msk [vmem:[#allocation6 + $0x8] sm:$0xff] %vm3455, 0.0
        %9458 = vst.msk [vmem:[#allocation6 + $0x10] sm:$0xff] %vm3455, 0.0
        %9459 = vst.msk [vmem:[#allocation6 + $0x18] sm:$0xff] %vm3455, 0.0
        %9460 = vst.msk [vmem:[#allocation6 + $0x20] sm:$0xf] %vm3496, 0.0
        %9461 = vst.msk [vmem:[#allocation6 + $0x7] sm:$0xf] %vm3496, %v9453
        %9462 = vst.msk [vmem:[#allocation6 + $0x7] sm:$0xc0] %vm3509, %v9453
        %9463 = vst.msk [vmem:[#allocation6 + $0xf] sm:$0x3] %vm3503, %v9454
        %9464 = vst.msk [vmem:[#allocation6 + $0xf] sm:$0xf0] %vm3505, %v9454
        %9465 = vst.msk [vmem:[#allocation6 + $0x17] sm:$0x3c] %vm8525, %v9455
        %v9466 = vld [vmem:[#allocation6] ss:$2 sm:$0xff]
        %v9467 = vld [vmem:[#allocation15] sm:$0xff]
        %v9468 = vld [vmem:[#allocation15 + $0x8] sm:$0xff]
        %v9469 = vld [vmem:[#allocation15 + $0x10] sm:$0xff]
        %v9470 = vld [vmem:[#allocation15 + $0x18] sm:$0xff]
        %s9471 = scalar_lea.vmem [#allocation6], 1
        %v9472 = vld [vmem:[%s9471] ss:$2 sm:$0xff]
        %s9473 = scalar_lea.vmem [#allocation15], 32
        %v9474 = vld [vmem:[%s9473] sm:$0xff]
        %v9475 = vld [vmem:[%s9473 + $0x8] sm:$0xff]
        %v9476 = vld [vmem:[%s9473 + $0x10] sm:$0xff]
        %v9477 = vld [vmem:[%s9473 + $0x18] sm:$0xff]
        %v9479 = vsel %vm3455, %v9472, 0
        %9481 = vmatprep.subr.mxu0 0.0
        %9482 = vmatpush1.msra.mxu0 0.0
        %9483 = vmatprep.subr.mxu0 0.0
        %9484 = vmatpush1.msra.mxu0 0.0
        %9485 = vmatprep.subr.mxu0 0.0
        %9486 = vmatpush1.msra.mxu0 0.0
        %9487 = vmatprep.subr.mxu0 0.0
        %9488 = vmatpush1.msra.mxu0 0.0
        %9489 = vmatprep.subr.mxu0 0.0
        %9490 = vmatpush1.msra.mxu0 0.0
        %9491 = vmatprep.subr.mxu0 0.0
        %9492 = vmatpush1.msra.mxu0 0.0
        %9493 = vmatprep.subr.mxu0 0.0
        %9494 = vmatpush1.msra.mxu0 0.0
        %9495 = vmatprep.subr.mxu0 0.0
        %9496 = vmatpush1.msra.mxu0 0.0
        %9497 = vmatprep.subr.mxu0 0.0
        %9498 = vmatpush1.msra.mxu0 0.0
        %9499 = vmatprep.subr.mxu0 0.0
        %9500 = vmatpush1.msra.mxu0 0.0
        %9501 = vmatprep.subr.mxu0 0.0
        %9502 = vmatpush1.msra.mxu0 0.0
        %9503 = vmatprep.subr.mxu0 0.0
        %9504 = vmatpush1.msra.mxu0 0.0
        %9505 = vmatprep.subr.mxu0 0.0
        %9506 = vmatpush1.msra.mxu0 %v9477
        %9507 = vmatprep.subr.mxu0 0.0
        %9508 = vmatpush1.msra.mxu0 %v9476
        %9509 = vmatprep.subr.mxu0 0.0
        %9510 = vmatpush1.msra.mxu0 %v9475
        %9511 = vmatprep.subr.mxu0 0.0
        %9512 = vmatpush1.msra.mxu0 %v9474
        %9513 = vmatprep.subr.mxu0 0.0
        %9514 = vmatpush2.msra.mxu0 0.0
        %9515 = vmatprep.subr.mxu0 0.0
        %9516 = vmatpush2.msra.mxu0 0.0
        %9517 = vmatprep.subr.mxu0 0.0
        %9518 = vmatpush2.msra.mxu0 0.0
        %9519 = vmatprep.subr.mxu0 0.0
        %9520 = vmatpush2.msra.mxu0 0.0
        %9521 = vmatprep.subr.mxu0 0.0
        %9522 = vmatpush2.msra.mxu0 0.0
        %9523 = vmatprep.subr.mxu0 0.0
        %9524 = vmatpush2.msra.mxu0 0.0
        %9525 = vmatprep.subr.mxu0 0.0
        %9526 = vmatpush2.msra.mxu0 0.0
        %9527 = vmatprep.subr.mxu0 0.0
        %9528 = vmatpush2.msra.mxu0 0.0
        %9529 = vmatprep.subr.mxu0 0.0
        %9530 = vmatpush2.msra.mxu0 0.0
        %9531 = vmatprep.subr.mxu0 0.0
        %9532 = vmatpush2.msra.mxu0 0.0
        %9533 = vmatprep.subr.mxu0 0.0
        %9534 = vmatpush2.msra.mxu0 0.0
        %9535 = vmatprep.subr.mxu0 0.0
        %9536 = vmatpush2.msra.mxu0 0.0
        %9537 = vmatprep.subr.mxu0 0.0
        %9538 = vmatpush2.msra.mxu0 0.0
        %9539 = vmatprep.subr.mxu0 0.0
        %9540 = vmatpush2.msra.mxu0 0.0
        %9541 = vmatprep.subr.mxu0 0.0
        %9542 = vmatpush2.msra.mxu0 0.0
        %9543 = vmatprep.subr.mxu0 0.0
        %9544 = vmatpush2.msra.mxu0 0.0
        %9545 = vmatprep.mubr.f32.mxu0 0.0
        %9546 = vmatmul.mubr.f32.gmra.mxu0 %v9479
        %v9547 = vpop.f32.mrf.mxu0
        %v9548 = vadd.f32 0.0, %v9547
        %v9549 = vpop.f32.mrf.mxu0
        %9550 = vdwg.mxu0
        %v9552 = vsel %vm3455, %v9466, 0
        %9554 = vmatprep.subr.mxu0 0.0
        %9555 = vmatpush1.msra.mxu0 0.0
        %9556 = vmatprep.subr.mxu0 0.0
        %9557 = vmatpush1.msra.mxu0 0.0
        %9558 = vmatprep.subr.mxu0 0.0
        %9559 = vmatpush1.msra.mxu0 0.0
        %9560 = vmatprep.subr.mxu0 0.0
        %9561 = vmatpush1.msra.mxu0 0.0
        %9562 = vmatprep.subr.mxu0 0.0
        %9563 = vmatpush1.msra.mxu0 0.0
        %9564 = vmatprep.subr.mxu0 0.0
        %9565 = vmatpush1.msra.mxu0 0.0
        %9566 = vmatprep.subr.mxu0 0.0
        %9567 = vmatpush1.msra.mxu0 0.0
        %9568 = vmatprep.subr.mxu0 0.0
        %9569 = vmatpush1.msra.mxu0 0.0
        %9570 = vmatprep.subr.mxu0 0.0
        %9571 = vmatpush1.msra.mxu0 0.0
        %9572 = vmatprep.subr.mxu0 0.0
        %9573 = vmatpush1.msra.mxu0 0.0
        %9574 = vmatprep.subr.mxu0 0.0
        %9575 = vmatpush1.msra.mxu0 0.0
        %9576 = vmatprep.subr.mxu0 0.0
        %9577 = vmatpush1.msra.mxu0 0.0
        %9578 = vmatprep.subr.mxu0 0.0
        %9579 = vmatpush1.msra.mxu0 %v9470
        %9580 = vmatprep.subr.mxu0 0.0
        %9581 = vmatpush1.msra.mxu0 %v9469
        %9582 = vmatprep.subr.mxu0 0.0
        %9583 = vmatpush1.msra.mxu0 %v9468
        %9584 = vmatprep.subr.mxu0 0.0
        %9585 = vmatpush1.msra.mxu0 %v9467
        %9586 = vmatprep.subr.mxu0 0.0
        %9587 = vmatpush2.msra.mxu0 0.0
        %9588 = vmatprep.subr.mxu0 0.0
        %9589 = vmatpush2.msra.mxu0 0.0
        %9590 = vmatprep.subr.mxu0 0.0
        %9591 = vmatpush2.msra.mxu0 0.0
        %9592 = vmatprep.subr.mxu0 0.0
        %9593 = vmatpush2.msra.mxu0 0.0
        %9594 = vmatprep.subr.mxu0 0.0
        %9595 = vmatpush2.msra.mxu0 0.0
        %9596 = vmatprep.subr.mxu0 0.0
        %9597 = vmatpush2.msra.mxu0 0.0
        %9598 = vmatprep.subr.mxu0 0.0
        %9599 = vmatpush2.msra.mxu0 0.0
        %9600 = vmatprep.subr.mxu0 0.0
        %9601 = vmatpush2.msra.mxu0 0.0
        %9602 = vmatprep.subr.mxu0 0.0
        %9603 = vmatpush2.msra.mxu0 0.0
        %9604 = vmatprep.subr.mxu0 0.0
        %9605 = vmatpush2.msra.mxu0 0.0
        %9606 = vmatprep.subr.mxu0 0.0
        %9607 = vmatpush2.msra.mxu0 0.0
        %9608 = vmatprep.subr.mxu0 0.0
        %9609 = vmatpush2.msra.mxu0 0.0
        %9610 = vmatprep.subr.mxu0 0.0
        %9611 = vmatpush2.msra.mxu0 0.0
        %9612 = vmatprep.subr.mxu0 0.0
        %9613 = vmatpush2.msra.mxu0 0.0
        %9614 = vmatprep.subr.mxu0 0.0
        %9615 = vmatpush2.msra.mxu0 0.0
        %9616 = vmatprep.subr.mxu0 0.0
        %9617 = vmatpush2.msra.mxu0 0.0
        %9618 = vmatprep.mubr.f32.mxu0 0.0
        %9619 = vmatmul.mubr.f32.gmra.mxu0 %v9552
        %v9620 = vpop.f32.mrf.mxu0
        %v9621 = vadd.f32 %v9548, %v9620
        %v9622 = vpop.f32.mrf.mxu0
        %9623 = vdwg.mxu0
        %s9624 = scalar_lea.vmem [#allocation6], 2
        %v9625 = vld [vmem:[%s9624] ss:$2 sm:$0xff]
        %s9626 = scalar_lea.vmem [#allocation15], 64
        %v9627 = vld [vmem:[%s9626] sm:$0xff]
        %v9628 = vld [vmem:[%s9626 + $0x8] sm:$0xff]
        %v9629 = vld [vmem:[%s9626 + $0x10] sm:$0xff]
        %v9630 = vld [vmem:[%s9626 + $0x18] sm:$0xff]
        %v9632 = vsel %vm3455, %v9625, 0
        %9634 = vmatprep.subr.mxu0 0.0
        %9635 = vmatpush1.msra.mxu0 0.0
        %9636 = vmatprep.subr.mxu0 0.0
        %9637 = vmatpush1.msra.mxu0 0.0
        %9638 = vmatprep.subr.mxu0 0.0
        %9639 = vmatpush1.msra.mxu0 0.0
        %9640 = vmatprep.subr.mxu0 0.0
        %9641 = vmatpush1.msra.mxu0 0.0
        %9642 = vmatprep.subr.mxu0 0.0
        %9643 = vmatpush1.msra.mxu0 0.0
        %9644 = vmatprep.subr.mxu0 0.0
        %9645 = vmatpush1.msra.mxu0 0.0
        %9646 = vmatprep.subr.mxu0 0.0
        %9647 = vmatpush1.msra.mxu0 0.0
        %9648 = vmatprep.subr.mxu0 0.0
        %9649 = vmatpush1.msra.mxu0 0.0
        %9650 = vmatprep.subr.mxu0 0.0
        %9651 = vmatpush1.msra.mxu0 0.0
        %9652 = vmatprep.subr.mxu0 0.0
        %9653 = vmatpush1.msra.mxu0 0.0
        %9654 = vmatprep.subr.mxu0 0.0
        %9655 = vmatpush1.msra.mxu0 0.0
        %9656 = vmatprep.subr.mxu0 0.0
        %9657 = vmatpush1.msra.mxu0 0.0
        %9658 = vmatprep.subr.mxu0 0.0
        %9659 = vmatpush1.msra.mxu0 %v9630
        %9660 = vmatprep.subr.mxu0 0.0
        %9661 = vmatpush1.msra.mxu0 %v9629
        %9662 = vmatprep.subr.mxu0 0.0
        %9663 = vmatpush1.msra.mxu0 %v9628
        %9664 = vmatprep.subr.mxu0 0.0
        %9665 = vmatpush1.msra.mxu0 %v9627
        %9666 = vmatprep.subr.mxu0 0.0
        %9667 = vmatpush2.msra.mxu0 0.0
        %9668 = vmatprep.subr.mxu0 0.0
        %9669 = vmatpush2.msra.mxu0 0.0
        %9670 = vmatprep.subr.mxu0 0.0
        %9671 = vmatpush2.msra.mxu0 0.0
        %9672 = vmatprep.subr.mxu0 0.0
        %9673 = vmatpush2.msra.mxu0 0.0
        %9674 = vmatprep.subr.mxu0 0.0
        %9675 = vmatpush2.msra.mxu0 0.0
        %9676 = vmatprep.subr.mxu0 0.0
        %9677 = vmatpush2.msra.mxu0 0.0
        %9678 = vmatprep.subr.mxu0 0.0
        %9679 = vmatpush2.msra.mxu0 0.0
        %9680 = vmatprep.subr.mxu0 0.0
        %9681 = vmatpush2.msra.mxu0 0.0
        %9682 = vmatprep.subr.mxu0 0.0
        %9683 = vmatpush2.msra.mxu0 0.0
        %9684 = vmatprep.subr.mxu0 0.0
        %9685 = vmatpush2.msra.mxu0 0.0
        %9686 = vmatprep.subr.mxu0 0.0
        %9687 = vmatpush2.msra.mxu0 0.0
        %9688 = vmatprep.subr.mxu0 0.0
        %9689 = vmatpush2.msra.mxu0 0.0
        %9690 = vmatprep.subr.mxu0 0.0
        %9691 = vmatpush2.msra.mxu0 0.0
        %9692 = vmatprep.subr.mxu0 0.0
        %9693 = vmatpush2.msra.mxu0 0.0
        %9694 = vmatprep.subr.mxu0 0.0
        %9695 = vmatpush2.msra.mxu0 0.0
        %9696 = vmatprep.subr.mxu0 0.0
        %9697 = vmatpush2.msra.mxu0 0.0
        %9698 = vmatprep.mubr.f32.mxu0 0.0
        %9699 = vmatmul.mubr.f32.gmra.mxu0 %v9632
        %v9700 = vpop.f32.mrf.mxu0
        %v9701 = vadd.f32 0.0, %v9700
        %v9702 = vpop.f32.mrf.mxu0
        %9703 = vdwg.mxu0
        %v9704 = vadd.f32 %v9621, %v9701
        %s9705 = scalar_lea.vmem [#allocation6], 6
        %v9706 = vld [vmem:[%s9705] ss:$2 sm:$0xff]
        %s9707 = scalar_lea.vmem [#allocation15], 96
        %v9708 = vld [vmem:[%s9707] sm:$0xff]
        %v9709 = vld [vmem:[%s9707 + $0x8] sm:$0xff]
        %v9710 = vld [vmem:[%s9707 + $0x10] sm:$0xff]
        %v9711 = vld [vmem:[%s9707 + $0x18] sm:$0xff]
        %v9713 = vsel %vm3455, %v9706, 0
        %9715 = vmatprep.subr.mxu0 0.0
        %9716 = vmatpush1.msra.mxu0 0.0
        %9717 = vmatprep.subr.mxu0 0.0
        %9718 = vmatpush1.msra.mxu0 0.0
        %9719 = vmatprep.subr.mxu0 0.0
        %9720 = vmatpush1.msra.mxu0 0.0
        %9721 = vmatprep.subr.mxu0 0.0
        %9722 = vmatpush1.msra.mxu0 0.0
        %9723 = vmatprep.subr.mxu0 0.0
        %9724 = vmatpush1.msra.mxu0 0.0
        %9725 = vmatprep.subr.mxu0 0.0
        %9726 = vmatpush1.msra.mxu0 0.0
        %9727 = vmatprep.subr.mxu0 0.0
        %9728 = vmatpush1.msra.mxu0 0.0
        %9729 = vmatprep.subr.mxu0 0.0
        %9730 = vmatpush1.msra.mxu0 0.0
        %9731 = vmatprep.subr.mxu0 0.0
        %9732 = vmatpush1.msra.mxu0 0.0
        %9733 = vmatprep.subr.mxu0 0.0
        %9734 = vmatpush1.msra.mxu0 0.0
        %9735 = vmatprep.subr.mxu0 0.0
        %9736 = vmatpush1.msra.mxu0 0.0
        %9737 = vmatprep.subr.mxu0 0.0
        %9738 = vmatpush1.msra.mxu0 0.0
        %9739 = vmatprep.subr.mxu0 0.0
        %9740 = vmatpush1.msra.mxu0 %v9711
        %9741 = vmatprep.subr.mxu0 0.0
        %9742 = vmatpush1.msra.mxu0 %v9710
        %9743 = vmatprep.subr.mxu0 0.0
        %9744 = vmatpush1.msra.mxu0 %v9709
        %9745 = vmatprep.subr.mxu0 0.0
        %9746 = vmatpush1.msra.mxu0 %v9708
        %9747 = vmatprep.subr.mxu0 0.0
        %9748 = vmatpush2.msra.mxu0 0.0
        %9749 = vmatprep.subr.mxu0 0.0
        %9750 = vmatpush2.msra.mxu0 0.0
        %9751 = vmatprep.subr.mxu0 0.0
        %9752 = vmatpush2.msra.mxu0 0.0
        %9753 = vmatprep.subr.mxu0 0.0
        %9754 = vmatpush2.msra.mxu0 0.0
        %9755 = vmatprep.subr.mxu0 0.0
        %9756 = vmatpush2.msra.mxu0 0.0
        %9757 = vmatprep.subr.mxu0 0.0
        %9758 = vmatpush2.msra.mxu0 0.0
        %9759 = vmatprep.subr.mxu0 0.0
        %9760 = vmatpush2.msra.mxu0 0.0
        %9761 = vmatprep.subr.mxu0 0.0
        %9762 = vmatpush2.msra.mxu0 0.0
        %9763 = vmatprep.subr.mxu0 0.0
        %9764 = vmatpush2.msra.mxu0 0.0
        %9765 = vmatprep.subr.mxu0 0.0
        %9766 = vmatpush2.msra.mxu0 0.0
        %9767 = vmatprep.subr.mxu0 0.0
        %9768 = vmatpush2.msra.mxu0 0.0
        %9769 = vmatprep.subr.mxu0 0.0
        %9770 = vmatpush2.msra.mxu0 0.0
        %9771 = vmatprep.subr.mxu0 0.0
        %9772 = vmatpush2.msra.mxu0 0.0
        %9773 = vmatprep.subr.mxu0 0.0
        %9774 = vmatpush2.msra.mxu0 0.0
        %9775 = vmatprep.subr.mxu0 0.0
        %9776 = vmatpush2.msra.mxu0 0.0
        %9777 = vmatprep.subr.mxu0 0.0
        %9778 = vmatpush2.msra.mxu0 0.0
        %9779 = vmatprep.mubr.f32.mxu0 0.0
        %9780 = vmatmul.mubr.f32.gmra.mxu0 %v9713
        %v9781 = vpop.f32.mrf.mxu0
        %v9782 = vadd.f32 0.0, %v9781
        %v9783 = vpop.f32.mrf.mxu0
        %9784 = vdwg.mxu0
        %v9785 = vadd.f32 %v9704, %v9782
        %s9786 = scalar_lea.vmem [#allocation6], 7
        %v9787 = vld [vmem:[%s9786] ss:$2 sm:$0xff]
        %s9788 = scalar_lea.vmem [#allocation15], 128
        %v9789 = vld [vmem:[%s9788] sm:$0xff]
        %v9790 = vld [vmem:[%s9788 + $0x8] sm:$0xff]
        %v9791 = vld [vmem:[%s9788 + $0x10] sm:$0xff]
        %v9792 = vld [vmem:[%s9788 + $0x18] sm:$0xff]
        %v9794 = vsel %vm3455, %v9787, 0
        %9796 = vmatprep.subr.mxu0 0.0
        %9797 = vmatpush1.msra.mxu0 0.0
        %9798 = vmatprep.subr.mxu0 0.0
        %9799 = vmatpush1.msra.mxu0 0.0
        %9800 = vmatprep.subr.mxu0 0.0
        %9801 = vmatpush1.msra.mxu0 0.0
        %9802 = vmatprep.subr.mxu0 0.0
        %9803 = vmatpush1.msra.mxu0 0.0
        %9804 = vmatprep.subr.mxu0 0.0
        %9805 = vmatpush1.msra.mxu0 0.0
        %9806 = vmatprep.subr.mxu0 0.0
        %9807 = vmatpush1.msra.mxu0 0.0
        %9808 = vmatprep.subr.mxu0 0.0
        %9809 = vmatpush1.msra.mxu0 0.0
        %9810 = vmatprep.subr.mxu0 0.0
        %9811 = vmatpush1.msra.mxu0 0.0
        %9812 = vmatprep.subr.mxu0 0.0
        %9813 = vmatpush1.msra.mxu0 0.0
        %9814 = vmatprep.subr.mxu0 0.0
        %9815 = vmatpush1.msra.mxu0 0.0
        %9816 = vmatprep.subr.mxu0 0.0
        %9817 = vmatpush1.msra.mxu0 0.0
        %9818 = vmatprep.subr.mxu0 0.0
        %9819 = vmatpush1.msra.mxu0 0.0
        %9820 = vmatprep.subr.mxu0 0.0
        %9821 = vmatpush1.msra.mxu0 %v9792
        %9822 = vmatprep.subr.mxu0 0.0
        %9823 = vmatpush1.msra.mxu0 %v9791
        %9824 = vmatprep.subr.mxu0 0.0
        %9825 = vmatpush1.msra.mxu0 %v9790
        %9826 = vmatprep.subr.mxu0 0.0
        %9827 = vmatpush1.msra.mxu0 %v9789
        %9828 = vmatprep.subr.mxu0 0.0
        %9829 = vmatpush2.msra.mxu0 0.0
        %9830 = vmatprep.subr.mxu0 0.0
        %9831 = vmatpush2.msra.mxu0 0.0
        %9832 = vmatprep.subr.mxu0 0.0
        %9833 = vmatpush2.msra.mxu0 0.0
        %9834 = vmatprep.subr.mxu0 0.0
        %9835 = vmatpush2.msra.mxu0 0.0
        %9836 = vmatprep.subr.mxu0 0.0
        %9837 = vmatpush2.msra.mxu0 0.0
        %9838 = vmatprep.subr.mxu0 0.0
        %9839 = vmatpush2.msra.mxu0 0.0
        %9840 = vmatprep.subr.mxu0 0.0
        %9841 = vmatpush2.msra.mxu0 0.0
        %9842 = vmatprep.subr.mxu0 0.0
        %9843 = vmatpush2.msra.mxu0 0.0
        %9844 = vmatprep.subr.mxu0 0.0
        %9845 = vmatpush2.msra.mxu0 0.0
        %9846 = vmatprep.subr.mxu0 0.0
        %9847 = vmatpush2.msra.mxu0 0.0
        %9848 = vmatprep.subr.mxu0 0.0
        %9849 = vmatpush2.msra.mxu0 0.0
        %9850 = vmatprep.subr.mxu0 0.0
        %9851 = vmatpush2.msra.mxu0 0.0
        %9852 = vmatprep.subr.mxu0 0.0
        %9853 = vmatpush2.msra.mxu0 0.0
        %9854 = vmatprep.subr.mxu0 0.0
        %9855 = vmatpush2.msra.mxu0 0.0
        %9856 = vmatprep.subr.mxu0 0.0
        %9857 = vmatpush2.msra.mxu0 0.0
        %9858 = vmatprep.subr.mxu0 0.0
        %9859 = vmatpush2.msra.mxu0 0.0
        %9860 = vmatprep.mubr.f32.mxu0 0.0
        %9861 = vmatmul.mubr.f32.gmra.mxu0 %v9794
        %v9862 = vpop.f32.mrf.mxu0
        %v9863 = vadd.f32 0.0, %v9862
        %v9864 = vpop.f32.mrf.mxu0
        %9865 = vdwg.mxu0
        %v9866 = vadd.f32 %v9785, %v9863
        %s9867 = scalar_lea.vmem [#allocation6], 8
        %v9868 = vld [vmem:[%s9867] ss:$2 sm:$0xff]
        %s9869 = scalar_lea.vmem [#allocation15], 160
        %v9870 = vld [vmem:[%s9869] sm:$0xff]
        %v9871 = vld [vmem:[%s9869 + $0x8] sm:$0xff]
        %v9872 = vld [vmem:[%s9869 + $0x10] sm:$0xff]
        %v9873 = vld [vmem:[%s9869 + $0x18] sm:$0xff]
        %v9875 = vsel %vm3455, %v9868, 0
        %9877 = vmatprep.subr.mxu0 0.0
        %9878 = vmatpush1.msra.mxu0 0.0
        %9879 = vmatprep.subr.mxu0 0.0
        %9880 = vmatpush1.msra.mxu0 0.0
        %9881 = vmatprep.subr.mxu0 0.0
        %9882 = vmatpush1.msra.mxu0 0.0
        %9883 = vmatprep.subr.mxu0 0.0
        %9884 = vmatpush1.msra.mxu0 0.0
        %9885 = vmatprep.subr.mxu0 0.0
        %9886 = vmatpush1.msra.mxu0 0.0
        %9887 = vmatprep.subr.mxu0 0.0
        %9888 = vmatpush1.msra.mxu0 0.0
        %9889 = vmatprep.subr.mxu0 0.0
        %9890 = vmatpush1.msra.mxu0 0.0
        %9891 = vmatprep.subr.mxu0 0.0
        %9892 = vmatpush1.msra.mxu0 0.0
        %9893 = vmatprep.subr.mxu0 0.0
        %9894 = vmatpush1.msra.mxu0 0.0
        %9895 = vmatprep.subr.mxu0 0.0
        %9896 = vmatpush1.msra.mxu0 0.0
        %9897 = vmatprep.subr.mxu0 0.0
        %9898 = vmatpush1.msra.mxu0 0.0
        %9899 = vmatprep.subr.mxu0 0.0
        %9900 = vmatpush1.msra.mxu0 0.0
        %9901 = vmatprep.subr.mxu0 0.0
        %9902 = vmatpush1.msra.mxu0 %v9873
        %9903 = vmatprep.subr.mxu0 0.0
        %9904 = vmatpush1.msra.mxu0 %v9872
        %9905 = vmatprep.subr.mxu0 0.0
        %9906 = vmatpush1.msra.mxu0 %v9871
        %9907 = vmatprep.subr.mxu0 0.0
        %9908 = vmatpush1.msra.mxu0 %v9870
        %9909 = vmatprep.subr.mxu0 0.0
        %9910 = vmatpush2.msra.mxu0 0.0
        %9911 = vmatprep.subr.mxu0 0.0
        %9912 = vmatpush2.msra.mxu0 0.0
        %9913 = vmatprep.subr.mxu0 0.0
        %9914 = vmatpush2.msra.mxu0 0.0
        %9915 = vmatprep.subr.mxu0 0.0
        %9916 = vmatpush2.msra.mxu0 0.0
        %9917 = vmatprep.subr.mxu0 0.0
        %9918 = vmatpush2.msra.mxu0 0.0
        %9919 = vmatprep.subr.mxu0 0.0
        %9920 = vmatpush2.msra.mxu0 0.0
        %9921 = vmatprep.subr.mxu0 0.0
        %9922 = vmatpush2.msra.mxu0 0.0
        %9923 = vmatprep.subr.mxu0 0.0
        %9924 = vmatpush2.msra.mxu0 0.0
        %9925 = vmatprep.subr.mxu0 0.0
        %9926 = vmatpush2.msra.mxu0 0.0
        %9927 = vmatprep.subr.mxu0 0.0
        %9928 = vmatpush2.msra.mxu0 0.0
        %9929 = vmatprep.subr.mxu0 0.0
        %9930 = vmatpush2.msra.mxu0 0.0
        %9931 = vmatprep.subr.mxu0 0.0
        %9932 = vmatpush2.msra.mxu0 0.0
        %9933 = vmatprep.subr.mxu0 0.0
        %9934 = vmatpush2.msra.mxu0 0.0
        %9935 = vmatprep.subr.mxu0 0.0
        %9936 = vmatpush2.msra.mxu0 0.0
        %9937 = vmatprep.subr.mxu0 0.0
        %9938 = vmatpush2.msra.mxu0 0.0
        %9939 = vmatprep.subr.mxu0 0.0
        %9940 = vmatpush2.msra.mxu0 0.0
        %9941 = vmatprep.mubr.f32.mxu0 0.0
        %9942 = vmatmul.mubr.f32.gmra.mxu0 %v9875
        %v9943 = vpop.f32.mrf.mxu0
        %v9944 = vadd.f32 0.0, %v9943
        %v9945 = vpop.f32.mrf.mxu0
        %9946 = vdwg.mxu0
        %v9947 = vadd.f32 %v9866, %v9944
        %s9948 = scalar_lea.vmem [#allocation6], 12
        %v9949 = vld [vmem:[%s9948] ss:$2 sm:$0xff]
        %s9950 = scalar_lea.vmem [#allocation15], 192
        %v9951 = vld [vmem:[%s9950] sm:$0xff]
        %v9952 = vld [vmem:[%s9950 + $0x8] sm:$0xff]
        %v9953 = vld [vmem:[%s9950 + $0x10] sm:$0xff]
        %v9954 = vld [vmem:[%s9950 + $0x18] sm:$0xff]
        %v9956 = vsel %vm3455, %v9949, 0
        %9958 = vmatprep.subr.mxu0 0.0
        %9959 = vmatpush1.msra.mxu0 0.0
        %9960 = vmatprep.subr.mxu0 0.0
        %9961 = vmatpush1.msra.mxu0 0.0
        %9962 = vmatprep.subr.mxu0 0.0
        %9963 = vmatpush1.msra.mxu0 0.0
        %9964 = vmatprep.subr.mxu0 0.0
        %9965 = vmatpush1.msra.mxu0 0.0
        %9966 = vmatprep.subr.mxu0 0.0
        %9967 = vmatpush1.msra.mxu0 0.0
        %9968 = vmatprep.subr.mxu0 0.0
        %9969 = vmatpush1.msra.mxu0 0.0
        %9970 = vmatprep.subr.mxu0 0.0
        %9971 = vmatpush1.msra.mxu0 0.0
        %9972 = vmatprep.subr.mxu0 0.0
        %9973 = vmatpush1.msra.mxu0 0.0
        %9974 = vmatprep.subr.mxu0 0.0
        %9975 = vmatpush1.msra.mxu0 0.0
        %9976 = vmatprep.subr.mxu0 0.0
        %9977 = vmatpush1.msra.mxu0 0.0
        %9978 = vmatprep.subr.mxu0 0.0
        %9979 = vmatpush1.msra.mxu0 0.0
        %9980 = vmatprep.subr.mxu0 0.0
        %9981 = vmatpush1.msra.mxu0 0.0
        %9982 = vmatprep.subr.mxu0 0.0
        %9983 = vmatpush1.msra.mxu0 %v9954
        %9984 = vmatprep.subr.mxu0 0.0
        %9985 = vmatpush1.msra.mxu0 %v9953
        %9986 = vmatprep.subr.mxu0 0.0
        %9987 = vmatpush1.msra.mxu0 %v9952
        %9988 = vmatprep.subr.mxu0 0.0
        %9989 = vmatpush1.msra.mxu0 %v9951
        %9990 = vmatprep.subr.mxu0 0.0
        %9991 = vmatpush2.msra.mxu0 0.0
        %9992 = vmatprep.subr.mxu0 0.0
        %9993 = vmatpush2.msra.mxu0 0.0
        %9994 = vmatprep.subr.mxu0 0.0
        %9995 = vmatpush2.msra.mxu0 0.0
        %9996 = vmatprep.subr.mxu0 0.0
        %9997 = vmatpush2.msra.mxu0 0.0
        %9998 = vmatprep.subr.mxu0 0.0
        %9999 = vmatpush2.msra.mxu0 0.0
        %10000 = vmatprep.subr.mxu0 0.0
        %10001 = vmatpush2.msra.mxu0 0.0
        %10002 = vmatprep.subr.mxu0 0.0
        %10003 = vmatpush2.msra.mxu0 0.0
        %10004 = vmatprep.subr.mxu0 0.0
        %10005 = vmatpush2.msra.mxu0 0.0
        %10006 = vmatprep.subr.mxu0 0.0
        %10007 = vmatpush2.msra.mxu0 0.0
        %10008 = vmatprep.subr.mxu0 0.0
        %10009 = vmatpush2.msra.mxu0 0.0
        %10010 = vmatprep.subr.mxu0 0.0
        %10011 = vmatpush2.msra.mxu0 0.0
        %10012 = vmatprep.subr.mxu0 0.0
        %10013 = vmatpush2.msra.mxu0 0.0
        %10014 = vmatprep.subr.mxu0 0.0
        %10015 = vmatpush2.msra.mxu0 0.0
        %10016 = vmatprep.subr.mxu0 0.0
        %10017 = vmatpush2.msra.mxu0 0.0
        %10018 = vmatprep.subr.mxu0 0.0
        %10019 = vmatpush2.msra.mxu0 0.0
        %10020 = vmatprep.subr.mxu0 0.0
        %10021 = vmatpush2.msra.mxu0 0.0
        %10022 = vmatprep.mubr.f32.mxu0 0.0
        %10023 = vmatmul.mubr.f32.gmra.mxu0 %v9956
        %v10024 = vpop.f32.mrf.mxu0
        %v10025 = vadd.f32 0.0, %v10024
        %v10026 = vpop.f32.mrf.mxu0
        %10027 = vdwg.mxu0
        %v10028 = vadd.f32 %v9947, %v10025
        %s10029 = scalar_lea.vmem [#allocation6], 13
        %v10030 = vld [vmem:[%s10029] ss:$2 sm:$0xff]
        %s10031 = scalar_lea.vmem [#allocation15], 224
        %v10032 = vld [vmem:[%s10031] sm:$0xff]
        %v10033 = vld [vmem:[%s10031 + $0x8] sm:$0xff]
        %v10034 = vld [vmem:[%s10031 + $0x10] sm:$0xff]
        %v10035 = vld [vmem:[%s10031 + $0x18] sm:$0xff]
        %v10037 = vsel %vm3455, %v10030, 0
        %10039 = vmatprep.subr.mxu0 0.0
        %10040 = vmatpush1.msra.mxu0 0.0
        %10041 = vmatprep.subr.mxu0 0.0
        %10042 = vmatpush1.msra.mxu0 0.0
        %10043 = vmatprep.subr.mxu0 0.0
        %10044 = vmatpush1.msra.mxu0 0.0
        %10045 = vmatprep.subr.mxu0 0.0
        %10046 = vmatpush1.msra.mxu0 0.0
        %10047 = vmatprep.subr.mxu0 0.0
        %10048 = vmatpush1.msra.mxu0 0.0
        %10049 = vmatprep.subr.mxu0 0.0
        %10050 = vmatpush1.msra.mxu0 0.0
        %10051 = vmatprep.subr.mxu0 0.0
        %10052 = vmatpush1.msra.mxu0 0.0
        %10053 = vmatprep.subr.mxu0 0.0
        %10054 = vmatpush1.msra.mxu0 0.0
        %10055 = vmatprep.subr.mxu0 0.0
        %10056 = vmatpush1.msra.mxu0 0.0
        %10057 = vmatprep.subr.mxu0 0.0
        %10058 = vmatpush1.msra.mxu0 0.0
        %10059 = vmatprep.subr.mxu0 0.0
        %10060 = vmatpush1.msra.mxu0 0.0
        %10061 = vmatprep.subr.mxu0 0.0
        %10062 = vmatpush1.msra.mxu0 0.0
        %10063 = vmatprep.subr.mxu0 0.0
        %10064 = vmatpush1.msra.mxu0 %v10035
        %10065 = vmatprep.subr.mxu0 0.0
        %10066 = vmatpush1.msra.mxu0 %v10034
        %10067 = vmatprep.subr.mxu0 0.0
        %10068 = vmatpush1.msra.mxu0 %v10033
        %10069 = vmatprep.subr.mxu0 0.0
        %10070 = vmatpush1.msra.mxu0 %v10032
        %10071 = vmatprep.subr.mxu0 0.0
        %10072 = vmatpush2.msra.mxu0 0.0
        %10073 = vmatprep.subr.mxu0 0.0
        %10074 = vmatpush2.msra.mxu0 0.0
        %10075 = vmatprep.subr.mxu0 0.0
        %10076 = vmatpush2.msra.mxu0 0.0
        %10077 = vmatprep.subr.mxu0 0.0
        %10078 = vmatpush2.msra.mxu0 0.0
        %10079 = vmatprep.subr.mxu0 0.0
        %10080 = vmatpush2.msra.mxu0 0.0
        %10081 = vmatprep.subr.mxu0 0.0
        %10082 = vmatpush2.msra.mxu0 0.0
        %10083 = vmatprep.subr.mxu0 0.0
        %10084 = vmatpush2.msra.mxu0 0.0
        %10085 = vmatprep.subr.mxu0 0.0
        %10086 = vmatpush2.msra.mxu0 0.0
        %10087 = vmatprep.subr.mxu0 0.0
        %10088 = vmatpush2.msra.mxu0 0.0
        %10089 = vmatprep.subr.mxu0 0.0
        %10090 = vmatpush2.msra.mxu0 0.0
        %10091 = vmatprep.subr.mxu0 0.0
        %10092 = vmatpush2.msra.mxu0 0.0
        %10093 = vmatprep.subr.mxu0 0.0
        %10094 = vmatpush2.msra.mxu0 0.0
        %10095 = vmatprep.subr.mxu0 0.0
        %10096 = vmatpush2.msra.mxu0 0.0
        %10097 = vmatprep.subr.mxu0 0.0
        %10098 = vmatpush2.msra.mxu0 0.0
        %10099 = vmatprep.subr.mxu0 0.0
        %10100 = vmatpush2.msra.mxu0 0.0
        %10101 = vmatprep.subr.mxu0 0.0
        %10102 = vmatpush2.msra.mxu0 0.0
        %10103 = vmatprep.mubr.f32.mxu0 0.0
        %10104 = vmatmul.mubr.f32.gmra.mxu0 %v10037
        %v10105 = vpop.f32.mrf.mxu0
        %v10106 = vadd.f32 0.0, %v10105
        %v10107 = vpop.f32.mrf.mxu0
        %10108 = vdwg.mxu0
        %v10109 = vadd.f32 %v10028, %v10106
        %s10110 = scalar_lea.vmem [#allocation6], 14
        %v10111 = vld [vmem:[%s10110] ss:$2 sm:$0xff]
        %s10112 = scalar_lea.vmem [#allocation15], 256
        %v10113 = vld [vmem:[%s10112] sm:$0xff]
        %v10114 = vld [vmem:[%s10112 + $0x8] sm:$0xff]
        %v10115 = vld [vmem:[%s10112 + $0x10] sm:$0xff]
        %v10116 = vld [vmem:[%s10112 + $0x18] sm:$0xff]
        %v10118 = vsel %vm3455, %v10111, 0
        %10120 = vmatprep.subr.mxu0 0.0
        %10121 = vmatpush1.msra.mxu0 0.0
        %10122 = vmatprep.subr.mxu0 0.0
        %10123 = vmatpush1.msra.mxu0 0.0
        %10124 = vmatprep.subr.mxu0 0.0
        %10125 = vmatpush1.msra.mxu0 0.0
        %10126 = vmatprep.subr.mxu0 0.0
        %10127 = vmatpush1.msra.mxu0 0.0
        %10128 = vmatprep.subr.mxu0 0.0
        %10129 = vmatpush1.msra.mxu0 0.0
        %10130 = vmatprep.subr.mxu0 0.0
        %10131 = vmatpush1.msra.mxu0 0.0
        %10132 = vmatprep.subr.mxu0 0.0
        %10133 = vmatpush1.msra.mxu0 0.0
        %10134 = vmatprep.subr.mxu0 0.0
        %10135 = vmatpush1.msra.mxu0 0.0
        %10136 = vmatprep.subr.mxu0 0.0
        %10137 = vmatpush1.msra.mxu0 0.0
        %10138 = vmatprep.subr.mxu0 0.0
        %10139 = vmatpush1.msra.mxu0 0.0
        %10140 = vmatprep.subr.mxu0 0.0
        %10141 = vmatpush1.msra.mxu0 0.0
        %10142 = vmatprep.subr.mxu0 0.0
        %10143 = vmatpush1.msra.mxu0 0.0
        %10144 = vmatprep.subr.mxu0 0.0
        %10145 = vmatpush1.msra.mxu0 %v10116
        %10146 = vmatprep.subr.mxu0 0.0
        %10147 = vmatpush1.msra.mxu0 %v10115
        %10148 = vmatprep.subr.mxu0 0.0
        %10149 = vmatpush1.msra.mxu0 %v10114
        %10150 = vmatprep.subr.mxu0 0.0
        %10151 = vmatpush1.msra.mxu0 %v10113
        %10152 = vmatprep.subr.mxu0 0.0
        %10153 = vmatpush2.msra.mxu0 0.0
        %10154 = vmatprep.subr.mxu0 0.0
        %10155 = vmatpush2.msra.mxu0 0.0
        %10156 = vmatprep.subr.mxu0 0.0
        %10157 = vmatpush2.msra.mxu0 0.0
        %10158 = vmatprep.subr.mxu0 0.0
        %10159 = vmatpush2.msra.mxu0 0.0
        %10160 = vmatprep.subr.mxu0 0.0
        %10161 = vmatpush2.msra.mxu0 0.0
        %10162 = vmatprep.subr.mxu0 0.0
        %10163 = vmatpush2.msra.mxu0 0.0
        %10164 = vmatprep.subr.mxu0 0.0
        %10165 = vmatpush2.msra.mxu0 0.0
        %10166 = vmatprep.subr.mxu0 0.0
        %10167 = vmatpush2.msra.mxu0 0.0
        %10168 = vmatprep.subr.mxu0 0.0
        %10169 = vmatpush2.msra.mxu0 0.0
        %10170 = vmatprep.subr.mxu0 0.0
        %10171 = vmatpush2.msra.mxu0 0.0
        %10172 = vmatprep.subr.mxu0 0.0
        %10173 = vmatpush2.msra.mxu0 0.0
        %10174 = vmatprep.subr.mxu0 0.0
        %10175 = vmatpush2.msra.mxu0 0.0
        %10176 = vmatprep.subr.mxu0 0.0
        %10177 = vmatpush2.msra.mxu0 0.0
        %10178 = vmatprep.subr.mxu0 0.0
        %10179 = vmatpush2.msra.mxu0 0.0
        %10180 = vmatprep.subr.mxu0 0.0
        %10181 = vmatpush2.msra.mxu0 0.0
        %10182 = vmatprep.subr.mxu0 0.0
        %10183 = vmatpush2.msra.mxu0 0.0
        %10184 = vmatprep.mubr.f32.mxu0 0.0
        %10185 = vmatmul.mubr.f32.gmra.mxu0 %v10118
        %v10186 = vpop.f32.mrf.mxu0
        %v10187 = vadd.f32 0.0, %v10186
        %v10188 = vpop.f32.mrf.mxu0
        %10189 = vdwg.mxu0
        %v10190 = vadd.f32 %v10109, %v10187
        %v10191 = vld [vmem:[%s15] sm:$0x1]
        %v10193 = vlaneseq
        %v10194 = vshrl.u32 %v10193, 7
        %v10195 = vsub.s32 0, %v10194
        %v10196 = vrot.slane %v10191, %v10195
        %v10198 = vadd.f32 %v10190, %v10196
        %10199 = vst.msk [vmem:[%s633] sm:$0x3] %vm3503, %v10198
        %s10200 = scalar_lea.vmem %s633, 2 [#allocation19]
        %10201 = vst.msk [vmem:[%s10200 - $0x6] sm:$0xc0] %vm3509, %v10198
        %s10202 = sand.u32 %s390, 1
        %s10203 = scalar_lea.sflag [#allocation12], %s10202
        %s10204 = sand.u32 %s390, 1
        %s10205 = smul.addr %s10204, 64
        %s10206 = scalar_lea.vmem [#allocation16], %s10205
        %s10207 = sand.u32 %s41, 1
        %s10208 = scalar_lea.sflag [#allocation18], %s10207
        %s10209 = sand.u32 %s416, 1
        %s10210 = smul.addr %s10209, 16
        %s10211 = scalar_lea.vmem [#allocation17], %s10210
        %s10212 = sand.u32 %s41, 1
        %s10213 = scalar_lea.sflag [#allocation18], %s10212
        %s10214 = sand.u32 %s442, 1
        %s10215 = smul.addr %s10214, 4
        %s10216 = scalar_lea.vmem [#allocation19], %s10215
        // Predicated region
        $region97: #{tpu_custom_call.1} parent=83 // pred_check
          %p10217 = pneg %p400
        $region98: #{tpu_custom_call.1} parent=83 // pred_check_branch
          %10219 = sbr.rel (%p10217) target = $region100
        $region99: #{tpu_custom_call.1} parent=83 // pred_region
          %s10221 = ssub.s32 1024, 1024
          %10222 = vsyncadd %s10203, %s10221
          %s10223 = smul.addr %s41, 8
          %s10224 = smul.addr %s10223, 128
          %s10225 = scalar_lea.hbm %s16, %s10224
          %s10226 = sshll.u32 %s10206, 4
          %s10227 = int_to_ptr.vmem [resolvable:$true] %s10226
          %10232 = dma.vmem_to_hbm [thread:$0]  %s10227, 1024, %s10225, %s10203, 128, 128, 8
        $region100: #{tpu_custom_call.1} parent=83 // pred_fallthru
          _
        // Predicated region
        $region101: #{tpu_custom_call.1} parent=83 // pred_check
          %p10233 = pneg %p426
        $region102: #{tpu_custom_call.1} parent=83 // pred_check_branch
          %10235 = sbr.rel (%p10233) target = $region104
        $region103: #{tpu_custom_call.1} parent=83 // pred_region
          %s10237 = ssub.s32 256, 256
          %10238 = vsyncadd %s10208, %s10237
          %s10239 = smul.addr %s41, 4
          %s10240 = smul.addr %s10239, 64
          %s10241 = scalar_lea.hbm %s17, %s10240
          %s10242 = sshll.u32 %s10211, 4
          %s10243 = int_to_ptr.vmem [resolvable:$true] %s10242
          %10248 = dma.vmem_to_hbm [thread:$0]  %s10243, 256, %s10241, %s10208, 64, 64, 4
        $region104: #{tpu_custom_call.1} parent=83 // pred_fallthru
          _
        // Predicated region
        $region105: #{tpu_custom_call.1} parent=83 // pred_check
          %p10249 = pneg %p452
        $region106: #{tpu_custom_call.1} parent=83 // pred_check_branch
          %10251 = sbr.rel (%p10249) target = $region108
        $region107: #{tpu_custom_call.1} parent=83 // pred_region
          %s10253 = ssub.s32 64, 64
          %10254 = vsyncadd %s10213, %s10253
          %s10255 = smul.addr %s41, 2
          %s10256 = smul.addr %s10255, 32
          %s10257 = scalar_lea.hbm %s18, %s10256
          %s10258 = sshll.u32 %s10216, 4
          %s10259 = int_to_ptr.vmem [resolvable:$true] %s10258
          %10264 = dma.vmem_to_hbm [thread:$0]  %s10259, 64, %s10257, %s10213, 32, 32, 2
        $region108: #{tpu_custom_call.1} parent=83 // pred_fallthru
          _
      $region84: #{tpu_custom_call.1} parent=5 // pred_fallthru
        _
      %p10265 = scmp.le.s32.totalorder 2, %s36
      // Predicated region
      $region109: #{tpu_custom_call.1} parent=5 // pred_check
        %p10266 = pneg %p10265
      $region110: #{tpu_custom_call.1} parent=5 // pred_check_branch
        %10268 = sbr.rel (%p10266) target = $region112
      $region111: #{tpu_custom_call.1} parent=5 // pred_region
        %s10269 = ssub.s32 %s36, 2
        // Predicated region
        $region113: #{tpu_custom_call.1} parent=111 // pred_check
          %p10270 = pneg %p406
        $region114: #{tpu_custom_call.1} parent=111 // pred_check_branch
          %10272 = sbr.rel (%p10270) target = $region116
        $region115: #{tpu_custom_call.1} parent=111 // pred_region
          %s10273 = sand.u32 %s391, 1
          %s10274 = scalar_lea.sflag [#allocation12], %s10273
          %s10275 = sand.u32 %s391, 1
          %s10276 = smul.addr %s10275, 64
          %s10277 = scalar_lea.vmem [#allocation16], %s10276
          %10278 = dma.done %s10274, 1024
        $region116: #{tpu_custom_call.1} parent=111 // pred_fallthru
          _
        // Predicated region
        $region117: #{tpu_custom_call.1} parent=111 // pred_check
          %p10279 = pneg %p432
        $region118: #{tpu_custom_call.1} parent=111 // pred_check_branch
          %10281 = sbr.rel (%p10279) target = $region120
        $region119: #{tpu_custom_call.1} parent=111 // pred_region
          %s10282 = sand.u32 %s42, 1
          %s10283 = scalar_lea.sflag [#allocation18], %s10282
          %s10284 = sand.u32 %s417, 1
          %s10285 = smul.addr %s10284, 16
          %s10286 = scalar_lea.vmem [#allocation17], %s10285
          %10287 = dma.done %s10283, 256
        $region120: #{tpu_custom_call.1} parent=111 // pred_fallthru
          _
        // Predicated region
        $region121: #{tpu_custom_call.1} parent=111 // pred_check
          %p10288 = pneg %p458
        $region122: #{tpu_custom_call.1} parent=111 // pred_check_branch
          %10290 = sbr.rel (%p10288) target = $region124
        $region123: #{tpu_custom_call.1} parent=111 // pred_region
          %s10291 = sand.u32 %s42, 1
          %s10292 = scalar_lea.sflag [#allocation18], %s10291
          %s10293 = sand.u32 %s443, 1
          %s10294 = smul.addr %s10293, 4
          %s10295 = scalar_lea.vmem [#allocation19], %s10294
          %10296 = dma.done %s10292, 64
        $region124: #{tpu_custom_call.1} parent=111 // pred_fallthru
          _
      $region112: #{tpu_custom_call.1} parent=5 // pred_fallthru
        _
    $region6: #{tpu_custom_call.1} parent=1 // loop_footer
      %s40 = sadd.s32 1, %s36
    $region7: #{tpu_custom_call.1} parent=1 // loop_footer_branch
      %35 = sbr.rel target = $region3
    $region8: #{tpu_custom_call.1} parent=1 // loop_exit
      _
    %10297 = vsyncpa [#allocation11], 1
    %s10298 = scalar_lea.sflag [#allocation11], 1
    %10299 = vsyncpa %s10298, 1
    %10300 = vsyncpa [#allocation14], 1
    %10301 = vsyncpa [#allocation12], 1
    %s10302 = scalar_lea.sflag [#allocation12], 1
    %10303 = vsyncpa %s10302, 1
    %10304 = vsyncpa [#allocation18], 1
    %s10305 = scalar_lea.sflag [#allocation18], 1
    %10306 = vsyncpa %s10305, 1

</llo_original>
